<compile_context>
chip_gen: v5e
topology: v5e:2x2
jax: 0.10.0
libtpu: 0.0.40
codegen_flags: <defaults>
</compile_context>

<pallas_src>
import jax
import jax.numpy as jnp
from jax import lax
from jax.experimental import pallas as pl
from jax.experimental.pallas import tpu as pltpu

FEAT = 512    # resnet18 final feature channels (512 + 512 == 1024 fusion input)
LANE = 128


def _round_up(x, m):
    return ((x + m - 1) // m) * m


def _pad_spatial(x_bsc, chunk_cap):
    """Pad the spatial (middle) axis of (B, S, C) to a lane-aligned multiple of the chunk."""
    B, S, C = x_bsc.shape
    cap = max(LANE, _round_up(int(chunk_cap), LANE))      # defensive: chunk % 128 == 0
    s_pad = _round_up(S, LANE)
    if s_pad > cap:
        s_pad = _round_up(S, cap)
        chunk = cap
    else:
        chunk = s_pad
    if s_pad != S:
        x_bsc = jnp.pad(x_bsc, ((0, 0), (0, s_pad - S), (0, 0)))
    return x_bsc, s_pad, chunk


# ---------------------------------------------------------------------------
# In-kernel helper: pointwise-conv stem + ReLU + global mean pool for ONE sample.
#   x_ref block: (1, s_pad, cin)   spatial on sublanes, channels minor (full dim)
#   w_ref:       (cin, FEAT)       lane-dense weights
#   b_ref:       (1,  FEAT)        lane-dense bias
# Returns a lane-dense (1, FEAT) pooled row.
# ---------------------------------------------------------------------------
def _stem_row(x_ref, w_ref, b_ref, *, cin, s_true, s_pad, chunk):
    w = w_ref[...]
    b_row = b_ref[...]
    n_inner = s_pad // chunk

    def chunk_sum(xc):                              # xc: (chunk, cin)
        y = xc[:, 0:1] * w[0:1, :]                  # (chunk, FEAT) VPU outer product (K<=3)
        for c in range(1, cin):
            y = y + xc[:, c:c + 1] * w[c:c + 1, :]
        # ReLU + cross-sublane reduce (XLU) -> (1, FEAT): no (FEAT, chunk) scratch RMW.
        return jnp.sum(jnp.maximum(y + b_row, 0.0), axis=0, keepdims=True)

    if n_inner == 1:
        acc = chunk_sum(x_ref[0])
    else:
        def body(ci, acc):
            xc = x_ref[0, pl.ds(ci * chunk, chunk), :]
            return acc + chunk_sum(xc)
        acc = lax.fori_loop(0, n_inner, body, jnp.zeros((1, FEAT), jnp.float32))

    n_pad = s_pad - s_true
    if n_pad:
        # zero-padded spatial rows each contributed exactly relu(b); remove them.
        acc = acc - float(n_pad) * jnp.maximum(b_row, 0.0)
    return acc * (1.0 / float(s_true))              # true mean over the real spatial extent


# ---------------------------------------------------------------------------
# Fused per-sample kernel: audio stem + visual stem + drop mask + ConcatFusion fc.
# ---------------------------------------------------------------------------
def _make_av_kernel(*, ca, cv, sa, sa_pad, chunk_a, sv, sv_pad, chunk_v):
    def kernel(ax_ref, ka_ref, wa_ref, ba_ref,
               vx_ref, kv_ref, wv_ref, bv_ref,
               wafc_ref, wvfc_ref, bfc_ref,
               a_out_ref, v_out_ref, o_ref):
        a_row = _stem_row(ax_ref, wa_ref, ba_ref,
                          cin=ca, s_true=sa, s_pad=sa_pad, chunk=chunk_a)
        v_row = _stem_row(vx_ref, wv_ref, bv_ref,
                          cin=cv, s_true=sv, s_pad=sv_pad, chunk=chunk_v)

        a_row = a_row * ka_ref[0]                   # (1, FEAT) * (1, 1) keep mask
        v_row = v_row * kv_ref[0]
        a_out_ref[0] = a_row                        # lane-dense (1, FEAT) store
        v_out_ref[0] = v_row

        # cat((a, v), 1) @ W + b  ==  a @ Wa + v @ Wv + b   (MXU, class dim padded to 128)
        logits = jnp.dot(a_row, wafc_ref[...], preferred_element_type=jnp.float32)
        logits = logits + jnp.dot(v_row, wvfc_ref[...], preferred_element_type=jnp.float32)
        o_ref[0] = logits + bfc_ref[...]
    return kernel


# ---------------------------------------------------------------------------
# AVClassifier (Pallas)
# ---------------------------------------------------------------------------
class AVClassifierPallas:
    def __init__(self, key, n_classes=10):
        k1, k2, k3, k4, k5, k6 = jax.random.split(key, 6)
        # TODO(synk): resnet18(modality=...) backbone source is not provided; replaced by a
        # deterministic pointwise-conv(+ReLU) stand-in emitting the 512-channel features
        # the rest of forward() requires.
        self.wa = 0.1 * jax.random.normal(k1, (1, FEAT), jnp.float32)   # audio stem (cin, FEAT)
        self.ba = 0.1 * jax.random.normal(k2, (1, FEAT), jnp.float32)
        self.wv = 0.1 * jax.random.normal(k3, (3, FEAT), jnp.float32)   # visual stem (cin, FEAT)
        self.bv = 0.1 * jax.random.normal(k4, (1, FEAT), jnp.float32)
        # ConcatFusion.fc_out = nn.Linear(1024, n_classes); stored as (1024, n_classes)
        self.w_fc = 0.05 * jax.random.normal(k5, (2 * FEAT, n_classes), jnp.float32)
        self.b_fc = 0.05 * jax.random.normal(k6, (n_classes,), jnp.float32)
        self.n_classes = n_classes

        self.pad_cls = _round_up(n_classes, LANE)          # lane-dense fc output, slice later
        w_pad = jnp.zeros((2 * FEAT, self.pad_cls), jnp.float32).at[:, :n_classes].set(self.w_fc)
        self.wa_fc = w_pad[:FEAT]                          # (512, pad_cls)
        self.wv_fc = w_pad[FEAT:]                          # (512, pad_cls)
        self.b_fc_pad = jnp.zeros((1, self.pad_cls), jnp.float32).at[0, :n_classes].set(self.b_fc)

    def __call__(self, audio, visual, drop=None, chunk_cap=2048):
        # audio: (B, 1, H, W) NCHW ; visual: (B, 3, T, H, W) NCTHW (PyTorch layouts).
        # TODO(synk): drop_arg / execute_drop training branch not translated (execute_drop
        # and self.p are undefined in the provided spec).
        B, ca = audio.shape[:2]
        cv = visual.shape[1]

        # Channels-last (B, S, cin): pointwise stem + global mean pool are invariant to the
        # spatial ordering, only the per-position channel pairing matters.  ca == 1 makes the
        # audio moveaxis a free reshape; the visual one is a single small XLA transpose that
        # buys lane-dense features everywhere inside the kernel.
        a_x = jnp.moveaxis(audio.reshape(B, ca, -1), 1, 2)
        v_x = jnp.moveaxis(visual.reshape(B, cv, -1), 1, 2)
        sa = a_x.shape[1]
        sv = v_x.shape[1]
        a_x, sa_pad, chunk_a = _pad_spatial(a_x, chunk_cap)
        v_x, sv_pad, chunk_v = _pad_spatial(v_x, chunk_cap)

        if drop is None:
            keep_a = jnp.ones((B, 1, 1), jnp.float32)
            keep_v = jnp.ones((B, 1, 1), jnp.float32)
        else:
            d = jnp.asarray(drop, jnp.int32).reshape(B, 1, 1)
            keep_a = (d != 1).astype(jnp.float32)
            keep_v = (d != 2).astype(jnp.float32)

        kernel = _make_av_kernel(ca=ca, cv=cv, sa=sa, sa_pad=sa_pad, chunk_a=chunk_a,
                                 sv=sv, sv_pad=sv_pad, chunk_v=chunk_v)

        a3, v3, o3 = pl.pallas_call(
            kernel,
            out_shape=(
                jax.ShapeDtypeStruct((B, 1, FEAT), jnp.float32),
                jax.ShapeDtypeStruct((B, 1, FEAT), jnp.float32),
                jax.ShapeDtypeStruct((B, 1, self.pad_cls), jnp.float32),
            ),
            grid=(B,),
            in_specs=[
                pl.BlockSpec((1, sa_pad, ca), lambda b: (b, 0, 0)),       # audio sample
                pl.BlockSpec((1, 1, 1), lambda b: (b, 0, 0)),             # keep_a
                pl.BlockSpec((ca, FEAT), lambda b: (0, 0)),               # audio stem W
                pl.BlockSpec((1, FEAT), lambda b: (0, 0)),                # audio stem b
                pl.BlockSpec((1, sv_pad, cv), lambda b: (b, 0, 0)),       # visual sample
                pl.BlockSpec((1, 1, 1), lambda b: (b, 0, 0)),             # keep_v
                pl.BlockSpec((cv, FEAT), lambda b: (0, 0)),               # visual stem W
                pl.BlockSpec((1, FEAT), lambda b: (0, 0)),                # visual stem b
                pl.BlockSpec((FEAT, self.pad_cls), lambda b: (0, 0)),     # fc W (audio half)
                pl.BlockSpec((FEAT, self.pad_cls), lambda b: (0, 0)),     # fc W (visual half)
                pl.BlockSpec((1, self.pad_cls), lambda b: (0, 0)),        # fc bias
            ],
            out_specs=(
                pl.BlockSpec((1, 1, FEAT), lambda b: (b, 0, 0)),
                pl.BlockSpec((1, 1, FEAT), lambda b: (b, 0, 0)),
                pl.BlockSpec((1, 1, self.pad_cls), lambda b: (b, 0, 0)),
            ),
            compiler_params=pltpu.CompilerParams(
                dimension_semantics=("parallel",)),
        )(a_x, keep_a, self.wa, self.ba,
          v_x, keep_v, self.wv, self.bv,
          self.wa_fc, self.wv_fc, self.b_fc_pad)

        a_vec = a3.reshape(B, FEAT)
        v_vec = v3.reshape(B, FEAT)
        out = o3.reshape(B, self.pad_cls)[:, :self.n_classes]
        return a_vec, v_vec, out


# ---------------------------------------------------------------------------
# Pure-JAX reference (same math, no Pallas) for a sanity check
# ---------------------------------------------------------------------------
def ref_forward(model, audio, visual, drop=None):
    B = audio.shape[0]
    a_x = jnp.moveaxis(audio.reshape(B, audio.shape[1], -1), 1, 2)
    v_x = jnp.moveaxis(visual.reshape(B, visual.shape[1], -1), 1, 2)
    a_f = jnp.maximum(jnp.einsum('bsc,cf->bsf', a_x, model.wa) + model.ba, 0.0)
    v_f = jnp.maximum(jnp.einsum('bsc,cf->bsf', v_x, model.wv) + model.bv, 0.0)
    a_vec = a_f.mean(axis=1)
    v_vec = v_f.mean(axis=1)
    if drop is not None:
        d = jnp.asarray(drop, jnp.int32).reshape(B, 1)
        a_vec = jnp.where(d == 1, 0.0, a_vec)
        v_vec = jnp.where(d == 2, 0.0, v_vec)
    out = jnp.concatenate([a_vec, v_vec], axis=1) @ model.w_fc + model.b_fc
    return a_vec, v_vec, out


if __name__ == "__main__":
    key = jax.random.PRNGKey(0)
    k_audio, k_visual, k_params = jax.random.split(key, 3)

    # S_audio = 400, S_visual = 1200: exercises lane padding (S not a multiple of 128)
    # and the padded-row correction at small scale.
    B, T, H, W = 2, 3, 20, 20
    n_classes = 10
    audio = jax.random.normal(k_audio, (B, 1, H, W), jnp.float32)        # NCHW
    visual = jax.random.normal(k_visual, (B, 3, T, H, W), jnp.float32)   # NCTHW

    model = AVClassifierPallas(k_params, n_classes=n_classes)

    a, v, out = model(audio, visual)
    jax.block_until_ready((a, v, out))
    assert a.shape == (B, FEAT) and v.shape == (B, FEAT) and out.shape == (B, n_classes)

    a_ref, v_ref, out_ref = ref_forward(model, audio, visual)
    assert jnp.allclose(a, a_ref, rtol=1e-3, atol=1e-3)
    assert jnp.allclose(v, v_ref, rtol=1e-3, atol=1e-3)
    assert jnp.allclose(out, out_ref, rtol=1e-2, atol=1e-2)

    # drop path: drop[i]==1 zeroes audio row i, ==2 zeroes visual row i (before the fc).
    drop = jnp.array([1, 2], jnp.int32)
    a2, v2, out2 = model(audio, visual, drop=drop)
    jax.block_until_ready((a2, v2, out2))
    a2_ref, v2_ref, out2_ref = ref_forward(model, audio, visual, drop=drop)
    assert jnp.allclose(a2, a2_ref, rtol=1e-3, atol=1e-3)
    assert jnp.allclose(v2, v2_ref, rtol=1e-3, atol=1e-3)
    assert jnp.allclose(out2, out2_ref, rtol=1e-2, atol=1e-2)
    assert float(jnp.max(jnp.abs(a2[0]))) == 0.0
    assert float(jnp.max(jnp.abs(v2[1]))) == 0.0

    print("KERNEL_OK")
</pallas_src>

<mosaic_0001>
module attributes {stable_mosaic.version = 11 : i64} {
  func.func @kernel(%arg0: i32, %arg1: memref<1x512x1xf32, #tpu.memory_space<vmem>>, %arg2: memref<1x1x1xf32, #tpu.memory_space<vmem>>, %arg3: memref<1x512xf32, #tpu.memory_space<vmem>>, %arg4: memref<1x512xf32, #tpu.memory_space<vmem>>, %arg5: memref<1x1280x3xf32, #tpu.memory_space<vmem>>, %arg6: memref<1x1x1xf32, #tpu.memory_space<vmem>>, %arg7: memref<3x512xf32, #tpu.memory_space<vmem>>, %arg8: memref<1x512xf32, #tpu.memory_space<vmem>>, %arg9: memref<512x128xf32, #tpu.memory_space<vmem>>, %arg10: memref<512x128xf32, #tpu.memory_space<vmem>>, %arg11: memref<1x128xf32, #tpu.memory_space<vmem>>, %arg12: memref<1x1x512xf32, #tpu.memory_space<vmem>>, %arg13: memref<1x1x512xf32, #tpu.memory_space<vmem>>, %arg14: memref<1x1x128xf32, #tpu.memory_space<vmem>>) attributes {dimension_semantics = [#tpu.dimension_semantics<parallel>], iteration_bounds = array<i64: 2>, scalar_prefetch = 0 : i64, scratch_operands = 0 : i64, tpu.core_type = #tpu.core_type<tc>, window_params = [{transform_indices = @transform_0, window_bounds = array<i64: 1, 512, 1>}, {transform_indices = @transform_1, window_bounds = array<i64: 1, 1, 1>}, {pipeline_mode = #tpu.pipeline_mode<synchronous>, transform_indices = @transform_2, window_bounds = array<i64: 1, 512>}, {pipeline_mode = #tpu.pipeline_mode<synchronous>, transform_indices = @transform_3, window_bounds = array<i64: 1, 512>}, {transform_indices = @transform_4, window_bounds = array<i64: 1, 1280, 3>}, {transform_indices = @transform_5, window_bounds = array<i64: 1, 1, 1>}, {pipeline_mode = #tpu.pipeline_mode<synchronous>, transform_indices = @transform_6, window_bounds = array<i64: 3, 512>}, {pipeline_mode = #tpu.pipeline_mode<synchronous>, transform_indices = @transform_7, window_bounds = array<i64: 1, 512>}, {pipeline_mode = #tpu.pipeline_mode<synchronous>, transform_indices = @transform_8, window_bounds = array<i64: 512, 128>}, {pipeline_mode = #tpu.pipeline_mode<synchronous>, transform_indices = @transform_9, window_bounds = array<i64: 512, 128>}, {pipeline_mode = #tpu.pipeline_mode<synchronous>, transform_indices = @transform_10, window_bounds = array<i64: 1, 128>}, {transform_indices = @transform_11, window_bounds = array<i64: 1, 1, 512>}, {transform_indices = @transform_12, window_bounds = array<i64: 1, 1, 512>}, {transform_indices = @transform_13, window_bounds = array<i64: 1, 1, 128>}]} {
    %c0 = arith.constant 0 : index
    %c0_0 = arith.constant 0 : index
    %0 = vector.load %arg3[%c0, %c0_0] : memref<1x512xf32, #tpu.memory_space<vmem>>, vector<1x512xf32>
    %c0_1 = arith.constant 0 : index
    %c0_2 = arith.constant 0 : index
    %1 = vector.load %arg4[%c0_1, %c0_2] : memref<1x512xf32, #tpu.memory_space<vmem>>, vector<1x512xf32>
    %c0_3 = arith.constant 0 : index
    %c0_4 = arith.constant 0 : index
    %c0_5 = arith.constant 0 : index
    %2 = vector.load %arg1[%c0_3, %c0_4, %c0_5] : memref<1x512x1xf32, #tpu.memory_space<vmem>>, vector<1x512x1xf32>
    %3 = vector.shape_cast %2 : vector<1x512x1xf32> to vector<512x1xf32>
    %4 = vector.broadcast %3 : vector<512x1xf32> to vector<512x512xf32>
    %5 = vector.broadcast %0 : vector<1x512xf32> to vector<512x512xf32>
    %6 = arith.mulf %4, %5 : vector<512x512xf32>
    %7 = vector.broadcast %1 : vector<1x512xf32> to vector<512x512xf32>
    %8 = arith.addf %6, %7 : vector<512x512xf32>
    %cst = arith.constant 0.000000e+00 : f32
    %9 = vector.broadcast %cst : f32 to vector<512x512xf32>
    %10 = arith.maximumf %8, %9 : vector<512x512xf32>
    %cst_6 = arith.constant dense<0.000000e+00> : vector<512xf32>
    %11 = vector.multi_reduction <add>, %10, %cst_6 [0] : vector<512x512xf32> to vector<512xf32>
    %12 = vector.shape_cast %11 : vector<512xf32> to vector<1x512xf32>
    %cst_7 = arith.constant 0.000000e+00 : f32
    %13 = vector.broadcast %cst_7 : f32 to vector<1x512xf32>
    %14 = arith.maximumf %1, %13 : vector<1x512xf32>
    %cst_8 = arith.constant 1.120000e+02 : f32
    %15 = vector.broadcast %cst_8 : f32 to vector<1x512xf32>
    %16 = arith.mulf %15, %14 : vector<1x512xf32>
    %17 = arith.subf %12, %16 : vector<1x512xf32>
    %cst_9 = arith.constant 2.500000e-03 : f32
    %18 = vector.broadcast %cst_9 : f32 to vector<1x512xf32>
    %19 = arith.mulf %17, %18 : vector<1x512xf32>
    %c0_10 = arith.constant 0 : index
    %c0_11 = arith.constant 0 : index
    %20 = vector.load %arg7[%c0_10, %c0_11] : memref<3x512xf32, #tpu.memory_space<vmem>>, vector<3x512xf32>
    %c0_12 = arith.constant 0 : index
    %c0_13 = arith.constant 0 : index
    %21 = vector.load %arg8[%c0_12, %c0_13] : memref<1x512xf32, #tpu.memory_space<vmem>>, vector<1x512xf32>
    %c0_14 = arith.constant 0 : index
    %c0_15 = arith.constant 0 : index
    %c0_16 = arith.constant 0 : index
    %22 = vector.load %arg5[%c0_14, %c0_15, %c0_16] : memref<1x1280x3xf32, #tpu.memory_space<vmem>>, vector<1x1280x3xf32>
    %23 = vector.shape_cast %22 : vector<1x1280x3xf32> to vector<1280x3xf32>
    %24 = vector.extract_strided_slice %23 {offsets = [0, 0], sizes = [1280, 1], strides = [1, 1]} : vector<1280x3xf32> to vector<1280x1xf32>
    %25 = vector.extract_strided_slice %20 {offsets = [0, 0], sizes = [1, 512], strides = [1, 1]} : vector<3x512xf32> to vector<1x512xf32>
    %26 = vector.broadcast %24 : vector<1280x1xf32> to vector<1280x512xf32>
    %27 = vector.broadcast %25 : vector<1x512xf32> to vector<1280x512xf32>
    %28 = arith.mulf %26, %27 : vector<1280x512xf32>
    %29 = vector.extract_strided_slice %23 {offsets = [0, 1], sizes = [1280, 1], strides = [1, 1]} : vector<1280x3xf32> to vector<1280x1xf32>
    %30 = vector.extract_strided_slice %20 {offsets = [1, 0], sizes = [1, 512], strides = [1, 1]} : vector<3x512xf32> to vector<1x512xf32>
    %31 = vector.broadcast %29 : vector<1280x1xf32> to vector<1280x512xf32>
    %32 = vector.broadcast %30 : vector<1x512xf32> to vector<1280x512xf32>
    %33 = arith.mulf %31, %32 : vector<1280x512xf32>
    %34 = arith.addf %28, %33 : vector<1280x512xf32>
    %35 = vector.extract_strided_slice %23 {offsets = [0, 2], sizes = [1280, 1], strides = [1, 1]} : vector<1280x3xf32> to vector<1280x1xf32>
    %36 = vector.extract_strided_slice %20 {offsets = [2, 0], sizes = [1, 512], strides = [1, 1]} : vector<3x512xf32> to vector<1x512xf32>
    %37 = vector.broadcast %35 : vector<1280x1xf32> to vector<1280x512xf32>
    %38 = vector.broadcast %36 : vector<1x512xf32> to vector<1280x512xf32>
    %39 = arith.mulf %37, %38 : vector<1280x512xf32>
    %40 = arith.addf %34, %39 : vector<1280x512xf32>
    %41 = vector.broadcast %21 : vector<1x512xf32> to vector<1280x512xf32>
    %42 = arith.addf %40, %41 : vector<1280x512xf32>
    %cst_17 = arith.constant 0.000000e+00 : f32
    %43 = vector.broadcast %cst_17 : f32 to vector<1280x512xf32>
    %44 = arith.maximumf %42, %43 : vector<1280x512xf32>
    %cst_18 = arith.constant dense<0.000000e+00> : vector<512xf32>
    %45 = vector.multi_reduction <add>, %44, %cst_18 [0] : vector<1280x512xf32> to vector<512xf32>
    %46 = vector.shape_cast %45 : vector<512xf32> to vector<1x512xf32>
    %cst_19 = arith.constant 0.000000e+00 : f32
    %47 = vector.broadcast %cst_19 : f32 to vector<1x512xf32>
    %48 = arith.maximumf %21, %47 : vector<1x512xf32>
    %cst_20 = arith.constant 8.000000e+01 : f32
    %49 = vector.broadcast %cst_20 : f32 to vector<1x512xf32>
    %50 = arith.mulf %49, %48 : vector<1x512xf32>
    %51 = arith.subf %46, %50 : vector<1x512xf32>
    %cst_21 = arith.constant 8.33333353E-4 : f32
    %52 = vector.broadcast %cst_21 : f32 to vector<1x512xf32>
    %53 = arith.mulf %51, %52 : vector<1x512xf32>
    %c0_22 = arith.constant 0 : index
    %c0_23 = arith.constant 0 : index
    %c0_24 = arith.constant 0 : index
    %54 = vector.load %arg2[%c0_22, %c0_23, %c0_24] : memref<1x1x1xf32, #tpu.memory_space<vmem>>, vector<1x1x1xf32>
    %55 = vector.shape_cast %54 : vector<1x1x1xf32> to vector<1x1xf32>
    %56 = vector.broadcast %55 : vector<1x1xf32> to vector<1x512xf32>
    %57 = arith.mulf %19, %56 : vector<1x512xf32>
    %c0_25 = arith.constant 0 : index
    %c0_26 = arith.constant 0 : index
    %c0_27 = arith.constant 0 : index
    %58 = vector.load %arg6[%c0_25, %c0_26, %c0_27] : memref<1x1x1xf32, #tpu.memory_space<vmem>>, vector<1x1x1xf32>
    %59 = vector.shape_cast %58 : vector<1x1x1xf32> to vector<1x1xf32>
    %60 = vector.broadcast %59 : vector<1x1xf32> to vector<1x512xf32>
    %61 = arith.mulf %53, %60 : vector<1x512xf32>
    %c0_28 = arith.constant 0 : index
    %c0_29 = arith.constant 0 : index
    %c0_30 = arith.constant 0 : index
    %62 = vector.load %arg12[%c0_28, %c0_29, %c0_30] : memref<1x1x512xf32, #tpu.memory_space<vmem>>, vector<1x1x512xf32>
    %63 = vector.shape_cast %62 : vector<1x1x512xf32> to vector<1x512xf32>
    %64 = vector.shape_cast %57 : vector<1x512xf32> to vector<1x1x512xf32>
    tpu.vector_store %arg12[%c0_28, %c0_29, %c0_30], %64 {strides = array<i32>} : memref<1x1x512xf32, #tpu.memory_space<vmem>>, vector<1x1x512xf32>,
    %c0_31 = arith.constant 0 : index
    %c0_32 = arith.constant 0 : index
    %c0_33 = arith.constant 0 : index
    %65 = vector.load %arg13[%c0_31, %c0_32, %c0_33] : memref<1x1x512xf32, #tpu.memory_space<vmem>>, vector<1x1x512xf32>
    %66 = vector.shape_cast %65 : vector<1x1x512xf32> to vector<1x512xf32>
    %67 = vector.shape_cast %61 : vector<1x512xf32> to vector<1x1x512xf32>
    tpu.vector_store %arg13[%c0_31, %c0_32, %c0_33], %67 {strides = array<i32>} : memref<1x1x512xf32, #tpu.memory_space<vmem>>, vector<1x1x512xf32>,
    %c0_34 = arith.constant 0 : index
    %c0_35 = arith.constant 0 : index
    %68 = vector.load %arg9[%c0_34, %c0_35] : memref<512x128xf32, #tpu.memory_space<vmem>>, vector<512x128xf32>
    %cst_36 = arith.constant dense<0.000000e+00> : vector<1x128xf32>
    %69 = tpu.matmul %57, %68, %cst_36 {dimension_numbers = #tpu.dot_dimension_numbers<[1], [0], [0], [1], [0, 0, 1, 1], [], []>} : vector<1x512xf32>, vector<512x128xf32>, vector<1x128xf32> -> vector<1x128xf32>
    %c0_37 = arith.constant 0 : index
    %c0_38 = arith.constant 0 : index
    %70 = vector.load %arg10[%c0_37, %c0_38] : memref<512x128xf32, #tpu.memory_space<vmem>>, vector<512x128xf32>
    %cst_39 = arith.constant dense<0.000000e+00> : vector<1x128xf32>
    %71 = tpu.matmul %61, %70, %cst_39 {dimension_numbers = #tpu.dot_dimension_numbers<[1], [0], [0], [1], [0, 0, 1, 1], [], []>} : vector<1x512xf32>, vector<512x128xf32>, vector<1x128xf32> -> vector<1x128xf32>
    %72 = arith.addf %69, %71 : vector<1x128xf32>
    %c0_40 = arith.constant 0 : index
    %c0_41 = arith.constant 0 : index
    %73 = vector.load %arg11[%c0_40, %c0_41] : memref<1x128xf32, #tpu.memory_space<vmem>>, vector<1x128xf32>
    %74 = arith.addf %72, %73 : vector<1x128xf32>
    %c0_42 = arith.constant 0 : index
    %c0_43 = arith.constant 0 : index
    %c0_44 = arith.constant 0 : index
    %75 = vector.load %arg14[%c0_42, %c0_43, %c0_44] : memref<1x1x128xf32, #tpu.memory_space<vmem>>, vector<1x1x128xf32>
    %76 = vector.shape_cast %75 : vector<1x1x128xf32> to vector<1x128xf32>
    %77 = vector.shape_cast %74 : vector<1x128xf32> to vector<1x1x128xf32>
    tpu.vector_store %arg14[%c0_42, %c0_43, %c0_44], %77 {strides = array<i32>} : memref<1x1x128xf32, #tpu.memory_space<vmem>>, vector<1x1x128xf32>,
    return
  }
  func.func @transform_0(%arg0: i32) -> (i32, i32, i32) {
    %c0_i32 = arith.constant 0 : i32
    %c0_i32_0 = arith.constant 0 : i32
    %c0_i32_1 = arith.constant 0 : i32
    return %arg0, %c0_i32, %c0_i32_0 : i32, i32, i32
  }
  func.func @transform_1(%arg0: i32) -> (i32, i32, i32) {
    %c0_i32 = arith.constant 0 : i32
    %c0_i32_0 = arith.constant 0 : i32
    %c0_i32_1 = arith.constant 0 : i32
    return %arg0, %c0_i32, %c0_i32_0 : i32, i32, i32
  }
  func.func @transform_2(%arg0: i32) -> (i32, i32) {
    %c0_i32 = arith.constant 0 : i32
    %c0_i32_0 = arith.constant 0 : i32
    %c0_i32_1 = arith.constant 0 : i32
    return %c0_i32, %c0_i32_0 : i32, i32
  }
  func.func @transform_3(%arg0: i32) -> (i32, i32) {
    %c0_i32 = arith.constant 0 : i32
    %c0_i32_0 = arith.constant 0 : i32
    %c0_i32_1 = arith.constant 0 : i32
    return %c0_i32, %c0_i32_0 : i32, i32
  }
  func.func @transform_4(%arg0: i32) -> (i32, i32, i32) {
    %c0_i32 = arith.constant 0 : i32
    %c0_i32_0 = arith.constant 0 : i32
    %c0_i32_1 = arith.constant 0 : i32
    return %arg0, %c0_i32, %c0_i32_0 : i32, i32, i32
  }
  func.func @transform_5(%arg0: i32) -> (i32, i32, i32) {
    %c0_i32 = arith.constant 0 : i32
    %c0_i32_0 = arith.constant 0 : i32
    %c0_i32_1 = arith.constant 0 : i32
    return %arg0, %c0_i32, %c0_i32_0 : i32, i32, i32
  }
  func.func @transform_6(%arg0: i32) -> (i32, i32) {
    %c0_i32 = arith.constant 0 : i32
    %c0_i32_0 = arith.constant 0 : i32
    %c0_i32_1 = arith.constant 0 : i32
    return %c0_i32, %c0_i32_0 : i32, i32
  }
  func.func @transform_7(%arg0: i32) -> (i32, i32) {
    %c0_i32 = arith.constant 0 : i32
    %c0_i32_0 = arith.constant 0 : i32
    %c0_i32_1 = arith.constant 0 : i32
    return %c0_i32, %c0_i32_0 : i32, i32
  }
  func.func @transform_8(%arg0: i32) -> (i32, i32) {
    %c0_i32 = arith.constant 0 : i32
    %c0_i32_0 = arith.constant 0 : i32
    %c0_i32_1 = arith.constant 0 : i32
    return %c0_i32, %c0_i32_0 : i32, i32
  }
  func.func @transform_9(%arg0: i32) -> (i32, i32) {
    %c0_i32 = arith.constant 0 : i32
    %c0_i32_0 = arith.constant 0 : i32
    %c0_i32_1 = arith.constant 0 : i32
    return %c0_i32, %c0_i32_0 : i32, i32
  }
  func.func @transform_10(%arg0: i32) -> (i32, i32) {
    %c0_i32 = arith.constant 0 : i32
    %c0_i32_0 = arith.constant 0 : i32
    %c0_i32_1 = arith.constant 0 : i32
    return %c0_i32, %c0_i32_0 : i32, i32
  }
  func.func @transform_11(%arg0: i32) -> (i32, i32, i32) {
    %c0_i32 = arith.constant 0 : i32
    %c0_i32_0 = arith.constant 0 : i32
    %c0_i32_1 = arith.constant 0 : i32
    return %arg0, %c0_i32, %c0_i32_0 : i32, i32, i32
  }
  func.func @transform_12(%arg0: i32) -> (i32, i32, i32) {
    %c0_i32 = arith.constant 0 : i32
    %c0_i32_0 = arith.constant 0 : i32
    %c0_i32_1 = arith.constant 0 : i32
    return %arg0, %c0_i32, %c0_i32_0 : i32, i32, i32
  }
  func.func @transform_13(%arg0: i32) -> (i32, i32, i32) {
    %c0_i32 = arith.constant 0 : i32
    %c0_i32_0 = arith.constant 0 : i32
    %c0_i32_1 = arith.constant 0 : i32
    return %arg0, %c0_i32, %c0_i32_0 : i32, i32, i32
  }
}

</mosaic_0001>

<llo_original>
// kernel: tpu_custom_call.1
$region0: #{tpu_custom_call.1}
  #allocation0 [shape = 'u32[]', space=smem, size = 0x4, offset = 0x4, fixed_abs, tag = 'smem constant byte address 0x4 - core index']
  #allocation1 [shape = 'u32[72,128]{1,0:T(1,128)}', space=vmem, size = 0x9000, scoped, tag = 'internal scratch']
  %s0 = inlined_call_operand.vmem [shape: f32[2,512,1], index: 0, kind: input, shape index: {}]
  %s1 = inlined_call_operand.vmem [shape: f32[2,1,1], index: 1, kind: input, shape index: {}]
  %s2 = inlined_call_operand.vmem [shape: f32[1,512], index: 2, kind: input, shape index: {}]
  %s3 = inlined_call_operand.vmem [shape: f32[1,512], index: 3, kind: input, shape index: {}]
  %s4 = inlined_call_operand.vmem [shape: f32[2,1280,3], index: 4, kind: input, shape index: {}]
  %s5 = inlined_call_operand.vmem [shape: f32[2,1,1], index: 5, kind: input, shape index: {}]
  %s6 = inlined_call_operand.vmem [shape: f32[3,512], index: 6, kind: input, shape index: {}]
  %s7 = inlined_call_operand.vmem [shape: f32[1,512], index: 7, kind: input, shape index: {}]
  %s8 = inlined_call_operand.vmem [shape: f32[512,128], index: 8, kind: input, shape index: {}]
  %s9 = inlined_call_operand.vmem [shape: f32[512,128], index: 9, kind: input, shape index: {}]
  %s10 = inlined_call_operand.vmem [shape: f32[1,128], index: 10, kind: input, shape index: {}]
  %s11 = inlined_call_operand.hbm [shape: f32[2,1,512], index: 11, kind: output, shape index: {0}]
  %s12 = inlined_call_operand.hbm [shape: f32[2,1,512], index: 12, kind: output, shape index: {1}]
  %s13 = inlined_call_operand.hbm [shape: f32[2,1,128], index: 13, kind: output, shape index: {2}]
  %14 = xla_tuple %s11, %s12, %s13
  %s15 = sld [smem:[#allocation0]]
  $region93: #{tpu_custom_call.1} parent=0
    _
  %s17 = ssub.s32 1, %s15
  %s18 = scalar_select 0, %s17, %s15
  $region1: #{tpu_custom_call.1} parent=0
    #allocation2 [shape = 'u8[4096]{0}', space=vmem, size = 0x1000, scoped, tag = 'output window, operand 0']
    #allocation3 [shape = 's32[2]{0}', space=sflag, size = 0x8, scoped, tag = 'scoped memory for tpu_custom_call.1']
    #allocation4 [shape = 'u8[4096]{0}', space=vmem, size = 0x1000, scoped, tag = 'output window, operand 1']
    #allocation5 [shape = 's32[2]{0}', space=sflag, size = 0x8, scoped, tag = 'scoped memory for tpu_custom_call.1']
    #allocation6 [shape = 'u8[1024]{0}', space=vmem, size = 0x400, scoped, tag = 'output window, operand 2']
    %19 = vsyncpa [#allocation3], 0
    %s20 = scalar_lea.sflag [#allocation3], 1
    %21 = vsyncpa %s20, 0
    %22 = vsyncpa [#allocation5], 0
    %s23 = scalar_lea.sflag [#allocation5], 1
    %24 = vsyncpa %s23, 0
    loop: start=0, step=1, limit=4
    $region2: #{tpu_custom_call.1} parent=1 // loop_pre_header
      _
    $region3: #{tpu_custom_call.1} parent=1 // loop_header
      %s26 = sphi 0, %s30
      %p27 = scmp.ge.s32.totalorder %s26, 4
      %s36 = sphi 0, %s38
      %s39 = sphi 0, %s36
      %s40 = sphi 0, %s39
      %s56 = sphi 0, %s40
      %s62 = sphi 0, %s64
      %s65 = sphi 0, %s62
      %s66 = sphi 0, %s65
      %s82 = sphi 0, %s66
      %s86 = sphi 0, %s86
      %s88 = sphi 0, %s86
      %s89 = sphi 0, %s88
      %s103 = sphi 0, %s89
      %s107 = sphi 0, %s107
      %s109 = sphi 0, %s107
      %s110 = sphi 0, %s109
      %s124 = sphi 0, %s110
      %s130 = sphi 0, %s132
      %s133 = sphi 0, %s130
      %s134 = sphi 0, %s133
      %s150 = sphi 0, %s134
      %s156 = sphi 0, %s158
      %s159 = sphi 0, %s156
      %s160 = sphi 0, %s159
      %s176 = sphi 0, %s160
      %s180 = sphi 0, %s180
      %s182 = sphi 0, %s180
      %s183 = sphi 0, %s182
      %s197 = sphi 0, %s183
      %s201 = sphi 0, %s201
      %s203 = sphi 0, %s201
      %s204 = sphi 0, %s203
      %s218 = sphi 0, %s204
      %s222 = sphi 0, %s222
      %s224 = sphi 0, %s222
      %s225 = sphi 0, %s224
      %s239 = sphi 0, %s225
      %s243 = sphi 0, %s243
      %s245 = sphi 0, %s243
      %s246 = sphi 0, %s245
      %s260 = sphi 0, %s246
      %s264 = sphi 0, %s264
      %s266 = sphi 0, %s264
      %s267 = sphi 0, %s266
      %s281 = sphi 0, %s267
      %s287 = sphi 0, %s289
      %s290 = sphi 0, %s287
      %s291 = sphi 0, %s290
      %s307 = sphi 0, %s291
      %s313 = sphi 0, %s315
      %s316 = sphi 0, %s313
      %s317 = sphi 0, %s316
      %s333 = sphi 0, %s317
      %s339 = sphi 0, %s341
      %s342 = sphi 0, %s339
      %s343 = sphi 0, %s342
      %s359 = sphi 0, %s343
    $region4: #{tpu_custom_call.1} parent=1 // loop_header_branch
      %29 = sbr.rel (%p27) target = $region8
    $region5: #{tpu_custom_call.1} parent=1 // loop_body
      %s31 = ssub.s32 %s26, 1
      %s32 = ssub.s32 %s26, 2
      %s33 = sadd.s32 %s26, 1
      %s34 = ssub.s32 %s26, %s33
      %p35 = scmp.eq.s32.totalorder %s34, 0
      %s37 = sadd.s32 %s36, 1
      %s38 = scalar_select %p35, %s36, %s37
      %p41 = pneg %p35
      %p42 = scmp.eq.s32.totalorder %s26, 1
      %p43 = por %p41, %p42
      %p44 = scmp.ne.s32.totalorder %s36, %s39
      %p45 = scmp.eq.s32.totalorder %s26, 0
      %p46 = por %p44, %p45
      %p47 = scmp.ne.s32.totalorder %s36, %s39
      %p48 = scmp.eq.s32.totalorder %s31, 1
      %p49 = por %p47, %p48
      %p50 = scmp.ne.s32.totalorder %s39, %s40
      %p51 = scmp.eq.s32.totalorder %s31, 0
      %p52 = por %p50, %p51
      %p53 = scmp.ne.s32.totalorder %s39, %s40
      %p54 = scmp.eq.s32.totalorder %s32, 1
      %p55 = por %p53, %p54
      %p57 = scmp.ne.s32.totalorder %s40, %s56
      %p58 = scmp.eq.s32.totalorder %s32, 0
      %p59 = por %p57, %p58
      %s60 = ssub.s32 %s26, %s33
      %p61 = scmp.eq.s32.totalorder %s60, 0
      %s63 = sadd.s32 %s62, 1
      %s64 = scalar_select %p61, %s62, %s63
      %p67 = pneg %p61
      %p68 = scmp.eq.s32.totalorder %s26, 1
      %p69 = por %p67, %p68
      %p70 = scmp.ne.s32.totalorder %s62, %s65
      %p71 = scmp.eq.s32.totalorder %s26, 0
      %p72 = por %p70, %p71
      %p73 = scmp.ne.s32.totalorder %s62, %s65
      %p74 = scmp.eq.s32.totalorder %s31, 1
      %p75 = por %p73, %p74
      %p76 = scmp.ne.s32.totalorder %s65, %s66
      %p77 = scmp.eq.s32.totalorder %s31, 0
      %p78 = por %p76, %p77
      %p79 = scmp.ne.s32.totalorder %s65, %s66
      %p80 = scmp.eq.s32.totalorder %s32, 1
      %p81 = por %p79, %p80
      %p83 = scmp.ne.s32.totalorder %s66, %s82
      %p84 = scmp.eq.s32.totalorder %s32, 0
      %p85 = por %p83, %p84
      %s87 = sadd.s32 %s86, 1
      %p90 = scmp.eq.s32.totalorder %s26, 1
      %p91 = scmp.ne.s32.totalorder %s86, %s88
      %p92 = scmp.eq.s32.totalorder %s26, 0
      %p93 = por %p91, %p92
      %p94 = scmp.ne.s32.totalorder %s86, %s88
      %p95 = scmp.eq.s32.totalorder %s31, 1
      %p96 = por %p94, %p95
      %p97 = scmp.ne.s32.totalorder %s88, %s89
      %p98 = scmp.eq.s32.totalorder %s31, 0
      %p99 = por %p97, %p98
      %p100 = scmp.ne.s32.totalorder %s88, %s89
      %p101 = scmp.eq.s32.totalorder %s32, 1
      %p102 = por %p100, %p101
      %p104 = scmp.ne.s32.totalorder %s89, %s103
      %p105 = scmp.eq.s32.totalorder %s32, 0
      %p106 = por %p104, %p105
      %s108 = sadd.s32 %s107, 1
      %p111 = scmp.eq.s32.totalorder %s26, 1
      %p112 = scmp.ne.s32.totalorder %s107, %s109
      %p113 = scmp.eq.s32.totalorder %s26, 0
      %p114 = por %p112, %p113
      %p115 = scmp.ne.s32.totalorder %s107, %s109
      %p116 = scmp.eq.s32.totalorder %s31, 1
      %p117 = por %p115, %p116
      %p118 = scmp.ne.s32.totalorder %s109, %s110
      %p119 = scmp.eq.s32.totalorder %s31, 0
      %p120 = por %p118, %p119
      %p121 = scmp.ne.s32.totalorder %s109, %s110
      %p122 = scmp.eq.s32.totalorder %s32, 1
      %p123 = por %p121, %p122
      %p125 = scmp.ne.s32.totalorder %s110, %s124
      %p126 = scmp.eq.s32.totalorder %s32, 0
      %p127 = por %p125, %p126
      %s128 = ssub.s32 %s26, %s33
      %p129 = scmp.eq.s32.totalorder %s128, 0
      %s131 = sadd.s32 %s130, 1
      %s132 = scalar_select %p129, %s130, %s131
      %p135 = pneg %p129
      %p136 = scmp.eq.s32.totalorder %s26, 1
      %p137 = por %p135, %p136
      %p138 = scmp.ne.s32.totalorder %s130, %s133
      %p139 = scmp.eq.s32.totalorder %s26, 0
      %p140 = por %p138, %p139
      %p141 = scmp.ne.s32.totalorder %s130, %s133
      %p142 = scmp.eq.s32.totalorder %s31, 1
      %p143 = por %p141, %p142
      %p144 = scmp.ne.s32.totalorder %s133, %s134
      %p145 = scmp.eq.s32.totalorder %s31, 0
      %p146 = por %p144, %p145
      %p147 = scmp.ne.s32.totalorder %s133, %s134
      %p148 = scmp.eq.s32.totalorder %s32, 1
      %p149 = por %p147, %p148
      %p151 = scmp.ne.s32.totalorder %s134, %s150
      %p152 = scmp.eq.s32.totalorder %s32, 0
      %p153 = por %p151, %p152
      %s154 = ssub.s32 %s26, %s33
      %p155 = scmp.eq.s32.totalorder %s154, 0
      %s157 = sadd.s32 %s156, 1
      %s158 = scalar_select %p155, %s156, %s157
      %p161 = pneg %p155
      %p162 = scmp.eq.s32.totalorder %s26, 1
      %p163 = por %p161, %p162
      %p164 = scmp.ne.s32.totalorder %s156, %s159
      %p165 = scmp.eq.s32.totalorder %s26, 0
      %p166 = por %p164, %p165
      %p167 = scmp.ne.s32.totalorder %s156, %s159
      %p168 = scmp.eq.s32.totalorder %s31, 1
      %p169 = por %p167, %p168
      %p170 = scmp.ne.s32.totalorder %s159, %s160
      %p171 = scmp.eq.s32.totalorder %s31, 0
      %p172 = por %p170, %p171
      %p173 = scmp.ne.s32.totalorder %s159, %s160
      %p174 = scmp.eq.s32.totalorder %s32, 1
      %p175 = por %p173, %p174
      %p177 = scmp.ne.s32.totalorder %s160, %s176
      %p178 = scmp.eq.s32.totalorder %s32, 0
      %p179 = por %p177, %p178
      %s181 = sadd.s32 %s180, 1
      %p184 = scmp.eq.s32.totalorder %s26, 1
      %p185 = scmp.ne.s32.totalorder %s180, %s182
      %p186 = scmp.eq.s32.totalorder %s26, 0
      %p187 = por %p185, %p186
      %p188 = scmp.ne.s32.totalorder %s180, %s182
      %p189 = scmp.eq.s32.totalorder %s31, 1
      %p190 = por %p188, %p189
      %p191 = scmp.ne.s32.totalorder %s182, %s183
      %p192 = scmp.eq.s32.totalorder %s31, 0
      %p193 = por %p191, %p192
      %p194 = scmp.ne.s32.totalorder %s182, %s183
      %p195 = scmp.eq.s32.totalorder %s32, 1
      %p196 = por %p194, %p195
      %p198 = scmp.ne.s32.totalorder %s183, %s197
      %p199 = scmp.eq.s32.totalorder %s32, 0
      %p200 = por %p198, %p199
      %s202 = sadd.s32 %s201, 1
      %p205 = scmp.eq.s32.totalorder %s26, 1
      %p206 = scmp.ne.s32.totalorder %s201, %s203
      %p207 = scmp.eq.s32.totalorder %s26, 0
      %p208 = por %p206, %p207
      %p209 = scmp.ne.s32.totalorder %s201, %s203
      %p210 = scmp.eq.s32.totalorder %s31, 1
      %p211 = por %p209, %p210
      %p212 = scmp.ne.s32.totalorder %s203, %s204
      %p213 = scmp.eq.s32.totalorder %s31, 0
      %p214 = por %p212, %p213
      %p215 = scmp.ne.s32.totalorder %s203, %s204
      %p216 = scmp.eq.s32.totalorder %s32, 1
      %p217 = por %p215, %p216
      %p219 = scmp.ne.s32.totalorder %s204, %s218
      %p220 = scmp.eq.s32.totalorder %s32, 0
      %p221 = por %p219, %p220
      %s223 = sadd.s32 %s222, 1
      %p226 = scmp.eq.s32.totalorder %s26, 1
      %p227 = scmp.ne.s32.totalorder %s222, %s224
      %p228 = scmp.eq.s32.totalorder %s26, 0
      %p229 = por %p227, %p228
      %p230 = scmp.ne.s32.totalorder %s222, %s224
      %p231 = scmp.eq.s32.totalorder %s31, 1
      %p232 = por %p230, %p231
      %p233 = scmp.ne.s32.totalorder %s224, %s225
      %p234 = scmp.eq.s32.totalorder %s31, 0
      %p235 = por %p233, %p234
      %p236 = scmp.ne.s32.totalorder %s224, %s225
      %p237 = scmp.eq.s32.totalorder %s32, 1
      %p238 = por %p236, %p237
      %p240 = scmp.ne.s32.totalorder %s225, %s239
      %p241 = scmp.eq.s32.totalorder %s32, 0
      %p242 = por %p240, %p241
      %s244 = sadd.s32 %s243, 1
      %p247 = scmp.eq.s32.totalorder %s26, 1
      %p248 = scmp.ne.s32.totalorder %s243, %s245
      %p249 = scmp.eq.s32.totalorder %s26, 0
      %p250 = por %p248, %p249
      %p251 = scmp.ne.s32.totalorder %s243, %s245
      %p252 = scmp.eq.s32.totalorder %s31, 1
      %p253 = por %p251, %p252
      %p254 = scmp.ne.s32.totalorder %s245, %s246
      %p255 = scmp.eq.s32.totalorder %s31, 0
      %p256 = por %p254, %p255
      %p257 = scmp.ne.s32.totalorder %s245, %s246
      %p258 = scmp.eq.s32.totalorder %s32, 1
      %p259 = por %p257, %p258
      %p261 = scmp.ne.s32.totalorder %s246, %s260
      %p262 = scmp.eq.s32.totalorder %s32, 0
      %p263 = por %p261, %p262
      %s265 = sadd.s32 %s264, 1
      %p268 = scmp.eq.s32.totalorder %s26, 1
      %p269 = scmp.ne.s32.totalorder %s264, %s266
      %p270 = scmp.eq.s32.totalorder %s26, 0
      %p271 = por %p269, %p270
      %p272 = scmp.ne.s32.totalorder %s264, %s266
      %p273 = scmp.eq.s32.totalorder %s31, 1
      %p274 = por %p272, %p273
      %p275 = scmp.ne.s32.totalorder %s266, %s267
      %p276 = scmp.eq.s32.totalorder %s31, 0
      %p277 = por %p275, %p276
      %p278 = scmp.ne.s32.totalorder %s266, %s267
      %p279 = scmp.eq.s32.totalorder %s32, 1
      %p280 = por %p278, %p279
      %p282 = scmp.ne.s32.totalorder %s267, %s281
      %p283 = scmp.eq.s32.totalorder %s32, 0
      %p284 = por %p282, %p283
      %s285 = ssub.s32 %s26, %s33
      %p286 = scmp.eq.s32.totalorder %s285, 0
      %s288 = sadd.s32 %s287, 1
      %s289 = scalar_select %p286, %s287, %s288
      %p292 = pneg %p286
      %p293 = scmp.eq.s32.totalorder %s26, 1
      %p294 = por %p292, %p293
      %p295 = scmp.ne.s32.totalorder %s287, %s290
      %p296 = scmp.eq.s32.totalorder %s26, 0
      %p297 = por %p295, %p296
      %p298 = scmp.ne.s32.totalorder %s287, %s290
      %p299 = scmp.eq.s32.totalorder %s31, 1
      %p300 = por %p298, %p299
      %p301 = scmp.ne.s32.totalorder %s290, %s291
      %p302 = scmp.eq.s32.totalorder %s31, 0
      %p303 = por %p301, %p302
      %p304 = scmp.ne.s32.totalorder %s290, %s291
      %p305 = scmp.eq.s32.totalorder %s32, 1
      %p306 = por %p304, %p305
      %p308 = scmp.ne.s32.totalorder %s291, %s307
      %p309 = scmp.eq.s32.totalorder %s32, 0
      %p310 = por %p308, %p309
      %s311 = ssub.s32 %s26, %s33
      %p312 = scmp.eq.s32.totalorder %s311, 0
      %s314 = sadd.s32 %s313, 1
      %s315 = scalar_select %p312, %s313, %s314
      %p318 = pneg %p312
      %p319 = scmp.eq.s32.totalorder %s26, 1
      %p320 = por %p318, %p319
      %p321 = scmp.ne.s32.totalorder %s313, %s316
      %p322 = scmp.eq.s32.totalorder %s26, 0
      %p323 = por %p321, %p322
      %p324 = scmp.ne.s32.totalorder %s313, %s316
      %p325 = scmp.eq.s32.totalorder %s31, 1
      %p326 = por %p324, %p325
      %p327 = scmp.ne.s32.totalorder %s316, %s317
      %p328 = scmp.eq.s32.totalorder %s31, 0
      %p329 = por %p327, %p328
      %p330 = scmp.ne.s32.totalorder %s316, %s317
      %p331 = scmp.eq.s32.totalorder %s32, 1
      %p332 = por %p330, %p331
      %p334 = scmp.ne.s32.totalorder %s317, %s333
      %p335 = scmp.eq.s32.totalorder %s32, 0
      %p336 = por %p334, %p335
      %s337 = ssub.s32 %s26, %s33
      %p338 = scmp.eq.s32.totalorder %s337, 0
      %s340 = sadd.s32 %s339, 1
      %s341 = scalar_select %p338, %s339, %s340
      %p344 = pneg %p338
      %p345 = scmp.eq.s32.totalorder %s26, 1
      %p346 = por %p344, %p345
      %p347 = scmp.ne.s32.totalorder %s339, %s342
      %p348 = scmp.eq.s32.totalorder %s26, 0
      %p349 = por %p347, %p348
      %p350 = scmp.ne.s32.totalorder %s339, %s342
      %p351 = scmp.eq.s32.totalorder %s31, 1
      %p352 = por %p350, %p351
      %p353 = scmp.ne.s32.totalorder %s342, %s343
      %p354 = scmp.eq.s32.totalorder %s31, 0
      %p355 = por %p353, %p354
      %p356 = scmp.ne.s32.totalorder %s342, %s343
      %p357 = scmp.eq.s32.totalorder %s32, 1
      %p358 = por %p356, %p357
      %p360 = scmp.ne.s32.totalorder %s343, %s359
      %p361 = scmp.eq.s32.totalorder %s32, 0
      %p362 = por %p360, %p361
      %p363 = scmp.le.s32.totalorder 1, %s26
      %p364 = scmp.lt.s32.totalorder %s26, 3
      %p365 = pnand %p363, %p364
      %p366 = pneg %p365
      // Predicated region
      $region9: #{tpu_custom_call.1} parent=5 // pred_check
        _
      $region10: #{tpu_custom_call.1} parent=5 // pred_check_branch
        %368 = sbr.rel (%p365) target = $region12
      $region11: #{tpu_custom_call.1} parent=5 // pred_region
        %s369 = ssub.s32 %s26, 1
        // Predicated region
        $region13: #{tpu_custom_call.1} parent=11 // pred_check
          %p370 = pneg %p99
        $region14: #{tpu_custom_call.1} parent=11 // pred_check_branch
          %372 = sbr.rel (%p370) target = $region16
        $region15: #{tpu_custom_call.1} parent=11 // pred_region
          _
        $region16: #{tpu_custom_call.1} parent=11 // pred_fallthru
          _
        // Predicated region
        $region17: #{tpu_custom_call.1} parent=11 // pred_check
          %p373 = pneg %p120
        $region18: #{tpu_custom_call.1} parent=11 // pred_check_branch
          %375 = sbr.rel (%p373) target = $region20
        $region19: #{tpu_custom_call.1} parent=11 // pred_region
          _
        $region20: #{tpu_custom_call.1} parent=11 // pred_fallthru
          _
        // Predicated region
        $region21: #{tpu_custom_call.1} parent=11 // pred_check
          %p376 = pneg %p193
        $region22: #{tpu_custom_call.1} parent=11 // pred_check_branch
          %378 = sbr.rel (%p376) target = $region24
        $region23: #{tpu_custom_call.1} parent=11 // pred_region
          _
        $region24: #{tpu_custom_call.1} parent=11 // pred_fallthru
          _
        // Predicated region
        $region25: #{tpu_custom_call.1} parent=11 // pred_check
          %p379 = pneg %p214
        $region26: #{tpu_custom_call.1} parent=11 // pred_check_branch
          %381 = sbr.rel (%p379) target = $region28
        $region27: #{tpu_custom_call.1} parent=11 // pred_region
          _
        $region28: #{tpu_custom_call.1} parent=11 // pred_fallthru
          _
        // Predicated region
        $region29: #{tpu_custom_call.1} parent=11 // pred_check
          %p382 = pneg %p235
        $region30: #{tpu_custom_call.1} parent=11 // pred_check_branch
          %384 = sbr.rel (%p382) target = $region32
        $region31: #{tpu_custom_call.1} parent=11 // pred_region
          _
        $region32: #{tpu_custom_call.1} parent=11 // pred_fallthru
          _
        // Predicated region
        $region33: #{tpu_custom_call.1} parent=11 // pred_check
          %p385 = pneg %p256
        $region34: #{tpu_custom_call.1} parent=11 // pred_check_branch
          %387 = sbr.rel (%p385) target = $region36
        $region35: #{tpu_custom_call.1} parent=11 // pred_region
          _
        $region36: #{tpu_custom_call.1} parent=11 // pred_fallthru
          _
        // Predicated region
        $region37: #{tpu_custom_call.1} parent=11 // pred_check
          %p388 = pneg %p277
        $region38: #{tpu_custom_call.1} parent=11 // pred_check_branch
          %390 = sbr.rel (%p388) target = $region40
        $region39: #{tpu_custom_call.1} parent=11 // pred_region
          _
        $region40: #{tpu_custom_call.1} parent=11 // pred_fallthru
          _
      $region12: #{tpu_custom_call.1} parent=5 // pred_fallthru
        _
      %p391 = scmp.lt.s32.totalorder %s26, 2
      // Predicated region
      $region41: #{tpu_custom_call.1} parent=5 // pred_check
        %p392 = pneg %p391
      $region42: #{tpu_custom_call.1} parent=5 // pred_check_branch
        %394 = sbr.rel (%p392) target = $region44
      $region43: #{tpu_custom_call.1} parent=5 // pred_region
        // Predicated region
        $region45: #{tpu_custom_call.1} parent=43 // pred_check
          %p395 = pneg %p46
        $region46: #{tpu_custom_call.1} parent=43 // pred_check_branch
          %397 = sbr.rel (%p395) target = $region48
        $region47: #{tpu_custom_call.1} parent=43 // pred_region
          %p398 = scmp.lt.s32.totalorder %s26, 1
          %s399 = scalar_select %p398, %s26, 1
          %s400 = smul.addr %s399, 64
          %s401 = smul.addr %s400, 8
          %s402 = scalar_lea.vmem %s0, %s401
        $region48: #{tpu_custom_call.1} parent=43 // pred_fallthru
          _
        // Predicated region
        $region49: #{tpu_custom_call.1} parent=43 // pred_check
          %p403 = pneg %p72
        $region50: #{tpu_custom_call.1} parent=43 // pred_check_branch
          %405 = sbr.rel (%p403) target = $region52
        $region51: #{tpu_custom_call.1} parent=43 // pred_region
          %p406 = scmp.lt.s32.totalorder %s26, 1
          %s407 = scalar_select %p406, %s26, 1
          %s408 = scalar_lea.vmem %s1, %s407
        $region52: #{tpu_custom_call.1} parent=43 // pred_fallthru
          _
        // Predicated region
        $region53: #{tpu_custom_call.1} parent=43 // pred_check
          %p409 = pneg %p140
        $region54: #{tpu_custom_call.1} parent=43 // pred_check_branch
          %411 = sbr.rel (%p409) target = $region56
        $region55: #{tpu_custom_call.1} parent=43 // pred_region
          %p412 = scmp.lt.s32.totalorder %s26, 1
          %s413 = scalar_select %p412, %s26, 1
          %s414 = smul.addr %s413, 160
          %s415 = smul.addr %s414, 8
          %s416 = scalar_lea.vmem %s4, %s415
        $region56: #{tpu_custom_call.1} parent=43 // pred_fallthru
          _
        // Predicated region
        $region57: #{tpu_custom_call.1} parent=43 // pred_check
          %p417 = pneg %p166
        $region58: #{tpu_custom_call.1} parent=43 // pred_check_branch
          %419 = sbr.rel (%p417) target = $region60
        $region59: #{tpu_custom_call.1} parent=43 // pred_region
          %p420 = scmp.lt.s32.totalorder %s26, 1
          %s421 = scalar_select %p420, %s26, 1
          %s422 = scalar_lea.vmem %s5, %s421
        $region60: #{tpu_custom_call.1} parent=43 // pred_fallthru
          _
      $region44: #{tpu_custom_call.1} parent=5 // pred_fallthru
        _
      %p423 = scmp.le.s32.totalorder 1, %s26
      %p424 = scmp.lt.s32.totalorder %s26, 3
      %p425 = pnand %p423, %p424
      %p426 = pneg %p425
      // Predicated region
      $region61: #{tpu_custom_call.1} parent=5 // pred_check
        _
      $region62: #{tpu_custom_call.1} parent=5 // pred_check_branch
        %428 = sbr.rel (%p425) target = $region64
      $region63: #{tpu_custom_call.1} parent=5 // pred_region
        %s429 = ssub.s32 %s26, 1
        %p430 = scmp.lt.s32.totalorder %s31, 1
        %s431 = scalar_select %p430, %s31, 1
        %s432 = smul.addr %s431, 64
        %s433 = smul.addr %s432, 8
        %s434 = scalar_lea.vmem %s0, %s433
        %p435 = pneg %p52
        %p436 = pneg %p49
        %p437 = scmp.lt.s32.totalorder %s31, 1
        %s438 = scalar_select %p437, %s31, 1
        %s439 = scalar_lea.vmem %s1, %s438
        %p440 = pneg %p78
        %p441 = pneg %p75
        %p442 = pneg %p99
        %p443 = pneg %p96
        %p444 = pneg %p120
        %p445 = pneg %p117
        %p446 = scmp.lt.s32.totalorder %s31, 1
        %s447 = scalar_select %p446, %s31, 1
        %s448 = smul.addr %s447, 160
        %s449 = smul.addr %s448, 8
        %s450 = scalar_lea.vmem %s4, %s449
        %p451 = pneg %p146
        %p452 = pneg %p143
        %p453 = scmp.lt.s32.totalorder %s31, 1
        %s454 = scalar_select %p453, %s31, 1
        %s455 = scalar_lea.vmem %s5, %s454
        %p456 = pneg %p172
        %p457 = pneg %p169
        %p458 = pneg %p193
        %p459 = pneg %p190
        %p460 = pneg %p214
        %p461 = pneg %p211
        %p462 = pneg %p235
        %p463 = pneg %p232
        %p464 = pneg %p256
        %p465 = pneg %p253
        %p466 = pneg %p277
        %p467 = pneg %p274
        %p468 = pneg %p303
        %p469 = pneg %p300
        %s470 = sand.u32 %s290, 1
        %s471 = scalar_lea.sflag [#allocation3], %s470
        %s472 = sand.u32 %s290, 1
        %s473 = smul.addr %s472, 4
        %s474 = scalar_lea.vmem [#allocation2], %s473
        %p475 = pneg %p329
        %p476 = pneg %p326
        %s477 = sand.u32 %s31, 1
        %s478 = scalar_lea.sflag [#allocation5], %s477
        %s479 = sand.u32 %s316, 1
        %s480 = smul.addr %s479, 4
        %s481 = scalar_lea.vmem [#allocation4], %s480
        %p482 = pneg %p355
        %p483 = pneg %p352
        %s484 = sand.u32 %s31, 1
        %s485 = scalar_lea.sflag [#allocation5], %s484
        %s486 = sand.u32 %s342, 1
        %s487 = scalar_lea.vmem [#allocation6], %s486
        %p488 = scmp.lt.s32.totalorder %s31, 1
        %s489 = scalar_select %p488, %s31, 1
        %s490 = smul.addr %s489, 64
        %s491 = smul.addr %s490, 8
        %s492 = scalar_lea.vmem %s0, %s491
        %p493 = scmp.lt.s32.totalorder %s31, 1
        %s494 = scalar_select %p493, %s31, 1
        %s495 = scalar_lea.vmem %s1, %s494
        %p496 = scmp.lt.s32.totalorder %s31, 1
        %s497 = scalar_select %p496, %s31, 1
        %s498 = smul.addr %s497, 160
        %s499 = smul.addr %s498, 8
        %s500 = scalar_lea.vmem %s4, %s499
        %p501 = scmp.lt.s32.totalorder %s31, 1
        %s502 = scalar_select %p501, %s31, 1
        %s503 = scalar_lea.vmem %s5, %s502
        %v504 = vld [vmem:[%s2] sm:$0xf]
        %v505 = vld [vmem:[%s3] sm:$0xf]
        %v506 = vld [vmem:[%s492] sm:$0xff]
        %v507 = vld [vmem:[%s492 + $0x8] sm:$0xff]
        %v508 = vld [vmem:[%s492 + $0x10] sm:$0xff]
        %v509 = vld [vmem:[%s492 + $0x18] sm:$0xff]
        %v510 = vld [vmem:[%s492 + $0x20] sm:$0xff]
        %v511 = vld [vmem:[%s492 + $0x28] sm:$0xff]
        %v512 = vld [vmem:[%s492 + $0x30] sm:$0xff]
        %v513 = vld [vmem:[%s492 + $0x38] sm:$0xff]
        %v514 = vld [vmem:[%s492 + $0x40] sm:$0xff]
        %v515 = vld [vmem:[%s492 + $0x48] sm:$0xff]
        %v516 = vld [vmem:[%s492 + $0x50] sm:$0xff]
        %v517 = vld [vmem:[%s492 + $0x58] sm:$0xff]
        %v518 = vld [vmem:[%s492 + $0x60] sm:$0xff]
        %v519 = vld [vmem:[%s492 + $0x68] sm:$0xff]
        %v520 = vld [vmem:[%s492 + $0x70] sm:$0xff]
        %v521 = vld [vmem:[%s492 + $0x78] sm:$0xff]
        %v522 = vld [vmem:[%s492 + $0x80] sm:$0xff]
        %v523 = vld [vmem:[%s492 + $0x88] sm:$0xff]
        %v524 = vld [vmem:[%s492 + $0x90] sm:$0xff]
        %v525 = vld [vmem:[%s492 + $0x98] sm:$0xff]
        %v526 = vld [vmem:[%s492 + $0xa0] sm:$0xff]
        %v527 = vld [vmem:[%s492 + $0xa8] sm:$0xff]
        %v528 = vld [vmem:[%s492 + $0xb0] sm:$0xff]
        %v529 = vld [vmem:[%s492 + $0xb8] sm:$0xff]
        %v530 = vld [vmem:[%s492 + $0xc0] sm:$0xff]
        %v531 = vld [vmem:[%s492 + $0xc8] sm:$0xff]
        %v532 = vld [vmem:[%s492 + $0xd0] sm:$0xff]
        %v533 = vld [vmem:[%s492 + $0xd8] sm:$0xff]
        %v534 = vld [vmem:[%s492 + $0xe0] sm:$0xff]
        %v535 = vld [vmem:[%s492 + $0xe8] sm:$0xff]
        %v536 = vld [vmem:[%s492 + $0xf0] sm:$0xff]
        %v537 = vld [vmem:[%s492 + $0xf8] sm:$0xff]
        %v538 = vld [vmem:[%s492 + $0x100] sm:$0xff]
        %v539 = vld [vmem:[%s492 + $0x108] sm:$0xff]
        %v540 = vld [vmem:[%s492 + $0x110] sm:$0xff]
        %v541 = vld [vmem:[%s492 + $0x118] sm:$0xff]
        %v542 = vld [vmem:[%s492 + $0x120] sm:$0xff]
        %v543 = vld [vmem:[%s492 + $0x128] sm:$0xff]
        %v544 = vld [vmem:[%s492 + $0x130] sm:$0xff]
        %v545 = vld [vmem:[%s492 + $0x138] sm:$0xff]
        %v546 = vld [vmem:[%s492 + $0x140] sm:$0xff]
        %v547 = vld [vmem:[%s492 + $0x148] sm:$0xff]
        %v548 = vld [vmem:[%s492 + $0x150] sm:$0xff]
        %v549 = vld [vmem:[%s492 + $0x158] sm:$0xff]
        %v550 = vld [vmem:[%s492 + $0x160] sm:$0xff]
        %v551 = vld [vmem:[%s492 + $0x168] sm:$0xff]
        %v552 = vld [vmem:[%s492 + $0x170] sm:$0xff]
        %v553 = vld [vmem:[%s492 + $0x178] sm:$0xff]
        %v554 = vld [vmem:[%s492 + $0x180] sm:$0xff]
        %v555 = vld [vmem:[%s492 + $0x188] sm:$0xff]
        %v556 = vld [vmem:[%s492 + $0x190] sm:$0xff]
        %v557 = vld [vmem:[%s492 + $0x198] sm:$0xff]
        %v558 = vld [vmem:[%s492 + $0x1a0] sm:$0xff]
        %v559 = vld [vmem:[%s492 + $0x1a8] sm:$0xff]
        %v560 = vld [vmem:[%s492 + $0x1b0] sm:$0xff]
        %v561 = vld [vmem:[%s492 + $0x1b8] sm:$0xff]
        %v562 = vld [vmem:[%s492 + $0x1c0] sm:$0xff]
        %v563 = vld [vmem:[%s492 + $0x1c8] sm:$0xff]
        %v564 = vld [vmem:[%s492 + $0x1d0] sm:$0xff]
        %v565 = vld [vmem:[%s492 + $0x1d8] sm:$0xff]
        %v566 = vld [vmem:[%s492 + $0x1e0] sm:$0xff]
        %v567 = vld [vmem:[%s492 + $0x1e8] sm:$0xff]
        %v568 = vld [vmem:[%s492 + $0x1f0] sm:$0xff]
        %v569 = vld [vmem:[%s492 + $0x1f8] sm:$0xff]
        %571 = vset.pattern.permute.xlu0 0
        %572 = vperm.xlu0 %571, %v506
        %v573 = vpop.permute.xlu0 %572
        %576 = vset.pattern.permute.xlu0 0
        %577 = vperm.xlu0 %576, %v507
        %v578 = vpop.permute.xlu0 %577
        %581 = vset.pattern.permute.xlu0 0
        %582 = vperm.xlu0 %581, %v508
        %v583 = vpop.permute.xlu0 %582
        %586 = vset.pattern.permute.xlu0 0
        %587 = vperm.xlu0 %586, %v509
        %v588 = vpop.permute.xlu0 %587
        %591 = vset.pattern.permute.xlu0 0
        %592 = vperm.xlu0 %591, %v510
        %v593 = vpop.permute.xlu0 %592
        %596 = vset.pattern.permute.xlu0 0
        %597 = vperm.xlu0 %596, %v511
        %v598 = vpop.permute.xlu0 %597
        %601 = vset.pattern.permute.xlu0 0
        %602 = vperm.xlu0 %601, %v512
        %v603 = vpop.permute.xlu0 %602
        %606 = vset.pattern.permute.xlu0 0
        %607 = vperm.xlu0 %606, %v513
        %v608 = vpop.permute.xlu0 %607
        %611 = vset.pattern.permute.xlu0 0
        %612 = vperm.xlu0 %611, %v514
        %v613 = vpop.permute.xlu0 %612
        %616 = vset.pattern.permute.xlu0 0
        %617 = vperm.xlu0 %616, %v515
        %v618 = vpop.permute.xlu0 %617
        %621 = vset.pattern.permute.xlu0 0
        %622 = vperm.xlu0 %621, %v516
        %v623 = vpop.permute.xlu0 %622
        %626 = vset.pattern.permute.xlu0 0
        %627 = vperm.xlu0 %626, %v517
        %v628 = vpop.permute.xlu0 %627
        %631 = vset.pattern.permute.xlu0 0
        %632 = vperm.xlu0 %631, %v518
        %v633 = vpop.permute.xlu0 %632
        %636 = vset.pattern.permute.xlu0 0
        %637 = vperm.xlu0 %636, %v519
        %v638 = vpop.permute.xlu0 %637
        %641 = vset.pattern.permute.xlu0 0
        %642 = vperm.xlu0 %641, %v520
        %v643 = vpop.permute.xlu0 %642
        %646 = vset.pattern.permute.xlu0 0
        %647 = vperm.xlu0 %646, %v521
        %v648 = vpop.permute.xlu0 %647
        %651 = vset.pattern.permute.xlu0 0
        %652 = vperm.xlu0 %651, %v522
        %v653 = vpop.permute.xlu0 %652
        %656 = vset.pattern.permute.xlu0 0
        %657 = vperm.xlu0 %656, %v523
        %v658 = vpop.permute.xlu0 %657
        %661 = vset.pattern.permute.xlu0 0
        %662 = vperm.xlu0 %661, %v524
        %v663 = vpop.permute.xlu0 %662
        %666 = vset.pattern.permute.xlu0 0
        %667 = vperm.xlu0 %666, %v525
        %v668 = vpop.permute.xlu0 %667
        %671 = vset.pattern.permute.xlu0 0
        %672 = vperm.xlu0 %671, %v526
        %v673 = vpop.permute.xlu0 %672
        %676 = vset.pattern.permute.xlu0 0
        %677 = vperm.xlu0 %676, %v527
        %v678 = vpop.permute.xlu0 %677
        %681 = vset.pattern.permute.xlu0 0
        %682 = vperm.xlu0 %681, %v528
        %v683 = vpop.permute.xlu0 %682
        %686 = vset.pattern.permute.xlu0 0
        %687 = vperm.xlu0 %686, %v529
        %v688 = vpop.permute.xlu0 %687
        %691 = vset.pattern.permute.xlu0 0
        %692 = vperm.xlu0 %691, %v530
        %v693 = vpop.permute.xlu0 %692
        %696 = vset.pattern.permute.xlu0 0
        %697 = vperm.xlu0 %696, %v531
        %v698 = vpop.permute.xlu0 %697
        %701 = vset.pattern.permute.xlu0 0
        %702 = vperm.xlu0 %701, %v532
        %v703 = vpop.permute.xlu0 %702
        %706 = vset.pattern.permute.xlu0 0
        %707 = vperm.xlu0 %706, %v533
        %v708 = vpop.permute.xlu0 %707
        %711 = vset.pattern.permute.xlu0 0
        %712 = vperm.xlu0 %711, %v534
        %v713 = vpop.permute.xlu0 %712
        %716 = vset.pattern.permute.xlu0 0
        %717 = vperm.xlu0 %716, %v535
        %v718 = vpop.permute.xlu0 %717
        %721 = vset.pattern.permute.xlu0 0
        %722 = vperm.xlu0 %721, %v536
        %v723 = vpop.permute.xlu0 %722
        %726 = vset.pattern.permute.xlu0 0
        %727 = vperm.xlu0 %726, %v537
        %v728 = vpop.permute.xlu0 %727
        %731 = vset.pattern.permute.xlu0 0
        %732 = vperm.xlu0 %731, %v538
        %v733 = vpop.permute.xlu0 %732
        %736 = vset.pattern.permute.xlu0 0
        %737 = vperm.xlu0 %736, %v539
        %v738 = vpop.permute.xlu0 %737
        %741 = vset.pattern.permute.xlu0 0
        %742 = vperm.xlu0 %741, %v540
        %v743 = vpop.permute.xlu0 %742
        %746 = vset.pattern.permute.xlu0 0
        %747 = vperm.xlu0 %746, %v541
        %v748 = vpop.permute.xlu0 %747
        %751 = vset.pattern.permute.xlu0 0
        %752 = vperm.xlu0 %751, %v542
        %v753 = vpop.permute.xlu0 %752
        %756 = vset.pattern.permute.xlu0 0
        %757 = vperm.xlu0 %756, %v543
        %v758 = vpop.permute.xlu0 %757
        %761 = vset.pattern.permute.xlu0 0
        %762 = vperm.xlu0 %761, %v544
        %v763 = vpop.permute.xlu0 %762
        %766 = vset.pattern.permute.xlu0 0
        %767 = vperm.xlu0 %766, %v545
        %v768 = vpop.permute.xlu0 %767
        %771 = vset.pattern.permute.xlu0 0
        %772 = vperm.xlu0 %771, %v546
        %v773 = vpop.permute.xlu0 %772
        %776 = vset.pattern.permute.xlu0 0
        %777 = vperm.xlu0 %776, %v547
        %v778 = vpop.permute.xlu0 %777
        %781 = vset.pattern.permute.xlu0 0
        %782 = vperm.xlu0 %781, %v548
        %v783 = vpop.permute.xlu0 %782
        %786 = vset.pattern.permute.xlu0 0
        %787 = vperm.xlu0 %786, %v549
        %v788 = vpop.permute.xlu0 %787
        %791 = vset.pattern.permute.xlu0 0
        %792 = vperm.xlu0 %791, %v550
        %v793 = vpop.permute.xlu0 %792
        %796 = vset.pattern.permute.xlu0 0
        %797 = vperm.xlu0 %796, %v551
        %v798 = vpop.permute.xlu0 %797
        %801 = vset.pattern.permute.xlu0 0
        %802 = vperm.xlu0 %801, %v552
        %v803 = vpop.permute.xlu0 %802
        %806 = vset.pattern.permute.xlu0 0
        %807 = vperm.xlu0 %806, %v553
        %v808 = vpop.permute.xlu0 %807
        %811 = vset.pattern.permute.xlu0 0
        %812 = vperm.xlu0 %811, %v554
        %v813 = vpop.permute.xlu0 %812
        %816 = vset.pattern.permute.xlu0 0
        %817 = vperm.xlu0 %816, %v555
        %v818 = vpop.permute.xlu0 %817
        %821 = vset.pattern.permute.xlu0 0
        %822 = vperm.xlu0 %821, %v556
        %v823 = vpop.permute.xlu0 %822
        %826 = vset.pattern.permute.xlu0 0
        %827 = vperm.xlu0 %826, %v557
        %v828 = vpop.permute.xlu0 %827
        %831 = vset.pattern.permute.xlu0 0
        %832 = vperm.xlu0 %831, %v558
        %v833 = vpop.permute.xlu0 %832
        %836 = vset.pattern.permute.xlu0 0
        %837 = vperm.xlu0 %836, %v559
        %v838 = vpop.permute.xlu0 %837
        %841 = vset.pattern.permute.xlu0 0
        %842 = vperm.xlu0 %841, %v560
        %v843 = vpop.permute.xlu0 %842
        %846 = vset.pattern.permute.xlu0 0
        %847 = vperm.xlu0 %846, %v561
        %v848 = vpop.permute.xlu0 %847
        %851 = vset.pattern.permute.xlu0 0
        %852 = vperm.xlu0 %851, %v562
        %v853 = vpop.permute.xlu0 %852
        %856 = vset.pattern.permute.xlu0 0
        %857 = vperm.xlu0 %856, %v563
        %v858 = vpop.permute.xlu0 %857
        %861 = vset.pattern.permute.xlu0 0
        %862 = vperm.xlu0 %861, %v564
        %v863 = vpop.permute.xlu0 %862
        %866 = vset.pattern.permute.xlu0 0
        %867 = vperm.xlu0 %866, %v565
        %v868 = vpop.permute.xlu0 %867
        %871 = vset.pattern.permute.xlu0 0
        %872 = vperm.xlu0 %871, %v566
        %v873 = vpop.permute.xlu0 %872
        %876 = vset.pattern.permute.xlu0 0
        %877 = vperm.xlu0 %876, %v567
        %v878 = vpop.permute.xlu0 %877
        %881 = vset.pattern.permute.xlu0 0
        %882 = vperm.xlu0 %881, %v568
        %v883 = vpop.permute.xlu0 %882
        %886 = vset.pattern.permute.xlu0 0
        %887 = vperm.xlu0 %886, %v569
        %v888 = vpop.permute.xlu0 %887
        %v891 = vperm.slane %v504, 0
        %v892 = vperm.slane %v504, 1
        %v893 = vperm.slane %v504, 2
        %v894 = vperm.slane %v504, 3
        %v899 = vmul.f32 %v573, %v891
        %v900 = vmul.f32 %v573, %v892
        %v901 = vmul.f32 %v573, %v893
        %v902 = vmul.f32 %v573, %v894
        %v903 = vmul.f32 %v578, %v891
        %v904 = vmul.f32 %v578, %v892
        %v905 = vmul.f32 %v578, %v893
        %v906 = vmul.f32 %v578, %v894
        %v907 = vmul.f32 %v583, %v891
        %v908 = vmul.f32 %v583, %v892
        %v909 = vmul.f32 %v583, %v893
        %v910 = vmul.f32 %v583, %v894
        %v911 = vmul.f32 %v588, %v891
        %v912 = vmul.f32 %v588, %v892
        %v913 = vmul.f32 %v588, %v893
        %v914 = vmul.f32 %v588, %v894
        %v915 = vmul.f32 %v593, %v891
        %v916 = vmul.f32 %v593, %v892
        %v917 = vmul.f32 %v593, %v893
        %v918 = vmul.f32 %v593, %v894
        %v919 = vmul.f32 %v598, %v891
        %v920 = vmul.f32 %v598, %v892
        %v921 = vmul.f32 %v598, %v893
        %v922 = vmul.f32 %v598, %v894
        %v923 = vmul.f32 %v603, %v891
        %v924 = vmul.f32 %v603, %v892
        %v925 = vmul.f32 %v603, %v893
        %v926 = vmul.f32 %v603, %v894
        %v927 = vmul.f32 %v608, %v891
        %v928 = vmul.f32 %v608, %v892
        %v929 = vmul.f32 %v608, %v893
        %v930 = vmul.f32 %v608, %v894
        %v931 = vmul.f32 %v613, %v891
        %v932 = vmul.f32 %v613, %v892
        %v933 = vmul.f32 %v613, %v893
        %v934 = vmul.f32 %v613, %v894
        %v935 = vmul.f32 %v618, %v891
        %v936 = vmul.f32 %v618, %v892
        %v937 = vmul.f32 %v618, %v893
        %v938 = vmul.f32 %v618, %v894
        %v939 = vmul.f32 %v623, %v891
        %v940 = vmul.f32 %v623, %v892
        %v941 = vmul.f32 %v623, %v893
        %v942 = vmul.f32 %v623, %v894
        %v943 = vmul.f32 %v628, %v891
        %v944 = vmul.f32 %v628, %v892
        %v945 = vmul.f32 %v628, %v893
        %v946 = vmul.f32 %v628, %v894
        %v947 = vmul.f32 %v633, %v891
        %v948 = vmul.f32 %v633, %v892
        %v949 = vmul.f32 %v633, %v893
        %v950 = vmul.f32 %v633, %v894
        %v951 = vmul.f32 %v638, %v891
        %v952 = vmul.f32 %v638, %v892
        %v953 = vmul.f32 %v638, %v893
        %v954 = vmul.f32 %v638, %v894
        %v955 = vmul.f32 %v643, %v891
        %v956 = vmul.f32 %v643, %v892
        %v957 = vmul.f32 %v643, %v893
        %v958 = vmul.f32 %v643, %v894
        %v959 = vmul.f32 %v648, %v891
        %v960 = vmul.f32 %v648, %v892
        %v961 = vmul.f32 %v648, %v893
        %v962 = vmul.f32 %v648, %v894
        %v963 = vmul.f32 %v653, %v891
        %v964 = vmul.f32 %v653, %v892
        %v965 = vmul.f32 %v653, %v893
        %v966 = vmul.f32 %v653, %v894
        %v967 = vmul.f32 %v658, %v891
        %v968 = vmul.f32 %v658, %v892
        %v969 = vmul.f32 %v658, %v893
        %v970 = vmul.f32 %v658, %v894
        %v971 = vmul.f32 %v663, %v891
        %v972 = vmul.f32 %v663, %v892
        %v973 = vmul.f32 %v663, %v893
        %v974 = vmul.f32 %v663, %v894
        %v975 = vmul.f32 %v668, %v891
        %v976 = vmul.f32 %v668, %v892
        %v977 = vmul.f32 %v668, %v893
        %v978 = vmul.f32 %v668, %v894
        %v979 = vmul.f32 %v673, %v891
        %v980 = vmul.f32 %v673, %v892
        %v981 = vmul.f32 %v673, %v893
        %v982 = vmul.f32 %v673, %v894
        %v983 = vmul.f32 %v678, %v891
        %v984 = vmul.f32 %v678, %v892
        %v985 = vmul.f32 %v678, %v893
        %v986 = vmul.f32 %v678, %v894
        %v987 = vmul.f32 %v683, %v891
        %v988 = vmul.f32 %v683, %v892
        %v989 = vmul.f32 %v683, %v893
        %v990 = vmul.f32 %v683, %v894
        %v991 = vmul.f32 %v688, %v891
        %v992 = vmul.f32 %v688, %v892
        %v993 = vmul.f32 %v688, %v893
        %v994 = vmul.f32 %v688, %v894
        %v995 = vmul.f32 %v693, %v891
        %v996 = vmul.f32 %v693, %v892
        %v997 = vmul.f32 %v693, %v893
        %v998 = vmul.f32 %v693, %v894
        %v999 = vmul.f32 %v698, %v891
        %v1000 = vmul.f32 %v698, %v892
        %v1001 = vmul.f32 %v698, %v893
        %v1002 = vmul.f32 %v698, %v894
        %v1003 = vmul.f32 %v703, %v891
        %v1004 = vmul.f32 %v703, %v892
        %v1005 = vmul.f32 %v703, %v893
        %v1006 = vmul.f32 %v703, %v894
        %v1007 = vmul.f32 %v708, %v891
        %v1008 = vmul.f32 %v708, %v892
        %v1009 = vmul.f32 %v708, %v893
        %v1010 = vmul.f32 %v708, %v894
        %v1011 = vmul.f32 %v713, %v891
        %v1012 = vmul.f32 %v713, %v892
        %v1013 = vmul.f32 %v713, %v893
        %v1014 = vmul.f32 %v713, %v894
        %v1015 = vmul.f32 %v718, %v891
        %v1016 = vmul.f32 %v718, %v892
        %v1017 = vmul.f32 %v718, %v893
        %v1018 = vmul.f32 %v718, %v894
        %v1019 = vmul.f32 %v723, %v891
        %v1020 = vmul.f32 %v723, %v892
        %v1021 = vmul.f32 %v723, %v893
        %v1022 = vmul.f32 %v723, %v894
        %v1023 = vmul.f32 %v728, %v891
        %v1024 = vmul.f32 %v728, %v892
        %v1025 = vmul.f32 %v728, %v893
        %v1026 = vmul.f32 %v728, %v894
        %v1027 = vmul.f32 %v733, %v891
        %v1028 = vmul.f32 %v733, %v892
        %v1029 = vmul.f32 %v733, %v893
        %v1030 = vmul.f32 %v733, %v894
        %v1031 = vmul.f32 %v738, %v891
        %v1032 = vmul.f32 %v738, %v892
        %v1033 = vmul.f32 %v738, %v893
        %v1034 = vmul.f32 %v738, %v894
        %v1035 = vmul.f32 %v743, %v891
        %v1036 = vmul.f32 %v743, %v892
        %v1037 = vmul.f32 %v743, %v893
        %v1038 = vmul.f32 %v743, %v894
        %v1039 = vmul.f32 %v748, %v891
        %v1040 = vmul.f32 %v748, %v892
        %v1041 = vmul.f32 %v748, %v893
        %v1042 = vmul.f32 %v748, %v894
        %v1043 = vmul.f32 %v753, %v891
        %v1044 = vmul.f32 %v753, %v892
        %v1045 = vmul.f32 %v753, %v893
        %v1046 = vmul.f32 %v753, %v894
        %v1047 = vmul.f32 %v758, %v891
        %v1048 = vmul.f32 %v758, %v892
        %v1049 = vmul.f32 %v758, %v893
        %v1050 = vmul.f32 %v758, %v894
        %v1051 = vmul.f32 %v763, %v891
        %v1052 = vmul.f32 %v763, %v892
        %v1053 = vmul.f32 %v763, %v893
        %v1054 = vmul.f32 %v763, %v894
        %v1055 = vmul.f32 %v768, %v891
        %v1056 = vmul.f32 %v768, %v892
        %v1057 = vmul.f32 %v768, %v893
        %v1058 = vmul.f32 %v768, %v894
        %v1059 = vmul.f32 %v773, %v891
        %v1060 = vmul.f32 %v773, %v892
        %v1061 = vmul.f32 %v773, %v893
        %v1062 = vmul.f32 %v773, %v894
        %v1063 = vmul.f32 %v778, %v891
        %v1064 = vmul.f32 %v778, %v892
        %v1065 = vmul.f32 %v778, %v893
        %v1066 = vmul.f32 %v778, %v894
        %v1067 = vmul.f32 %v783, %v891
        %v1068 = vmul.f32 %v783, %v892
        %v1069 = vmul.f32 %v783, %v893
        %v1070 = vmul.f32 %v783, %v894
        %v1071 = vmul.f32 %v788, %v891
        %v1072 = vmul.f32 %v788, %v892
        %v1073 = vmul.f32 %v788, %v893
        %v1074 = vmul.f32 %v788, %v894
        %v1075 = vmul.f32 %v793, %v891
        %v1076 = vmul.f32 %v793, %v892
        %v1077 = vmul.f32 %v793, %v893
        %v1078 = vmul.f32 %v793, %v894
        %v1079 = vmul.f32 %v798, %v891
        %v1080 = vmul.f32 %v798, %v892
        %v1081 = vmul.f32 %v798, %v893
        %v1082 = vmul.f32 %v798, %v894
        %v1083 = vmul.f32 %v803, %v891
        %v1084 = vmul.f32 %v803, %v892
        %v1085 = vmul.f32 %v803, %v893
        %v1086 = vmul.f32 %v803, %v894
        %v1087 = vmul.f32 %v808, %v891
        %v1088 = vmul.f32 %v808, %v892
        %v1089 = vmul.f32 %v808, %v893
        %v1090 = vmul.f32 %v808, %v894
        %v1091 = vmul.f32 %v813, %v891
        %v1092 = vmul.f32 %v813, %v892
        %v1093 = vmul.f32 %v813, %v893
        %v1094 = vmul.f32 %v813, %v894
        %v1095 = vmul.f32 %v818, %v891
        %v1096 = vmul.f32 %v818, %v892
        %v1097 = vmul.f32 %v818, %v893
        %v1098 = vmul.f32 %v818, %v894
        %v1099 = vmul.f32 %v823, %v891
        %v1100 = vmul.f32 %v823, %v892
        %v1101 = vmul.f32 %v823, %v893
        %v1102 = vmul.f32 %v823, %v894
        %v1103 = vmul.f32 %v828, %v891
        %v1104 = vmul.f32 %v828, %v892
        %v1105 = vmul.f32 %v828, %v893
        %v1106 = vmul.f32 %v828, %v894
        %v1107 = vmul.f32 %v833, %v891
        %v1108 = vmul.f32 %v833, %v892
        %v1109 = vmul.f32 %v833, %v893
        %v1110 = vmul.f32 %v833, %v894
        %v1111 = vmul.f32 %v838, %v891
        %v1112 = vmul.f32 %v838, %v892
        %v1113 = vmul.f32 %v838, %v893
        %v1114 = vmul.f32 %v838, %v894
        %v1115 = vmul.f32 %v843, %v891
        %v1116 = vmul.f32 %v843, %v892
        %v1117 = vmul.f32 %v843, %v893
        %v1118 = vmul.f32 %v843, %v894
        %v1119 = vmul.f32 %v848, %v891
        %v1120 = vmul.f32 %v848, %v892
        %v1121 = vmul.f32 %v848, %v893
        %v1122 = vmul.f32 %v848, %v894
        %v1123 = vmul.f32 %v853, %v891
        %v1124 = vmul.f32 %v853, %v892
        %v1125 = vmul.f32 %v853, %v893
        %v1126 = vmul.f32 %v853, %v894
        %v1127 = vmul.f32 %v858, %v891
        %v1128 = vmul.f32 %v858, %v892
        %v1129 = vmul.f32 %v858, %v893
        %v1130 = vmul.f32 %v858, %v894
        %v1131 = vmul.f32 %v863, %v891
        %v1132 = vmul.f32 %v863, %v892
        %v1133 = vmul.f32 %v863, %v893
        %v1134 = vmul.f32 %v863, %v894
        %v1135 = vmul.f32 %v868, %v891
        %v1136 = vmul.f32 %v868, %v892
        %v1137 = vmul.f32 %v868, %v893
        %v1138 = vmul.f32 %v868, %v894
        %v1139 = vmul.f32 %v873, %v891
        %v1140 = vmul.f32 %v873, %v892
        %v1141 = vmul.f32 %v873, %v893
        %v1142 = vmul.f32 %v873, %v894
        %v1143 = vmul.f32 %v878, %v891
        %v1144 = vmul.f32 %v878, %v892
        %v1145 = vmul.f32 %v878, %v893
        %v1146 = vmul.f32 %v878, %v894
        %v1147 = vmul.f32 %v883, %v891
        %v1148 = vmul.f32 %v883, %v892
        %v1149 = vmul.f32 %v883, %v893
        %v1150 = vmul.f32 %v883, %v894
        %v1151 = vmul.f32 %v888, %v891
        %v1152 = vmul.f32 %v888, %v892
        %v1153 = vmul.f32 %v888, %v893
        %v1154 = vmul.f32 %v888, %v894
        %v1156 = vperm.slane %v505, 0
        %v1157 = vperm.slane %v505, 1
        %v1158 = vperm.slane %v505, 2
        %v1159 = vperm.slane %v505, 3
        %v1164 = vadd.f32 %v899, %v1156
        %v1165 = vadd.f32 %v900, %v1157
        %v1166 = vadd.f32 %v901, %v1158
        %v1167 = vadd.f32 %v902, %v1159
        %v1168 = vadd.f32 %v903, %v1156
        %v1169 = vadd.f32 %v904, %v1157
        %v1170 = vadd.f32 %v905, %v1158
        %v1171 = vadd.f32 %v906, %v1159
        %v1172 = vadd.f32 %v907, %v1156
        %v1173 = vadd.f32 %v908, %v1157
        %v1174 = vadd.f32 %v909, %v1158
        %v1175 = vadd.f32 %v910, %v1159
        %v1176 = vadd.f32 %v911, %v1156
        %v1177 = vadd.f32 %v912, %v1157
        %v1178 = vadd.f32 %v913, %v1158
        %v1179 = vadd.f32 %v914, %v1159
        %v1180 = vadd.f32 %v915, %v1156
        %v1181 = vadd.f32 %v916, %v1157
        %v1182 = vadd.f32 %v917, %v1158
        %v1183 = vadd.f32 %v918, %v1159
        %v1184 = vadd.f32 %v919, %v1156
        %v1185 = vadd.f32 %v920, %v1157
        %v1186 = vadd.f32 %v921, %v1158
        %v1187 = vadd.f32 %v922, %v1159
        %v1188 = vadd.f32 %v923, %v1156
        %v1189 = vadd.f32 %v924, %v1157
        %v1190 = vadd.f32 %v925, %v1158
        %v1191 = vadd.f32 %v926, %v1159
        %v1192 = vadd.f32 %v927, %v1156
        %v1193 = vadd.f32 %v928, %v1157
        %v1194 = vadd.f32 %v929, %v1158
        %v1195 = vadd.f32 %v930, %v1159
        %v1196 = vadd.f32 %v931, %v1156
        %v1197 = vadd.f32 %v932, %v1157
        %v1198 = vadd.f32 %v933, %v1158
        %v1199 = vadd.f32 %v934, %v1159
        %v1200 = vadd.f32 %v935, %v1156
        %v1201 = vadd.f32 %v936, %v1157
        %v1202 = vadd.f32 %v937, %v1158
        %v1203 = vadd.f32 %v938, %v1159
        %v1204 = vadd.f32 %v939, %v1156
        %v1205 = vadd.f32 %v940, %v1157
        %v1206 = vadd.f32 %v941, %v1158
        %v1207 = vadd.f32 %v942, %v1159
        %v1208 = vadd.f32 %v943, %v1156
        %v1209 = vadd.f32 %v944, %v1157
        %v1210 = vadd.f32 %v945, %v1158
        %v1211 = vadd.f32 %v946, %v1159
        %v1212 = vadd.f32 %v947, %v1156
        %v1213 = vadd.f32 %v948, %v1157
        %v1214 = vadd.f32 %v949, %v1158
        %v1215 = vadd.f32 %v950, %v1159
        %v1216 = vadd.f32 %v951, %v1156
        %v1217 = vadd.f32 %v952, %v1157
        %v1218 = vadd.f32 %v953, %v1158
        %v1219 = vadd.f32 %v954, %v1159
        %v1220 = vadd.f32 %v955, %v1156
        %v1221 = vadd.f32 %v956, %v1157
        %v1222 = vadd.f32 %v957, %v1158
        %v1223 = vadd.f32 %v958, %v1159
        %v1224 = vadd.f32 %v959, %v1156
        %v1225 = vadd.f32 %v960, %v1157
        %v1226 = vadd.f32 %v961, %v1158
        %v1227 = vadd.f32 %v962, %v1159
        %v1228 = vadd.f32 %v963, %v1156
        %v1229 = vadd.f32 %v964, %v1157
        %v1230 = vadd.f32 %v965, %v1158
        %v1231 = vadd.f32 %v966, %v1159
        %v1232 = vadd.f32 %v967, %v1156
        %v1233 = vadd.f32 %v968, %v1157
        %v1234 = vadd.f32 %v969, %v1158
        %v1235 = vadd.f32 %v970, %v1159
        %v1236 = vadd.f32 %v971, %v1156
        %v1237 = vadd.f32 %v972, %v1157
        %v1238 = vadd.f32 %v973, %v1158
        %v1239 = vadd.f32 %v974, %v1159
        %v1240 = vadd.f32 %v975, %v1156
        %v1241 = vadd.f32 %v976, %v1157
        %v1242 = vadd.f32 %v977, %v1158
        %v1243 = vadd.f32 %v978, %v1159
        %v1244 = vadd.f32 %v979, %v1156
        %v1245 = vadd.f32 %v980, %v1157
        %v1246 = vadd.f32 %v981, %v1158
        %v1247 = vadd.f32 %v982, %v1159
        %v1248 = vadd.f32 %v983, %v1156
        %v1249 = vadd.f32 %v984, %v1157
        %v1250 = vadd.f32 %v985, %v1158
        %v1251 = vadd.f32 %v986, %v1159
        %v1252 = vadd.f32 %v987, %v1156
        %v1253 = vadd.f32 %v988, %v1157
        %v1254 = vadd.f32 %v989, %v1158
        %v1255 = vadd.f32 %v990, %v1159
        %v1256 = vadd.f32 %v991, %v1156
        %v1257 = vadd.f32 %v992, %v1157
        %v1258 = vadd.f32 %v993, %v1158
        %v1259 = vadd.f32 %v994, %v1159
        %v1260 = vadd.f32 %v995, %v1156
        %v1261 = vadd.f32 %v996, %v1157
        %v1262 = vadd.f32 %v997, %v1158
        %v1263 = vadd.f32 %v998, %v1159
        %v1264 = vadd.f32 %v999, %v1156
        %v1265 = vadd.f32 %v1000, %v1157
        %v1266 = vadd.f32 %v1001, %v1158
        %v1267 = vadd.f32 %v1002, %v1159
        %v1268 = vadd.f32 %v1003, %v1156
        %v1269 = vadd.f32 %v1004, %v1157
        %v1270 = vadd.f32 %v1005, %v1158
        %v1271 = vadd.f32 %v1006, %v1159
        %v1272 = vadd.f32 %v1007, %v1156
        %v1273 = vadd.f32 %v1008, %v1157
        %v1274 = vadd.f32 %v1009, %v1158
        %v1275 = vadd.f32 %v1010, %v1159
        %v1276 = vadd.f32 %v1011, %v1156
        %v1277 = vadd.f32 %v1012, %v1157
        %v1278 = vadd.f32 %v1013, %v1158
        %v1279 = vadd.f32 %v1014, %v1159
        %v1280 = vadd.f32 %v1015, %v1156
        %v1281 = vadd.f32 %v1016, %v1157
        %v1282 = vadd.f32 %v1017, %v1158
        %v1283 = vadd.f32 %v1018, %v1159
        %v1284 = vadd.f32 %v1019, %v1156
        %v1285 = vadd.f32 %v1020, %v1157
        %v1286 = vadd.f32 %v1021, %v1158
        %v1287 = vadd.f32 %v1022, %v1159
        %v1288 = vadd.f32 %v1023, %v1156
        %v1289 = vadd.f32 %v1024, %v1157
        %v1290 = vadd.f32 %v1025, %v1158
        %v1291 = vadd.f32 %v1026, %v1159
        %v1292 = vadd.f32 %v1027, %v1156
        %v1293 = vadd.f32 %v1028, %v1157
        %v1294 = vadd.f32 %v1029, %v1158
        %v1295 = vadd.f32 %v1030, %v1159
        %v1296 = vadd.f32 %v1031, %v1156
        %v1297 = vadd.f32 %v1032, %v1157
        %v1298 = vadd.f32 %v1033, %v1158
        %v1299 = vadd.f32 %v1034, %v1159
        %v1300 = vadd.f32 %v1035, %v1156
        %v1301 = vadd.f32 %v1036, %v1157
        %v1302 = vadd.f32 %v1037, %v1158
        %v1303 = vadd.f32 %v1038, %v1159
        %v1304 = vadd.f32 %v1039, %v1156
        %v1305 = vadd.f32 %v1040, %v1157
        %v1306 = vadd.f32 %v1041, %v1158
        %v1307 = vadd.f32 %v1042, %v1159
        %v1308 = vadd.f32 %v1043, %v1156
        %v1309 = vadd.f32 %v1044, %v1157
        %v1310 = vadd.f32 %v1045, %v1158
        %v1311 = vadd.f32 %v1046, %v1159
        %v1312 = vadd.f32 %v1047, %v1156
        %v1313 = vadd.f32 %v1048, %v1157
        %v1314 = vadd.f32 %v1049, %v1158
        %v1315 = vadd.f32 %v1050, %v1159
        %v1316 = vadd.f32 %v1051, %v1156
        %v1317 = vadd.f32 %v1052, %v1157
        %v1318 = vadd.f32 %v1053, %v1158
        %v1319 = vadd.f32 %v1054, %v1159
        %v1320 = vadd.f32 %v1055, %v1156
        %v1321 = vadd.f32 %v1056, %v1157
        %v1322 = vadd.f32 %v1057, %v1158
        %v1323 = vadd.f32 %v1058, %v1159
        %v1324 = vadd.f32 %v1059, %v1156
        %v1325 = vadd.f32 %v1060, %v1157
        %v1326 = vadd.f32 %v1061, %v1158
        %v1327 = vadd.f32 %v1062, %v1159
        %v1328 = vadd.f32 %v1063, %v1156
        %v1329 = vadd.f32 %v1064, %v1157
        %v1330 = vadd.f32 %v1065, %v1158
        %v1331 = vadd.f32 %v1066, %v1159
        %v1332 = vadd.f32 %v1067, %v1156
        %v1333 = vadd.f32 %v1068, %v1157
        %v1334 = vadd.f32 %v1069, %v1158
        %v1335 = vadd.f32 %v1070, %v1159
        %v1336 = vadd.f32 %v1071, %v1156
        %v1337 = vadd.f32 %v1072, %v1157
        %v1338 = vadd.f32 %v1073, %v1158
        %v1339 = vadd.f32 %v1074, %v1159
        %v1340 = vadd.f32 %v1075, %v1156
        %v1341 = vadd.f32 %v1076, %v1157
        %v1342 = vadd.f32 %v1077, %v1158
        %v1343 = vadd.f32 %v1078, %v1159
        %v1344 = vadd.f32 %v1079, %v1156
        %v1345 = vadd.f32 %v1080, %v1157
        %v1346 = vadd.f32 %v1081, %v1158
        %v1347 = vadd.f32 %v1082, %v1159
        %v1348 = vadd.f32 %v1083, %v1156
        %v1349 = vadd.f32 %v1084, %v1157
        %v1350 = vadd.f32 %v1085, %v1158
        %v1351 = vadd.f32 %v1086, %v1159
        %v1352 = vadd.f32 %v1087, %v1156
        %v1353 = vadd.f32 %v1088, %v1157
        %v1354 = vadd.f32 %v1089, %v1158
        %v1355 = vadd.f32 %v1090, %v1159
        %v1356 = vadd.f32 %v1091, %v1156
        %v1357 = vadd.f32 %v1092, %v1157
        %v1358 = vadd.f32 %v1093, %v1158
        %v1359 = vadd.f32 %v1094, %v1159
        %v1360 = vadd.f32 %v1095, %v1156
        %v1361 = vadd.f32 %v1096, %v1157
        %v1362 = vadd.f32 %v1097, %v1158
        %v1363 = vadd.f32 %v1098, %v1159
        %v1364 = vadd.f32 %v1099, %v1156
        %v1365 = vadd.f32 %v1100, %v1157
        %v1366 = vadd.f32 %v1101, %v1158
        %v1367 = vadd.f32 %v1102, %v1159
        %v1368 = vadd.f32 %v1103, %v1156
        %v1369 = vadd.f32 %v1104, %v1157
        %v1370 = vadd.f32 %v1105, %v1158
        %v1371 = vadd.f32 %v1106, %v1159
        %v1372 = vadd.f32 %v1107, %v1156
        %v1373 = vadd.f32 %v1108, %v1157
        %v1374 = vadd.f32 %v1109, %v1158
        %v1375 = vadd.f32 %v1110, %v1159
        %v1376 = vadd.f32 %v1111, %v1156
        %v1377 = vadd.f32 %v1112, %v1157
        %v1378 = vadd.f32 %v1113, %v1158
        %v1379 = vadd.f32 %v1114, %v1159
        %v1380 = vadd.f32 %v1115, %v1156
        %v1381 = vadd.f32 %v1116, %v1157
        %v1382 = vadd.f32 %v1117, %v1158
        %v1383 = vadd.f32 %v1118, %v1159
        %v1384 = vadd.f32 %v1119, %v1156
        %v1385 = vadd.f32 %v1120, %v1157
        %v1386 = vadd.f32 %v1121, %v1158
        %v1387 = vadd.f32 %v1122, %v1159
        %v1388 = vadd.f32 %v1123, %v1156
        %v1389 = vadd.f32 %v1124, %v1157
        %v1390 = vadd.f32 %v1125, %v1158
        %v1391 = vadd.f32 %v1126, %v1159
        %v1392 = vadd.f32 %v1127, %v1156
        %v1393 = vadd.f32 %v1128, %v1157
        %v1394 = vadd.f32 %v1129, %v1158
        %v1395 = vadd.f32 %v1130, %v1159
        %v1396 = vadd.f32 %v1131, %v1156
        %v1397 = vadd.f32 %v1132, %v1157
        %v1398 = vadd.f32 %v1133, %v1158
        %v1399 = vadd.f32 %v1134, %v1159
        %v1400 = vadd.f32 %v1135, %v1156
        %v1401 = vadd.f32 %v1136, %v1157
        %v1402 = vadd.f32 %v1137, %v1158
        %v1403 = vadd.f32 %v1138, %v1159
        %v1404 = vadd.f32 %v1139, %v1156
        %v1405 = vadd.f32 %v1140, %v1157
        %v1406 = vadd.f32 %v1141, %v1158
        %v1407 = vadd.f32 %v1142, %v1159
        %v1408 = vadd.f32 %v1143, %v1156
        %v1409 = vadd.f32 %v1144, %v1157
        %v1410 = vadd.f32 %v1145, %v1158
        %v1411 = vadd.f32 %v1146, %v1159
        %v1412 = vadd.f32 %v1147, %v1156
        %v1413 = vadd.f32 %v1148, %v1157
        %v1414 = vadd.f32 %v1149, %v1158
        %v1415 = vadd.f32 %v1150, %v1159
        %v1416 = vadd.f32 %v1151, %v1156
        %v1417 = vadd.f32 %v1152, %v1157
        %v1418 = vadd.f32 %v1153, %v1158
        %v1419 = vadd.f32 %v1154, %v1159
        %v1420 = vmax.f32 %v1164, 0.0
        %v1421 = vmax.f32 %v1165, 0.0
        %v1422 = vmax.f32 %v1166, 0.0
        %v1423 = vmax.f32 %v1167, 0.0
        %v1424 = vmax.f32 %v1168, 0.0
        %v1425 = vmax.f32 %v1169, 0.0
        %v1426 = vmax.f32 %v1170, 0.0
        %v1427 = vmax.f32 %v1171, 0.0
        %v1428 = vmax.f32 %v1172, 0.0
        %v1429 = vmax.f32 %v1173, 0.0
        %v1430 = vmax.f32 %v1174, 0.0
        %v1431 = vmax.f32 %v1175, 0.0
        %v1432 = vmax.f32 %v1176, 0.0
        %v1433 = vmax.f32 %v1177, 0.0
        %v1434 = vmax.f32 %v1178, 0.0
        %v1435 = vmax.f32 %v1179, 0.0
        %v1436 = vmax.f32 %v1180, 0.0
        %v1437 = vmax.f32 %v1181, 0.0
        %v1438 = vmax.f32 %v1182, 0.0
        %v1439 = vmax.f32 %v1183, 0.0
        %v1440 = vmax.f32 %v1184, 0.0
        %v1441 = vmax.f32 %v1185, 0.0
        %v1442 = vmax.f32 %v1186, 0.0
        %v1443 = vmax.f32 %v1187, 0.0
        %v1444 = vmax.f32 %v1188, 0.0
        %v1445 = vmax.f32 %v1189, 0.0
        %v1446 = vmax.f32 %v1190, 0.0
        %v1447 = vmax.f32 %v1191, 0.0
        %v1448 = vmax.f32 %v1192, 0.0
        %v1449 = vmax.f32 %v1193, 0.0
        %v1450 = vmax.f32 %v1194, 0.0
        %v1451 = vmax.f32 %v1195, 0.0
        %v1452 = vmax.f32 %v1196, 0.0
        %v1453 = vmax.f32 %v1197, 0.0
        %v1454 = vmax.f32 %v1198, 0.0
        %v1455 = vmax.f32 %v1199, 0.0
        %v1456 = vmax.f32 %v1200, 0.0
        %v1457 = vmax.f32 %v1201, 0.0
        %v1458 = vmax.f32 %v1202, 0.0
        %v1459 = vmax.f32 %v1203, 0.0
        %v1460 = vmax.f32 %v1204, 0.0
        %v1461 = vmax.f32 %v1205, 0.0
        %v1462 = vmax.f32 %v1206, 0.0
        %v1463 = vmax.f32 %v1207, 0.0
        %v1464 = vmax.f32 %v1208, 0.0
        %v1465 = vmax.f32 %v1209, 0.0
        %v1466 = vmax.f32 %v1210, 0.0
        %v1467 = vmax.f32 %v1211, 0.0
        %v1468 = vmax.f32 %v1212, 0.0
        %v1469 = vmax.f32 %v1213, 0.0
        %v1470 = vmax.f32 %v1214, 0.0
        %v1471 = vmax.f32 %v1215, 0.0
        %v1472 = vmax.f32 %v1216, 0.0
        %v1473 = vmax.f32 %v1217, 0.0
        %v1474 = vmax.f32 %v1218, 0.0
        %v1475 = vmax.f32 %v1219, 0.0
        %v1476 = vmax.f32 %v1220, 0.0
        %v1477 = vmax.f32 %v1221, 0.0
        %v1478 = vmax.f32 %v1222, 0.0
        %v1479 = vmax.f32 %v1223, 0.0
        %v1480 = vmax.f32 %v1224, 0.0
        %v1481 = vmax.f32 %v1225, 0.0
        %v1482 = vmax.f32 %v1226, 0.0
        %v1483 = vmax.f32 %v1227, 0.0
        %v1484 = vmax.f32 %v1228, 0.0
        %v1485 = vmax.f32 %v1229, 0.0
        %v1486 = vmax.f32 %v1230, 0.0
        %v1487 = vmax.f32 %v1231, 0.0
        %v1488 = vmax.f32 %v1232, 0.0
        %v1489 = vmax.f32 %v1233, 0.0
        %v1490 = vmax.f32 %v1234, 0.0
        %v1491 = vmax.f32 %v1235, 0.0
        %v1492 = vmax.f32 %v1236, 0.0
        %v1493 = vmax.f32 %v1237, 0.0
        %v1494 = vmax.f32 %v1238, 0.0
        %v1495 = vmax.f32 %v1239, 0.0
        %v1496 = vmax.f32 %v1240, 0.0
        %v1497 = vmax.f32 %v1241, 0.0
        %v1498 = vmax.f32 %v1242, 0.0
        %v1499 = vmax.f32 %v1243, 0.0
        %v1500 = vmax.f32 %v1244, 0.0
        %v1501 = vmax.f32 %v1245, 0.0
        %v1502 = vmax.f32 %v1246, 0.0
        %v1503 = vmax.f32 %v1247, 0.0
        %v1504 = vmax.f32 %v1248, 0.0
        %v1505 = vmax.f32 %v1249, 0.0
        %v1506 = vmax.f32 %v1250, 0.0
        %v1507 = vmax.f32 %v1251, 0.0
        %v1508 = vmax.f32 %v1252, 0.0
        %v1509 = vmax.f32 %v1253, 0.0
        %v1510 = vmax.f32 %v1254, 0.0
        %v1511 = vmax.f32 %v1255, 0.0
        %v1512 = vmax.f32 %v1256, 0.0
        %v1513 = vmax.f32 %v1257, 0.0
        %v1514 = vmax.f32 %v1258, 0.0
        %v1515 = vmax.f32 %v1259, 0.0
        %v1516 = vmax.f32 %v1260, 0.0
        %v1517 = vmax.f32 %v1261, 0.0
        %v1518 = vmax.f32 %v1262, 0.0
        %v1519 = vmax.f32 %v1263, 0.0
        %v1520 = vmax.f32 %v1264, 0.0
        %v1521 = vmax.f32 %v1265, 0.0
        %v1522 = vmax.f32 %v1266, 0.0
        %v1523 = vmax.f32 %v1267, 0.0
        %v1524 = vmax.f32 %v1268, 0.0
        %v1525 = vmax.f32 %v1269, 0.0
        %v1526 = vmax.f32 %v1270, 0.0
        %v1527 = vmax.f32 %v1271, 0.0
        %v1528 = vmax.f32 %v1272, 0.0
        %v1529 = vmax.f32 %v1273, 0.0
        %v1530 = vmax.f32 %v1274, 0.0
        %v1531 = vmax.f32 %v1275, 0.0
        %v1532 = vmax.f32 %v1276, 0.0
        %v1533 = vmax.f32 %v1277, 0.0
        %v1534 = vmax.f32 %v1278, 0.0
        %v1535 = vmax.f32 %v1279, 0.0
        %v1536 = vmax.f32 %v1280, 0.0
        %v1537 = vmax.f32 %v1281, 0.0
        %v1538 = vmax.f32 %v1282, 0.0
        %v1539 = vmax.f32 %v1283, 0.0
        %v1540 = vmax.f32 %v1284, 0.0
        %v1541 = vmax.f32 %v1285, 0.0
        %v1542 = vmax.f32 %v1286, 0.0
        %v1543 = vmax.f32 %v1287, 0.0
        %v1544 = vmax.f32 %v1288, 0.0
        %v1545 = vmax.f32 %v1289, 0.0
        %v1546 = vmax.f32 %v1290, 0.0
        %v1547 = vmax.f32 %v1291, 0.0
        %v1548 = vmax.f32 %v1292, 0.0
        %v1549 = vmax.f32 %v1293, 0.0
        %v1550 = vmax.f32 %v1294, 0.0
        %v1551 = vmax.f32 %v1295, 0.0
        %v1552 = vmax.f32 %v1296, 0.0
        %v1553 = vmax.f32 %v1297, 0.0
        %v1554 = vmax.f32 %v1298, 0.0
        %v1555 = vmax.f32 %v1299, 0.0
        %v1556 = vmax.f32 %v1300, 0.0
        %v1557 = vmax.f32 %v1301, 0.0
        %v1558 = vmax.f32 %v1302, 0.0
        %v1559 = vmax.f32 %v1303, 0.0
        %v1560 = vmax.f32 %v1304, 0.0
        %v1561 = vmax.f32 %v1305, 0.0
        %v1562 = vmax.f32 %v1306, 0.0
        %v1563 = vmax.f32 %v1307, 0.0
        %v1564 = vmax.f32 %v1308, 0.0
        %v1565 = vmax.f32 %v1309, 0.0
        %v1566 = vmax.f32 %v1310, 0.0
        %v1567 = vmax.f32 %v1311, 0.0
        %v1568 = vmax.f32 %v1312, 0.0
        %v1569 = vmax.f32 %v1313, 0.0
        %v1570 = vmax.f32 %v1314, 0.0
        %v1571 = vmax.f32 %v1315, 0.0
        %v1572 = vmax.f32 %v1316, 0.0
        %v1573 = vmax.f32 %v1317, 0.0
        %v1574 = vmax.f32 %v1318, 0.0
        %v1575 = vmax.f32 %v1319, 0.0
        %v1576 = vmax.f32 %v1320, 0.0
        %v1577 = vmax.f32 %v1321, 0.0
        %v1578 = vmax.f32 %v1322, 0.0
        %v1579 = vmax.f32 %v1323, 0.0
        %v1580 = vmax.f32 %v1324, 0.0
        %v1581 = vmax.f32 %v1325, 0.0
        %v1582 = vmax.f32 %v1326, 0.0
        %v1583 = vmax.f32 %v1327, 0.0
        %v1584 = vmax.f32 %v1328, 0.0
        %v1585 = vmax.f32 %v1329, 0.0
        %v1586 = vmax.f32 %v1330, 0.0
        %v1587 = vmax.f32 %v1331, 0.0
        %v1588 = vmax.f32 %v1332, 0.0
        %v1589 = vmax.f32 %v1333, 0.0
        %v1590 = vmax.f32 %v1334, 0.0
        %v1591 = vmax.f32 %v1335, 0.0
        %v1592 = vmax.f32 %v1336, 0.0
        %v1593 = vmax.f32 %v1337, 0.0
        %v1594 = vmax.f32 %v1338, 0.0
        %v1595 = vmax.f32 %v1339, 0.0
        %v1596 = vmax.f32 %v1340, 0.0
        %v1597 = vmax.f32 %v1341, 0.0
        %v1598 = vmax.f32 %v1342, 0.0
        %v1599 = vmax.f32 %v1343, 0.0
        %v1600 = vmax.f32 %v1344, 0.0
        %v1601 = vmax.f32 %v1345, 0.0
        %v1602 = vmax.f32 %v1346, 0.0
        %v1603 = vmax.f32 %v1347, 0.0
        %v1604 = vmax.f32 %v1348, 0.0
        %v1605 = vmax.f32 %v1349, 0.0
        %v1606 = vmax.f32 %v1350, 0.0
        %v1607 = vmax.f32 %v1351, 0.0
        %v1608 = vmax.f32 %v1352, 0.0
        %v1609 = vmax.f32 %v1353, 0.0
        %v1610 = vmax.f32 %v1354, 0.0
        %v1611 = vmax.f32 %v1355, 0.0
        %v1612 = vmax.f32 %v1356, 0.0
        %v1613 = vmax.f32 %v1357, 0.0
        %v1614 = vmax.f32 %v1358, 0.0
        %v1615 = vmax.f32 %v1359, 0.0
        %v1616 = vmax.f32 %v1360, 0.0
        %v1617 = vmax.f32 %v1361, 0.0
        %v1618 = vmax.f32 %v1362, 0.0
        %v1619 = vmax.f32 %v1363, 0.0
        %v1620 = vmax.f32 %v1364, 0.0
        %v1621 = vmax.f32 %v1365, 0.0
        %v1622 = vmax.f32 %v1366, 0.0
        %v1623 = vmax.f32 %v1367, 0.0
        %v1624 = vmax.f32 %v1368, 0.0
        %v1625 = vmax.f32 %v1369, 0.0
        %v1626 = vmax.f32 %v1370, 0.0
        %v1627 = vmax.f32 %v1371, 0.0
        %v1628 = vmax.f32 %v1372, 0.0
        %v1629 = vmax.f32 %v1373, 0.0
        %v1630 = vmax.f32 %v1374, 0.0
        %v1631 = vmax.f32 %v1375, 0.0
        %v1632 = vmax.f32 %v1376, 0.0
        %v1633 = vmax.f32 %v1377, 0.0
        %v1634 = vmax.f32 %v1378, 0.0
        %v1635 = vmax.f32 %v1379, 0.0
        %v1636 = vmax.f32 %v1380, 0.0
        %v1637 = vmax.f32 %v1381, 0.0
        %v1638 = vmax.f32 %v1382, 0.0
        %v1639 = vmax.f32 %v1383, 0.0
        %v1640 = vmax.f32 %v1384, 0.0
        %v1641 = vmax.f32 %v1385, 0.0
        %v1642 = vmax.f32 %v1386, 0.0
        %v1643 = vmax.f32 %v1387, 0.0
        %v1644 = vmax.f32 %v1388, 0.0
        %v1645 = vmax.f32 %v1389, 0.0
        %v1646 = vmax.f32 %v1390, 0.0
        %v1647 = vmax.f32 %v1391, 0.0
        %v1648 = vmax.f32 %v1392, 0.0
        %v1649 = vmax.f32 %v1393, 0.0
        %v1650 = vmax.f32 %v1394, 0.0
        %v1651 = vmax.f32 %v1395, 0.0
        %v1652 = vmax.f32 %v1396, 0.0
        %v1653 = vmax.f32 %v1397, 0.0
        %v1654 = vmax.f32 %v1398, 0.0
        %v1655 = vmax.f32 %v1399, 0.0
        %v1656 = vmax.f32 %v1400, 0.0
        %v1657 = vmax.f32 %v1401, 0.0
        %v1658 = vmax.f32 %v1402, 0.0
        %v1659 = vmax.f32 %v1403, 0.0
        %v1660 = vmax.f32 %v1404, 0.0
        %v1661 = vmax.f32 %v1405, 0.0
        %v1662 = vmax.f32 %v1406, 0.0
        %v1663 = vmax.f32 %v1407, 0.0
        %v1664 = vmax.f32 %v1408, 0.0
        %v1665 = vmax.f32 %v1409, 0.0
        %v1666 = vmax.f32 %v1410, 0.0
        %v1667 = vmax.f32 %v1411, 0.0
        %v1668 = vmax.f32 %v1412, 0.0
        %v1669 = vmax.f32 %v1413, 0.0
        %v1670 = vmax.f32 %v1414, 0.0
        %v1671 = vmax.f32 %v1415, 0.0
        %v1672 = vmax.f32 %v1416, 0.0
        %v1673 = vmax.f32 %v1417, 0.0
        %v1674 = vmax.f32 %v1418, 0.0
        %v1675 = vmax.f32 %v1419, 0.0
        %v1676 = vadd.f32 %v1420, %v1424
        %v1677 = vadd.f32 %v1676, %v1428
        %v1678 = vadd.f32 %v1677, %v1432
        %v1679 = vadd.f32 %v1678, %v1436
        %v1680 = vadd.f32 %v1679, %v1440
        %v1681 = vadd.f32 %v1680, %v1444
        %v1682 = vadd.f32 %v1681, %v1448
        %v1683 = vadd.f32 %v1682, %v1452
        %v1684 = vadd.f32 %v1683, %v1456
        %v1685 = vadd.f32 %v1684, %v1460
        %v1686 = vadd.f32 %v1685, %v1464
        %v1687 = vadd.f32 %v1686, %v1468
        %v1688 = vadd.f32 %v1687, %v1472
        %v1689 = vadd.f32 %v1688, %v1476
        %v1690 = vadd.f32 %v1689, %v1480
        %v1691 = vadd.f32 %v1690, %v1484
        %v1692 = vadd.f32 %v1691, %v1488
        %v1693 = vadd.f32 %v1692, %v1492
        %v1694 = vadd.f32 %v1693, %v1496
        %v1695 = vadd.f32 %v1694, %v1500
        %v1696 = vadd.f32 %v1695, %v1504
        %v1697 = vadd.f32 %v1696, %v1508
        %v1698 = vadd.f32 %v1697, %v1512
        %v1699 = vadd.f32 %v1698, %v1516
        %v1700 = vadd.f32 %v1699, %v1520
        %v1701 = vadd.f32 %v1700, %v1524
        %v1702 = vadd.f32 %v1701, %v1528
        %v1703 = vadd.f32 %v1702, %v1532
        %v1704 = vadd.f32 %v1703, %v1536
        %v1705 = vadd.f32 %v1704, %v1540
        %v1706 = vadd.f32 %v1705, %v1544
        %v1707 = vadd.f32 %v1706, %v1548
        %v1708 = vadd.f32 %v1707, %v1552
        %v1709 = vadd.f32 %v1708, %v1556
        %v1710 = vadd.f32 %v1709, %v1560
        %v1711 = vadd.f32 %v1710, %v1564
        %v1712 = vadd.f32 %v1711, %v1568
        %v1713 = vadd.f32 %v1712, %v1572
        %v1714 = vadd.f32 %v1713, %v1576
        %v1715 = vadd.f32 %v1714, %v1580
        %v1716 = vadd.f32 %v1715, %v1584
        %v1717 = vadd.f32 %v1716, %v1588
        %v1718 = vadd.f32 %v1717, %v1592
        %v1719 = vadd.f32 %v1718, %v1596
        %v1720 = vadd.f32 %v1719, %v1600
        %v1721 = vadd.f32 %v1720, %v1604
        %v1722 = vadd.f32 %v1721, %v1608
        %v1723 = vadd.f32 %v1722, %v1612
        %v1724 = vadd.f32 %v1723, %v1616
        %v1725 = vadd.f32 %v1724, %v1620
        %v1726 = vadd.f32 %v1725, %v1624
        %v1727 = vadd.f32 %v1726, %v1628
        %v1728 = vadd.f32 %v1727, %v1632
        %v1729 = vadd.f32 %v1728, %v1636
        %v1730 = vadd.f32 %v1729, %v1640
        %v1731 = vadd.f32 %v1730, %v1644
        %v1732 = vadd.f32 %v1731, %v1648
        %v1733 = vadd.f32 %v1732, %v1652
        %v1734 = vadd.f32 %v1733, %v1656
        %v1735 = vadd.f32 %v1734, %v1660
        %v1736 = vadd.f32 %v1735, %v1664
        %v1737 = vadd.f32 %v1736, %v1668
        %v1738 = vadd.f32 %v1737, %v1672
        %v1739 = vrot.slane %v1738, 4
        %v1740 = vadd.f32 %v1738, %v1739
        %v1741 = vrot.slane %v1740, 2
        %v1742 = vadd.f32 %v1740, %v1741
        %v1743 = vrot.slane %v1742, 1
        %v1744 = vadd.f32 %v1742, %v1743
        %v1745 = vadd.f32 %v1421, %v1425
        %v1746 = vadd.f32 %v1745, %v1429
        %v1747 = vadd.f32 %v1746, %v1433
        %v1748 = vadd.f32 %v1747, %v1437
        %v1749 = vadd.f32 %v1748, %v1441
        %v1750 = vadd.f32 %v1749, %v1445
        %v1751 = vadd.f32 %v1750, %v1449
        %v1752 = vadd.f32 %v1751, %v1453
        %v1753 = vadd.f32 %v1752, %v1457
        %v1754 = vadd.f32 %v1753, %v1461
        %v1755 = vadd.f32 %v1754, %v1465
        %v1756 = vadd.f32 %v1755, %v1469
        %v1757 = vadd.f32 %v1756, %v1473
        %v1758 = vadd.f32 %v1757, %v1477
        %v1759 = vadd.f32 %v1758, %v1481
        %v1760 = vadd.f32 %v1759, %v1485
        %v1761 = vadd.f32 %v1760, %v1489
        %v1762 = vadd.f32 %v1761, %v1493
        %v1763 = vadd.f32 %v1762, %v1497
        %v1764 = vadd.f32 %v1763, %v1501
        %v1765 = vadd.f32 %v1764, %v1505
        %v1766 = vadd.f32 %v1765, %v1509
        %v1767 = vadd.f32 %v1766, %v1513
        %v1768 = vadd.f32 %v1767, %v1517
        %v1769 = vadd.f32 %v1768, %v1521
        %v1770 = vadd.f32 %v1769, %v1525
        %v1771 = vadd.f32 %v1770, %v1529
        %v1772 = vadd.f32 %v1771, %v1533
        %v1773 = vadd.f32 %v1772, %v1537
        %v1774 = vadd.f32 %v1773, %v1541
        %v1775 = vadd.f32 %v1774, %v1545
        %v1776 = vadd.f32 %v1775, %v1549
        %v1777 = vadd.f32 %v1776, %v1553
        %v1778 = vadd.f32 %v1777, %v1557
        %v1779 = vadd.f32 %v1778, %v1561
        %v1780 = vadd.f32 %v1779, %v1565
        %v1781 = vadd.f32 %v1780, %v1569
        %v1782 = vadd.f32 %v1781, %v1573
        %v1783 = vadd.f32 %v1782, %v1577
        %v1784 = vadd.f32 %v1783, %v1581
        %v1785 = vadd.f32 %v1784, %v1585
        %v1786 = vadd.f32 %v1785, %v1589
        %v1787 = vadd.f32 %v1786, %v1593
        %v1788 = vadd.f32 %v1787, %v1597
        %v1789 = vadd.f32 %v1788, %v1601
        %v1790 = vadd.f32 %v1789, %v1605
        %v1791 = vadd.f32 %v1790, %v1609
        %v1792 = vadd.f32 %v1791, %v1613
        %v1793 = vadd.f32 %v1792, %v1617
        %v1794 = vadd.f32 %v1793, %v1621
        %v1795 = vadd.f32 %v1794, %v1625
        %v1796 = vadd.f32 %v1795, %v1629
        %v1797 = vadd.f32 %v1796, %v1633
        %v1798 = vadd.f32 %v1797, %v1637
        %v1799 = vadd.f32 %v1798, %v1641
        %v1800 = vadd.f32 %v1799, %v1645
        %v1801 = vadd.f32 %v1800, %v1649
        %v1802 = vadd.f32 %v1801, %v1653
        %v1803 = vadd.f32 %v1802, %v1657
        %v1804 = vadd.f32 %v1803, %v1661
        %v1805 = vadd.f32 %v1804, %v1665
        %v1806 = vadd.f32 %v1805, %v1669
        %v1807 = vadd.f32 %v1806, %v1673
        %v1808 = vrot.slane %v1807, 4
        %v1809 = vadd.f32 %v1807, %v1808
        %v1810 = vrot.slane %v1809, 2
        %v1811 = vadd.f32 %v1809, %v1810
        %v1812 = vrot.slane %v1811, 1
        %v1813 = vadd.f32 %v1811, %v1812
        %v1814 = vadd.f32 %v1422, %v1426
        %v1815 = vadd.f32 %v1814, %v1430
        %v1816 = vadd.f32 %v1815, %v1434
        %v1817 = vadd.f32 %v1816, %v1438
        %v1818 = vadd.f32 %v1817, %v1442
        %v1819 = vadd.f32 %v1818, %v1446
        %v1820 = vadd.f32 %v1819, %v1450
        %v1821 = vadd.f32 %v1820, %v1454
        %v1822 = vadd.f32 %v1821, %v1458
        %v1823 = vadd.f32 %v1822, %v1462
        %v1824 = vadd.f32 %v1823, %v1466
        %v1825 = vadd.f32 %v1824, %v1470
        %v1826 = vadd.f32 %v1825, %v1474
        %v1827 = vadd.f32 %v1826, %v1478
        %v1828 = vadd.f32 %v1827, %v1482
        %v1829 = vadd.f32 %v1828, %v1486
        %v1830 = vadd.f32 %v1829, %v1490
        %v1831 = vadd.f32 %v1830, %v1494
        %v1832 = vadd.f32 %v1831, %v1498
        %v1833 = vadd.f32 %v1832, %v1502
        %v1834 = vadd.f32 %v1833, %v1506
        %v1835 = vadd.f32 %v1834, %v1510
        %v1836 = vadd.f32 %v1835, %v1514
        %v1837 = vadd.f32 %v1836, %v1518
        %v1838 = vadd.f32 %v1837, %v1522
        %v1839 = vadd.f32 %v1838, %v1526
        %v1840 = vadd.f32 %v1839, %v1530
        %v1841 = vadd.f32 %v1840, %v1534
        %v1842 = vadd.f32 %v1841, %v1538
        %v1843 = vadd.f32 %v1842, %v1542
        %v1844 = vadd.f32 %v1843, %v1546
        %v1845 = vadd.f32 %v1844, %v1550
        %v1846 = vadd.f32 %v1845, %v1554
        %v1847 = vadd.f32 %v1846, %v1558
        %v1848 = vadd.f32 %v1847, %v1562
        %v1849 = vadd.f32 %v1848, %v1566
        %v1850 = vadd.f32 %v1849, %v1570
        %v1851 = vadd.f32 %v1850, %v1574
        %v1852 = vadd.f32 %v1851, %v1578
        %v1853 = vadd.f32 %v1852, %v1582
        %v1854 = vadd.f32 %v1853, %v1586
        %v1855 = vadd.f32 %v1854, %v1590
        %v1856 = vadd.f32 %v1855, %v1594
        %v1857 = vadd.f32 %v1856, %v1598
        %v1858 = vadd.f32 %v1857, %v1602
        %v1859 = vadd.f32 %v1858, %v1606
        %v1860 = vadd.f32 %v1859, %v1610
        %v1861 = vadd.f32 %v1860, %v1614
        %v1862 = vadd.f32 %v1861, %v1618
        %v1863 = vadd.f32 %v1862, %v1622
        %v1864 = vadd.f32 %v1863, %v1626
        %v1865 = vadd.f32 %v1864, %v1630
        %v1866 = vadd.f32 %v1865, %v1634
        %v1867 = vadd.f32 %v1866, %v1638
        %v1868 = vadd.f32 %v1867, %v1642
        %v1869 = vadd.f32 %v1868, %v1646
        %v1870 = vadd.f32 %v1869, %v1650
        %v1871 = vadd.f32 %v1870, %v1654
        %v1872 = vadd.f32 %v1871, %v1658
        %v1873 = vadd.f32 %v1872, %v1662
        %v1874 = vadd.f32 %v1873, %v1666
        %v1875 = vadd.f32 %v1874, %v1670
        %v1876 = vadd.f32 %v1875, %v1674
        %v1877 = vrot.slane %v1876, 4
        %v1878 = vadd.f32 %v1876, %v1877
        %v1879 = vrot.slane %v1878, 2
        %v1880 = vadd.f32 %v1878, %v1879
        %v1881 = vrot.slane %v1880, 1
        %v1882 = vadd.f32 %v1880, %v1881
        %v1883 = vadd.f32 %v1423, %v1427
        %v1884 = vadd.f32 %v1883, %v1431
        %v1885 = vadd.f32 %v1884, %v1435
        %v1886 = vadd.f32 %v1885, %v1439
        %v1887 = vadd.f32 %v1886, %v1443
        %v1888 = vadd.f32 %v1887, %v1447
        %v1889 = vadd.f32 %v1888, %v1451
        %v1890 = vadd.f32 %v1889, %v1455
        %v1891 = vadd.f32 %v1890, %v1459
        %v1892 = vadd.f32 %v1891, %v1463
        %v1893 = vadd.f32 %v1892, %v1467
        %v1894 = vadd.f32 %v1893, %v1471
        %v1895 = vadd.f32 %v1894, %v1475
        %v1896 = vadd.f32 %v1895, %v1479
        %v1897 = vadd.f32 %v1896, %v1483
        %v1898 = vadd.f32 %v1897, %v1487
        %v1899 = vadd.f32 %v1898, %v1491
        %v1900 = vadd.f32 %v1899, %v1495
        %v1901 = vadd.f32 %v1900, %v1499
        %v1902 = vadd.f32 %v1901, %v1503
        %v1903 = vadd.f32 %v1902, %v1507
        %v1904 = vadd.f32 %v1903, %v1511
        %v1905 = vadd.f32 %v1904, %v1515
        %v1906 = vadd.f32 %v1905, %v1519
        %v1907 = vadd.f32 %v1906, %v1523
        %v1908 = vadd.f32 %v1907, %v1527
        %v1909 = vadd.f32 %v1908, %v1531
        %v1910 = vadd.f32 %v1909, %v1535
        %v1911 = vadd.f32 %v1910, %v1539
        %v1912 = vadd.f32 %v1911, %v1543
        %v1913 = vadd.f32 %v1912, %v1547
        %v1914 = vadd.f32 %v1913, %v1551
        %v1915 = vadd.f32 %v1914, %v1555
        %v1916 = vadd.f32 %v1915, %v1559
        %v1917 = vadd.f32 %v1916, %v1563
        %v1918 = vadd.f32 %v1917, %v1567
        %v1919 = vadd.f32 %v1918, %v1571
        %v1920 = vadd.f32 %v1919, %v1575
        %v1921 = vadd.f32 %v1920, %v1579
        %v1922 = vadd.f32 %v1921, %v1583
        %v1923 = vadd.f32 %v1922, %v1587
        %v1924 = vadd.f32 %v1923, %v1591
        %v1925 = vadd.f32 %v1924, %v1595
        %v1926 = vadd.f32 %v1925, %v1599
        %v1927 = vadd.f32 %v1926, %v1603
        %v1928 = vadd.f32 %v1927, %v1607
        %v1929 = vadd.f32 %v1928, %v1611
        %v1930 = vadd.f32 %v1929, %v1615
        %v1931 = vadd.f32 %v1930, %v1619
        %v1932 = vadd.f32 %v1931, %v1623
        %v1933 = vadd.f32 %v1932, %v1627
        %v1934 = vadd.f32 %v1933, %v1631
        %v1935 = vadd.f32 %v1934, %v1635
        %v1936 = vadd.f32 %v1935, %v1639
        %v1937 = vadd.f32 %v1936, %v1643
        %v1938 = vadd.f32 %v1937, %v1647
        %v1939 = vadd.f32 %v1938, %v1651
        %v1940 = vadd.f32 %v1939, %v1655
        %v1941 = vadd.f32 %v1940, %v1659
        %v1942 = vadd.f32 %v1941, %v1663
        %v1943 = vadd.f32 %v1942, %v1667
        %v1944 = vadd.f32 %v1943, %v1671
        %v1945 = vadd.f32 %v1944, %v1675
        %v1946 = vrot.slane %v1945, 4
        %v1947 = vadd.f32 %v1945, %v1946
        %v1948 = vrot.slane %v1947, 2
        %v1949 = vadd.f32 %v1947, %v1948
        %v1950 = vrot.slane %v1949, 1
        %v1951 = vadd.f32 %v1949, %v1950
        %v1952 = vmax.f32 %v505, 0.0
        %v1953 = vmul.f32 %v1952, 112.0
        %v1955 = vperm.slane %v1953, 0
        %v1956 = vperm.slane %v1953, 1
        %v1957 = vperm.slane %v1953, 2
        %v1958 = vperm.slane %v1953, 3
        %v1963 = vsub.f32 %v1744, %v1955
        %v1964 = vsub.f32 %v1813, %v1956
        %v1965 = vsub.f32 %v1882, %v1957
        %v1966 = vsub.f32 %v1951, %v1958
        %v1967 = vmul.f32 %v1963, 0.0025
        %v1968 = vmul.f32 %v1964, 0.0025
        %v1969 = vmul.f32 %v1965, 0.0025
        %v1970 = vmul.f32 %v1966, 0.0025
        %v1971 = vld [vmem:[%s6] sm:$0x77]
        %v1972 = vld [vmem:[%s6 + $0x8] sm:$0x77]
        %v1973 = vld [vmem:[%s7] sm:$0xf]
        %v1974 = vld [vmem:[%s500] sm:$0xff]
        %v1975 = vld [vmem:[%s500 + $0x8] sm:$0xff]
        %v1976 = vld [vmem:[%s500 + $0x10] sm:$0xff]
        %v1977 = vld [vmem:[%s500 + $0x18] sm:$0xff]
        %v1978 = vld [vmem:[%s500 + $0x20] sm:$0xff]
        %v1979 = vld [vmem:[%s500 + $0x28] sm:$0xff]
        %v1980 = vld [vmem:[%s500 + $0x30] sm:$0xff]
        %v1981 = vld [vmem:[%s500 + $0x38] sm:$0xff]
        %v1982 = vld [vmem:[%s500 + $0x40] sm:$0xff]
        %v1983 = vld [vmem:[%s500 + $0x48] sm:$0xff]
        %v1984 = vld [vmem:[%s500 + $0x50] sm:$0xff]
        %v1985 = vld [vmem:[%s500 + $0x58] sm:$0xff]
        %v1986 = vld [vmem:[%s500 + $0x60] sm:$0xff]
        %v1987 = vld [vmem:[%s500 + $0x68] sm:$0xff]
        %v1988 = vld [vmem:[%s500 + $0x70] sm:$0xff]
        %v1989 = vld [vmem:[%s500 + $0x78] sm:$0xff]
        %v1990 = vld [vmem:[%s500 + $0x80] sm:$0xff]
        %v1991 = vld [vmem:[%s500 + $0x88] sm:$0xff]
        %v1992 = vld [vmem:[%s500 + $0x90] sm:$0xff]
        %v1993 = vld [vmem:[%s500 + $0x98] sm:$0xff]
        %v1994 = vld [vmem:[%s500 + $0xa0] sm:$0xff]
        %v1995 = vld [vmem:[%s500 + $0xa8] sm:$0xff]
        %v1996 = vld [vmem:[%s500 + $0xb0] sm:$0xff]
        %v1997 = vld [vmem:[%s500 + $0xb8] sm:$0xff]
        %v1998 = vld [vmem:[%s500 + $0xc0] sm:$0xff]
        %v1999 = vld [vmem:[%s500 + $0xc8] sm:$0xff]
        %v2000 = vld [vmem:[%s500 + $0xd0] sm:$0xff]
        %v2001 = vld [vmem:[%s500 + $0xd8] sm:$0xff]
        %v2002 = vld [vmem:[%s500 + $0xe0] sm:$0xff]
        %v2003 = vld [vmem:[%s500 + $0xe8] sm:$0xff]
        %v2004 = vld [vmem:[%s500 + $0xf0] sm:$0xff]
        %v2005 = vld [vmem:[%s500 + $0xf8] sm:$0xff]
        %v2006 = vld [vmem:[%s500 + $0x100] sm:$0xff]
        %v2007 = vld [vmem:[%s500 + $0x108] sm:$0xff]
        %v2008 = vld [vmem:[%s500 + $0x110] sm:$0xff]
        %v2009 = vld [vmem:[%s500 + $0x118] sm:$0xff]
        %v2010 = vld [vmem:[%s500 + $0x120] sm:$0xff]
        %v2011 = vld [vmem:[%s500 + $0x128] sm:$0xff]
        %v2012 = vld [vmem:[%s500 + $0x130] sm:$0xff]
        %v2013 = vld [vmem:[%s500 + $0x138] sm:$0xff]
        %v2014 = vld [vmem:[%s500 + $0x140] sm:$0xff]
        %v2015 = vld [vmem:[%s500 + $0x148] sm:$0xff]
        %v2016 = vld [vmem:[%s500 + $0x150] sm:$0xff]
        %v2017 = vld [vmem:[%s500 + $0x158] sm:$0xff]
        %v2018 = vld [vmem:[%s500 + $0x160] sm:$0xff]
        %v2019 = vld [vmem:[%s500 + $0x168] sm:$0xff]
        %v2020 = vld [vmem:[%s500 + $0x170] sm:$0xff]
        %v2021 = vld [vmem:[%s500 + $0x178] sm:$0xff]
        %v2022 = vld [vmem:[%s500 + $0x180] sm:$0xff]
        %v2023 = vld [vmem:[%s500 + $0x188] sm:$0xff]
        %v2024 = vld [vmem:[%s500 + $0x190] sm:$0xff]
        %v2025 = vld [vmem:[%s500 + $0x198] sm:$0xff]
        %v2026 = vld [vmem:[%s500 + $0x1a0] sm:$0xff]
        %v2027 = vld [vmem:[%s500 + $0x1a8] sm:$0xff]
        %v2028 = vld [vmem:[%s500 + $0x1b0] sm:$0xff]
        %v2029 = vld [vmem:[%s500 + $0x1b8] sm:$0xff]
        %v2030 = vld [vmem:[%s500 + $0x1c0] sm:$0xff]
        %v2031 = vld [vmem:[%s500 + $0x1c8] sm:$0xff]
        %v2032 = vld [vmem:[%s500 + $0x1d0] sm:$0xff]
        %v2033 = vld [vmem:[%s500 + $0x1d8] sm:$0xff]
        %v2034 = vld [vmem:[%s500 + $0x1e0] sm:$0xff]
        %v2035 = vld [vmem:[%s500 + $0x1e8] sm:$0xff]
        %v2036 = vld [vmem:[%s500 + $0x1f0] sm:$0xff]
        %v2037 = vld [vmem:[%s500 + $0x1f8] sm:$0xff]
        %v2038 = vld [vmem:[%s500 + $0x200] sm:$0xff]
        %v2039 = vld [vmem:[%s500 + $0x208] sm:$0xff]
        %v2040 = vld [vmem:[%s500 + $0x210] sm:$0xff]
        %v2041 = vld [vmem:[%s500 + $0x218] sm:$0xff]
        %v2042 = vld [vmem:[%s500 + $0x220] sm:$0xff]
        %v2043 = vld [vmem:[%s500 + $0x228] sm:$0xff]
        %v2044 = vld [vmem:[%s500 + $0x230] sm:$0xff]
        %v2045 = vld [vmem:[%s500 + $0x238] sm:$0xff]
        %v2046 = vld [vmem:[%s500 + $0x240] sm:$0xff]
        %v2047 = vld [vmem:[%s500 + $0x248] sm:$0xff]
        %v2048 = vld [vmem:[%s500 + $0x250] sm:$0xff]
        %v2049 = vld [vmem:[%s500 + $0x258] sm:$0xff]
        %v2050 = vld [vmem:[%s500 + $0x260] sm:$0xff]
        %v2051 = vld [vmem:[%s500 + $0x268] sm:$0xff]
        %v2052 = vld [vmem:[%s500 + $0x270] sm:$0xff]
        %v2053 = vld [vmem:[%s500 + $0x278] sm:$0xff]
        %v2054 = vld [vmem:[%s500 + $0x280] sm:$0xff]
        %v2055 = vld [vmem:[%s500 + $0x288] sm:$0xff]
        %v2056 = vld [vmem:[%s500 + $0x290] sm:$0xff]
        %v2057 = vld [vmem:[%s500 + $0x298] sm:$0xff]
        %v2058 = vld [vmem:[%s500 + $0x2a0] sm:$0xff]
        %v2059 = vld [vmem:[%s500 + $0x2a8] sm:$0xff]
        %v2060 = vld [vmem:[%s500 + $0x2b0] sm:$0xff]
        %v2061 = vld [vmem:[%s500 + $0x2b8] sm:$0xff]
        %v2062 = vld [vmem:[%s500 + $0x2c0] sm:$0xff]
        %v2063 = vld [vmem:[%s500 + $0x2c8] sm:$0xff]
        %v2064 = vld [vmem:[%s500 + $0x2d0] sm:$0xff]
        %v2065 = vld [vmem:[%s500 + $0x2d8] sm:$0xff]
        %v2066 = vld [vmem:[%s500 + $0x2e0] sm:$0xff]
        %v2067 = vld [vmem:[%s500 + $0x2e8] sm:$0xff]
        %v2068 = vld [vmem:[%s500 + $0x2f0] sm:$0xff]
        %v2069 = vld [vmem:[%s500 + $0x2f8] sm:$0xff]
        %v2070 = vld [vmem:[%s500 + $0x300] sm:$0xff]
        %v2071 = vld [vmem:[%s500 + $0x308] sm:$0xff]
        %v2072 = vld [vmem:[%s500 + $0x310] sm:$0xff]
        %v2073 = vld [vmem:[%s500 + $0x318] sm:$0xff]
        %v2074 = vld [vmem:[%s500 + $0x320] sm:$0xff]
        %v2075 = vld [vmem:[%s500 + $0x328] sm:$0xff]
        %v2076 = vld [vmem:[%s500 + $0x330] sm:$0xff]
        %v2077 = vld [vmem:[%s500 + $0x338] sm:$0xff]
        %v2078 = vld [vmem:[%s500 + $0x340] sm:$0xff]
        %v2079 = vld [vmem:[%s500 + $0x348] sm:$0xff]
        %v2080 = vld [vmem:[%s500 + $0x350] sm:$0xff]
        %v2081 = vld [vmem:[%s500 + $0x358] sm:$0xff]
        %v2082 = vld [vmem:[%s500 + $0x360] sm:$0xff]
        %v2083 = vld [vmem:[%s500 + $0x368] sm:$0xff]
        %v2084 = vld [vmem:[%s500 + $0x370] sm:$0xff]
        %v2085 = vld [vmem:[%s500 + $0x378] sm:$0xff]
        %v2086 = vld [vmem:[%s500 + $0x380] sm:$0xff]
        %v2087 = vld [vmem:[%s500 + $0x388] sm:$0xff]
        %v2088 = vld [vmem:[%s500 + $0x390] sm:$0xff]
        %v2089 = vld [vmem:[%s500 + $0x398] sm:$0xff]
        %v2090 = vld [vmem:[%s500 + $0x3a0] sm:$0xff]
        %v2091 = vld [vmem:[%s500 + $0x3a8] sm:$0xff]
        %v2092 = vld [vmem:[%s500 + $0x3b0] sm:$0xff]
        %v2093 = vld [vmem:[%s500 + $0x3b8] sm:$0xff]
        %v2094 = vld [vmem:[%s500 + $0x3c0] sm:$0xff]
        %v2095 = vld [vmem:[%s500 + $0x3c8] sm:$0xff]
        %v2096 = vld [vmem:[%s500 + $0x3d0] sm:$0xff]
        %v2097 = vld [vmem:[%s500 + $0x3d8] sm:$0xff]
        %v2098 = vld [vmem:[%s500 + $0x3e0] sm:$0xff]
        %v2099 = vld [vmem:[%s500 + $0x3e8] sm:$0xff]
        %v2100 = vld [vmem:[%s500 + $0x3f0] sm:$0xff]
        %v2101 = vld [vmem:[%s500 + $0x3f8] sm:$0xff]
        %v2102 = vld [vmem:[%s500 + $0x400] sm:$0xff]
        %v2103 = vld [vmem:[%s500 + $0x408] sm:$0xff]
        %v2104 = vld [vmem:[%s500 + $0x410] sm:$0xff]
        %v2105 = vld [vmem:[%s500 + $0x418] sm:$0xff]
        %v2106 = vld [vmem:[%s500 + $0x420] sm:$0xff]
        %v2107 = vld [vmem:[%s500 + $0x428] sm:$0xff]
        %v2108 = vld [vmem:[%s500 + $0x430] sm:$0xff]
        %v2109 = vld [vmem:[%s500 + $0x438] sm:$0xff]
        %v2110 = vld [vmem:[%s500 + $0x440] sm:$0xff]
        %v2111 = vld [vmem:[%s500 + $0x448] sm:$0xff]
        %v2112 = vld [vmem:[%s500 + $0x450] sm:$0xff]
        %v2113 = vld [vmem:[%s500 + $0x458] sm:$0xff]
        %v2114 = vld [vmem:[%s500 + $0x460] sm:$0xff]
        %v2115 = vld [vmem:[%s500 + $0x468] sm:$0xff]
        %v2116 = vld [vmem:[%s500 + $0x470] sm:$0xff]
        %v2117 = vld [vmem:[%s500 + $0x478] sm:$0xff]
        %v2118 = vld [vmem:[%s500 + $0x480] sm:$0xff]
        %v2119 = vld [vmem:[%s500 + $0x488] sm:$0xff]
        %v2120 = vld [vmem:[%s500 + $0x490] sm:$0xff]
        %v2121 = vld [vmem:[%s500 + $0x498] sm:$0xff]
        %v2122 = vld [vmem:[%s500 + $0x4a0] sm:$0xff]
        %v2123 = vld [vmem:[%s500 + $0x4a8] sm:$0xff]
        %v2124 = vld [vmem:[%s500 + $0x4b0] sm:$0xff]
        %v2125 = vld [vmem:[%s500 + $0x4b8] sm:$0xff]
        %v2126 = vld [vmem:[%s500 + $0x4c0] sm:$0xff]
        %v2127 = vld [vmem:[%s500 + $0x4c8] sm:$0xff]
        %v2128 = vld [vmem:[%s500 + $0x4d0] sm:$0xff]
        %v2129 = vld [vmem:[%s500 + $0x4d8] sm:$0xff]
        %v2130 = vld [vmem:[%s500 + $0x4e0] sm:$0xff]
        %v2131 = vld [vmem:[%s500 + $0x4e8] sm:$0xff]
        %v2132 = vld [vmem:[%s500 + $0x4f0] sm:$0xff]
        %v2133 = vld [vmem:[%s500 + $0x4f8] sm:$0xff]
        %2135 = vset.pattern.permute.xlu0 0
        %2136 = vperm.xlu0 %2135, %v1974
        %v2137 = vpop.permute.xlu0 %2136
        %2140 = vset.pattern.permute.xlu0 0
        %2141 = vperm.xlu0 %2140, %v1975
        %v2142 = vpop.permute.xlu0 %2141
        %2145 = vset.pattern.permute.xlu0 0
        %2146 = vperm.xlu0 %2145, %v1976
        %v2147 = vpop.permute.xlu0 %2146
        %2150 = vset.pattern.permute.xlu0 0
        %2151 = vperm.xlu0 %2150, %v1977
        %v2152 = vpop.permute.xlu0 %2151
        %2155 = vset.pattern.permute.xlu0 0
        %2156 = vperm.xlu0 %2155, %v1978
        %v2157 = vpop.permute.xlu0 %2156
        %2160 = vset.pattern.permute.xlu0 0
        %2161 = vperm.xlu0 %2160, %v1979
        %v2162 = vpop.permute.xlu0 %2161
        %2165 = vset.pattern.permute.xlu0 0
        %2166 = vperm.xlu0 %2165, %v1980
        %v2167 = vpop.permute.xlu0 %2166
        %2170 = vset.pattern.permute.xlu0 0
        %2171 = vperm.xlu0 %2170, %v1981
        %v2172 = vpop.permute.xlu0 %2171
        %2175 = vset.pattern.permute.xlu0 0
        %2176 = vperm.xlu0 %2175, %v1982
        %v2177 = vpop.permute.xlu0 %2176
        %2180 = vset.pattern.permute.xlu0 0
        %2181 = vperm.xlu0 %2180, %v1983
        %v2182 = vpop.permute.xlu0 %2181
        %2185 = vset.pattern.permute.xlu0 0
        %2186 = vperm.xlu0 %2185, %v1984
        %v2187 = vpop.permute.xlu0 %2186
        %2190 = vset.pattern.permute.xlu0 0
        %2191 = vperm.xlu0 %2190, %v1985
        %v2192 = vpop.permute.xlu0 %2191
        %2195 = vset.pattern.permute.xlu0 0
        %2196 = vperm.xlu0 %2195, %v1986
        %v2197 = vpop.permute.xlu0 %2196
        %2200 = vset.pattern.permute.xlu0 0
        %2201 = vperm.xlu0 %2200, %v1987
        %v2202 = vpop.permute.xlu0 %2201
        %2205 = vset.pattern.permute.xlu0 0
        %2206 = vperm.xlu0 %2205, %v1988
        %v2207 = vpop.permute.xlu0 %2206
        %2210 = vset.pattern.permute.xlu0 0
        %2211 = vperm.xlu0 %2210, %v1989
        %v2212 = vpop.permute.xlu0 %2211
        %2215 = vset.pattern.permute.xlu0 0
        %2216 = vperm.xlu0 %2215, %v1990
        %v2217 = vpop.permute.xlu0 %2216
        %2220 = vset.pattern.permute.xlu0 0
        %2221 = vperm.xlu0 %2220, %v1991
        %v2222 = vpop.permute.xlu0 %2221
        %2225 = vset.pattern.permute.xlu0 0
        %2226 = vperm.xlu0 %2225, %v1992
        %v2227 = vpop.permute.xlu0 %2226
        %2230 = vset.pattern.permute.xlu0 0
        %2231 = vperm.xlu0 %2230, %v1993
        %v2232 = vpop.permute.xlu0 %2231
        %2235 = vset.pattern.permute.xlu0 0
        %2236 = vperm.xlu0 %2235, %v1994
        %v2237 = vpop.permute.xlu0 %2236
        %2240 = vset.pattern.permute.xlu0 0
        %2241 = vperm.xlu0 %2240, %v1995
        %v2242 = vpop.permute.xlu0 %2241
        %2245 = vset.pattern.permute.xlu0 0
        %2246 = vperm.xlu0 %2245, %v1996
        %v2247 = vpop.permute.xlu0 %2246
        %2250 = vset.pattern.permute.xlu0 0
        %2251 = vperm.xlu0 %2250, %v1997
        %v2252 = vpop.permute.xlu0 %2251
        %2255 = vset.pattern.permute.xlu0 0
        %2256 = vperm.xlu0 %2255, %v1998
        %v2257 = vpop.permute.xlu0 %2256
        %2260 = vset.pattern.permute.xlu0 0
        %2261 = vperm.xlu0 %2260, %v1999
        %v2262 = vpop.permute.xlu0 %2261
        %2265 = vset.pattern.permute.xlu0 0
        %2266 = vperm.xlu0 %2265, %v2000
        %v2267 = vpop.permute.xlu0 %2266
        %2270 = vset.pattern.permute.xlu0 0
        %2271 = vperm.xlu0 %2270, %v2001
        %v2272 = vpop.permute.xlu0 %2271
        %2275 = vset.pattern.permute.xlu0 0
        %2276 = vperm.xlu0 %2275, %v2002
        %v2277 = vpop.permute.xlu0 %2276
        %2280 = vset.pattern.permute.xlu0 0
        %2281 = vperm.xlu0 %2280, %v2003
        %v2282 = vpop.permute.xlu0 %2281
        %2285 = vset.pattern.permute.xlu0 0
        %2286 = vperm.xlu0 %2285, %v2004
        %v2287 = vpop.permute.xlu0 %2286
        %2290 = vset.pattern.permute.xlu0 0
        %2291 = vperm.xlu0 %2290, %v2005
        %v2292 = vpop.permute.xlu0 %2291
        %2295 = vset.pattern.permute.xlu0 0
        %2296 = vperm.xlu0 %2295, %v2006
        %v2297 = vpop.permute.xlu0 %2296
        %2300 = vset.pattern.permute.xlu0 0
        %2301 = vperm.xlu0 %2300, %v2007
        %v2302 = vpop.permute.xlu0 %2301
        %2305 = vset.pattern.permute.xlu0 0
        %2306 = vperm.xlu0 %2305, %v2008
        %v2307 = vpop.permute.xlu0 %2306
        %2310 = vset.pattern.permute.xlu0 0
        %2311 = vperm.xlu0 %2310, %v2009
        %v2312 = vpop.permute.xlu0 %2311
        %2315 = vset.pattern.permute.xlu0 0
        %2316 = vperm.xlu0 %2315, %v2010
        %v2317 = vpop.permute.xlu0 %2316
        %2320 = vset.pattern.permute.xlu0 0
        %2321 = vperm.xlu0 %2320, %v2011
        %v2322 = vpop.permute.xlu0 %2321
        %2325 = vset.pattern.permute.xlu0 0
        %2326 = vperm.xlu0 %2325, %v2012
        %v2327 = vpop.permute.xlu0 %2326
        %2330 = vset.pattern.permute.xlu0 0
        %2331 = vperm.xlu0 %2330, %v2013
        %v2332 = vpop.permute.xlu0 %2331
        %2335 = vset.pattern.permute.xlu0 0
        %2336 = vperm.xlu0 %2335, %v2014
        %v2337 = vpop.permute.xlu0 %2336
        %2340 = vset.pattern.permute.xlu0 0
        %2341 = vperm.xlu0 %2340, %v2015
        %v2342 = vpop.permute.xlu0 %2341
        %2345 = vset.pattern.permute.xlu0 0
        %2346 = vperm.xlu0 %2345, %v2016
        %v2347 = vpop.permute.xlu0 %2346
        %2350 = vset.pattern.permute.xlu0 0
        %2351 = vperm.xlu0 %2350, %v2017
        %v2352 = vpop.permute.xlu0 %2351
        %2355 = vset.pattern.permute.xlu0 0
        %2356 = vperm.xlu0 %2355, %v2018
        %v2357 = vpop.permute.xlu0 %2356
        %2360 = vset.pattern.permute.xlu0 0
        %2361 = vperm.xlu0 %2360, %v2019
        %v2362 = vpop.permute.xlu0 %2361
        %2365 = vset.pattern.permute.xlu0 0
        %2366 = vperm.xlu0 %2365, %v2020
        %v2367 = vpop.permute.xlu0 %2366
        %2370 = vset.pattern.permute.xlu0 0
        %2371 = vperm.xlu0 %2370, %v2021
        %v2372 = vpop.permute.xlu0 %2371
        %2375 = vset.pattern.permute.xlu0 0
        %2376 = vperm.xlu0 %2375, %v2022
        %v2377 = vpop.permute.xlu0 %2376
        %2380 = vset.pattern.permute.xlu0 0
        %2381 = vperm.xlu0 %2380, %v2023
        %v2382 = vpop.permute.xlu0 %2381
        %2385 = vset.pattern.permute.xlu0 0
        %2386 = vperm.xlu0 %2385, %v2024
        %v2387 = vpop.permute.xlu0 %2386
        %2390 = vset.pattern.permute.xlu0 0
        %2391 = vperm.xlu0 %2390, %v2025
        %v2392 = vpop.permute.xlu0 %2391
        %2395 = vset.pattern.permute.xlu0 0
        %2396 = vperm.xlu0 %2395, %v2026
        %v2397 = vpop.permute.xlu0 %2396
        %2400 = vset.pattern.permute.xlu0 0
        %2401 = vperm.xlu0 %2400, %v2027
        %v2402 = vpop.permute.xlu0 %2401
        %2405 = vset.pattern.permute.xlu0 0
        %2406 = vperm.xlu0 %2405, %v2028
        %v2407 = vpop.permute.xlu0 %2406
        %2410 = vset.pattern.permute.xlu0 0
        %2411 = vperm.xlu0 %2410, %v2029
        %v2412 = vpop.permute.xlu0 %2411
        %2415 = vset.pattern.permute.xlu0 0
        %2416 = vperm.xlu0 %2415, %v2030
        %v2417 = vpop.permute.xlu0 %2416
        %2420 = vset.pattern.permute.xlu0 0
        %2421 = vperm.xlu0 %2420, %v2031
        %v2422 = vpop.permute.xlu0 %2421
        %2425 = vset.pattern.permute.xlu0 0
        %2426 = vperm.xlu0 %2425, %v2032
        %v2427 = vpop.permute.xlu0 %2426
        %2430 = vset.pattern.permute.xlu0 0
        %2431 = vperm.xlu0 %2430, %v2033
        %v2432 = vpop.permute.xlu0 %2431
        %2435 = vset.pattern.permute.xlu0 0
        %2436 = vperm.xlu0 %2435, %v2034
        %v2437 = vpop.permute.xlu0 %2436
        %2440 = vset.pattern.permute.xlu0 0
        %2441 = vperm.xlu0 %2440, %v2035
        %v2442 = vpop.permute.xlu0 %2441
        %2445 = vset.pattern.permute.xlu0 0
        %2446 = vperm.xlu0 %2445, %v2036
        %v2447 = vpop.permute.xlu0 %2446
        %2450 = vset.pattern.permute.xlu0 0
        %2451 = vperm.xlu0 %2450, %v2037
        %v2452 = vpop.permute.xlu0 %2451
        %2455 = vset.pattern.permute.xlu0 0
        %2456 = vperm.xlu0 %2455, %v2038
        %v2457 = vpop.permute.xlu0 %2456
        %2460 = vset.pattern.permute.xlu0 0
        %2461 = vperm.xlu0 %2460, %v2039
        %v2462 = vpop.permute.xlu0 %2461
        %2465 = vset.pattern.permute.xlu0 0
        %2466 = vperm.xlu0 %2465, %v2040
        %v2467 = vpop.permute.xlu0 %2466
        %2470 = vset.pattern.permute.xlu0 0
        %2471 = vperm.xlu0 %2470, %v2041
        %v2472 = vpop.permute.xlu0 %2471
        %2475 = vset.pattern.permute.xlu0 0
        %2476 = vperm.xlu0 %2475, %v2042
        %v2477 = vpop.permute.xlu0 %2476
        %2480 = vset.pattern.permute.xlu0 0
        %2481 = vperm.xlu0 %2480, %v2043
        %v2482 = vpop.permute.xlu0 %2481
        %2485 = vset.pattern.permute.xlu0 0
        %2486 = vperm.xlu0 %2485, %v2044
        %v2487 = vpop.permute.xlu0 %2486
        %2490 = vset.pattern.permute.xlu0 0
        %2491 = vperm.xlu0 %2490, %v2045
        %v2492 = vpop.permute.xlu0 %2491
        %2495 = vset.pattern.permute.xlu0 0
        %2496 = vperm.xlu0 %2495, %v2046
        %v2497 = vpop.permute.xlu0 %2496
        %2500 = vset.pattern.permute.xlu0 0
        %2501 = vperm.xlu0 %2500, %v2047
        %v2502 = vpop.permute.xlu0 %2501
        %2505 = vset.pattern.permute.xlu0 0
        %2506 = vperm.xlu0 %2505, %v2048
        %v2507 = vpop.permute.xlu0 %2506
        %2510 = vset.pattern.permute.xlu0 0
        %2511 = vperm.xlu0 %2510, %v2049
        %v2512 = vpop.permute.xlu0 %2511
        %2515 = vset.pattern.permute.xlu0 0
        %2516 = vperm.xlu0 %2515, %v2050
        %v2517 = vpop.permute.xlu0 %2516
        %2520 = vset.pattern.permute.xlu0 0
        %2521 = vperm.xlu0 %2520, %v2051
        %v2522 = vpop.permute.xlu0 %2521
        %2525 = vset.pattern.permute.xlu0 0
        %2526 = vperm.xlu0 %2525, %v2052
        %v2527 = vpop.permute.xlu0 %2526
        %2530 = vset.pattern.permute.xlu0 0
        %2531 = vperm.xlu0 %2530, %v2053
        %v2532 = vpop.permute.xlu0 %2531
        %2535 = vset.pattern.permute.xlu0 0
        %2536 = vperm.xlu0 %2535, %v2054
        %v2537 = vpop.permute.xlu0 %2536
        %2540 = vset.pattern.permute.xlu0 0
        %2541 = vperm.xlu0 %2540, %v2055
        %v2542 = vpop.permute.xlu0 %2541
        %2545 = vset.pattern.permute.xlu0 0
        %2546 = vperm.xlu0 %2545, %v2056
        %v2547 = vpop.permute.xlu0 %2546
        %2550 = vset.pattern.permute.xlu0 0
        %2551 = vperm.xlu0 %2550, %v2057
        %v2552 = vpop.permute.xlu0 %2551
        %2555 = vset.pattern.permute.xlu0 0
        %2556 = vperm.xlu0 %2555, %v2058
        %v2557 = vpop.permute.xlu0 %2556
        %2560 = vset.pattern.permute.xlu0 0
        %2561 = vperm.xlu0 %2560, %v2059
        %v2562 = vpop.permute.xlu0 %2561
        %2565 = vset.pattern.permute.xlu0 0
        %2566 = vperm.xlu0 %2565, %v2060
        %v2567 = vpop.permute.xlu0 %2566
        %2570 = vset.pattern.permute.xlu0 0
        %2571 = vperm.xlu0 %2570, %v2061
        %v2572 = vpop.permute.xlu0 %2571
        %2575 = vset.pattern.permute.xlu0 0
        %2576 = vperm.xlu0 %2575, %v2062
        %v2577 = vpop.permute.xlu0 %2576
        %2580 = vset.pattern.permute.xlu0 0
        %2581 = vperm.xlu0 %2580, %v2063
        %v2582 = vpop.permute.xlu0 %2581
        %2585 = vset.pattern.permute.xlu0 0
        %2586 = vperm.xlu0 %2585, %v2064
        %v2587 = vpop.permute.xlu0 %2586
        %2590 = vset.pattern.permute.xlu0 0
        %2591 = vperm.xlu0 %2590, %v2065
        %v2592 = vpop.permute.xlu0 %2591
        %2595 = vset.pattern.permute.xlu0 0
        %2596 = vperm.xlu0 %2595, %v2066
        %v2597 = vpop.permute.xlu0 %2596
        %2600 = vset.pattern.permute.xlu0 0
        %2601 = vperm.xlu0 %2600, %v2067
        %v2602 = vpop.permute.xlu0 %2601
        %2605 = vset.pattern.permute.xlu0 0
        %2606 = vperm.xlu0 %2605, %v2068
        %v2607 = vpop.permute.xlu0 %2606
        %2610 = vset.pattern.permute.xlu0 0
        %2611 = vperm.xlu0 %2610, %v2069
        %v2612 = vpop.permute.xlu0 %2611
        %2615 = vset.pattern.permute.xlu0 0
        %2616 = vperm.xlu0 %2615, %v2070
        %v2617 = vpop.permute.xlu0 %2616
        %2620 = vset.pattern.permute.xlu0 0
        %2621 = vperm.xlu0 %2620, %v2071
        %v2622 = vpop.permute.xlu0 %2621
        %2625 = vset.pattern.permute.xlu0 0
        %2626 = vperm.xlu0 %2625, %v2072
        %v2627 = vpop.permute.xlu0 %2626
        %2630 = vset.pattern.permute.xlu0 0
        %2631 = vperm.xlu0 %2630, %v2073
        %v2632 = vpop.permute.xlu0 %2631
        %2635 = vset.pattern.permute.xlu0 0
        %2636 = vperm.xlu0 %2635, %v2074
        %v2637 = vpop.permute.xlu0 %2636
        %2640 = vset.pattern.permute.xlu0 0
        %2641 = vperm.xlu0 %2640, %v2075
        %v2642 = vpop.permute.xlu0 %2641
        %2645 = vset.pattern.permute.xlu0 0
        %2646 = vperm.xlu0 %2645, %v2076
        %v2647 = vpop.permute.xlu0 %2646
        %2650 = vset.pattern.permute.xlu0 0
        %2651 = vperm.xlu0 %2650, %v2077
        %v2652 = vpop.permute.xlu0 %2651
        %2655 = vset.pattern.permute.xlu0 0
        %2656 = vperm.xlu0 %2655, %v2078
        %v2657 = vpop.permute.xlu0 %2656
        %2660 = vset.pattern.permute.xlu0 0
        %2661 = vperm.xlu0 %2660, %v2079
        %v2662 = vpop.permute.xlu0 %2661
        %2665 = vset.pattern.permute.xlu0 0
        %2666 = vperm.xlu0 %2665, %v2080
        %v2667 = vpop.permute.xlu0 %2666
        %2670 = vset.pattern.permute.xlu0 0
        %2671 = vperm.xlu0 %2670, %v2081
        %v2672 = vpop.permute.xlu0 %2671
        %2675 = vset.pattern.permute.xlu0 0
        %2676 = vperm.xlu0 %2675, %v2082
        %v2677 = vpop.permute.xlu0 %2676
        %2680 = vset.pattern.permute.xlu0 0
        %2681 = vperm.xlu0 %2680, %v2083
        %v2682 = vpop.permute.xlu0 %2681
        %2685 = vset.pattern.permute.xlu0 0
        %2686 = vperm.xlu0 %2685, %v2084
        %v2687 = vpop.permute.xlu0 %2686
        %2690 = vset.pattern.permute.xlu0 0
        %2691 = vperm.xlu0 %2690, %v2085
        %v2692 = vpop.permute.xlu0 %2691
        %2695 = vset.pattern.permute.xlu0 0
        %2696 = vperm.xlu0 %2695, %v2086
        %v2697 = vpop.permute.xlu0 %2696
        %2700 = vset.pattern.permute.xlu0 0
        %2701 = vperm.xlu0 %2700, %v2087
        %v2702 = vpop.permute.xlu0 %2701
        %2705 = vset.pattern.permute.xlu0 0
        %2706 = vperm.xlu0 %2705, %v2088
        %v2707 = vpop.permute.xlu0 %2706
        %2710 = vset.pattern.permute.xlu0 0
        %2711 = vperm.xlu0 %2710, %v2089
        %v2712 = vpop.permute.xlu0 %2711
        %2715 = vset.pattern.permute.xlu0 0
        %2716 = vperm.xlu0 %2715, %v2090
        %v2717 = vpop.permute.xlu0 %2716
        %2720 = vset.pattern.permute.xlu0 0
        %2721 = vperm.xlu0 %2720, %v2091
        %v2722 = vpop.permute.xlu0 %2721
        %2725 = vset.pattern.permute.xlu0 0
        %2726 = vperm.xlu0 %2725, %v2092
        %v2727 = vpop.permute.xlu0 %2726
        %2730 = vset.pattern.permute.xlu0 0
        %2731 = vperm.xlu0 %2730, %v2093
        %v2732 = vpop.permute.xlu0 %2731
        %2735 = vset.pattern.permute.xlu0 0
        %2736 = vperm.xlu0 %2735, %v2094
        %v2737 = vpop.permute.xlu0 %2736
        %2740 = vset.pattern.permute.xlu0 0
        %2741 = vperm.xlu0 %2740, %v2095
        %v2742 = vpop.permute.xlu0 %2741
        %2745 = vset.pattern.permute.xlu0 0
        %2746 = vperm.xlu0 %2745, %v2096
        %v2747 = vpop.permute.xlu0 %2746
        %2750 = vset.pattern.permute.xlu0 0
        %2751 = vperm.xlu0 %2750, %v2097
        %v2752 = vpop.permute.xlu0 %2751
        %2755 = vset.pattern.permute.xlu0 0
        %2756 = vperm.xlu0 %2755, %v2098
        %v2757 = vpop.permute.xlu0 %2756
        %2760 = vset.pattern.permute.xlu0 0
        %2761 = vperm.xlu0 %2760, %v2099
        %v2762 = vpop.permute.xlu0 %2761
        %2765 = vset.pattern.permute.xlu0 0
        %2766 = vperm.xlu0 %2765, %v2100
        %v2767 = vpop.permute.xlu0 %2766
        %2770 = vset.pattern.permute.xlu0 0
        %2771 = vperm.xlu0 %2770, %v2101
        %v2772 = vpop.permute.xlu0 %2771
        %2775 = vset.pattern.permute.xlu0 0
        %2776 = vperm.xlu0 %2775, %v2102
        %v2777 = vpop.permute.xlu0 %2776
        %2780 = vset.pattern.permute.xlu0 0
        %2781 = vperm.xlu0 %2780, %v2103
        %v2782 = vpop.permute.xlu0 %2781
        %2785 = vset.pattern.permute.xlu0 0
        %2786 = vperm.xlu0 %2785, %v2104
        %v2787 = vpop.permute.xlu0 %2786
        %2790 = vset.pattern.permute.xlu0 0
        %2791 = vperm.xlu0 %2790, %v2105
        %v2792 = vpop.permute.xlu0 %2791
        %2795 = vset.pattern.permute.xlu0 0
        %2796 = vperm.xlu0 %2795, %v2106
        %v2797 = vpop.permute.xlu0 %2796
        %2800 = vset.pattern.permute.xlu0 0
        %2801 = vperm.xlu0 %2800, %v2107
        %v2802 = vpop.permute.xlu0 %2801
        %2805 = vset.pattern.permute.xlu0 0
        %2806 = vperm.xlu0 %2805, %v2108
        %v2807 = vpop.permute.xlu0 %2806
        %2810 = vset.pattern.permute.xlu0 0
        %2811 = vperm.xlu0 %2810, %v2109
        %v2812 = vpop.permute.xlu0 %2811
        %2815 = vset.pattern.permute.xlu0 0
        %2816 = vperm.xlu0 %2815, %v2110
        %v2817 = vpop.permute.xlu0 %2816
        %2820 = vset.pattern.permute.xlu0 0
        %2821 = vperm.xlu0 %2820, %v2111
        %v2822 = vpop.permute.xlu0 %2821
        %2825 = vset.pattern.permute.xlu0 0
        %2826 = vperm.xlu0 %2825, %v2112
        %v2827 = vpop.permute.xlu0 %2826
        %2830 = vset.pattern.permute.xlu0 0
        %2831 = vperm.xlu0 %2830, %v2113
        %v2832 = vpop.permute.xlu0 %2831
        %2835 = vset.pattern.permute.xlu0 0
        %2836 = vperm.xlu0 %2835, %v2114
        %v2837 = vpop.permute.xlu0 %2836
        %2840 = vset.pattern.permute.xlu0 0
        %2841 = vperm.xlu0 %2840, %v2115
        %v2842 = vpop.permute.xlu0 %2841
        %2845 = vset.pattern.permute.xlu0 0
        %2846 = vperm.xlu0 %2845, %v2116
        %v2847 = vpop.permute.xlu0 %2846
        %2850 = vset.pattern.permute.xlu0 0
        %2851 = vperm.xlu0 %2850, %v2117
        %v2852 = vpop.permute.xlu0 %2851
        %2855 = vset.pattern.permute.xlu0 0
        %2856 = vperm.xlu0 %2855, %v2118
        %v2857 = vpop.permute.xlu0 %2856
        %2860 = vset.pattern.permute.xlu0 0
        %2861 = vperm.xlu0 %2860, %v2119
        %v2862 = vpop.permute.xlu0 %2861
        %2865 = vset.pattern.permute.xlu0 0
        %2866 = vperm.xlu0 %2865, %v2120
        %v2867 = vpop.permute.xlu0 %2866
        %2870 = vset.pattern.permute.xlu0 0
        %2871 = vperm.xlu0 %2870, %v2121
        %v2872 = vpop.permute.xlu0 %2871
        %2875 = vset.pattern.permute.xlu0 0
        %2876 = vperm.xlu0 %2875, %v2122
        %v2877 = vpop.permute.xlu0 %2876
        %2880 = vset.pattern.permute.xlu0 0
        %2881 = vperm.xlu0 %2880, %v2123
        %v2882 = vpop.permute.xlu0 %2881
        %2885 = vset.pattern.permute.xlu0 0
        %2886 = vperm.xlu0 %2885, %v2124
        %v2887 = vpop.permute.xlu0 %2886
        %2890 = vset.pattern.permute.xlu0 0
        %2891 = vperm.xlu0 %2890, %v2125
        %v2892 = vpop.permute.xlu0 %2891
        %2895 = vset.pattern.permute.xlu0 0
        %2896 = vperm.xlu0 %2895, %v2126
        %v2897 = vpop.permute.xlu0 %2896
        %2900 = vset.pattern.permute.xlu0 0
        %2901 = vperm.xlu0 %2900, %v2127
        %v2902 = vpop.permute.xlu0 %2901
        %2905 = vset.pattern.permute.xlu0 0
        %2906 = vperm.xlu0 %2905, %v2128
        %v2907 = vpop.permute.xlu0 %2906
        %2910 = vset.pattern.permute.xlu0 0
        %2911 = vperm.xlu0 %2910, %v2129
        %v2912 = vpop.permute.xlu0 %2911
        %2915 = vset.pattern.permute.xlu0 0
        %2916 = vperm.xlu0 %2915, %v2130
        %v2917 = vpop.permute.xlu0 %2916
        %2920 = vset.pattern.permute.xlu0 0
        %2921 = vperm.xlu0 %2920, %v2131
        %v2922 = vpop.permute.xlu0 %2921
        %2925 = vset.pattern.permute.xlu0 0
        %2926 = vperm.xlu0 %2925, %v2132
        %v2927 = vpop.permute.xlu0 %2926
        %2930 = vset.pattern.permute.xlu0 0
        %2931 = vperm.xlu0 %2930, %v2133
        %v2932 = vpop.permute.xlu0 %2931
        %v2936 = vperm.slane %v1971, 0
        %v2937 = vperm.slane %v1971, 4
        %v2938 = vperm.slane %v1972, 0
        %v2939 = vperm.slane %v1972, 4
        %v2944 = vperm.slane %v2936, 0
        %v2945 = vperm.slane %v2937, 0
        %v2946 = vperm.slane %v2938, 0
        %v2947 = vperm.slane %v2939, 0
        %v2948 = vmul.f32 %v2137, %v2944
        %v2949 = vmul.f32 %v2137, %v2945
        %v2950 = vmul.f32 %v2137, %v2946
        %v2951 = vmul.f32 %v2137, %v2947
        %v2952 = vmul.f32 %v2142, %v2944
        %v2953 = vmul.f32 %v2142, %v2945
        %v2954 = vmul.f32 %v2142, %v2946
        %v2955 = vmul.f32 %v2142, %v2947
        %v2956 = vmul.f32 %v2147, %v2944
        %v2957 = vmul.f32 %v2147, %v2945
        %v2958 = vmul.f32 %v2147, %v2946
        %v2959 = vmul.f32 %v2147, %v2947
        %v2960 = vmul.f32 %v2152, %v2944
        %v2961 = vmul.f32 %v2152, %v2945
        %v2962 = vmul.f32 %v2152, %v2946
        %v2963 = vmul.f32 %v2152, %v2947
        %v2964 = vmul.f32 %v2157, %v2944
        %v2965 = vmul.f32 %v2157, %v2945
        %v2966 = vmul.f32 %v2157, %v2946
        %v2967 = vmul.f32 %v2157, %v2947
        %v2968 = vmul.f32 %v2162, %v2944
        %v2969 = vmul.f32 %v2162, %v2945
        %v2970 = vmul.f32 %v2162, %v2946
        %v2971 = vmul.f32 %v2162, %v2947
        %v2972 = vmul.f32 %v2167, %v2944
        %v2973 = vmul.f32 %v2167, %v2945
        %v2974 = vmul.f32 %v2167, %v2946
        %v2975 = vmul.f32 %v2167, %v2947
        %v2976 = vmul.f32 %v2172, %v2944
        %v2977 = vmul.f32 %v2172, %v2945
        %v2978 = vmul.f32 %v2172, %v2946
        %v2979 = vmul.f32 %v2172, %v2947
        %v2980 = vmul.f32 %v2177, %v2944
        %v2981 = vmul.f32 %v2177, %v2945
        %v2982 = vmul.f32 %v2177, %v2946
        %v2983 = vmul.f32 %v2177, %v2947
        %v2984 = vmul.f32 %v2182, %v2944
        %v2985 = vmul.f32 %v2182, %v2945
        %v2986 = vmul.f32 %v2182, %v2946
        %v2987 = vmul.f32 %v2182, %v2947
        %v2988 = vmul.f32 %v2187, %v2944
        %v2989 = vmul.f32 %v2187, %v2945
        %v2990 = vmul.f32 %v2187, %v2946
        %v2991 = vmul.f32 %v2187, %v2947
        %v2992 = vmul.f32 %v2192, %v2944
        %v2993 = vmul.f32 %v2192, %v2945
        %v2994 = vmul.f32 %v2192, %v2946
        %v2995 = vmul.f32 %v2192, %v2947
        %v2996 = vmul.f32 %v2197, %v2944
        %v2997 = vmul.f32 %v2197, %v2945
        %v2998 = vmul.f32 %v2197, %v2946
        %v2999 = vmul.f32 %v2197, %v2947
        %v3000 = vmul.f32 %v2202, %v2944
        %v3001 = vmul.f32 %v2202, %v2945
        %v3002 = vmul.f32 %v2202, %v2946
        %v3003 = vmul.f32 %v2202, %v2947
        %v3004 = vmul.f32 %v2207, %v2944
        %v3005 = vmul.f32 %v2207, %v2945
        %v3006 = vmul.f32 %v2207, %v2946
        %v3007 = vmul.f32 %v2207, %v2947
        %v3008 = vmul.f32 %v2212, %v2944
        %v3009 = vmul.f32 %v2212, %v2945
        %v3010 = vmul.f32 %v2212, %v2946
        %v3011 = vmul.f32 %v2212, %v2947
        %v3012 = vmul.f32 %v2217, %v2944
        %v3013 = vmul.f32 %v2217, %v2945
        %v3014 = vmul.f32 %v2217, %v2946
        %v3015 = vmul.f32 %v2217, %v2947
        %v3016 = vmul.f32 %v2222, %v2944
        %v3017 = vmul.f32 %v2222, %v2945
        %v3018 = vmul.f32 %v2222, %v2946
        %v3019 = vmul.f32 %v2222, %v2947
        %v3020 = vmul.f32 %v2227, %v2944
        %v3021 = vmul.f32 %v2227, %v2945
        %v3022 = vmul.f32 %v2227, %v2946
        %v3023 = vmul.f32 %v2227, %v2947
        %v3024 = vmul.f32 %v2232, %v2944
        %v3025 = vmul.f32 %v2232, %v2945
        %v3026 = vmul.f32 %v2232, %v2946
        %v3027 = vmul.f32 %v2232, %v2947
        %v3028 = vmul.f32 %v2237, %v2944
        %v3029 = vmul.f32 %v2237, %v2945
        %v3030 = vmul.f32 %v2237, %v2946
        %v3031 = vmul.f32 %v2237, %v2947
        %v3032 = vmul.f32 %v2242, %v2944
        %v3033 = vmul.f32 %v2242, %v2945
        %v3034 = vmul.f32 %v2242, %v2946
        %v3035 = vmul.f32 %v2242, %v2947
        %v3036 = vmul.f32 %v2247, %v2944
        %v3037 = vmul.f32 %v2247, %v2945
        %v3038 = vmul.f32 %v2247, %v2946
        %v3039 = vmul.f32 %v2247, %v2947
        %v3040 = vmul.f32 %v2252, %v2944
        %v3041 = vmul.f32 %v2252, %v2945
        %v3042 = vmul.f32 %v2252, %v2946
        %v3043 = vmul.f32 %v2252, %v2947
        %v3044 = vmul.f32 %v2257, %v2944
        %v3045 = vmul.f32 %v2257, %v2945
        %v3046 = vmul.f32 %v2257, %v2946
        %v3047 = vmul.f32 %v2257, %v2947
        %v3048 = vmul.f32 %v2262, %v2944
        %v3049 = vmul.f32 %v2262, %v2945
        %v3050 = vmul.f32 %v2262, %v2946
        %v3051 = vmul.f32 %v2262, %v2947
        %v3052 = vmul.f32 %v2267, %v2944
        %v3053 = vmul.f32 %v2267, %v2945
        %v3054 = vmul.f32 %v2267, %v2946
        %v3055 = vmul.f32 %v2267, %v2947
        %v3056 = vmul.f32 %v2272, %v2944
        %v3057 = vmul.f32 %v2272, %v2945
        %v3058 = vmul.f32 %v2272, %v2946
        %v3059 = vmul.f32 %v2272, %v2947
        %v3060 = vmul.f32 %v2277, %v2944
        %v3061 = vmul.f32 %v2277, %v2945
        %v3062 = vmul.f32 %v2277, %v2946
        %v3063 = vmul.f32 %v2277, %v2947
        %v3064 = vmul.f32 %v2282, %v2944
        %v3065 = vmul.f32 %v2282, %v2945
        %v3066 = vmul.f32 %v2282, %v2946
        %v3067 = vmul.f32 %v2282, %v2947
        %v3068 = vmul.f32 %v2287, %v2944
        %v3069 = vmul.f32 %v2287, %v2945
        %v3070 = vmul.f32 %v2287, %v2946
        %v3071 = vmul.f32 %v2287, %v2947
        %v3072 = vmul.f32 %v2292, %v2944
        %v3073 = vmul.f32 %v2292, %v2945
        %v3074 = vmul.f32 %v2292, %v2946
        %v3075 = vmul.f32 %v2292, %v2947
        %v3076 = vmul.f32 %v2297, %v2944
        %v3077 = vmul.f32 %v2297, %v2945
        %v3078 = vmul.f32 %v2297, %v2946
        %v3079 = vmul.f32 %v2297, %v2947
        %v3080 = vmul.f32 %v2302, %v2944
        %v3081 = vmul.f32 %v2302, %v2945
        %v3082 = vmul.f32 %v2302, %v2946
        %v3083 = vmul.f32 %v2302, %v2947
        %v3084 = vmul.f32 %v2307, %v2944
        %v3085 = vmul.f32 %v2307, %v2945
        %v3086 = vmul.f32 %v2307, %v2946
        %v3087 = vmul.f32 %v2307, %v2947
        %v3088 = vmul.f32 %v2312, %v2944
        %v3089 = vmul.f32 %v2312, %v2945
        %v3090 = vmul.f32 %v2312, %v2946
        %v3091 = vmul.f32 %v2312, %v2947
        %v3092 = vmul.f32 %v2317, %v2944
        %v3093 = vmul.f32 %v2317, %v2945
        %v3094 = vmul.f32 %v2317, %v2946
        %v3095 = vmul.f32 %v2317, %v2947
        %v3096 = vmul.f32 %v2322, %v2944
        %v3097 = vmul.f32 %v2322, %v2945
        %v3098 = vmul.f32 %v2322, %v2946
        %v3099 = vmul.f32 %v2322, %v2947
        %v3100 = vmul.f32 %v2327, %v2944
        %v3101 = vmul.f32 %v2327, %v2945
        %v3102 = vmul.f32 %v2327, %v2946
        %v3103 = vmul.f32 %v2327, %v2947
        %v3104 = vmul.f32 %v2332, %v2944
        %v3105 = vmul.f32 %v2332, %v2945
        %v3106 = vmul.f32 %v2332, %v2946
        %v3107 = vmul.f32 %v2332, %v2947
        %v3108 = vmul.f32 %v2337, %v2944
        %v3109 = vmul.f32 %v2337, %v2945
        %v3110 = vmul.f32 %v2337, %v2946
        %v3111 = vmul.f32 %v2337, %v2947
        %v3112 = vmul.f32 %v2342, %v2944
        %v3113 = vmul.f32 %v2342, %v2945
        %v3114 = vmul.f32 %v2342, %v2946
        %v3115 = vmul.f32 %v2342, %v2947
        %v3116 = vmul.f32 %v2347, %v2944
        %v3117 = vmul.f32 %v2347, %v2945
        %v3118 = vmul.f32 %v2347, %v2946
        %v3119 = vmul.f32 %v2347, %v2947
        %v3120 = vmul.f32 %v2352, %v2944
        %v3121 = vmul.f32 %v2352, %v2945
        %v3122 = vmul.f32 %v2352, %v2946
        %v3123 = vmul.f32 %v2352, %v2947
        %v3124 = vmul.f32 %v2357, %v2944
        %v3125 = vmul.f32 %v2357, %v2945
        %v3126 = vmul.f32 %v2357, %v2946
        %v3127 = vmul.f32 %v2357, %v2947
        %v3128 = vmul.f32 %v2362, %v2944
        %v3129 = vmul.f32 %v2362, %v2945
        %v3130 = vmul.f32 %v2362, %v2946
        %v3131 = vmul.f32 %v2362, %v2947
        %v3132 = vmul.f32 %v2367, %v2944
        %v3133 = vmul.f32 %v2367, %v2945
        %v3134 = vmul.f32 %v2367, %v2946
        %v3135 = vmul.f32 %v2367, %v2947
        %v3136 = vmul.f32 %v2372, %v2944
        %v3137 = vmul.f32 %v2372, %v2945
        %v3138 = vmul.f32 %v2372, %v2946
        %v3139 = vmul.f32 %v2372, %v2947
        %v3140 = vmul.f32 %v2377, %v2944
        %v3141 = vmul.f32 %v2377, %v2945
        %v3142 = vmul.f32 %v2377, %v2946
        %v3143 = vmul.f32 %v2377, %v2947
        %v3144 = vmul.f32 %v2382, %v2944
        %v3145 = vmul.f32 %v2382, %v2945
        %v3146 = vmul.f32 %v2382, %v2946
        %v3147 = vmul.f32 %v2382, %v2947
        %v3148 = vmul.f32 %v2387, %v2944
        %v3149 = vmul.f32 %v2387, %v2945
        %v3150 = vmul.f32 %v2387, %v2946
        %v3151 = vmul.f32 %v2387, %v2947
        %v3152 = vmul.f32 %v2392, %v2944
        %v3153 = vmul.f32 %v2392, %v2945
        %v3154 = vmul.f32 %v2392, %v2946
        %v3155 = vmul.f32 %v2392, %v2947
        %v3156 = vmul.f32 %v2397, %v2944
        %v3157 = vmul.f32 %v2397, %v2945
        %v3158 = vmul.f32 %v2397, %v2946
        %v3159 = vmul.f32 %v2397, %v2947
        %v3160 = vmul.f32 %v2402, %v2944
        %v3161 = vmul.f32 %v2402, %v2945
        %v3162 = vmul.f32 %v2402, %v2946
        %v3163 = vmul.f32 %v2402, %v2947
        %v3164 = vmul.f32 %v2407, %v2944
        %v3165 = vmul.f32 %v2407, %v2945
        %v3166 = vmul.f32 %v2407, %v2946
        %v3167 = vmul.f32 %v2407, %v2947
        %v3168 = vmul.f32 %v2412, %v2944
        %v3169 = vmul.f32 %v2412, %v2945
        %v3170 = vmul.f32 %v2412, %v2946
        %v3171 = vmul.f32 %v2412, %v2947
        %v3172 = vmul.f32 %v2417, %v2944
        %v3173 = vmul.f32 %v2417, %v2945
        %v3174 = vmul.f32 %v2417, %v2946
        %v3175 = vmul.f32 %v2417, %v2947
        %v3176 = vmul.f32 %v2422, %v2944
        %v3177 = vmul.f32 %v2422, %v2945
        %v3178 = vmul.f32 %v2422, %v2946
        %v3179 = vmul.f32 %v2422, %v2947
        %v3180 = vmul.f32 %v2427, %v2944
        %v3181 = vmul.f32 %v2427, %v2945
        %v3182 = vmul.f32 %v2427, %v2946
        %v3183 = vmul.f32 %v2427, %v2947
        %v3184 = vmul.f32 %v2432, %v2944
        %v3185 = vmul.f32 %v2432, %v2945
        %v3186 = vmul.f32 %v2432, %v2946
        %v3187 = vmul.f32 %v2432, %v2947
        %v3188 = vmul.f32 %v2437, %v2944
        %v3189 = vmul.f32 %v2437, %v2945
        %v3190 = vmul.f32 %v2437, %v2946
        %v3191 = vmul.f32 %v2437, %v2947
        %v3192 = vmul.f32 %v2442, %v2944
        %v3193 = vmul.f32 %v2442, %v2945
        %v3194 = vmul.f32 %v2442, %v2946
        %v3195 = vmul.f32 %v2442, %v2947
        %v3196 = vmul.f32 %v2447, %v2944
        %v3197 = vmul.f32 %v2447, %v2945
        %v3198 = vmul.f32 %v2447, %v2946
        %v3199 = vmul.f32 %v2447, %v2947
        %v3200 = vmul.f32 %v2452, %v2944
        %v3201 = vmul.f32 %v2452, %v2945
        %v3202 = vmul.f32 %v2452, %v2946
        %v3203 = vmul.f32 %v2452, %v2947
        %v3204 = vmul.f32 %v2457, %v2944
        %v3205 = vmul.f32 %v2457, %v2945
        %v3206 = vmul.f32 %v2457, %v2946
        %v3207 = vmul.f32 %v2457, %v2947
        %v3208 = vmul.f32 %v2462, %v2944
        %v3209 = vmul.f32 %v2462, %v2945
        %v3210 = vmul.f32 %v2462, %v2946
        %v3211 = vmul.f32 %v2462, %v2947
        %v3212 = vmul.f32 %v2467, %v2944
        %v3213 = vmul.f32 %v2467, %v2945
        %v3214 = vmul.f32 %v2467, %v2946
        %v3215 = vmul.f32 %v2467, %v2947
        %v3216 = vmul.f32 %v2472, %v2944
        %v3217 = vmul.f32 %v2472, %v2945
        %v3218 = vmul.f32 %v2472, %v2946
        %v3219 = vmul.f32 %v2472, %v2947
        %v3220 = vmul.f32 %v2477, %v2944
        %v3221 = vmul.f32 %v2477, %v2945
        %v3222 = vmul.f32 %v2477, %v2946
        %v3223 = vmul.f32 %v2477, %v2947
        %v3224 = vmul.f32 %v2482, %v2944
        %v3225 = vmul.f32 %v2482, %v2945
        %v3226 = vmul.f32 %v2482, %v2946
        %v3227 = vmul.f32 %v2482, %v2947
        %v3228 = vmul.f32 %v2487, %v2944
        %v3229 = vmul.f32 %v2487, %v2945
        %v3230 = vmul.f32 %v2487, %v2946
        %v3231 = vmul.f32 %v2487, %v2947
        %v3232 = vmul.f32 %v2492, %v2944
        %v3233 = vmul.f32 %v2492, %v2945
        %v3234 = vmul.f32 %v2492, %v2946
        %v3235 = vmul.f32 %v2492, %v2947
        %v3236 = vmul.f32 %v2497, %v2944
        %v3237 = vmul.f32 %v2497, %v2945
        %v3238 = vmul.f32 %v2497, %v2946
        %v3239 = vmul.f32 %v2497, %v2947
        %v3240 = vmul.f32 %v2502, %v2944
        %v3241 = vmul.f32 %v2502, %v2945
        %v3242 = vmul.f32 %v2502, %v2946
        %v3243 = vmul.f32 %v2502, %v2947
        %v3244 = vmul.f32 %v2507, %v2944
        %v3245 = vmul.f32 %v2507, %v2945
        %v3246 = vmul.f32 %v2507, %v2946
        %v3247 = vmul.f32 %v2507, %v2947
        %v3248 = vmul.f32 %v2512, %v2944
        %v3249 = vmul.f32 %v2512, %v2945
        %v3250 = vmul.f32 %v2512, %v2946
        %v3251 = vmul.f32 %v2512, %v2947
        %v3252 = vmul.f32 %v2517, %v2944
        %v3253 = vmul.f32 %v2517, %v2945
        %v3254 = vmul.f32 %v2517, %v2946
        %v3255 = vmul.f32 %v2517, %v2947
        %v3256 = vmul.f32 %v2522, %v2944
        %v3257 = vmul.f32 %v2522, %v2945
        %v3258 = vmul.f32 %v2522, %v2946
        %v3259 = vmul.f32 %v2522, %v2947
        %v3260 = vmul.f32 %v2527, %v2944
        %v3261 = vmul.f32 %v2527, %v2945
        %v3262 = vmul.f32 %v2527, %v2946
        %v3263 = vmul.f32 %v2527, %v2947
        %v3264 = vmul.f32 %v2532, %v2944
        %v3265 = vmul.f32 %v2532, %v2945
        %v3266 = vmul.f32 %v2532, %v2946
        %v3267 = vmul.f32 %v2532, %v2947
        %v3268 = vmul.f32 %v2537, %v2944
        %v3269 = vmul.f32 %v2537, %v2945
        %v3270 = vmul.f32 %v2537, %v2946
        %v3271 = vmul.f32 %v2537, %v2947
        %v3272 = vmul.f32 %v2542, %v2944
        %v3273 = vmul.f32 %v2542, %v2945
        %v3274 = vmul.f32 %v2542, %v2946
        %v3275 = vmul.f32 %v2542, %v2947
        %v3276 = vmul.f32 %v2547, %v2944
        %v3277 = vmul.f32 %v2547, %v2945
        %v3278 = vmul.f32 %v2547, %v2946
        %v3279 = vmul.f32 %v2547, %v2947
        %v3280 = vmul.f32 %v2552, %v2944
        %v3281 = vmul.f32 %v2552, %v2945
        %v3282 = vmul.f32 %v2552, %v2946
        %v3283 = vmul.f32 %v2552, %v2947
        %v3284 = vmul.f32 %v2557, %v2944
        %v3285 = vmul.f32 %v2557, %v2945
        %v3286 = vmul.f32 %v2557, %v2946
        %v3287 = vmul.f32 %v2557, %v2947
        %v3288 = vmul.f32 %v2562, %v2944
        %v3289 = vmul.f32 %v2562, %v2945
        %v3290 = vmul.f32 %v2562, %v2946
        %v3291 = vmul.f32 %v2562, %v2947
        %v3292 = vmul.f32 %v2567, %v2944
        %v3293 = vmul.f32 %v2567, %v2945
        %v3294 = vmul.f32 %v2567, %v2946
        %v3295 = vmul.f32 %v2567, %v2947
        %v3296 = vmul.f32 %v2572, %v2944
        %v3297 = vmul.f32 %v2572, %v2945
        %v3298 = vmul.f32 %v2572, %v2946
        %v3299 = vmul.f32 %v2572, %v2947
        %v3300 = vmul.f32 %v2577, %v2944
        %v3301 = vmul.f32 %v2577, %v2945
        %v3302 = vmul.f32 %v2577, %v2946
        %v3303 = vmul.f32 %v2577, %v2947
        %v3304 = vmul.f32 %v2582, %v2944
        %v3305 = vmul.f32 %v2582, %v2945
        %v3306 = vmul.f32 %v2582, %v2946
        %v3307 = vmul.f32 %v2582, %v2947
        %v3308 = vmul.f32 %v2587, %v2944
        %v3309 = vmul.f32 %v2587, %v2945
        %v3310 = vmul.f32 %v2587, %v2946
        %v3311 = vmul.f32 %v2587, %v2947
        %v3312 = vmul.f32 %v2592, %v2944
        %v3313 = vmul.f32 %v2592, %v2945
        %v3314 = vmul.f32 %v2592, %v2946
        %v3315 = vmul.f32 %v2592, %v2947
        %v3316 = vmul.f32 %v2597, %v2944
        %v3317 = vmul.f32 %v2597, %v2945
        %v3318 = vmul.f32 %v2597, %v2946
        %v3319 = vmul.f32 %v2597, %v2947
        %v3320 = vmul.f32 %v2602, %v2944
        %v3321 = vmul.f32 %v2602, %v2945
        %v3322 = vmul.f32 %v2602, %v2946
        %v3323 = vmul.f32 %v2602, %v2947
        %v3324 = vmul.f32 %v2607, %v2944
        %v3325 = vmul.f32 %v2607, %v2945
        %v3326 = vmul.f32 %v2607, %v2946
        %v3327 = vmul.f32 %v2607, %v2947
        %v3328 = vmul.f32 %v2612, %v2944
        %v3329 = vmul.f32 %v2612, %v2945
        %v3330 = vmul.f32 %v2612, %v2946
        %v3331 = vmul.f32 %v2612, %v2947
        %v3332 = vmul.f32 %v2617, %v2944
        %v3333 = vmul.f32 %v2617, %v2945
        %v3334 = vmul.f32 %v2617, %v2946
        %v3335 = vmul.f32 %v2617, %v2947
        %v3336 = vmul.f32 %v2622, %v2944
        %v3337 = vmul.f32 %v2622, %v2945
        %v3338 = vmul.f32 %v2622, %v2946
        %v3339 = vmul.f32 %v2622, %v2947
        %v3340 = vmul.f32 %v2627, %v2944
        %v3341 = vmul.f32 %v2627, %v2945
        %v3342 = vmul.f32 %v2627, %v2946
        %v3343 = vmul.f32 %v2627, %v2947
        %v3344 = vmul.f32 %v2632, %v2944
        %v3345 = vmul.f32 %v2632, %v2945
        %v3346 = vmul.f32 %v2632, %v2946
        %v3347 = vmul.f32 %v2632, %v2947
        %v3348 = vmul.f32 %v2637, %v2944
        %v3349 = vmul.f32 %v2637, %v2945
        %v3350 = vmul.f32 %v2637, %v2946
        %v3351 = vmul.f32 %v2637, %v2947
        %v3352 = vmul.f32 %v2642, %v2944
        %v3353 = vmul.f32 %v2642, %v2945
        %v3354 = vmul.f32 %v2642, %v2946
        %v3355 = vmul.f32 %v2642, %v2947
        %v3356 = vmul.f32 %v2647, %v2944
        %v3357 = vmul.f32 %v2647, %v2945
        %v3358 = vmul.f32 %v2647, %v2946
        %v3359 = vmul.f32 %v2647, %v2947
        %v3360 = vmul.f32 %v2652, %v2944
        %v3361 = vmul.f32 %v2652, %v2945
        %v3362 = vmul.f32 %v2652, %v2946
        %v3363 = vmul.f32 %v2652, %v2947
        %v3364 = vmul.f32 %v2657, %v2944
        %v3365 = vmul.f32 %v2657, %v2945
        %v3366 = vmul.f32 %v2657, %v2946
        %v3367 = vmul.f32 %v2657, %v2947
        %v3368 = vmul.f32 %v2662, %v2944
        %v3369 = vmul.f32 %v2662, %v2945
        %v3370 = vmul.f32 %v2662, %v2946
        %v3371 = vmul.f32 %v2662, %v2947
        %v3372 = vmul.f32 %v2667, %v2944
        %v3373 = vmul.f32 %v2667, %v2945
        %v3374 = vmul.f32 %v2667, %v2946
        %v3375 = vmul.f32 %v2667, %v2947
        %v3376 = vmul.f32 %v2672, %v2944
        %v3377 = vmul.f32 %v2672, %v2945
        %v3378 = vmul.f32 %v2672, %v2946
        %v3379 = vmul.f32 %v2672, %v2947
        %v3380 = vmul.f32 %v2677, %v2944
        %v3381 = vmul.f32 %v2677, %v2945
        %v3382 = vmul.f32 %v2677, %v2946
        %v3383 = vmul.f32 %v2677, %v2947
        %v3384 = vmul.f32 %v2682, %v2944
        %v3385 = vmul.f32 %v2682, %v2945
        %v3386 = vmul.f32 %v2682, %v2946
        %v3387 = vmul.f32 %v2682, %v2947
        %v3388 = vmul.f32 %v2687, %v2944
        %v3389 = vmul.f32 %v2687, %v2945
        %v3390 = vmul.f32 %v2687, %v2946
        %v3391 = vmul.f32 %v2687, %v2947
        %v3392 = vmul.f32 %v2692, %v2944
        %v3393 = vmul.f32 %v2692, %v2945
        %v3394 = vmul.f32 %v2692, %v2946
        %v3395 = vmul.f32 %v2692, %v2947
        %v3396 = vmul.f32 %v2697, %v2944
        %v3397 = vmul.f32 %v2697, %v2945
        %v3398 = vmul.f32 %v2697, %v2946
        %v3399 = vmul.f32 %v2697, %v2947
        %v3400 = vmul.f32 %v2702, %v2944
        %v3401 = vmul.f32 %v2702, %v2945
        %v3402 = vmul.f32 %v2702, %v2946
        %v3403 = vmul.f32 %v2702, %v2947
        %v3404 = vmul.f32 %v2707, %v2944
        %v3405 = vmul.f32 %v2707, %v2945
        %v3406 = vmul.f32 %v2707, %v2946
        %v3407 = vmul.f32 %v2707, %v2947
        %v3408 = vmul.f32 %v2712, %v2944
        %v3409 = vmul.f32 %v2712, %v2945
        %v3410 = vmul.f32 %v2712, %v2946
        %v3411 = vmul.f32 %v2712, %v2947
        %v3412 = vmul.f32 %v2717, %v2944
        %v3413 = vmul.f32 %v2717, %v2945
        %v3414 = vmul.f32 %v2717, %v2946
        %v3415 = vmul.f32 %v2717, %v2947
        %v3416 = vmul.f32 %v2722, %v2944
        %v3417 = vmul.f32 %v2722, %v2945
        %v3418 = vmul.f32 %v2722, %v2946
        %v3419 = vmul.f32 %v2722, %v2947
        %v3420 = vmul.f32 %v2727, %v2944
        %v3421 = vmul.f32 %v2727, %v2945
        %v3422 = vmul.f32 %v2727, %v2946
        %v3423 = vmul.f32 %v2727, %v2947
        %v3424 = vmul.f32 %v2732, %v2944
        %v3425 = vmul.f32 %v2732, %v2945
        %v3426 = vmul.f32 %v2732, %v2946
        %v3427 = vmul.f32 %v2732, %v2947
        %v3428 = vmul.f32 %v2737, %v2944
        %v3429 = vmul.f32 %v2737, %v2945
        %v3430 = vmul.f32 %v2737, %v2946
        %v3431 = vmul.f32 %v2737, %v2947
        %v3432 = vmul.f32 %v2742, %v2944
        %v3433 = vmul.f32 %v2742, %v2945
        %v3434 = vmul.f32 %v2742, %v2946
        %v3435 = vmul.f32 %v2742, %v2947
        %v3436 = vmul.f32 %v2747, %v2944
        %v3437 = vmul.f32 %v2747, %v2945
        %v3438 = vmul.f32 %v2747, %v2946
        %v3439 = vmul.f32 %v2747, %v2947
        %v3440 = vmul.f32 %v2752, %v2944
        %v3441 = vmul.f32 %v2752, %v2945
        %v3442 = vmul.f32 %v2752, %v2946
        %v3443 = vmul.f32 %v2752, %v2947
        %v3444 = vmul.f32 %v2757, %v2944
        %v3445 = vmul.f32 %v2757, %v2945
        %v3446 = vmul.f32 %v2757, %v2946
        %v3447 = vmul.f32 %v2757, %v2947
        %v3448 = vmul.f32 %v2762, %v2944
        %v3449 = vmul.f32 %v2762, %v2945
        %v3450 = vmul.f32 %v2762, %v2946
        %v3451 = vmul.f32 %v2762, %v2947
        %v3452 = vmul.f32 %v2767, %v2944
        %v3453 = vmul.f32 %v2767, %v2945
        %v3454 = vmul.f32 %v2767, %v2946
        %v3455 = vmul.f32 %v2767, %v2947
        %v3456 = vmul.f32 %v2772, %v2944
        %v3457 = vmul.f32 %v2772, %v2945
        %v3458 = vmul.f32 %v2772, %v2946
        %v3459 = vmul.f32 %v2772, %v2947
        %v3460 = vmul.f32 %v2777, %v2944
        %v3461 = vmul.f32 %v2777, %v2945
        %v3462 = vmul.f32 %v2777, %v2946
        %v3463 = vmul.f32 %v2777, %v2947
        %v3464 = vmul.f32 %v2782, %v2944
        %v3465 = vmul.f32 %v2782, %v2945
        %v3466 = vmul.f32 %v2782, %v2946
        %v3467 = vmul.f32 %v2782, %v2947
        %v3468 = vmul.f32 %v2787, %v2944
        %v3469 = vmul.f32 %v2787, %v2945
        %v3470 = vmul.f32 %v2787, %v2946
        %v3471 = vmul.f32 %v2787, %v2947
        %v3472 = vmul.f32 %v2792, %v2944
        %v3473 = vmul.f32 %v2792, %v2945
        %v3474 = vmul.f32 %v2792, %v2946
        %v3475 = vmul.f32 %v2792, %v2947
        %v3476 = vmul.f32 %v2797, %v2944
        %v3477 = vmul.f32 %v2797, %v2945
        %v3478 = vmul.f32 %v2797, %v2946
        %v3479 = vmul.f32 %v2797, %v2947
        %v3480 = vmul.f32 %v2802, %v2944
        %v3481 = vmul.f32 %v2802, %v2945
        %v3482 = vmul.f32 %v2802, %v2946
        %v3483 = vmul.f32 %v2802, %v2947
        %v3484 = vmul.f32 %v2807, %v2944
        %v3485 = vmul.f32 %v2807, %v2945
        %v3486 = vmul.f32 %v2807, %v2946
        %v3487 = vmul.f32 %v2807, %v2947
        %v3488 = vmul.f32 %v2812, %v2944
        %v3489 = vmul.f32 %v2812, %v2945
        %v3490 = vmul.f32 %v2812, %v2946
        %v3491 = vmul.f32 %v2812, %v2947
        %v3492 = vmul.f32 %v2817, %v2944
        %v3493 = vmul.f32 %v2817, %v2945
        %v3494 = vmul.f32 %v2817, %v2946
        %v3495 = vmul.f32 %v2817, %v2947
        %v3496 = vmul.f32 %v2822, %v2944
        %v3497 = vmul.f32 %v2822, %v2945
        %v3498 = vmul.f32 %v2822, %v2946
        %v3499 = vmul.f32 %v2822, %v2947
        %v3500 = vmul.f32 %v2827, %v2944
        %v3501 = vmul.f32 %v2827, %v2945
        %v3502 = vmul.f32 %v2827, %v2946
        %v3503 = vmul.f32 %v2827, %v2947
        %v3504 = vmul.f32 %v2832, %v2944
        %v3505 = vmul.f32 %v2832, %v2945
        %v3506 = vmul.f32 %v2832, %v2946
        %v3507 = vmul.f32 %v2832, %v2947
        %v3508 = vmul.f32 %v2837, %v2944
        %v3509 = vmul.f32 %v2837, %v2945
        %v3510 = vmul.f32 %v2837, %v2946
        %v3511 = vmul.f32 %v2837, %v2947
        %v3512 = vmul.f32 %v2842, %v2944
        %v3513 = vmul.f32 %v2842, %v2945
        %v3514 = vmul.f32 %v2842, %v2946
        %v3515 = vmul.f32 %v2842, %v2947
        %v3516 = vmul.f32 %v2847, %v2944
        %v3517 = vmul.f32 %v2847, %v2945
        %v3518 = vmul.f32 %v2847, %v2946
        %v3519 = vmul.f32 %v2847, %v2947
        %v3520 = vmul.f32 %v2852, %v2944
        %v3521 = vmul.f32 %v2852, %v2945
        %v3522 = vmul.f32 %v2852, %v2946
        %v3523 = vmul.f32 %v2852, %v2947
        %v3524 = vmul.f32 %v2857, %v2944
        %v3525 = vmul.f32 %v2857, %v2945
        %v3526 = vmul.f32 %v2857, %v2946
        %v3527 = vmul.f32 %v2857, %v2947
        %v3528 = vmul.f32 %v2862, %v2944
        %v3529 = vmul.f32 %v2862, %v2945
        %v3530 = vmul.f32 %v2862, %v2946
        %v3531 = vmul.f32 %v2862, %v2947
        %v3532 = vmul.f32 %v2867, %v2944
        %v3533 = vmul.f32 %v2867, %v2945
        %v3534 = vmul.f32 %v2867, %v2946
        %v3535 = vmul.f32 %v2867, %v2947
        %v3536 = vmul.f32 %v2872, %v2944
        %v3537 = vmul.f32 %v2872, %v2945
        %v3538 = vmul.f32 %v2872, %v2946
        %v3539 = vmul.f32 %v2872, %v2947
        %v3540 = vmul.f32 %v2877, %v2944
        %v3541 = vmul.f32 %v2877, %v2945
        %v3542 = vmul.f32 %v2877, %v2946
        %v3543 = vmul.f32 %v2877, %v2947
        %v3544 = vmul.f32 %v2882, %v2944
        %v3545 = vmul.f32 %v2882, %v2945
        %v3546 = vmul.f32 %v2882, %v2946
        %v3547 = vmul.f32 %v2882, %v2947
        %v3548 = vmul.f32 %v2887, %v2944
        %v3549 = vmul.f32 %v2887, %v2945
        %v3550 = vmul.f32 %v2887, %v2946
        %v3551 = vmul.f32 %v2887, %v2947
        %v3552 = vmul.f32 %v2892, %v2944
        %v3553 = vmul.f32 %v2892, %v2945
        %v3554 = vmul.f32 %v2892, %v2946
        %v3555 = vmul.f32 %v2892, %v2947
        %v3556 = vmul.f32 %v2897, %v2944
        %v3557 = vmul.f32 %v2897, %v2945
        %v3558 = vmul.f32 %v2897, %v2946
        %v3559 = vmul.f32 %v2897, %v2947
        %v3560 = vmul.f32 %v2902, %v2944
        %v3561 = vmul.f32 %v2902, %v2945
        %v3562 = vmul.f32 %v2902, %v2946
        %v3563 = vmul.f32 %v2902, %v2947
        %v3564 = vmul.f32 %v2907, %v2944
        %v3565 = vmul.f32 %v2907, %v2945
        %v3566 = vmul.f32 %v2907, %v2946
        %v3567 = vmul.f32 %v2907, %v2947
        %v3568 = vmul.f32 %v2912, %v2944
        %v3569 = vmul.f32 %v2912, %v2945
        %v3570 = vmul.f32 %v2912, %v2946
        %v3571 = vmul.f32 %v2912, %v2947
        %v3572 = vmul.f32 %v2917, %v2944
        %v3573 = vmul.f32 %v2917, %v2945
        %v3574 = vmul.f32 %v2917, %v2946
        %v3575 = vmul.f32 %v2917, %v2947
        %v3576 = vmul.f32 %v2922, %v2944
        %v3577 = vmul.f32 %v2922, %v2945
        %v3578 = vmul.f32 %v2922, %v2946
        %v3579 = vmul.f32 %v2922, %v2947
        %v3580 = vmul.f32 %v2927, %v2944
        %v3581 = vmul.f32 %v2927, %v2945
        %v3582 = vmul.f32 %v2927, %v2946
        %v3583 = vmul.f32 %v2927, %v2947
        %v3584 = vmul.f32 %v2932, %v2944
        %v3585 = vmul.f32 %v2932, %v2945
        %v3586 = vmul.f32 %v2932, %v2946
        %v3587 = vmul.f32 %v2932, %v2947
        %3588 = vset.pattern.permute.xlu0 1
        %3589 = vperm.xlu0 %3588, %v1974
        %v3590 = vpop.permute.xlu0 %3589
        %3592 = vset.pattern.permute.xlu0 1
        %3593 = vperm.xlu0 %3592, %v1975
        %v3594 = vpop.permute.xlu0 %3593
        %3596 = vset.pattern.permute.xlu0 1
        %3597 = vperm.xlu0 %3596, %v1976
        %v3598 = vpop.permute.xlu0 %3597
        %3600 = vset.pattern.permute.xlu0 1
        %3601 = vperm.xlu0 %3600, %v1977
        %v3602 = vpop.permute.xlu0 %3601
        %3604 = vset.pattern.permute.xlu0 1
        %3605 = vperm.xlu0 %3604, %v1978
        %v3606 = vpop.permute.xlu0 %3605
        %3608 = vset.pattern.permute.xlu0 1
        %3609 = vperm.xlu0 %3608, %v1979
        %v3610 = vpop.permute.xlu0 %3609
        %3612 = vset.pattern.permute.xlu0 1
        %3613 = vperm.xlu0 %3612, %v1980
        %v3614 = vpop.permute.xlu0 %3613
        %3616 = vset.pattern.permute.xlu0 1
        %3617 = vperm.xlu0 %3616, %v1981
        %v3618 = vpop.permute.xlu0 %3617
        %3620 = vset.pattern.permute.xlu0 1
        %3621 = vperm.xlu0 %3620, %v1982
        %v3622 = vpop.permute.xlu0 %3621
        %3624 = vset.pattern.permute.xlu0 1
        %3625 = vperm.xlu0 %3624, %v1983
        %v3626 = vpop.permute.xlu0 %3625
        %3628 = vset.pattern.permute.xlu0 1
        %3629 = vperm.xlu0 %3628, %v1984
        %v3630 = vpop.permute.xlu0 %3629
        %3632 = vset.pattern.permute.xlu0 1
        %3633 = vperm.xlu0 %3632, %v1985
        %v3634 = vpop.permute.xlu0 %3633
        %3636 = vset.pattern.permute.xlu0 1
        %3637 = vperm.xlu0 %3636, %v1986
        %v3638 = vpop.permute.xlu0 %3637
        %3640 = vset.pattern.permute.xlu0 1
        %3641 = vperm.xlu0 %3640, %v1987
        %v3642 = vpop.permute.xlu0 %3641
        %3644 = vset.pattern.permute.xlu0 1
        %3645 = vperm.xlu0 %3644, %v1988
        %v3646 = vpop.permute.xlu0 %3645
        %3648 = vset.pattern.permute.xlu0 1
        %3649 = vperm.xlu0 %3648, %v1989
        %v3650 = vpop.permute.xlu0 %3649
        %3652 = vset.pattern.permute.xlu0 1
        %3653 = vperm.xlu0 %3652, %v1990
        %v3654 = vpop.permute.xlu0 %3653
        %3656 = vset.pattern.permute.xlu0 1
        %3657 = vperm.xlu0 %3656, %v1991
        %v3658 = vpop.permute.xlu0 %3657
        %3660 = vset.pattern.permute.xlu0 1
        %3661 = vperm.xlu0 %3660, %v1992
        %v3662 = vpop.permute.xlu0 %3661
        %3664 = vset.pattern.permute.xlu0 1
        %3665 = vperm.xlu0 %3664, %v1993
        %v3666 = vpop.permute.xlu0 %3665
        %3668 = vset.pattern.permute.xlu0 1
        %3669 = vperm.xlu0 %3668, %v1994
        %v3670 = vpop.permute.xlu0 %3669
        %3672 = vset.pattern.permute.xlu0 1
        %3673 = vperm.xlu0 %3672, %v1995
        %v3674 = vpop.permute.xlu0 %3673
        %3676 = vset.pattern.permute.xlu0 1
        %3677 = vperm.xlu0 %3676, %v1996
        %v3678 = vpop.permute.xlu0 %3677
        %3680 = vset.pattern.permute.xlu0 1
        %3681 = vperm.xlu0 %3680, %v1997
        %v3682 = vpop.permute.xlu0 %3681
        %3684 = vset.pattern.permute.xlu0 1
        %3685 = vperm.xlu0 %3684, %v1998
        %v3686 = vpop.permute.xlu0 %3685
        %3688 = vset.pattern.permute.xlu0 1
        %3689 = vperm.xlu0 %3688, %v1999
        %v3690 = vpop.permute.xlu0 %3689
        %3692 = vset.pattern.permute.xlu0 1
        %3693 = vperm.xlu0 %3692, %v2000
        %v3694 = vpop.permute.xlu0 %3693
        %3696 = vset.pattern.permute.xlu0 1
        %3697 = vperm.xlu0 %3696, %v2001
        %v3698 = vpop.permute.xlu0 %3697
        %3700 = vset.pattern.permute.xlu0 1
        %3701 = vperm.xlu0 %3700, %v2002
        %v3702 = vpop.permute.xlu0 %3701
        %3704 = vset.pattern.permute.xlu0 1
        %3705 = vperm.xlu0 %3704, %v2003
        %v3706 = vpop.permute.xlu0 %3705
        %3708 = vset.pattern.permute.xlu0 1
        %3709 = vperm.xlu0 %3708, %v2004
        %v3710 = vpop.permute.xlu0 %3709
        %3712 = vset.pattern.permute.xlu0 1
        %3713 = vperm.xlu0 %3712, %v2005
        %v3714 = vpop.permute.xlu0 %3713
        %3716 = vset.pattern.permute.xlu0 1
        %3717 = vperm.xlu0 %3716, %v2006
        %v3718 = vpop.permute.xlu0 %3717
        %3720 = vset.pattern.permute.xlu0 1
        %3721 = vperm.xlu0 %3720, %v2007
        %v3722 = vpop.permute.xlu0 %3721
        %3724 = vset.pattern.permute.xlu0 1
        %3725 = vperm.xlu0 %3724, %v2008
        %v3726 = vpop.permute.xlu0 %3725
        %3728 = vset.pattern.permute.xlu0 1
        %3729 = vperm.xlu0 %3728, %v2009
        %v3730 = vpop.permute.xlu0 %3729
        %3732 = vset.pattern.permute.xlu0 1
        %3733 = vperm.xlu0 %3732, %v2010
        %v3734 = vpop.permute.xlu0 %3733
        %3736 = vset.pattern.permute.xlu0 1
        %3737 = vperm.xlu0 %3736, %v2011
        %v3738 = vpop.permute.xlu0 %3737
        %3740 = vset.pattern.permute.xlu0 1
        %3741 = vperm.xlu0 %3740, %v2012
        %v3742 = vpop.permute.xlu0 %3741
        %3744 = vset.pattern.permute.xlu0 1
        %3745 = vperm.xlu0 %3744, %v2013
        %v3746 = vpop.permute.xlu0 %3745
        %3748 = vset.pattern.permute.xlu0 1
        %3749 = vperm.xlu0 %3748, %v2014
        %v3750 = vpop.permute.xlu0 %3749
        %3752 = vset.pattern.permute.xlu0 1
        %3753 = vperm.xlu0 %3752, %v2015
        %v3754 = vpop.permute.xlu0 %3753
        %3756 = vset.pattern.permute.xlu0 1
        %3757 = vperm.xlu0 %3756, %v2016
        %v3758 = vpop.permute.xlu0 %3757
        %3760 = vset.pattern.permute.xlu0 1
        %3761 = vperm.xlu0 %3760, %v2017
        %v3762 = vpop.permute.xlu0 %3761
        %3764 = vset.pattern.permute.xlu0 1
        %3765 = vperm.xlu0 %3764, %v2018
        %v3766 = vpop.permute.xlu0 %3765
        %3768 = vset.pattern.permute.xlu0 1
        %3769 = vperm.xlu0 %3768, %v2019
        %v3770 = vpop.permute.xlu0 %3769
        %3772 = vset.pattern.permute.xlu0 1
        %3773 = vperm.xlu0 %3772, %v2020
        %v3774 = vpop.permute.xlu0 %3773
        %3776 = vset.pattern.permute.xlu0 1
        %3777 = vperm.xlu0 %3776, %v2021
        %v3778 = vpop.permute.xlu0 %3777
        %3780 = vset.pattern.permute.xlu0 1
        %3781 = vperm.xlu0 %3780, %v2022
        %v3782 = vpop.permute.xlu0 %3781
        %3784 = vset.pattern.permute.xlu0 1
        %3785 = vperm.xlu0 %3784, %v2023
        %v3786 = vpop.permute.xlu0 %3785
        %3788 = vset.pattern.permute.xlu0 1
        %3789 = vperm.xlu0 %3788, %v2024
        %v3790 = vpop.permute.xlu0 %3789
        %3792 = vset.pattern.permute.xlu0 1
        %3793 = vperm.xlu0 %3792, %v2025
        %v3794 = vpop.permute.xlu0 %3793
        %3796 = vset.pattern.permute.xlu0 1
        %3797 = vperm.xlu0 %3796, %v2026
        %v3798 = vpop.permute.xlu0 %3797
        %3800 = vset.pattern.permute.xlu0 1
        %3801 = vperm.xlu0 %3800, %v2027
        %v3802 = vpop.permute.xlu0 %3801
        %3804 = vset.pattern.permute.xlu0 1
        %3805 = vperm.xlu0 %3804, %v2028
        %v3806 = vpop.permute.xlu0 %3805
        %3808 = vset.pattern.permute.xlu0 1
        %3809 = vperm.xlu0 %3808, %v2029
        %v3810 = vpop.permute.xlu0 %3809
        %3812 = vset.pattern.permute.xlu0 1
        %3813 = vperm.xlu0 %3812, %v2030
        %v3814 = vpop.permute.xlu0 %3813
        %3816 = vset.pattern.permute.xlu0 1
        %3817 = vperm.xlu0 %3816, %v2031
        %v3818 = vpop.permute.xlu0 %3817
        %3820 = vset.pattern.permute.xlu0 1
        %3821 = vperm.xlu0 %3820, %v2032
        %v3822 = vpop.permute.xlu0 %3821
        %3824 = vset.pattern.permute.xlu0 1
        %3825 = vperm.xlu0 %3824, %v2033
        %v3826 = vpop.permute.xlu0 %3825
        %3828 = vset.pattern.permute.xlu0 1
        %3829 = vperm.xlu0 %3828, %v2034
        %v3830 = vpop.permute.xlu0 %3829
        %3832 = vset.pattern.permute.xlu0 1
        %3833 = vperm.xlu0 %3832, %v2035
        %v3834 = vpop.permute.xlu0 %3833
        %3836 = vset.pattern.permute.xlu0 1
        %3837 = vperm.xlu0 %3836, %v2036
        %v3838 = vpop.permute.xlu0 %3837
        %3840 = vset.pattern.permute.xlu0 1
        %3841 = vperm.xlu0 %3840, %v2037
        %v3842 = vpop.permute.xlu0 %3841
        %3844 = vset.pattern.permute.xlu0 1
        %3845 = vperm.xlu0 %3844, %v2038
        %v3846 = vpop.permute.xlu0 %3845
        %3848 = vset.pattern.permute.xlu0 1
        %3849 = vperm.xlu0 %3848, %v2039
        %v3850 = vpop.permute.xlu0 %3849
        %3852 = vset.pattern.permute.xlu0 1
        %3853 = vperm.xlu0 %3852, %v2040
        %v3854 = vpop.permute.xlu0 %3853
        %3856 = vset.pattern.permute.xlu0 1
        %3857 = vperm.xlu0 %3856, %v2041
        %v3858 = vpop.permute.xlu0 %3857
        %3860 = vset.pattern.permute.xlu0 1
        %3861 = vperm.xlu0 %3860, %v2042
        %v3862 = vpop.permute.xlu0 %3861
        %3864 = vset.pattern.permute.xlu0 1
        %3865 = vperm.xlu0 %3864, %v2043
        %v3866 = vpop.permute.xlu0 %3865
        %3868 = vset.pattern.permute.xlu0 1
        %3869 = vperm.xlu0 %3868, %v2044
        %v3870 = vpop.permute.xlu0 %3869
        %3872 = vset.pattern.permute.xlu0 1
        %3873 = vperm.xlu0 %3872, %v2045
        %v3874 = vpop.permute.xlu0 %3873
        %3876 = vset.pattern.permute.xlu0 1
        %3877 = vperm.xlu0 %3876, %v2046
        %v3878 = vpop.permute.xlu0 %3877
        %3880 = vset.pattern.permute.xlu0 1
        %3881 = vperm.xlu0 %3880, %v2047
        %v3882 = vpop.permute.xlu0 %3881
        %3884 = vset.pattern.permute.xlu0 1
        %3885 = vperm.xlu0 %3884, %v2048
        %v3886 = vpop.permute.xlu0 %3885
        %3888 = vset.pattern.permute.xlu0 1
        %3889 = vperm.xlu0 %3888, %v2049
        %v3890 = vpop.permute.xlu0 %3889
        %3892 = vset.pattern.permute.xlu0 1
        %3893 = vperm.xlu0 %3892, %v2050
        %v3894 = vpop.permute.xlu0 %3893
        %3896 = vset.pattern.permute.xlu0 1
        %3897 = vperm.xlu0 %3896, %v2051
        %v3898 = vpop.permute.xlu0 %3897
        %3900 = vset.pattern.permute.xlu0 1
        %3901 = vperm.xlu0 %3900, %v2052
        %v3902 = vpop.permute.xlu0 %3901
        %3904 = vset.pattern.permute.xlu0 1
        %3905 = vperm.xlu0 %3904, %v2053
        %v3906 = vpop.permute.xlu0 %3905
        %3908 = vset.pattern.permute.xlu0 1
        %3909 = vperm.xlu0 %3908, %v2054
        %v3910 = vpop.permute.xlu0 %3909
        %3912 = vset.pattern.permute.xlu0 1
        %3913 = vperm.xlu0 %3912, %v2055
        %v3914 = vpop.permute.xlu0 %3913
        %3916 = vset.pattern.permute.xlu0 1
        %3917 = vperm.xlu0 %3916, %v2056
        %v3918 = vpop.permute.xlu0 %3917
        %3920 = vset.pattern.permute.xlu0 1
        %3921 = vperm.xlu0 %3920, %v2057
        %v3922 = vpop.permute.xlu0 %3921
        %3924 = vset.pattern.permute.xlu0 1
        %3925 = vperm.xlu0 %3924, %v2058
        %v3926 = vpop.permute.xlu0 %3925
        %3928 = vset.pattern.permute.xlu0 1
        %3929 = vperm.xlu0 %3928, %v2059
        %v3930 = vpop.permute.xlu0 %3929
        %3932 = vset.pattern.permute.xlu0 1
        %3933 = vperm.xlu0 %3932, %v2060
        %v3934 = vpop.permute.xlu0 %3933
        %3936 = vset.pattern.permute.xlu0 1
        %3937 = vperm.xlu0 %3936, %v2061
        %v3938 = vpop.permute.xlu0 %3937
        %3940 = vset.pattern.permute.xlu0 1
        %3941 = vperm.xlu0 %3940, %v2062
        %v3942 = vpop.permute.xlu0 %3941
        %3944 = vset.pattern.permute.xlu0 1
        %3945 = vperm.xlu0 %3944, %v2063
        %v3946 = vpop.permute.xlu0 %3945
        %3948 = vset.pattern.permute.xlu0 1
        %3949 = vperm.xlu0 %3948, %v2064
        %v3950 = vpop.permute.xlu0 %3949
        %3952 = vset.pattern.permute.xlu0 1
        %3953 = vperm.xlu0 %3952, %v2065
        %v3954 = vpop.permute.xlu0 %3953
        %3956 = vset.pattern.permute.xlu0 1
        %3957 = vperm.xlu0 %3956, %v2066
        %v3958 = vpop.permute.xlu0 %3957
        %3960 = vset.pattern.permute.xlu0 1
        %3961 = vperm.xlu0 %3960, %v2067
        %v3962 = vpop.permute.xlu0 %3961
        %3964 = vset.pattern.permute.xlu0 1
        %3965 = vperm.xlu0 %3964, %v2068
        %v3966 = vpop.permute.xlu0 %3965
        %3968 = vset.pattern.permute.xlu0 1
        %3969 = vperm.xlu0 %3968, %v2069
        %v3970 = vpop.permute.xlu0 %3969
        %3972 = vset.pattern.permute.xlu0 1
        %3973 = vperm.xlu0 %3972, %v2070
        %v3974 = vpop.permute.xlu0 %3973
        %3976 = vset.pattern.permute.xlu0 1
        %3977 = vperm.xlu0 %3976, %v2071
        %v3978 = vpop.permute.xlu0 %3977
        %3980 = vset.pattern.permute.xlu0 1
        %3981 = vperm.xlu0 %3980, %v2072
        %v3982 = vpop.permute.xlu0 %3981
        %3984 = vset.pattern.permute.xlu0 1
        %3985 = vperm.xlu0 %3984, %v2073
        %v3986 = vpop.permute.xlu0 %3985
        %3988 = vset.pattern.permute.xlu0 1
        %3989 = vperm.xlu0 %3988, %v2074
        %v3990 = vpop.permute.xlu0 %3989
        %3992 = vset.pattern.permute.xlu0 1
        %3993 = vperm.xlu0 %3992, %v2075
        %v3994 = vpop.permute.xlu0 %3993
        %3996 = vset.pattern.permute.xlu0 1
        %3997 = vperm.xlu0 %3996, %v2076
        %v3998 = vpop.permute.xlu0 %3997
        %4000 = vset.pattern.permute.xlu0 1
        %4001 = vperm.xlu0 %4000, %v2077
        %v4002 = vpop.permute.xlu0 %4001
        %4004 = vset.pattern.permute.xlu0 1
        %4005 = vperm.xlu0 %4004, %v2078
        %v4006 = vpop.permute.xlu0 %4005
        %4008 = vset.pattern.permute.xlu0 1
        %4009 = vperm.xlu0 %4008, %v2079
        %v4010 = vpop.permute.xlu0 %4009
        %4012 = vset.pattern.permute.xlu0 1
        %4013 = vperm.xlu0 %4012, %v2080
        %v4014 = vpop.permute.xlu0 %4013
        %4016 = vset.pattern.permute.xlu0 1
        %4017 = vperm.xlu0 %4016, %v2081
        %v4018 = vpop.permute.xlu0 %4017
        %4020 = vset.pattern.permute.xlu0 1
        %4021 = vperm.xlu0 %4020, %v2082
        %v4022 = vpop.permute.xlu0 %4021
        %4024 = vset.pattern.permute.xlu0 1
        %4025 = vperm.xlu0 %4024, %v2083
        %v4026 = vpop.permute.xlu0 %4025
        %4028 = vset.pattern.permute.xlu0 1
        %4029 = vperm.xlu0 %4028, %v2084
        %v4030 = vpop.permute.xlu0 %4029
        %4032 = vset.pattern.permute.xlu0 1
        %4033 = vperm.xlu0 %4032, %v2085
        %v4034 = vpop.permute.xlu0 %4033
        %4036 = vset.pattern.permute.xlu0 1
        %4037 = vperm.xlu0 %4036, %v2086
        %v4038 = vpop.permute.xlu0 %4037
        %4040 = vset.pattern.permute.xlu0 1
        %4041 = vperm.xlu0 %4040, %v2087
        %v4042 = vpop.permute.xlu0 %4041
        %4044 = vset.pattern.permute.xlu0 1
        %4045 = vperm.xlu0 %4044, %v2088
        %v4046 = vpop.permute.xlu0 %4045
        %4048 = vset.pattern.permute.xlu0 1
        %4049 = vperm.xlu0 %4048, %v2089
        %v4050 = vpop.permute.xlu0 %4049
        %4052 = vset.pattern.permute.xlu0 1
        %4053 = vperm.xlu0 %4052, %v2090
        %v4054 = vpop.permute.xlu0 %4053
        %4056 = vset.pattern.permute.xlu0 1
        %4057 = vperm.xlu0 %4056, %v2091
        %v4058 = vpop.permute.xlu0 %4057
        %4060 = vset.pattern.permute.xlu0 1
        %4061 = vperm.xlu0 %4060, %v2092
        %v4062 = vpop.permute.xlu0 %4061
        %4064 = vset.pattern.permute.xlu0 1
        %4065 = vperm.xlu0 %4064, %v2093
        %v4066 = vpop.permute.xlu0 %4065
        %4068 = vset.pattern.permute.xlu0 1
        %4069 = vperm.xlu0 %4068, %v2094
        %v4070 = vpop.permute.xlu0 %4069
        %4072 = vset.pattern.permute.xlu0 1
        %4073 = vperm.xlu0 %4072, %v2095
        %v4074 = vpop.permute.xlu0 %4073
        %4076 = vset.pattern.permute.xlu0 1
        %4077 = vperm.xlu0 %4076, %v2096
        %v4078 = vpop.permute.xlu0 %4077
        %4080 = vset.pattern.permute.xlu0 1
        %4081 = vperm.xlu0 %4080, %v2097
        %v4082 = vpop.permute.xlu0 %4081
        %4084 = vset.pattern.permute.xlu0 1
        %4085 = vperm.xlu0 %4084, %v2098
        %v4086 = vpop.permute.xlu0 %4085
        %4088 = vset.pattern.permute.xlu0 1
        %4089 = vperm.xlu0 %4088, %v2099
        %v4090 = vpop.permute.xlu0 %4089
        %4092 = vset.pattern.permute.xlu0 1
        %4093 = vperm.xlu0 %4092, %v2100
        %v4094 = vpop.permute.xlu0 %4093
        %4096 = vset.pattern.permute.xlu0 1
        %4097 = vperm.xlu0 %4096, %v2101
        %v4098 = vpop.permute.xlu0 %4097
        %4100 = vset.pattern.permute.xlu0 1
        %4101 = vperm.xlu0 %4100, %v2102
        %v4102 = vpop.permute.xlu0 %4101
        %4104 = vset.pattern.permute.xlu0 1
        %4105 = vperm.xlu0 %4104, %v2103
        %v4106 = vpop.permute.xlu0 %4105
        %4108 = vset.pattern.permute.xlu0 1
        %4109 = vperm.xlu0 %4108, %v2104
        %v4110 = vpop.permute.xlu0 %4109
        %4112 = vset.pattern.permute.xlu0 1
        %4113 = vperm.xlu0 %4112, %v2105
        %v4114 = vpop.permute.xlu0 %4113
        %4116 = vset.pattern.permute.xlu0 1
        %4117 = vperm.xlu0 %4116, %v2106
        %v4118 = vpop.permute.xlu0 %4117
        %4120 = vset.pattern.permute.xlu0 1
        %4121 = vperm.xlu0 %4120, %v2107
        %v4122 = vpop.permute.xlu0 %4121
        %4124 = vset.pattern.permute.xlu0 1
        %4125 = vperm.xlu0 %4124, %v2108
        %v4126 = vpop.permute.xlu0 %4125
        %4128 = vset.pattern.permute.xlu0 1
        %4129 = vperm.xlu0 %4128, %v2109
        %v4130 = vpop.permute.xlu0 %4129
        %4132 = vset.pattern.permute.xlu0 1
        %4133 = vperm.xlu0 %4132, %v2110
        %v4134 = vpop.permute.xlu0 %4133
        %4136 = vset.pattern.permute.xlu0 1
        %4137 = vperm.xlu0 %4136, %v2111
        %v4138 = vpop.permute.xlu0 %4137
        %4140 = vset.pattern.permute.xlu0 1
        %4141 = vperm.xlu0 %4140, %v2112
        %v4142 = vpop.permute.xlu0 %4141
        %4144 = vset.pattern.permute.xlu0 1
        %4145 = vperm.xlu0 %4144, %v2113
        %v4146 = vpop.permute.xlu0 %4145
        %4148 = vset.pattern.permute.xlu0 1
        %4149 = vperm.xlu0 %4148, %v2114
        %v4150 = vpop.permute.xlu0 %4149
        %4152 = vset.pattern.permute.xlu0 1
        %4153 = vperm.xlu0 %4152, %v2115
        %v4154 = vpop.permute.xlu0 %4153
        %4156 = vset.pattern.permute.xlu0 1
        %4157 = vperm.xlu0 %4156, %v2116
        %v4158 = vpop.permute.xlu0 %4157
        %4160 = vset.pattern.permute.xlu0 1
        %4161 = vperm.xlu0 %4160, %v2117
        %v4162 = vpop.permute.xlu0 %4161
        %4164 = vset.pattern.permute.xlu0 1
        %4165 = vperm.xlu0 %4164, %v2118
        %v4166 = vpop.permute.xlu0 %4165
        %4168 = vset.pattern.permute.xlu0 1
        %4169 = vperm.xlu0 %4168, %v2119
        %v4170 = vpop.permute.xlu0 %4169
        %4172 = vset.pattern.permute.xlu0 1
        %4173 = vperm.xlu0 %4172, %v2120
        %v4174 = vpop.permute.xlu0 %4173
        %4176 = vset.pattern.permute.xlu0 1
        %4177 = vperm.xlu0 %4176, %v2121
        %v4178 = vpop.permute.xlu0 %4177
        %4180 = vset.pattern.permute.xlu0 1
        %4181 = vperm.xlu0 %4180, %v2122
        %v4182 = vpop.permute.xlu0 %4181
        %4184 = vset.pattern.permute.xlu0 1
        %4185 = vperm.xlu0 %4184, %v2123
        %v4186 = vpop.permute.xlu0 %4185
        %4188 = vset.pattern.permute.xlu0 1
        %4189 = vperm.xlu0 %4188, %v2124
        %v4190 = vpop.permute.xlu0 %4189
        %4192 = vset.pattern.permute.xlu0 1
        %4193 = vperm.xlu0 %4192, %v2125
        %v4194 = vpop.permute.xlu0 %4193
        %4196 = vset.pattern.permute.xlu0 1
        %4197 = vperm.xlu0 %4196, %v2126
        %v4198 = vpop.permute.xlu0 %4197
        %4200 = vset.pattern.permute.xlu0 1
        %4201 = vperm.xlu0 %4200, %v2127
        %v4202 = vpop.permute.xlu0 %4201
        %4204 = vset.pattern.permute.xlu0 1
        %4205 = vperm.xlu0 %4204, %v2128
        %v4206 = vpop.permute.xlu0 %4205
        %4208 = vset.pattern.permute.xlu0 1
        %4209 = vperm.xlu0 %4208, %v2129
        %v4210 = vpop.permute.xlu0 %4209
        %4212 = vset.pattern.permute.xlu0 1
        %4213 = vperm.xlu0 %4212, %v2130
        %v4214 = vpop.permute.xlu0 %4213
        %4216 = vset.pattern.permute.xlu0 1
        %4217 = vperm.xlu0 %4216, %v2131
        %v4218 = vpop.permute.xlu0 %4217
        %4220 = vset.pattern.permute.xlu0 1
        %4221 = vperm.xlu0 %4220, %v2132
        %v4222 = vpop.permute.xlu0 %4221
        %4224 = vset.pattern.permute.xlu0 1
        %4225 = vperm.xlu0 %4224, %v2133
        %v4226 = vpop.permute.xlu0 %4225
        %v4228 = vperm.slane %v1971, 1
        %v4229 = vperm.slane %v1971, 5
        %v4230 = vperm.slane %v1972, 1
        %v4231 = vperm.slane %v1972, 5
        %v4236 = vperm.slane %v4228, 1
        %v4237 = vperm.slane %v4229, 1
        %v4238 = vperm.slane %v4230, 1
        %v4239 = vperm.slane %v4231, 1
        %v4240 = vmul.f32 %v3590, %v4236
        %v4241 = vmul.f32 %v3590, %v4237
        %v4242 = vmul.f32 %v3590, %v4238
        %v4243 = vmul.f32 %v3590, %v4239
        %v4244 = vmul.f32 %v3594, %v4236
        %v4245 = vmul.f32 %v3594, %v4237
        %v4246 = vmul.f32 %v3594, %v4238
        %v4247 = vmul.f32 %v3594, %v4239
        %v4248 = vmul.f32 %v3598, %v4236
        %v4249 = vmul.f32 %v3598, %v4237
        %v4250 = vmul.f32 %v3598, %v4238
        %v4251 = vmul.f32 %v3598, %v4239
        %v4252 = vmul.f32 %v3602, %v4236
        %v4253 = vmul.f32 %v3602, %v4237
        %v4254 = vmul.f32 %v3602, %v4238
        %v4255 = vmul.f32 %v3602, %v4239
        %v4256 = vmul.f32 %v3606, %v4236
        %v4257 = vmul.f32 %v3606, %v4237
        %v4258 = vmul.f32 %v3606, %v4238
        %v4259 = vmul.f32 %v3606, %v4239
        %v4260 = vmul.f32 %v3610, %v4236
        %v4261 = vmul.f32 %v3610, %v4237
        %v4262 = vmul.f32 %v3610, %v4238
        %v4263 = vmul.f32 %v3610, %v4239
        %v4264 = vmul.f32 %v3614, %v4236
        %v4265 = vmul.f32 %v3614, %v4237
        %v4266 = vmul.f32 %v3614, %v4238
        %v4267 = vmul.f32 %v3614, %v4239
        %v4268 = vmul.f32 %v3618, %v4236
        %v4269 = vmul.f32 %v3618, %v4237
        %v4270 = vmul.f32 %v3618, %v4238
        %v4271 = vmul.f32 %v3618, %v4239
        %v4272 = vmul.f32 %v3622, %v4236
        %v4273 = vmul.f32 %v3622, %v4237
        %v4274 = vmul.f32 %v3622, %v4238
        %v4275 = vmul.f32 %v3622, %v4239
        %v4276 = vmul.f32 %v3626, %v4236
        %v4277 = vmul.f32 %v3626, %v4237
        %v4278 = vmul.f32 %v3626, %v4238
        %v4279 = vmul.f32 %v3626, %v4239
        %v4280 = vmul.f32 %v3630, %v4236
        %v4281 = vmul.f32 %v3630, %v4237
        %v4282 = vmul.f32 %v3630, %v4238
        %v4283 = vmul.f32 %v3630, %v4239
        %v4284 = vmul.f32 %v3634, %v4236
        %v4285 = vmul.f32 %v3634, %v4237
        %v4286 = vmul.f32 %v3634, %v4238
        %v4287 = vmul.f32 %v3634, %v4239
        %v4288 = vmul.f32 %v3638, %v4236
        %v4289 = vmul.f32 %v3638, %v4237
        %v4290 = vmul.f32 %v3638, %v4238
        %v4291 = vmul.f32 %v3638, %v4239
        %v4292 = vmul.f32 %v3642, %v4236
        %v4293 = vmul.f32 %v3642, %v4237
        %v4294 = vmul.f32 %v3642, %v4238
        %v4295 = vmul.f32 %v3642, %v4239
        %v4296 = vmul.f32 %v3646, %v4236
        %v4297 = vmul.f32 %v3646, %v4237
        %v4298 = vmul.f32 %v3646, %v4238
        %v4299 = vmul.f32 %v3646, %v4239
        %v4300 = vmul.f32 %v3650, %v4236
        %v4301 = vmul.f32 %v3650, %v4237
        %v4302 = vmul.f32 %v3650, %v4238
        %v4303 = vmul.f32 %v3650, %v4239
        %v4304 = vmul.f32 %v3654, %v4236
        %v4305 = vmul.f32 %v3654, %v4237
        %v4306 = vmul.f32 %v3654, %v4238
        %v4307 = vmul.f32 %v3654, %v4239
        %v4308 = vmul.f32 %v3658, %v4236
        %v4309 = vmul.f32 %v3658, %v4237
        %v4310 = vmul.f32 %v3658, %v4238
        %v4311 = vmul.f32 %v3658, %v4239
        %v4312 = vmul.f32 %v3662, %v4236
        %v4313 = vmul.f32 %v3662, %v4237
        %v4314 = vmul.f32 %v3662, %v4238
        %v4315 = vmul.f32 %v3662, %v4239
        %v4316 = vmul.f32 %v3666, %v4236
        %v4317 = vmul.f32 %v3666, %v4237
        %v4318 = vmul.f32 %v3666, %v4238
        %v4319 = vmul.f32 %v3666, %v4239
        %v4320 = vmul.f32 %v3670, %v4236
        %v4321 = vmul.f32 %v3670, %v4237
        %v4322 = vmul.f32 %v3670, %v4238
        %v4323 = vmul.f32 %v3670, %v4239
        %v4324 = vmul.f32 %v3674, %v4236
        %v4325 = vmul.f32 %v3674, %v4237
        %v4326 = vmul.f32 %v3674, %v4238
        %v4327 = vmul.f32 %v3674, %v4239
        %v4328 = vmul.f32 %v3678, %v4236
        %v4329 = vmul.f32 %v3678, %v4237
        %v4330 = vmul.f32 %v3678, %v4238
        %v4331 = vmul.f32 %v3678, %v4239
        %v4332 = vmul.f32 %v3682, %v4236
        %v4333 = vmul.f32 %v3682, %v4237
        %v4334 = vmul.f32 %v3682, %v4238
        %v4335 = vmul.f32 %v3682, %v4239
        %v4336 = vmul.f32 %v3686, %v4236
        %v4337 = vmul.f32 %v3686, %v4237
        %v4338 = vmul.f32 %v3686, %v4238
        %v4339 = vmul.f32 %v3686, %v4239
        %v4340 = vmul.f32 %v3690, %v4236
        %v4341 = vmul.f32 %v3690, %v4237
        %v4342 = vmul.f32 %v3690, %v4238
        %v4343 = vmul.f32 %v3690, %v4239
        %v4344 = vmul.f32 %v3694, %v4236
        %v4345 = vmul.f32 %v3694, %v4237
        %v4346 = vmul.f32 %v3694, %v4238
        %v4347 = vmul.f32 %v3694, %v4239
        %v4348 = vmul.f32 %v3698, %v4236
        %v4349 = vmul.f32 %v3698, %v4237
        %v4350 = vmul.f32 %v3698, %v4238
        %v4351 = vmul.f32 %v3698, %v4239
        %v4352 = vmul.f32 %v3702, %v4236
        %v4353 = vmul.f32 %v3702, %v4237
        %v4354 = vmul.f32 %v3702, %v4238
        %v4355 = vmul.f32 %v3702, %v4239
        %v4356 = vmul.f32 %v3706, %v4236
        %v4357 = vmul.f32 %v3706, %v4237
        %v4358 = vmul.f32 %v3706, %v4238
        %v4359 = vmul.f32 %v3706, %v4239
        %v4360 = vmul.f32 %v3710, %v4236
        %v4361 = vmul.f32 %v3710, %v4237
        %v4362 = vmul.f32 %v3710, %v4238
        %v4363 = vmul.f32 %v3710, %v4239
        %v4364 = vmul.f32 %v3714, %v4236
        %v4365 = vmul.f32 %v3714, %v4237
        %v4366 = vmul.f32 %v3714, %v4238
        %v4367 = vmul.f32 %v3714, %v4239
        %v4368 = vmul.f32 %v3718, %v4236
        %v4369 = vmul.f32 %v3718, %v4237
        %v4370 = vmul.f32 %v3718, %v4238
        %v4371 = vmul.f32 %v3718, %v4239
        %v4372 = vmul.f32 %v3722, %v4236
        %v4373 = vmul.f32 %v3722, %v4237
        %v4374 = vmul.f32 %v3722, %v4238
        %v4375 = vmul.f32 %v3722, %v4239
        %v4376 = vmul.f32 %v3726, %v4236
        %v4377 = vmul.f32 %v3726, %v4237
        %v4378 = vmul.f32 %v3726, %v4238
        %v4379 = vmul.f32 %v3726, %v4239
        %v4380 = vmul.f32 %v3730, %v4236
        %v4381 = vmul.f32 %v3730, %v4237
        %v4382 = vmul.f32 %v3730, %v4238
        %v4383 = vmul.f32 %v3730, %v4239
        %v4384 = vmul.f32 %v3734, %v4236
        %v4385 = vmul.f32 %v3734, %v4237
        %v4386 = vmul.f32 %v3734, %v4238
        %v4387 = vmul.f32 %v3734, %v4239
        %v4388 = vmul.f32 %v3738, %v4236
        %v4389 = vmul.f32 %v3738, %v4237
        %v4390 = vmul.f32 %v3738, %v4238
        %v4391 = vmul.f32 %v3738, %v4239
        %v4392 = vmul.f32 %v3742, %v4236
        %v4393 = vmul.f32 %v3742, %v4237
        %v4394 = vmul.f32 %v3742, %v4238
        %v4395 = vmul.f32 %v3742, %v4239
        %v4396 = vmul.f32 %v3746, %v4236
        %v4397 = vmul.f32 %v3746, %v4237
        %v4398 = vmul.f32 %v3746, %v4238
        %v4399 = vmul.f32 %v3746, %v4239
        %v4400 = vmul.f32 %v3750, %v4236
        %v4401 = vmul.f32 %v3750, %v4237
        %v4402 = vmul.f32 %v3750, %v4238
        %v4403 = vmul.f32 %v3750, %v4239
        %v4404 = vmul.f32 %v3754, %v4236
        %v4405 = vmul.f32 %v3754, %v4237
        %v4406 = vmul.f32 %v3754, %v4238
        %v4407 = vmul.f32 %v3754, %v4239
        %v4408 = vmul.f32 %v3758, %v4236
        %v4409 = vmul.f32 %v3758, %v4237
        %v4410 = vmul.f32 %v3758, %v4238
        %v4411 = vmul.f32 %v3758, %v4239
        %v4412 = vmul.f32 %v3762, %v4236
        %v4413 = vmul.f32 %v3762, %v4237
        %v4414 = vmul.f32 %v3762, %v4238
        %v4415 = vmul.f32 %v3762, %v4239
        %v4416 = vmul.f32 %v3766, %v4236
        %v4417 = vmul.f32 %v3766, %v4237
        %v4418 = vmul.f32 %v3766, %v4238
        %v4419 = vmul.f32 %v3766, %v4239
        %v4420 = vmul.f32 %v3770, %v4236
        %v4421 = vmul.f32 %v3770, %v4237
        %v4422 = vmul.f32 %v3770, %v4238
        %v4423 = vmul.f32 %v3770, %v4239
        %v4424 = vmul.f32 %v3774, %v4236
        %v4425 = vmul.f32 %v3774, %v4237
        %v4426 = vmul.f32 %v3774, %v4238
        %v4427 = vmul.f32 %v3774, %v4239
        %v4428 = vmul.f32 %v3778, %v4236
        %v4429 = vmul.f32 %v3778, %v4237
        %v4430 = vmul.f32 %v3778, %v4238
        %v4431 = vmul.f32 %v3778, %v4239
        %v4432 = vmul.f32 %v3782, %v4236
        %v4433 = vmul.f32 %v3782, %v4237
        %v4434 = vmul.f32 %v3782, %v4238
        %v4435 = vmul.f32 %v3782, %v4239
        %v4436 = vmul.f32 %v3786, %v4236
        %v4437 = vmul.f32 %v3786, %v4237
        %v4438 = vmul.f32 %v3786, %v4238
        %v4439 = vmul.f32 %v3786, %v4239
        %v4440 = vmul.f32 %v3790, %v4236
        %v4441 = vmul.f32 %v3790, %v4237
        %v4442 = vmul.f32 %v3790, %v4238
        %v4443 = vmul.f32 %v3790, %v4239
        %v4444 = vmul.f32 %v3794, %v4236
        %v4445 = vmul.f32 %v3794, %v4237
        %v4446 = vmul.f32 %v3794, %v4238
        %v4447 = vmul.f32 %v3794, %v4239
        %v4448 = vmul.f32 %v3798, %v4236
        %v4449 = vmul.f32 %v3798, %v4237
        %v4450 = vmul.f32 %v3798, %v4238
        %v4451 = vmul.f32 %v3798, %v4239
        %v4452 = vmul.f32 %v3802, %v4236
        %v4453 = vmul.f32 %v3802, %v4237
        %v4454 = vmul.f32 %v3802, %v4238
        %v4455 = vmul.f32 %v3802, %v4239
        %v4456 = vmul.f32 %v3806, %v4236
        %v4457 = vmul.f32 %v3806, %v4237
        %v4458 = vmul.f32 %v3806, %v4238
        %v4459 = vmul.f32 %v3806, %v4239
        %v4460 = vmul.f32 %v3810, %v4236
        %v4461 = vmul.f32 %v3810, %v4237
        %v4462 = vmul.f32 %v3810, %v4238
        %v4463 = vmul.f32 %v3810, %v4239
        %v4464 = vmul.f32 %v3814, %v4236
        %v4465 = vmul.f32 %v3814, %v4237
        %v4466 = vmul.f32 %v3814, %v4238
        %v4467 = vmul.f32 %v3814, %v4239
        %v4468 = vmul.f32 %v3818, %v4236
        %v4469 = vmul.f32 %v3818, %v4237
        %v4470 = vmul.f32 %v3818, %v4238
        %v4471 = vmul.f32 %v3818, %v4239
        %v4472 = vmul.f32 %v3822, %v4236
        %v4473 = vmul.f32 %v3822, %v4237
        %v4474 = vmul.f32 %v3822, %v4238
        %v4475 = vmul.f32 %v3822, %v4239
        %v4476 = vmul.f32 %v3826, %v4236
        %v4477 = vmul.f32 %v3826, %v4237
        %v4478 = vmul.f32 %v3826, %v4238
        %v4479 = vmul.f32 %v3826, %v4239
        %v4480 = vmul.f32 %v3830, %v4236
        %v4481 = vmul.f32 %v3830, %v4237
        %v4482 = vmul.f32 %v3830, %v4238
        %v4483 = vmul.f32 %v3830, %v4239
        %v4484 = vmul.f32 %v3834, %v4236
        %v4485 = vmul.f32 %v3834, %v4237
        %v4486 = vmul.f32 %v3834, %v4238
        %v4487 = vmul.f32 %v3834, %v4239
        %v4488 = vmul.f32 %v3838, %v4236
        %v4489 = vmul.f32 %v3838, %v4237
        %v4490 = vmul.f32 %v3838, %v4238
        %v4491 = vmul.f32 %v3838, %v4239
        %v4492 = vmul.f32 %v3842, %v4236
        %v4493 = vmul.f32 %v3842, %v4237
        %v4494 = vmul.f32 %v3842, %v4238
        %v4495 = vmul.f32 %v3842, %v4239
        %v4496 = vmul.f32 %v3846, %v4236
        %v4497 = vmul.f32 %v3846, %v4237
        %v4498 = vmul.f32 %v3846, %v4238
        %v4499 = vmul.f32 %v3846, %v4239
        %v4500 = vmul.f32 %v3850, %v4236
        %v4501 = vmul.f32 %v3850, %v4237
        %v4502 = vmul.f32 %v3850, %v4238
        %v4503 = vmul.f32 %v3850, %v4239
        %v4504 = vmul.f32 %v3854, %v4236
        %v4505 = vmul.f32 %v3854, %v4237
        %v4506 = vmul.f32 %v3854, %v4238
        %v4507 = vmul.f32 %v3854, %v4239
        %v4508 = vmul.f32 %v3858, %v4236
        %v4509 = vmul.f32 %v3858, %v4237
        %v4510 = vmul.f32 %v3858, %v4238
        %v4511 = vmul.f32 %v3858, %v4239
        %v4512 = vmul.f32 %v3862, %v4236
        %v4513 = vmul.f32 %v3862, %v4237
        %v4514 = vmul.f32 %v3862, %v4238
        %v4515 = vmul.f32 %v3862, %v4239
        %v4516 = vmul.f32 %v3866, %v4236
        %v4517 = vmul.f32 %v3866, %v4237
        %v4518 = vmul.f32 %v3866, %v4238
        %v4519 = vmul.f32 %v3866, %v4239
        %v4520 = vmul.f32 %v3870, %v4236
        %v4521 = vmul.f32 %v3870, %v4237
        %v4522 = vmul.f32 %v3870, %v4238
        %v4523 = vmul.f32 %v3870, %v4239
        %v4524 = vmul.f32 %v3874, %v4236
        %v4525 = vmul.f32 %v3874, %v4237
        %v4526 = vmul.f32 %v3874, %v4238
        %v4527 = vmul.f32 %v3874, %v4239
        %v4528 = vmul.f32 %v3878, %v4236
        %v4529 = vmul.f32 %v3878, %v4237
        %v4530 = vmul.f32 %v3878, %v4238
        %v4531 = vmul.f32 %v3878, %v4239
        %v4532 = vmul.f32 %v3882, %v4236
        %v4533 = vmul.f32 %v3882, %v4237
        %v4534 = vmul.f32 %v3882, %v4238
        %v4535 = vmul.f32 %v3882, %v4239
        %v4536 = vmul.f32 %v3886, %v4236
        %v4537 = vmul.f32 %v3886, %v4237
        %v4538 = vmul.f32 %v3886, %v4238
        %v4539 = vmul.f32 %v3886, %v4239
        %v4540 = vmul.f32 %v3890, %v4236
        %v4541 = vmul.f32 %v3890, %v4237
        %v4542 = vmul.f32 %v3890, %v4238
        %v4543 = vmul.f32 %v3890, %v4239
        %v4544 = vmul.f32 %v3894, %v4236
        %v4545 = vmul.f32 %v3894, %v4237
        %v4546 = vmul.f32 %v3894, %v4238
        %v4547 = vmul.f32 %v3894, %v4239
        %v4548 = vmul.f32 %v3898, %v4236
        %v4549 = vmul.f32 %v3898, %v4237
        %v4550 = vmul.f32 %v3898, %v4238
        %v4551 = vmul.f32 %v3898, %v4239
        %v4552 = vmul.f32 %v3902, %v4236
        %v4553 = vmul.f32 %v3902, %v4237
        %v4554 = vmul.f32 %v3902, %v4238
        %v4555 = vmul.f32 %v3902, %v4239
        %v4556 = vmul.f32 %v3906, %v4236
        %v4557 = vmul.f32 %v3906, %v4237
        %v4558 = vmul.f32 %v3906, %v4238
        %v4559 = vmul.f32 %v3906, %v4239
        %v4560 = vmul.f32 %v3910, %v4236
        %v4561 = vmul.f32 %v3910, %v4237
        %v4562 = vmul.f32 %v3910, %v4238
        %v4563 = vmul.f32 %v3910, %v4239
        %v4564 = vmul.f32 %v3914, %v4236
        %v4565 = vmul.f32 %v3914, %v4237
        %v4566 = vmul.f32 %v3914, %v4238
        %v4567 = vmul.f32 %v3914, %v4239
        %v4568 = vmul.f32 %v3918, %v4236
        %v4569 = vmul.f32 %v3918, %v4237
        %v4570 = vmul.f32 %v3918, %v4238
        %v4571 = vmul.f32 %v3918, %v4239
        %v4572 = vmul.f32 %v3922, %v4236
        %v4573 = vmul.f32 %v3922, %v4237
        %v4574 = vmul.f32 %v3922, %v4238
        %v4575 = vmul.f32 %v3922, %v4239
        %v4576 = vmul.f32 %v3926, %v4236
        %v4577 = vmul.f32 %v3926, %v4237
        %v4578 = vmul.f32 %v3926, %v4238
        %v4579 = vmul.f32 %v3926, %v4239
        %v4580 = vmul.f32 %v3930, %v4236
        %v4581 = vmul.f32 %v3930, %v4237
        %v4582 = vmul.f32 %v3930, %v4238
        %v4583 = vmul.f32 %v3930, %v4239
        %v4584 = vmul.f32 %v3934, %v4236
        %v4585 = vmul.f32 %v3934, %v4237
        %v4586 = vmul.f32 %v3934, %v4238
        %v4587 = vmul.f32 %v3934, %v4239
        %v4588 = vmul.f32 %v3938, %v4236
        %v4589 = vmul.f32 %v3938, %v4237
        %v4590 = vmul.f32 %v3938, %v4238
        %v4591 = vmul.f32 %v3938, %v4239
        %v4592 = vmul.f32 %v3942, %v4236
        %v4593 = vmul.f32 %v3942, %v4237
        %v4594 = vmul.f32 %v3942, %v4238
        %v4595 = vmul.f32 %v3942, %v4239
        %v4596 = vmul.f32 %v3946, %v4236
        %v4597 = vmul.f32 %v3946, %v4237
        %v4598 = vmul.f32 %v3946, %v4238
        %v4599 = vmul.f32 %v3946, %v4239
        %v4600 = vmul.f32 %v3950, %v4236
        %v4601 = vmul.f32 %v3950, %v4237
        %v4602 = vmul.f32 %v3950, %v4238
        %v4603 = vmul.f32 %v3950, %v4239
        %v4604 = vmul.f32 %v3954, %v4236
        %v4605 = vmul.f32 %v3954, %v4237
        %v4606 = vmul.f32 %v3954, %v4238
        %v4607 = vmul.f32 %v3954, %v4239
        %v4608 = vmul.f32 %v3958, %v4236
        %v4609 = vmul.f32 %v3958, %v4237
        %v4610 = vmul.f32 %v3958, %v4238
        %v4611 = vmul.f32 %v3958, %v4239
        %v4612 = vmul.f32 %v3962, %v4236
        %v4613 = vmul.f32 %v3962, %v4237
        %v4614 = vmul.f32 %v3962, %v4238
        %v4615 = vmul.f32 %v3962, %v4239
        %v4616 = vmul.f32 %v3966, %v4236
        %v4617 = vmul.f32 %v3966, %v4237
        %v4618 = vmul.f32 %v3966, %v4238
        %v4619 = vmul.f32 %v3966, %v4239
        %v4620 = vmul.f32 %v3970, %v4236
        %v4621 = vmul.f32 %v3970, %v4237
        %v4622 = vmul.f32 %v3970, %v4238
        %v4623 = vmul.f32 %v3970, %v4239
        %v4624 = vmul.f32 %v3974, %v4236
        %v4625 = vmul.f32 %v3974, %v4237
        %v4626 = vmul.f32 %v3974, %v4238
        %v4627 = vmul.f32 %v3974, %v4239
        %v4628 = vmul.f32 %v3978, %v4236
        %v4629 = vmul.f32 %v3978, %v4237
        %v4630 = vmul.f32 %v3978, %v4238
        %v4631 = vmul.f32 %v3978, %v4239
        %v4632 = vmul.f32 %v3982, %v4236
        %v4633 = vmul.f32 %v3982, %v4237
        %v4634 = vmul.f32 %v3982, %v4238
        %v4635 = vmul.f32 %v3982, %v4239
        %v4636 = vmul.f32 %v3986, %v4236
        %v4637 = vmul.f32 %v3986, %v4237
        %v4638 = vmul.f32 %v3986, %v4238
        %v4639 = vmul.f32 %v3986, %v4239
        %v4640 = vmul.f32 %v3990, %v4236
        %v4641 = vmul.f32 %v3990, %v4237
        %v4642 = vmul.f32 %v3990, %v4238
        %v4643 = vmul.f32 %v3990, %v4239
        %v4644 = vmul.f32 %v3994, %v4236
        %v4645 = vmul.f32 %v3994, %v4237
        %v4646 = vmul.f32 %v3994, %v4238
        %v4647 = vmul.f32 %v3994, %v4239
        %v4648 = vmul.f32 %v3998, %v4236
        %v4649 = vmul.f32 %v3998, %v4237
        %v4650 = vmul.f32 %v3998, %v4238
        %v4651 = vmul.f32 %v3998, %v4239
        %v4652 = vmul.f32 %v4002, %v4236
        %v4653 = vmul.f32 %v4002, %v4237
        %v4654 = vmul.f32 %v4002, %v4238
        %v4655 = vmul.f32 %v4002, %v4239
        %v4656 = vmul.f32 %v4006, %v4236
        %v4657 = vmul.f32 %v4006, %v4237
        %v4658 = vmul.f32 %v4006, %v4238
        %v4659 = vmul.f32 %v4006, %v4239
        %v4660 = vmul.f32 %v4010, %v4236
        %v4661 = vmul.f32 %v4010, %v4237
        %v4662 = vmul.f32 %v4010, %v4238
        %v4663 = vmul.f32 %v4010, %v4239
        %v4664 = vmul.f32 %v4014, %v4236
        %v4665 = vmul.f32 %v4014, %v4237
        %v4666 = vmul.f32 %v4014, %v4238
        %v4667 = vmul.f32 %v4014, %v4239
        %v4668 = vmul.f32 %v4018, %v4236
        %v4669 = vmul.f32 %v4018, %v4237
        %v4670 = vmul.f32 %v4018, %v4238
        %v4671 = vmul.f32 %v4018, %v4239
        %v4672 = vmul.f32 %v4022, %v4236
        %v4673 = vmul.f32 %v4022, %v4237
        %v4674 = vmul.f32 %v4022, %v4238
        %v4675 = vmul.f32 %v4022, %v4239
        %v4676 = vmul.f32 %v4026, %v4236
        %v4677 = vmul.f32 %v4026, %v4237
        %v4678 = vmul.f32 %v4026, %v4238
        %v4679 = vmul.f32 %v4026, %v4239
        %v4680 = vmul.f32 %v4030, %v4236
        %v4681 = vmul.f32 %v4030, %v4237
        %v4682 = vmul.f32 %v4030, %v4238
        %v4683 = vmul.f32 %v4030, %v4239
        %v4684 = vmul.f32 %v4034, %v4236
        %v4685 = vmul.f32 %v4034, %v4237
        %v4686 = vmul.f32 %v4034, %v4238
        %v4687 = vmul.f32 %v4034, %v4239
        %v4688 = vmul.f32 %v4038, %v4236
        %v4689 = vmul.f32 %v4038, %v4237
        %v4690 = vmul.f32 %v4038, %v4238
        %v4691 = vmul.f32 %v4038, %v4239
        %v4692 = vmul.f32 %v4042, %v4236
        %v4693 = vmul.f32 %v4042, %v4237
        %v4694 = vmul.f32 %v4042, %v4238
        %v4695 = vmul.f32 %v4042, %v4239
        %v4696 = vmul.f32 %v4046, %v4236
        %v4697 = vmul.f32 %v4046, %v4237
        %v4698 = vmul.f32 %v4046, %v4238
        %v4699 = vmul.f32 %v4046, %v4239
        %v4700 = vmul.f32 %v4050, %v4236
        %v4701 = vmul.f32 %v4050, %v4237
        %v4702 = vmul.f32 %v4050, %v4238
        %v4703 = vmul.f32 %v4050, %v4239
        %v4704 = vmul.f32 %v4054, %v4236
        %v4705 = vmul.f32 %v4054, %v4237
        %v4706 = vmul.f32 %v4054, %v4238
        %v4707 = vmul.f32 %v4054, %v4239
        %v4708 = vmul.f32 %v4058, %v4236
        %v4709 = vmul.f32 %v4058, %v4237
        %v4710 = vmul.f32 %v4058, %v4238
        %v4711 = vmul.f32 %v4058, %v4239
        %v4712 = vmul.f32 %v4062, %v4236
        %v4713 = vmul.f32 %v4062, %v4237
        %v4714 = vmul.f32 %v4062, %v4238
        %v4715 = vmul.f32 %v4062, %v4239
        %v4716 = vmul.f32 %v4066, %v4236
        %v4717 = vmul.f32 %v4066, %v4237
        %v4718 = vmul.f32 %v4066, %v4238
        %v4719 = vmul.f32 %v4066, %v4239
        %v4720 = vmul.f32 %v4070, %v4236
        %v4721 = vmul.f32 %v4070, %v4237
        %v4722 = vmul.f32 %v4070, %v4238
        %v4723 = vmul.f32 %v4070, %v4239
        %v4724 = vmul.f32 %v4074, %v4236
        %v4725 = vmul.f32 %v4074, %v4237
        %v4726 = vmul.f32 %v4074, %v4238
        %v4727 = vmul.f32 %v4074, %v4239
        %v4728 = vmul.f32 %v4078, %v4236
        %v4729 = vmul.f32 %v4078, %v4237
        %v4730 = vmul.f32 %v4078, %v4238
        %v4731 = vmul.f32 %v4078, %v4239
        %v4732 = vmul.f32 %v4082, %v4236
        %v4733 = vmul.f32 %v4082, %v4237
        %v4734 = vmul.f32 %v4082, %v4238
        %v4735 = vmul.f32 %v4082, %v4239
        %v4736 = vmul.f32 %v4086, %v4236
        %v4737 = vmul.f32 %v4086, %v4237
        %v4738 = vmul.f32 %v4086, %v4238
        %v4739 = vmul.f32 %v4086, %v4239
        %v4740 = vmul.f32 %v4090, %v4236
        %v4741 = vmul.f32 %v4090, %v4237
        %v4742 = vmul.f32 %v4090, %v4238
        %v4743 = vmul.f32 %v4090, %v4239
        %v4744 = vmul.f32 %v4094, %v4236
        %v4745 = vmul.f32 %v4094, %v4237
        %v4746 = vmul.f32 %v4094, %v4238
        %v4747 = vmul.f32 %v4094, %v4239
        %v4748 = vmul.f32 %v4098, %v4236
        %v4749 = vmul.f32 %v4098, %v4237
        %v4750 = vmul.f32 %v4098, %v4238
        %v4751 = vmul.f32 %v4098, %v4239
        %v4752 = vmul.f32 %v4102, %v4236
        %v4753 = vmul.f32 %v4102, %v4237
        %v4754 = vmul.f32 %v4102, %v4238
        %v4755 = vmul.f32 %v4102, %v4239
        %v4756 = vmul.f32 %v4106, %v4236
        %v4757 = vmul.f32 %v4106, %v4237
        %v4758 = vmul.f32 %v4106, %v4238
        %v4759 = vmul.f32 %v4106, %v4239
        %v4760 = vmul.f32 %v4110, %v4236
        %v4761 = vmul.f32 %v4110, %v4237
        %v4762 = vmul.f32 %v4110, %v4238
        %v4763 = vmul.f32 %v4110, %v4239
        %v4764 = vmul.f32 %v4114, %v4236
        %v4765 = vmul.f32 %v4114, %v4237
        %v4766 = vmul.f32 %v4114, %v4238
        %v4767 = vmul.f32 %v4114, %v4239
        %v4768 = vmul.f32 %v4118, %v4236
        %v4769 = vmul.f32 %v4118, %v4237
        %v4770 = vmul.f32 %v4118, %v4238
        %v4771 = vmul.f32 %v4118, %v4239
        %v4772 = vmul.f32 %v4122, %v4236
        %v4773 = vmul.f32 %v4122, %v4237
        %v4774 = vmul.f32 %v4122, %v4238
        %v4775 = vmul.f32 %v4122, %v4239
        %v4776 = vmul.f32 %v4126, %v4236
        %v4777 = vmul.f32 %v4126, %v4237
        %v4778 = vmul.f32 %v4126, %v4238
        %v4779 = vmul.f32 %v4126, %v4239
        %v4780 = vmul.f32 %v4130, %v4236
        %v4781 = vmul.f32 %v4130, %v4237
        %v4782 = vmul.f32 %v4130, %v4238
        %v4783 = vmul.f32 %v4130, %v4239
        %v4784 = vmul.f32 %v4134, %v4236
        %v4785 = vmul.f32 %v4134, %v4237
        %v4786 = vmul.f32 %v4134, %v4238
        %v4787 = vmul.f32 %v4134, %v4239
        %v4788 = vmul.f32 %v4138, %v4236
        %v4789 = vmul.f32 %v4138, %v4237
        %v4790 = vmul.f32 %v4138, %v4238
        %v4791 = vmul.f32 %v4138, %v4239
        %v4792 = vmul.f32 %v4142, %v4236
        %v4793 = vmul.f32 %v4142, %v4237
        %v4794 = vmul.f32 %v4142, %v4238
        %v4795 = vmul.f32 %v4142, %v4239
        %v4796 = vmul.f32 %v4146, %v4236
        %v4797 = vmul.f32 %v4146, %v4237
        %v4798 = vmul.f32 %v4146, %v4238
        %v4799 = vmul.f32 %v4146, %v4239
        %v4800 = vmul.f32 %v4150, %v4236
        %v4801 = vmul.f32 %v4150, %v4237
        %v4802 = vmul.f32 %v4150, %v4238
        %v4803 = vmul.f32 %v4150, %v4239
        %v4804 = vmul.f32 %v4154, %v4236
        %v4805 = vmul.f32 %v4154, %v4237
        %v4806 = vmul.f32 %v4154, %v4238
        %v4807 = vmul.f32 %v4154, %v4239
        %v4808 = vmul.f32 %v4158, %v4236
        %v4809 = vmul.f32 %v4158, %v4237
        %v4810 = vmul.f32 %v4158, %v4238
        %v4811 = vmul.f32 %v4158, %v4239
        %v4812 = vmul.f32 %v4162, %v4236
        %v4813 = vmul.f32 %v4162, %v4237
        %v4814 = vmul.f32 %v4162, %v4238
        %v4815 = vmul.f32 %v4162, %v4239
        %v4816 = vmul.f32 %v4166, %v4236
        %v4817 = vmul.f32 %v4166, %v4237
        %v4818 = vmul.f32 %v4166, %v4238
        %v4819 = vmul.f32 %v4166, %v4239
        %v4820 = vmul.f32 %v4170, %v4236
        %v4821 = vmul.f32 %v4170, %v4237
        %v4822 = vmul.f32 %v4170, %v4238
        %v4823 = vmul.f32 %v4170, %v4239
        %v4824 = vmul.f32 %v4174, %v4236
        %v4825 = vmul.f32 %v4174, %v4237
        %v4826 = vmul.f32 %v4174, %v4238
        %v4827 = vmul.f32 %v4174, %v4239
        %v4828 = vmul.f32 %v4178, %v4236
        %v4829 = vmul.f32 %v4178, %v4237
        %v4830 = vmul.f32 %v4178, %v4238
        %v4831 = vmul.f32 %v4178, %v4239
        %v4832 = vmul.f32 %v4182, %v4236
        %v4833 = vmul.f32 %v4182, %v4237
        %v4834 = vmul.f32 %v4182, %v4238
        %v4835 = vmul.f32 %v4182, %v4239
        %v4836 = vmul.f32 %v4186, %v4236
        %v4837 = vmul.f32 %v4186, %v4237
        %v4838 = vmul.f32 %v4186, %v4238
        %v4839 = vmul.f32 %v4186, %v4239
        %v4840 = vmul.f32 %v4190, %v4236
        %v4841 = vmul.f32 %v4190, %v4237
        %v4842 = vmul.f32 %v4190, %v4238
        %v4843 = vmul.f32 %v4190, %v4239
        %v4844 = vmul.f32 %v4194, %v4236
        %v4845 = vmul.f32 %v4194, %v4237
        %v4846 = vmul.f32 %v4194, %v4238
        %v4847 = vmul.f32 %v4194, %v4239
        %v4848 = vmul.f32 %v4198, %v4236
        %v4849 = vmul.f32 %v4198, %v4237
        %v4850 = vmul.f32 %v4198, %v4238
        %v4851 = vmul.f32 %v4198, %v4239
        %v4852 = vmul.f32 %v4202, %v4236
        %v4853 = vmul.f32 %v4202, %v4237
        %v4854 = vmul.f32 %v4202, %v4238
        %v4855 = vmul.f32 %v4202, %v4239
        %v4856 = vmul.f32 %v4206, %v4236
        %v4857 = vmul.f32 %v4206, %v4237
        %v4858 = vmul.f32 %v4206, %v4238
        %v4859 = vmul.f32 %v4206, %v4239
        %v4860 = vmul.f32 %v4210, %v4236
        %v4861 = vmul.f32 %v4210, %v4237
        %v4862 = vmul.f32 %v4210, %v4238
        %v4863 = vmul.f32 %v4210, %v4239
        %v4864 = vmul.f32 %v4214, %v4236
        %v4865 = vmul.f32 %v4214, %v4237
        %v4866 = vmul.f32 %v4214, %v4238
        %v4867 = vmul.f32 %v4214, %v4239
        %v4868 = vmul.f32 %v4218, %v4236
        %v4869 = vmul.f32 %v4218, %v4237
        %v4870 = vmul.f32 %v4218, %v4238
        %v4871 = vmul.f32 %v4218, %v4239
        %v4872 = vmul.f32 %v4222, %v4236
        %v4873 = vmul.f32 %v4222, %v4237
        %v4874 = vmul.f32 %v4222, %v4238
        %v4875 = vmul.f32 %v4222, %v4239
        %v4876 = vmul.f32 %v4226, %v4236
        %v4877 = vmul.f32 %v4226, %v4237
        %v4878 = vmul.f32 %v4226, %v4238
        %v4879 = vmul.f32 %v4226, %v4239
        %v4880 = vadd.f32 %v2948, %v4240
        %v4881 = vadd.f32 %v2949, %v4241
        %v4882 = vadd.f32 %v2950, %v4242
        %v4883 = vadd.f32 %v2951, %v4243
        %v4884 = vadd.f32 %v2952, %v4244
        %v4885 = vadd.f32 %v2953, %v4245
        %v4886 = vadd.f32 %v2954, %v4246
        %v4887 = vadd.f32 %v2955, %v4247
        %v4888 = vadd.f32 %v2956, %v4248
        %v4889 = vadd.f32 %v2957, %v4249
        %v4890 = vadd.f32 %v2958, %v4250
        %v4891 = vadd.f32 %v2959, %v4251
        %v4892 = vadd.f32 %v2960, %v4252
        %v4893 = vadd.f32 %v2961, %v4253
        %v4894 = vadd.f32 %v2962, %v4254
        %v4895 = vadd.f32 %v2963, %v4255
        %v4896 = vadd.f32 %v2964, %v4256
        %v4897 = vadd.f32 %v2965, %v4257
        %v4898 = vadd.f32 %v2966, %v4258
        %v4899 = vadd.f32 %v2967, %v4259
        %v4900 = vadd.f32 %v2968, %v4260
        %v4901 = vadd.f32 %v2969, %v4261
        %v4902 = vadd.f32 %v2970, %v4262
        %v4903 = vadd.f32 %v2971, %v4263
        %v4904 = vadd.f32 %v2972, %v4264
        %v4905 = vadd.f32 %v2973, %v4265
        %v4906 = vadd.f32 %v2974, %v4266
        %v4907 = vadd.f32 %v2975, %v4267
        %v4908 = vadd.f32 %v2976, %v4268
        %v4909 = vadd.f32 %v2977, %v4269
        %v4910 = vadd.f32 %v2978, %v4270
        %v4911 = vadd.f32 %v2979, %v4271
        %v4912 = vadd.f32 %v2980, %v4272
        %v4913 = vadd.f32 %v2981, %v4273
        %v4914 = vadd.f32 %v2982, %v4274
        %v4915 = vadd.f32 %v2983, %v4275
        %v4916 = vadd.f32 %v2984, %v4276
        %v4917 = vadd.f32 %v2985, %v4277
        %v4918 = vadd.f32 %v2986, %v4278
        %v4919 = vadd.f32 %v2987, %v4279
        %v4920 = vadd.f32 %v2988, %v4280
        %v4921 = vadd.f32 %v2989, %v4281
        %v4922 = vadd.f32 %v2990, %v4282
        %v4923 = vadd.f32 %v2991, %v4283
        %v4924 = vadd.f32 %v2992, %v4284
        %v4925 = vadd.f32 %v2993, %v4285
        %v4926 = vadd.f32 %v2994, %v4286
        %v4927 = vadd.f32 %v2995, %v4287
        %v4928 = vadd.f32 %v2996, %v4288
        %v4929 = vadd.f32 %v2997, %v4289
        %v4930 = vadd.f32 %v2998, %v4290
        %v4931 = vadd.f32 %v2999, %v4291
        %v4932 = vadd.f32 %v3000, %v4292
        %v4933 = vadd.f32 %v3001, %v4293
        %v4934 = vadd.f32 %v3002, %v4294
        %v4935 = vadd.f32 %v3003, %v4295
        %v4936 = vadd.f32 %v3004, %v4296
        %v4937 = vadd.f32 %v3005, %v4297
        %v4938 = vadd.f32 %v3006, %v4298
        %v4939 = vadd.f32 %v3007, %v4299
        %v4940 = vadd.f32 %v3008, %v4300
        %v4941 = vadd.f32 %v3009, %v4301
        %v4942 = vadd.f32 %v3010, %v4302
        %v4943 = vadd.f32 %v3011, %v4303
        %v4944 = vadd.f32 %v3012, %v4304
        %v4945 = vadd.f32 %v3013, %v4305
        %v4946 = vadd.f32 %v3014, %v4306
        %v4947 = vadd.f32 %v3015, %v4307
        %v4948 = vadd.f32 %v3016, %v4308
        %v4949 = vadd.f32 %v3017, %v4309
        %v4950 = vadd.f32 %v3018, %v4310
        %v4951 = vadd.f32 %v3019, %v4311
        %v4952 = vadd.f32 %v3020, %v4312
        %v4953 = vadd.f32 %v3021, %v4313
        %v4954 = vadd.f32 %v3022, %v4314
        %v4955 = vadd.f32 %v3023, %v4315
        %v4956 = vadd.f32 %v3024, %v4316
        %v4957 = vadd.f32 %v3025, %v4317
        %v4958 = vadd.f32 %v3026, %v4318
        %v4959 = vadd.f32 %v3027, %v4319
        %v4960 = vadd.f32 %v3028, %v4320
        %v4961 = vadd.f32 %v3029, %v4321
        %v4962 = vadd.f32 %v3030, %v4322
        %v4963 = vadd.f32 %v3031, %v4323
        %v4964 = vadd.f32 %v3032, %v4324
        %v4965 = vadd.f32 %v3033, %v4325
        %v4966 = vadd.f32 %v3034, %v4326
        %v4967 = vadd.f32 %v3035, %v4327
        %v4968 = vadd.f32 %v3036, %v4328
        %v4969 = vadd.f32 %v3037, %v4329
        %v4970 = vadd.f32 %v3038, %v4330
        %v4971 = vadd.f32 %v3039, %v4331
        %v4972 = vadd.f32 %v3040, %v4332
        %v4973 = vadd.f32 %v3041, %v4333
        %v4974 = vadd.f32 %v3042, %v4334
        %v4975 = vadd.f32 %v3043, %v4335
        %v4976 = vadd.f32 %v3044, %v4336
        %v4977 = vadd.f32 %v3045, %v4337
        %v4978 = vadd.f32 %v3046, %v4338
        %v4979 = vadd.f32 %v3047, %v4339
        %v4980 = vadd.f32 %v3048, %v4340
        %v4981 = vadd.f32 %v3049, %v4341
        %v4982 = vadd.f32 %v3050, %v4342
        %v4983 = vadd.f32 %v3051, %v4343
        %v4984 = vadd.f32 %v3052, %v4344
        %v4985 = vadd.f32 %v3053, %v4345
        %v4986 = vadd.f32 %v3054, %v4346
        %v4987 = vadd.f32 %v3055, %v4347
        %v4988 = vadd.f32 %v3056, %v4348
        %v4989 = vadd.f32 %v3057, %v4349
        %v4990 = vadd.f32 %v3058, %v4350
        %v4991 = vadd.f32 %v3059, %v4351
        %v4992 = vadd.f32 %v3060, %v4352
        %v4993 = vadd.f32 %v3061, %v4353
        %v4994 = vadd.f32 %v3062, %v4354
        %v4995 = vadd.f32 %v3063, %v4355
        %v4996 = vadd.f32 %v3064, %v4356
        %v4997 = vadd.f32 %v3065, %v4357
        %v4998 = vadd.f32 %v3066, %v4358
        %v4999 = vadd.f32 %v3067, %v4359
        %v5000 = vadd.f32 %v3068, %v4360
        %v5001 = vadd.f32 %v3069, %v4361
        %v5002 = vadd.f32 %v3070, %v4362
        %v5003 = vadd.f32 %v3071, %v4363
        %v5004 = vadd.f32 %v3072, %v4364
        %v5005 = vadd.f32 %v3073, %v4365
        %v5006 = vadd.f32 %v3074, %v4366
        %v5007 = vadd.f32 %v3075, %v4367
        %v5008 = vadd.f32 %v3076, %v4368
        %v5009 = vadd.f32 %v3077, %v4369
        %v5010 = vadd.f32 %v3078, %v4370
        %v5011 = vadd.f32 %v3079, %v4371
        %v5012 = vadd.f32 %v3080, %v4372
        %v5013 = vadd.f32 %v3081, %v4373
        %v5014 = vadd.f32 %v3082, %v4374
        %v5015 = vadd.f32 %v3083, %v4375
        %v5016 = vadd.f32 %v3084, %v4376
        %v5017 = vadd.f32 %v3085, %v4377
        %v5018 = vadd.f32 %v3086, %v4378
        %v5019 = vadd.f32 %v3087, %v4379
        %v5020 = vadd.f32 %v3088, %v4380
        %v5021 = vadd.f32 %v3089, %v4381
        %v5022 = vadd.f32 %v3090, %v4382
        %v5023 = vadd.f32 %v3091, %v4383
        %v5024 = vadd.f32 %v3092, %v4384
        %v5025 = vadd.f32 %v3093, %v4385
        %v5026 = vadd.f32 %v3094, %v4386
        %v5027 = vadd.f32 %v3095, %v4387
        %v5028 = vadd.f32 %v3096, %v4388
        %v5029 = vadd.f32 %v3097, %v4389
        %v5030 = vadd.f32 %v3098, %v4390
        %v5031 = vadd.f32 %v3099, %v4391
        %v5032 = vadd.f32 %v3100, %v4392
        %v5033 = vadd.f32 %v3101, %v4393
        %v5034 = vadd.f32 %v3102, %v4394
        %v5035 = vadd.f32 %v3103, %v4395
        %v5036 = vadd.f32 %v3104, %v4396
        %v5037 = vadd.f32 %v3105, %v4397
        %v5038 = vadd.f32 %v3106, %v4398
        %v5039 = vadd.f32 %v3107, %v4399
        %v5040 = vadd.f32 %v3108, %v4400
        %v5041 = vadd.f32 %v3109, %v4401
        %v5042 = vadd.f32 %v3110, %v4402
        %v5043 = vadd.f32 %v3111, %v4403
        %v5044 = vadd.f32 %v3112, %v4404
        %v5045 = vadd.f32 %v3113, %v4405
        %v5046 = vadd.f32 %v3114, %v4406
        %v5047 = vadd.f32 %v3115, %v4407
        %v5048 = vadd.f32 %v3116, %v4408
        %v5049 = vadd.f32 %v3117, %v4409
        %v5050 = vadd.f32 %v3118, %v4410
        %v5051 = vadd.f32 %v3119, %v4411
        %v5052 = vadd.f32 %v3120, %v4412
        %v5053 = vadd.f32 %v3121, %v4413
        %v5054 = vadd.f32 %v3122, %v4414
        %v5055 = vadd.f32 %v3123, %v4415
        %v5056 = vadd.f32 %v3124, %v4416
        %v5057 = vadd.f32 %v3125, %v4417
        %v5058 = vadd.f32 %v3126, %v4418
        %v5059 = vadd.f32 %v3127, %v4419
        %v5060 = vadd.f32 %v3128, %v4420
        %v5061 = vadd.f32 %v3129, %v4421
        %v5062 = vadd.f32 %v3130, %v4422
        %v5063 = vadd.f32 %v3131, %v4423
        %v5064 = vadd.f32 %v3132, %v4424
        %v5065 = vadd.f32 %v3133, %v4425
        %v5066 = vadd.f32 %v3134, %v4426
        %v5067 = vadd.f32 %v3135, %v4427
        %v5068 = vadd.f32 %v3136, %v4428
        %v5069 = vadd.f32 %v3137, %v4429
        %v5070 = vadd.f32 %v3138, %v4430
        %v5071 = vadd.f32 %v3139, %v4431
        %v5072 = vadd.f32 %v3140, %v4432
        %v5073 = vadd.f32 %v3141, %v4433
        %v5074 = vadd.f32 %v3142, %v4434
        %v5075 = vadd.f32 %v3143, %v4435
        %v5076 = vadd.f32 %v3144, %v4436
        %v5077 = vadd.f32 %v3145, %v4437
        %v5078 = vadd.f32 %v3146, %v4438
        %v5079 = vadd.f32 %v3147, %v4439
        %v5080 = vadd.f32 %v3148, %v4440
        %v5081 = vadd.f32 %v3149, %v4441
        %v5082 = vadd.f32 %v3150, %v4442
        %v5083 = vadd.f32 %v3151, %v4443
        %v5084 = vadd.f32 %v3152, %v4444
        %v5085 = vadd.f32 %v3153, %v4445
        %v5086 = vadd.f32 %v3154, %v4446
        %v5087 = vadd.f32 %v3155, %v4447
        %v5088 = vadd.f32 %v3156, %v4448
        %v5089 = vadd.f32 %v3157, %v4449
        %v5090 = vadd.f32 %v3158, %v4450
        %v5091 = vadd.f32 %v3159, %v4451
        %v5092 = vadd.f32 %v3160, %v4452
        %v5093 = vadd.f32 %v3161, %v4453
        %v5094 = vadd.f32 %v3162, %v4454
        %v5095 = vadd.f32 %v3163, %v4455
        %v5096 = vadd.f32 %v3164, %v4456
        %v5097 = vadd.f32 %v3165, %v4457
        %v5098 = vadd.f32 %v3166, %v4458
        %v5099 = vadd.f32 %v3167, %v4459
        %v5100 = vadd.f32 %v3168, %v4460
        %v5101 = vadd.f32 %v3169, %v4461
        %v5102 = vadd.f32 %v3170, %v4462
        %v5103 = vadd.f32 %v3171, %v4463
        %v5104 = vadd.f32 %v3172, %v4464
        %v5105 = vadd.f32 %v3173, %v4465
        %v5106 = vadd.f32 %v3174, %v4466
        %v5107 = vadd.f32 %v3175, %v4467
        %v5108 = vadd.f32 %v3176, %v4468
        %v5109 = vadd.f32 %v3177, %v4469
        %v5110 = vadd.f32 %v3178, %v4470
        %v5111 = vadd.f32 %v3179, %v4471
        %v5112 = vadd.f32 %v3180, %v4472
        %v5113 = vadd.f32 %v3181, %v4473
        %v5114 = vadd.f32 %v3182, %v4474
        %v5115 = vadd.f32 %v3183, %v4475
        %v5116 = vadd.f32 %v3184, %v4476
        %v5117 = vadd.f32 %v3185, %v4477
        %v5118 = vadd.f32 %v3186, %v4478
        %v5119 = vadd.f32 %v3187, %v4479
        %v5120 = vadd.f32 %v3188, %v4480
        %v5121 = vadd.f32 %v3189, %v4481
        %v5122 = vadd.f32 %v3190, %v4482
        %v5123 = vadd.f32 %v3191, %v4483
        %v5124 = vadd.f32 %v3192, %v4484
        %v5125 = vadd.f32 %v3193, %v4485
        %v5126 = vadd.f32 %v3194, %v4486
        %v5127 = vadd.f32 %v3195, %v4487
        %v5128 = vadd.f32 %v3196, %v4488
        %v5129 = vadd.f32 %v3197, %v4489
        %v5130 = vadd.f32 %v3198, %v4490
        %v5131 = vadd.f32 %v3199, %v4491
        %v5132 = vadd.f32 %v3200, %v4492
        %v5133 = vadd.f32 %v3201, %v4493
        %v5134 = vadd.f32 %v3202, %v4494
        %v5135 = vadd.f32 %v3203, %v4495
        %v5136 = vadd.f32 %v3204, %v4496
        %v5137 = vadd.f32 %v3205, %v4497
        %v5138 = vadd.f32 %v3206, %v4498
        %v5139 = vadd.f32 %v3207, %v4499
        %v5140 = vadd.f32 %v3208, %v4500
        %v5141 = vadd.f32 %v3209, %v4501
        %v5142 = vadd.f32 %v3210, %v4502
        %v5143 = vadd.f32 %v3211, %v4503
        %v5144 = vadd.f32 %v3212, %v4504
        %v5145 = vadd.f32 %v3213, %v4505
        %v5146 = vadd.f32 %v3214, %v4506
        %v5147 = vadd.f32 %v3215, %v4507
        %v5148 = vadd.f32 %v3216, %v4508
        %v5149 = vadd.f32 %v3217, %v4509
        %v5150 = vadd.f32 %v3218, %v4510
        %v5151 = vadd.f32 %v3219, %v4511
        %v5152 = vadd.f32 %v3220, %v4512
        %v5153 = vadd.f32 %v3221, %v4513
        %v5154 = vadd.f32 %v3222, %v4514
        %v5155 = vadd.f32 %v3223, %v4515
        %v5156 = vadd.f32 %v3224, %v4516
        %v5157 = vadd.f32 %v3225, %v4517
        %v5158 = vadd.f32 %v3226, %v4518
        %v5159 = vadd.f32 %v3227, %v4519
        %v5160 = vadd.f32 %v3228, %v4520
        %v5161 = vadd.f32 %v3229, %v4521
        %v5162 = vadd.f32 %v3230, %v4522
        %v5163 = vadd.f32 %v3231, %v4523
        %v5164 = vadd.f32 %v3232, %v4524
        %v5165 = vadd.f32 %v3233, %v4525
        %v5166 = vadd.f32 %v3234, %v4526
        %v5167 = vadd.f32 %v3235, %v4527
        %v5168 = vadd.f32 %v3236, %v4528
        %v5169 = vadd.f32 %v3237, %v4529
        %v5170 = vadd.f32 %v3238, %v4530
        %v5171 = vadd.f32 %v3239, %v4531
        %v5172 = vadd.f32 %v3240, %v4532
        %v5173 = vadd.f32 %v3241, %v4533
        %v5174 = vadd.f32 %v3242, %v4534
        %v5175 = vadd.f32 %v3243, %v4535
        %v5176 = vadd.f32 %v3244, %v4536
        %v5177 = vadd.f32 %v3245, %v4537
        %v5178 = vadd.f32 %v3246, %v4538
        %v5179 = vadd.f32 %v3247, %v4539
        %v5180 = vadd.f32 %v3248, %v4540
        %v5181 = vadd.f32 %v3249, %v4541
        %v5182 = vadd.f32 %v3250, %v4542
        %v5183 = vadd.f32 %v3251, %v4543
        %v5184 = vadd.f32 %v3252, %v4544
        %v5185 = vadd.f32 %v3253, %v4545
        %v5186 = vadd.f32 %v3254, %v4546
        %v5187 = vadd.f32 %v3255, %v4547
        %v5188 = vadd.f32 %v3256, %v4548
        %v5189 = vadd.f32 %v3257, %v4549
        %v5190 = vadd.f32 %v3258, %v4550
        %v5191 = vadd.f32 %v3259, %v4551
        %v5192 = vadd.f32 %v3260, %v4552
        %v5193 = vadd.f32 %v3261, %v4553
        %v5194 = vadd.f32 %v3262, %v4554
        %v5195 = vadd.f32 %v3263, %v4555
        %v5196 = vadd.f32 %v3264, %v4556
        %v5197 = vadd.f32 %v3265, %v4557
        %v5198 = vadd.f32 %v3266, %v4558
        %v5199 = vadd.f32 %v3267, %v4559
        %v5200 = vadd.f32 %v3268, %v4560
        %v5201 = vadd.f32 %v3269, %v4561
        %v5202 = vadd.f32 %v3270, %v4562
        %v5203 = vadd.f32 %v3271, %v4563
        %v5204 = vadd.f32 %v3272, %v4564
        %v5205 = vadd.f32 %v3273, %v4565
        %v5206 = vadd.f32 %v3274, %v4566
        %v5207 = vadd.f32 %v3275, %v4567
        %v5208 = vadd.f32 %v3276, %v4568
        %v5209 = vadd.f32 %v3277, %v4569
        %v5210 = vadd.f32 %v3278, %v4570
        %v5211 = vadd.f32 %v3279, %v4571
        %v5212 = vadd.f32 %v3280, %v4572
        %v5213 = vadd.f32 %v3281, %v4573
        %v5214 = vadd.f32 %v3282, %v4574
        %v5215 = vadd.f32 %v3283, %v4575
        %v5216 = vadd.f32 %v3284, %v4576
        %v5217 = vadd.f32 %v3285, %v4577
        %v5218 = vadd.f32 %v3286, %v4578
        %v5219 = vadd.f32 %v3287, %v4579
        %v5220 = vadd.f32 %v3288, %v4580
        %v5221 = vadd.f32 %v3289, %v4581
        %v5222 = vadd.f32 %v3290, %v4582
        %v5223 = vadd.f32 %v3291, %v4583
        %v5224 = vadd.f32 %v3292, %v4584
        %v5225 = vadd.f32 %v3293, %v4585
        %v5226 = vadd.f32 %v3294, %v4586
        %v5227 = vadd.f32 %v3295, %v4587
        %v5228 = vadd.f32 %v3296, %v4588
        %v5229 = vadd.f32 %v3297, %v4589
        %v5230 = vadd.f32 %v3298, %v4590
        %v5231 = vadd.f32 %v3299, %v4591
        %v5232 = vadd.f32 %v3300, %v4592
        %v5233 = vadd.f32 %v3301, %v4593
        %v5234 = vadd.f32 %v3302, %v4594
        %v5235 = vadd.f32 %v3303, %v4595
        %v5236 = vadd.f32 %v3304, %v4596
        %v5237 = vadd.f32 %v3305, %v4597
        %v5238 = vadd.f32 %v3306, %v4598
        %v5239 = vadd.f32 %v3307, %v4599
        %v5240 = vadd.f32 %v3308, %v4600
        %v5241 = vadd.f32 %v3309, %v4601
        %v5242 = vadd.f32 %v3310, %v4602
        %v5243 = vadd.f32 %v3311, %v4603
        %v5244 = vadd.f32 %v3312, %v4604
        %v5245 = vadd.f32 %v3313, %v4605
        %v5246 = vadd.f32 %v3314, %v4606
        %v5247 = vadd.f32 %v3315, %v4607
        %v5248 = vadd.f32 %v3316, %v4608
        %v5249 = vadd.f32 %v3317, %v4609
        %v5250 = vadd.f32 %v3318, %v4610
        %v5251 = vadd.f32 %v3319, %v4611
        %v5252 = vadd.f32 %v3320, %v4612
        %v5253 = vadd.f32 %v3321, %v4613
        %v5254 = vadd.f32 %v3322, %v4614
        %v5255 = vadd.f32 %v3323, %v4615
        %v5256 = vadd.f32 %v3324, %v4616
        %v5257 = vadd.f32 %v3325, %v4617
        %v5258 = vadd.f32 %v3326, %v4618
        %v5259 = vadd.f32 %v3327, %v4619
        %v5260 = vadd.f32 %v3328, %v4620
        %v5261 = vadd.f32 %v3329, %v4621
        %v5262 = vadd.f32 %v3330, %v4622
        %v5263 = vadd.f32 %v3331, %v4623
        %v5264 = vadd.f32 %v3332, %v4624
        %v5265 = vadd.f32 %v3333, %v4625
        %v5266 = vadd.f32 %v3334, %v4626
        %v5267 = vadd.f32 %v3335, %v4627
        %v5268 = vadd.f32 %v3336, %v4628
        %v5269 = vadd.f32 %v3337, %v4629
        %v5270 = vadd.f32 %v3338, %v4630
        %v5271 = vadd.f32 %v3339, %v4631
        %v5272 = vadd.f32 %v3340, %v4632
        %v5273 = vadd.f32 %v3341, %v4633
        %v5274 = vadd.f32 %v3342, %v4634
        %v5275 = vadd.f32 %v3343, %v4635
        %v5276 = vadd.f32 %v3344, %v4636
        %v5277 = vadd.f32 %v3345, %v4637
        %v5278 = vadd.f32 %v3346, %v4638
        %v5279 = vadd.f32 %v3347, %v4639
        %v5280 = vadd.f32 %v3348, %v4640
        %v5281 = vadd.f32 %v3349, %v4641
        %v5282 = vadd.f32 %v3350, %v4642
        %v5283 = vadd.f32 %v3351, %v4643
        %v5284 = vadd.f32 %v3352, %v4644
        %v5285 = vadd.f32 %v3353, %v4645
        %v5286 = vadd.f32 %v3354, %v4646
        %v5287 = vadd.f32 %v3355, %v4647
        %v5288 = vadd.f32 %v3356, %v4648
        %v5289 = vadd.f32 %v3357, %v4649
        %v5290 = vadd.f32 %v3358, %v4650
        %v5291 = vadd.f32 %v3359, %v4651
        %v5292 = vadd.f32 %v3360, %v4652
        %v5293 = vadd.f32 %v3361, %v4653
        %v5294 = vadd.f32 %v3362, %v4654
        %v5295 = vadd.f32 %v3363, %v4655
        %v5296 = vadd.f32 %v3364, %v4656
        %v5297 = vadd.f32 %v3365, %v4657
        %v5298 = vadd.f32 %v3366, %v4658
        %v5299 = vadd.f32 %v3367, %v4659
        %v5300 = vadd.f32 %v3368, %v4660
        %v5301 = vadd.f32 %v3369, %v4661
        %v5302 = vadd.f32 %v3370, %v4662
        %v5303 = vadd.f32 %v3371, %v4663
        %v5304 = vadd.f32 %v3372, %v4664
        %v5305 = vadd.f32 %v3373, %v4665
        %v5306 = vadd.f32 %v3374, %v4666
        %v5307 = vadd.f32 %v3375, %v4667
        %v5308 = vadd.f32 %v3376, %v4668
        %v5309 = vadd.f32 %v3377, %v4669
        %v5310 = vadd.f32 %v3378, %v4670
        %v5311 = vadd.f32 %v3379, %v4671
        %v5312 = vadd.f32 %v3380, %v4672
        %v5313 = vadd.f32 %v3381, %v4673
        %v5314 = vadd.f32 %v3382, %v4674
        %v5315 = vadd.f32 %v3383, %v4675
        %v5316 = vadd.f32 %v3384, %v4676
        %v5317 = vadd.f32 %v3385, %v4677
        %v5318 = vadd.f32 %v3386, %v4678
        %v5319 = vadd.f32 %v3387, %v4679
        %v5320 = vadd.f32 %v3388, %v4680
        %v5321 = vadd.f32 %v3389, %v4681
        %v5322 = vadd.f32 %v3390, %v4682
        %v5323 = vadd.f32 %v3391, %v4683
        %v5324 = vadd.f32 %v3392, %v4684
        %v5325 = vadd.f32 %v3393, %v4685
        %v5326 = vadd.f32 %v3394, %v4686
        %v5327 = vadd.f32 %v3395, %v4687
        %v5328 = vadd.f32 %v3396, %v4688
        %v5329 = vadd.f32 %v3397, %v4689
        %v5330 = vadd.f32 %v3398, %v4690
        %v5331 = vadd.f32 %v3399, %v4691
        %v5332 = vadd.f32 %v3400, %v4692
        %v5333 = vadd.f32 %v3401, %v4693
        %v5334 = vadd.f32 %v3402, %v4694
        %v5335 = vadd.f32 %v3403, %v4695
        %v5336 = vadd.f32 %v3404, %v4696
        %v5337 = vadd.f32 %v3405, %v4697
        %v5338 = vadd.f32 %v3406, %v4698
        %v5339 = vadd.f32 %v3407, %v4699
        %v5340 = vadd.f32 %v3408, %v4700
        %v5341 = vadd.f32 %v3409, %v4701
        %v5342 = vadd.f32 %v3410, %v4702
        %v5343 = vadd.f32 %v3411, %v4703
        %v5344 = vadd.f32 %v3412, %v4704
        %v5345 = vadd.f32 %v3413, %v4705
        %v5346 = vadd.f32 %v3414, %v4706
        %v5347 = vadd.f32 %v3415, %v4707
        %v5348 = vadd.f32 %v3416, %v4708
        %v5349 = vadd.f32 %v3417, %v4709
        %v5350 = vadd.f32 %v3418, %v4710
        %v5351 = vadd.f32 %v3419, %v4711
        %v5352 = vadd.f32 %v3420, %v4712
        %v5353 = vadd.f32 %v3421, %v4713
        %v5354 = vadd.f32 %v3422, %v4714
        %v5355 = vadd.f32 %v3423, %v4715
        %v5356 = vadd.f32 %v3424, %v4716
        %v5357 = vadd.f32 %v3425, %v4717
        %v5358 = vadd.f32 %v3426, %v4718
        %v5359 = vadd.f32 %v3427, %v4719
        %v5360 = vadd.f32 %v3428, %v4720
        %v5361 = vadd.f32 %v3429, %v4721
        %v5362 = vadd.f32 %v3430, %v4722
        %v5363 = vadd.f32 %v3431, %v4723
        %v5364 = vadd.f32 %v3432, %v4724
        %v5365 = vadd.f32 %v3433, %v4725
        %v5366 = vadd.f32 %v3434, %v4726
        %v5367 = vadd.f32 %v3435, %v4727
        %v5368 = vadd.f32 %v3436, %v4728
        %v5369 = vadd.f32 %v3437, %v4729
        %v5370 = vadd.f32 %v3438, %v4730
        %v5371 = vadd.f32 %v3439, %v4731
        %v5372 = vadd.f32 %v3440, %v4732
        %v5373 = vadd.f32 %v3441, %v4733
        %v5374 = vadd.f32 %v3442, %v4734
        %v5375 = vadd.f32 %v3443, %v4735
        %v5376 = vadd.f32 %v3444, %v4736
        %v5377 = vadd.f32 %v3445, %v4737
        %v5378 = vadd.f32 %v3446, %v4738
        %v5379 = vadd.f32 %v3447, %v4739
        %v5380 = vadd.f32 %v3448, %v4740
        %v5381 = vadd.f32 %v3449, %v4741
        %v5382 = vadd.f32 %v3450, %v4742
        %v5383 = vadd.f32 %v3451, %v4743
        %v5384 = vadd.f32 %v3452, %v4744
        %v5385 = vadd.f32 %v3453, %v4745
        %v5386 = vadd.f32 %v3454, %v4746
        %v5387 = vadd.f32 %v3455, %v4747
        %v5388 = vadd.f32 %v3456, %v4748
        %v5389 = vadd.f32 %v3457, %v4749
        %v5390 = vadd.f32 %v3458, %v4750
        %v5391 = vadd.f32 %v3459, %v4751
        %v5392 = vadd.f32 %v3460, %v4752
        %v5393 = vadd.f32 %v3461, %v4753
        %v5394 = vadd.f32 %v3462, %v4754
        %v5395 = vadd.f32 %v3463, %v4755
        %v5396 = vadd.f32 %v3464, %v4756
        %v5397 = vadd.f32 %v3465, %v4757
        %v5398 = vadd.f32 %v3466, %v4758
        %v5399 = vadd.f32 %v3467, %v4759
        %v5400 = vadd.f32 %v3468, %v4760
        %v5401 = vadd.f32 %v3469, %v4761
        %v5402 = vadd.f32 %v3470, %v4762
        %v5403 = vadd.f32 %v3471, %v4763
        %v5404 = vadd.f32 %v3472, %v4764
        %v5405 = vadd.f32 %v3473, %v4765
        %v5406 = vadd.f32 %v3474, %v4766
        %v5407 = vadd.f32 %v3475, %v4767
        %v5408 = vadd.f32 %v3476, %v4768
        %v5409 = vadd.f32 %v3477, %v4769
        %v5410 = vadd.f32 %v3478, %v4770
        %v5411 = vadd.f32 %v3479, %v4771
        %v5412 = vadd.f32 %v3480, %v4772
        %v5413 = vadd.f32 %v3481, %v4773
        %v5414 = vadd.f32 %v3482, %v4774
        %v5415 = vadd.f32 %v3483, %v4775
        %v5416 = vadd.f32 %v3484, %v4776
        %v5417 = vadd.f32 %v3485, %v4777
        %v5418 = vadd.f32 %v3486, %v4778
        %v5419 = vadd.f32 %v3487, %v4779
        %v5420 = vadd.f32 %v3488, %v4780
        %v5421 = vadd.f32 %v3489, %v4781
        %v5422 = vadd.f32 %v3490, %v4782
        %v5423 = vadd.f32 %v3491, %v4783
        %v5424 = vadd.f32 %v3492, %v4784
        %v5425 = vadd.f32 %v3493, %v4785
        %v5426 = vadd.f32 %v3494, %v4786
        %v5427 = vadd.f32 %v3495, %v4787
        %v5428 = vadd.f32 %v3496, %v4788
        %v5429 = vadd.f32 %v3497, %v4789
        %v5430 = vadd.f32 %v3498, %v4790
        %v5431 = vadd.f32 %v3499, %v4791
        %v5432 = vadd.f32 %v3500, %v4792
        %v5433 = vadd.f32 %v3501, %v4793
        %v5434 = vadd.f32 %v3502, %v4794
        %v5435 = vadd.f32 %v3503, %v4795
        %v5436 = vadd.f32 %v3504, %v4796
        %v5437 = vadd.f32 %v3505, %v4797
        %v5438 = vadd.f32 %v3506, %v4798
        %v5439 = vadd.f32 %v3507, %v4799
        %v5440 = vadd.f32 %v3508, %v4800
        %v5441 = vadd.f32 %v3509, %v4801
        %v5442 = vadd.f32 %v3510, %v4802
        %v5443 = vadd.f32 %v3511, %v4803
        %v5444 = vadd.f32 %v3512, %v4804
        %v5445 = vadd.f32 %v3513, %v4805
        %v5446 = vadd.f32 %v3514, %v4806
        %v5447 = vadd.f32 %v3515, %v4807
        %v5448 = vadd.f32 %v3516, %v4808
        %v5449 = vadd.f32 %v3517, %v4809
        %v5450 = vadd.f32 %v3518, %v4810
        %v5451 = vadd.f32 %v3519, %v4811
        %v5452 = vadd.f32 %v3520, %v4812
        %v5453 = vadd.f32 %v3521, %v4813
        %v5454 = vadd.f32 %v3522, %v4814
        %v5455 = vadd.f32 %v3523, %v4815
        %v5456 = vadd.f32 %v3524, %v4816
        %v5457 = vadd.f32 %v3525, %v4817
        %v5458 = vadd.f32 %v3526, %v4818
        %v5459 = vadd.f32 %v3527, %v4819
        %v5460 = vadd.f32 %v3528, %v4820
        %v5461 = vadd.f32 %v3529, %v4821
        %v5462 = vadd.f32 %v3530, %v4822
        %v5463 = vadd.f32 %v3531, %v4823
        %v5464 = vadd.f32 %v3532, %v4824
        %v5465 = vadd.f32 %v3533, %v4825
        %v5466 = vadd.f32 %v3534, %v4826
        %v5467 = vadd.f32 %v3535, %v4827
        %v5468 = vadd.f32 %v3536, %v4828
        %v5469 = vadd.f32 %v3537, %v4829
        %v5470 = vadd.f32 %v3538, %v4830
        %v5471 = vadd.f32 %v3539, %v4831
        %v5472 = vadd.f32 %v3540, %v4832
        %v5473 = vadd.f32 %v3541, %v4833
        %v5474 = vadd.f32 %v3542, %v4834
        %v5475 = vadd.f32 %v3543, %v4835
        %v5476 = vadd.f32 %v3544, %v4836
        %v5477 = vadd.f32 %v3545, %v4837
        %v5478 = vadd.f32 %v3546, %v4838
        %v5479 = vadd.f32 %v3547, %v4839
        %v5480 = vadd.f32 %v3548, %v4840
        %v5481 = vadd.f32 %v3549, %v4841
        %v5482 = vadd.f32 %v3550, %v4842
        %v5483 = vadd.f32 %v3551, %v4843
        %v5484 = vadd.f32 %v3552, %v4844
        %v5485 = vadd.f32 %v3553, %v4845
        %v5486 = vadd.f32 %v3554, %v4846
        %v5487 = vadd.f32 %v3555, %v4847
        %v5488 = vadd.f32 %v3556, %v4848
        %v5489 = vadd.f32 %v3557, %v4849
        %v5490 = vadd.f32 %v3558, %v4850
        %v5491 = vadd.f32 %v3559, %v4851
        %v5492 = vadd.f32 %v3560, %v4852
        %v5493 = vadd.f32 %v3561, %v4853
        %v5494 = vadd.f32 %v3562, %v4854
        %v5495 = vadd.f32 %v3563, %v4855
        %v5496 = vadd.f32 %v3564, %v4856
        %v5497 = vadd.f32 %v3565, %v4857
        %v5498 = vadd.f32 %v3566, %v4858
        %v5499 = vadd.f32 %v3567, %v4859
        %v5500 = vadd.f32 %v3568, %v4860
        %v5501 = vadd.f32 %v3569, %v4861
        %v5502 = vadd.f32 %v3570, %v4862
        %v5503 = vadd.f32 %v3571, %v4863
        %v5504 = vadd.f32 %v3572, %v4864
        %v5505 = vadd.f32 %v3573, %v4865
        %v5506 = vadd.f32 %v3574, %v4866
        %v5507 = vadd.f32 %v3575, %v4867
        %v5508 = vadd.f32 %v3576, %v4868
        %v5509 = vadd.f32 %v3577, %v4869
        %v5510 = vadd.f32 %v3578, %v4870
        %v5511 = vadd.f32 %v3579, %v4871
        %v5512 = vadd.f32 %v3580, %v4872
        %v5513 = vadd.f32 %v3581, %v4873
        %v5514 = vadd.f32 %v3582, %v4874
        %v5515 = vadd.f32 %v3583, %v4875
        %v5516 = vadd.f32 %v3584, %v4876
        %v5517 = vadd.f32 %v3585, %v4877
        %v5518 = vadd.f32 %v3586, %v4878
        %v5519 = vadd.f32 %v3587, %v4879
        %5520 = vset.pattern.permute.xlu0 2
        %5521 = vperm.xlu0 %5520, %v1974
        %v5522 = vpop.permute.xlu0 %5521
        %5524 = vset.pattern.permute.xlu0 2
        %5525 = vperm.xlu0 %5524, %v1975
        %v5526 = vpop.permute.xlu0 %5525
        %5528 = vset.pattern.permute.xlu0 2
        %5529 = vperm.xlu0 %5528, %v1976
        %v5530 = vpop.permute.xlu0 %5529
        %5532 = vset.pattern.permute.xlu0 2
        %5533 = vperm.xlu0 %5532, %v1977
        %v5534 = vpop.permute.xlu0 %5533
        %5536 = vset.pattern.permute.xlu0 2
        %5537 = vperm.xlu0 %5536, %v1978
        %v5538 = vpop.permute.xlu0 %5537
        %5540 = vset.pattern.permute.xlu0 2
        %5541 = vperm.xlu0 %5540, %v1979
        %v5542 = vpop.permute.xlu0 %5541
        %5544 = vset.pattern.permute.xlu0 2
        %5545 = vperm.xlu0 %5544, %v1980
        %v5546 = vpop.permute.xlu0 %5545
        %5548 = vset.pattern.permute.xlu0 2
        %5549 = vperm.xlu0 %5548, %v1981
        %v5550 = vpop.permute.xlu0 %5549
        %5552 = vset.pattern.permute.xlu0 2
        %5553 = vperm.xlu0 %5552, %v1982
        %v5554 = vpop.permute.xlu0 %5553
        %5556 = vset.pattern.permute.xlu0 2
        %5557 = vperm.xlu0 %5556, %v1983
        %v5558 = vpop.permute.xlu0 %5557
        %5560 = vset.pattern.permute.xlu0 2
        %5561 = vperm.xlu0 %5560, %v1984
        %v5562 = vpop.permute.xlu0 %5561
        %5564 = vset.pattern.permute.xlu0 2
        %5565 = vperm.xlu0 %5564, %v1985
        %v5566 = vpop.permute.xlu0 %5565
        %5568 = vset.pattern.permute.xlu0 2
        %5569 = vperm.xlu0 %5568, %v1986
        %v5570 = vpop.permute.xlu0 %5569
        %5572 = vset.pattern.permute.xlu0 2
        %5573 = vperm.xlu0 %5572, %v1987
        %v5574 = vpop.permute.xlu0 %5573
        %5576 = vset.pattern.permute.xlu0 2
        %5577 = vperm.xlu0 %5576, %v1988
        %v5578 = vpop.permute.xlu0 %5577
        %5580 = vset.pattern.permute.xlu0 2
        %5581 = vperm.xlu0 %5580, %v1989
        %v5582 = vpop.permute.xlu0 %5581
        %5584 = vset.pattern.permute.xlu0 2
        %5585 = vperm.xlu0 %5584, %v1990
        %v5586 = vpop.permute.xlu0 %5585
        %5588 = vset.pattern.permute.xlu0 2
        %5589 = vperm.xlu0 %5588, %v1991
        %v5590 = vpop.permute.xlu0 %5589
        %5592 = vset.pattern.permute.xlu0 2
        %5593 = vperm.xlu0 %5592, %v1992
        %v5594 = vpop.permute.xlu0 %5593
        %5596 = vset.pattern.permute.xlu0 2
        %5597 = vperm.xlu0 %5596, %v1993
        %v5598 = vpop.permute.xlu0 %5597
        %5600 = vset.pattern.permute.xlu0 2
        %5601 = vperm.xlu0 %5600, %v1994
        %v5602 = vpop.permute.xlu0 %5601
        %5604 = vset.pattern.permute.xlu0 2
        %5605 = vperm.xlu0 %5604, %v1995
        %v5606 = vpop.permute.xlu0 %5605
        %5608 = vset.pattern.permute.xlu0 2
        %5609 = vperm.xlu0 %5608, %v1996
        %v5610 = vpop.permute.xlu0 %5609
        %5612 = vset.pattern.permute.xlu0 2
        %5613 = vperm.xlu0 %5612, %v1997
        %v5614 = vpop.permute.xlu0 %5613
        %5616 = vset.pattern.permute.xlu0 2
        %5617 = vperm.xlu0 %5616, %v1998
        %v5618 = vpop.permute.xlu0 %5617
        %5620 = vset.pattern.permute.xlu0 2
        %5621 = vperm.xlu0 %5620, %v1999
        %v5622 = vpop.permute.xlu0 %5621
        %5624 = vset.pattern.permute.xlu0 2
        %5625 = vperm.xlu0 %5624, %v2000
        %v5626 = vpop.permute.xlu0 %5625
        %5628 = vset.pattern.permute.xlu0 2
        %5629 = vperm.xlu0 %5628, %v2001
        %v5630 = vpop.permute.xlu0 %5629
        %5632 = vset.pattern.permute.xlu0 2
        %5633 = vperm.xlu0 %5632, %v2002
        %v5634 = vpop.permute.xlu0 %5633
        %5636 = vset.pattern.permute.xlu0 2
        %5637 = vperm.xlu0 %5636, %v2003
        %v5638 = vpop.permute.xlu0 %5637
        %5640 = vset.pattern.permute.xlu0 2
        %5641 = vperm.xlu0 %5640, %v2004
        %v5642 = vpop.permute.xlu0 %5641
        %5644 = vset.pattern.permute.xlu0 2
        %5645 = vperm.xlu0 %5644, %v2005
        %v5646 = vpop.permute.xlu0 %5645
        %5648 = vset.pattern.permute.xlu0 2
        %5649 = vperm.xlu0 %5648, %v2006
        %v5650 = vpop.permute.xlu0 %5649
        %5652 = vset.pattern.permute.xlu0 2
        %5653 = vperm.xlu0 %5652, %v2007
        %v5654 = vpop.permute.xlu0 %5653
        %5656 = vset.pattern.permute.xlu0 2
        %5657 = vperm.xlu0 %5656, %v2008
        %v5658 = vpop.permute.xlu0 %5657
        %5660 = vset.pattern.permute.xlu0 2
        %5661 = vperm.xlu0 %5660, %v2009
        %v5662 = vpop.permute.xlu0 %5661
        %5664 = vset.pattern.permute.xlu0 2
        %5665 = vperm.xlu0 %5664, %v2010
        %v5666 = vpop.permute.xlu0 %5665
        %5668 = vset.pattern.permute.xlu0 2
        %5669 = vperm.xlu0 %5668, %v2011
        %v5670 = vpop.permute.xlu0 %5669
        %5672 = vset.pattern.permute.xlu0 2
        %5673 = vperm.xlu0 %5672, %v2012
        %v5674 = vpop.permute.xlu0 %5673
        %5676 = vset.pattern.permute.xlu0 2
        %5677 = vperm.xlu0 %5676, %v2013
        %v5678 = vpop.permute.xlu0 %5677
        %5680 = vset.pattern.permute.xlu0 2
        %5681 = vperm.xlu0 %5680, %v2014
        %v5682 = vpop.permute.xlu0 %5681
        %5684 = vset.pattern.permute.xlu0 2
        %5685 = vperm.xlu0 %5684, %v2015
        %v5686 = vpop.permute.xlu0 %5685
        %5688 = vset.pattern.permute.xlu0 2
        %5689 = vperm.xlu0 %5688, %v2016
        %v5690 = vpop.permute.xlu0 %5689
        %5692 = vset.pattern.permute.xlu0 2
        %5693 = vperm.xlu0 %5692, %v2017
        %v5694 = vpop.permute.xlu0 %5693
        %5696 = vset.pattern.permute.xlu0 2
        %5697 = vperm.xlu0 %5696, %v2018
        %v5698 = vpop.permute.xlu0 %5697
        %5700 = vset.pattern.permute.xlu0 2
        %5701 = vperm.xlu0 %5700, %v2019
        %v5702 = vpop.permute.xlu0 %5701
        %5704 = vset.pattern.permute.xlu0 2
        %5705 = vperm.xlu0 %5704, %v2020
        %v5706 = vpop.permute.xlu0 %5705
        %5708 = vset.pattern.permute.xlu0 2
        %5709 = vperm.xlu0 %5708, %v2021
        %v5710 = vpop.permute.xlu0 %5709
        %5712 = vset.pattern.permute.xlu0 2
        %5713 = vperm.xlu0 %5712, %v2022
        %v5714 = vpop.permute.xlu0 %5713
        %5716 = vset.pattern.permute.xlu0 2
        %5717 = vperm.xlu0 %5716, %v2023
        %v5718 = vpop.permute.xlu0 %5717
        %5720 = vset.pattern.permute.xlu0 2
        %5721 = vperm.xlu0 %5720, %v2024
        %v5722 = vpop.permute.xlu0 %5721
        %5724 = vset.pattern.permute.xlu0 2
        %5725 = vperm.xlu0 %5724, %v2025
        %v5726 = vpop.permute.xlu0 %5725
        %5728 = vset.pattern.permute.xlu0 2
        %5729 = vperm.xlu0 %5728, %v2026
        %v5730 = vpop.permute.xlu0 %5729
        %5732 = vset.pattern.permute.xlu0 2
        %5733 = vperm.xlu0 %5732, %v2027
        %v5734 = vpop.permute.xlu0 %5733
        %5736 = vset.pattern.permute.xlu0 2
        %5737 = vperm.xlu0 %5736, %v2028
        %v5738 = vpop.permute.xlu0 %5737
        %5740 = vset.pattern.permute.xlu0 2
        %5741 = vperm.xlu0 %5740, %v2029
        %v5742 = vpop.permute.xlu0 %5741
        %5744 = vset.pattern.permute.xlu0 2
        %5745 = vperm.xlu0 %5744, %v2030
        %v5746 = vpop.permute.xlu0 %5745
        %5748 = vset.pattern.permute.xlu0 2
        %5749 = vperm.xlu0 %5748, %v2031
        %v5750 = vpop.permute.xlu0 %5749
        %5752 = vset.pattern.permute.xlu0 2
        %5753 = vperm.xlu0 %5752, %v2032
        %v5754 = vpop.permute.xlu0 %5753
        %5756 = vset.pattern.permute.xlu0 2
        %5757 = vperm.xlu0 %5756, %v2033
        %v5758 = vpop.permute.xlu0 %5757
        %5760 = vset.pattern.permute.xlu0 2
        %5761 = vperm.xlu0 %5760, %v2034
        %v5762 = vpop.permute.xlu0 %5761
        %5764 = vset.pattern.permute.xlu0 2
        %5765 = vperm.xlu0 %5764, %v2035
        %v5766 = vpop.permute.xlu0 %5765
        %5768 = vset.pattern.permute.xlu0 2
        %5769 = vperm.xlu0 %5768, %v2036
        %v5770 = vpop.permute.xlu0 %5769
        %5772 = vset.pattern.permute.xlu0 2
        %5773 = vperm.xlu0 %5772, %v2037
        %v5774 = vpop.permute.xlu0 %5773
        %5776 = vset.pattern.permute.xlu0 2
        %5777 = vperm.xlu0 %5776, %v2038
        %v5778 = vpop.permute.xlu0 %5777
        %5780 = vset.pattern.permute.xlu0 2
        %5781 = vperm.xlu0 %5780, %v2039
        %v5782 = vpop.permute.xlu0 %5781
        %5784 = vset.pattern.permute.xlu0 2
        %5785 = vperm.xlu0 %5784, %v2040
        %v5786 = vpop.permute.xlu0 %5785
        %5788 = vset.pattern.permute.xlu0 2
        %5789 = vperm.xlu0 %5788, %v2041
        %v5790 = vpop.permute.xlu0 %5789
        %5792 = vset.pattern.permute.xlu0 2
        %5793 = vperm.xlu0 %5792, %v2042
        %v5794 = vpop.permute.xlu0 %5793
        %5796 = vset.pattern.permute.xlu0 2
        %5797 = vperm.xlu0 %5796, %v2043
        %v5798 = vpop.permute.xlu0 %5797
        %5800 = vset.pattern.permute.xlu0 2
        %5801 = vperm.xlu0 %5800, %v2044
        %v5802 = vpop.permute.xlu0 %5801
        %5804 = vset.pattern.permute.xlu0 2
        %5805 = vperm.xlu0 %5804, %v2045
        %v5806 = vpop.permute.xlu0 %5805
        %5808 = vset.pattern.permute.xlu0 2
        %5809 = vperm.xlu0 %5808, %v2046
        %v5810 = vpop.permute.xlu0 %5809
        %5812 = vset.pattern.permute.xlu0 2
        %5813 = vperm.xlu0 %5812, %v2047
        %v5814 = vpop.permute.xlu0 %5813
        %5816 = vset.pattern.permute.xlu0 2
        %5817 = vperm.xlu0 %5816, %v2048
        %v5818 = vpop.permute.xlu0 %5817
        %5820 = vset.pattern.permute.xlu0 2
        %5821 = vperm.xlu0 %5820, %v2049
        %v5822 = vpop.permute.xlu0 %5821
        %5824 = vset.pattern.permute.xlu0 2
        %5825 = vperm.xlu0 %5824, %v2050
        %v5826 = vpop.permute.xlu0 %5825
        %5828 = vset.pattern.permute.xlu0 2
        %5829 = vperm.xlu0 %5828, %v2051
        %v5830 = vpop.permute.xlu0 %5829
        %5832 = vset.pattern.permute.xlu0 2
        %5833 = vperm.xlu0 %5832, %v2052
        %v5834 = vpop.permute.xlu0 %5833
        %5836 = vset.pattern.permute.xlu0 2
        %5837 = vperm.xlu0 %5836, %v2053
        %v5838 = vpop.permute.xlu0 %5837
        %5840 = vset.pattern.permute.xlu0 2
        %5841 = vperm.xlu0 %5840, %v2054
        %v5842 = vpop.permute.xlu0 %5841
        %5844 = vset.pattern.permute.xlu0 2
        %5845 = vperm.xlu0 %5844, %v2055
        %v5846 = vpop.permute.xlu0 %5845
        %5848 = vset.pattern.permute.xlu0 2
        %5849 = vperm.xlu0 %5848, %v2056
        %v5850 = vpop.permute.xlu0 %5849
        %5852 = vset.pattern.permute.xlu0 2
        %5853 = vperm.xlu0 %5852, %v2057
        %v5854 = vpop.permute.xlu0 %5853
        %5856 = vset.pattern.permute.xlu0 2
        %5857 = vperm.xlu0 %5856, %v2058
        %v5858 = vpop.permute.xlu0 %5857
        %5860 = vset.pattern.permute.xlu0 2
        %5861 = vperm.xlu0 %5860, %v2059
        %v5862 = vpop.permute.xlu0 %5861
        %5864 = vset.pattern.permute.xlu0 2
        %5865 = vperm.xlu0 %5864, %v2060
        %v5866 = vpop.permute.xlu0 %5865
        %5868 = vset.pattern.permute.xlu0 2
        %5869 = vperm.xlu0 %5868, %v2061
        %v5870 = vpop.permute.xlu0 %5869
        %5872 = vset.pattern.permute.xlu0 2
        %5873 = vperm.xlu0 %5872, %v2062
        %v5874 = vpop.permute.xlu0 %5873
        %5876 = vset.pattern.permute.xlu0 2
        %5877 = vperm.xlu0 %5876, %v2063
        %v5878 = vpop.permute.xlu0 %5877
        %5880 = vset.pattern.permute.xlu0 2
        %5881 = vperm.xlu0 %5880, %v2064
        %v5882 = vpop.permute.xlu0 %5881
        %5884 = vset.pattern.permute.xlu0 2
        %5885 = vperm.xlu0 %5884, %v2065
        %v5886 = vpop.permute.xlu0 %5885
        %5888 = vset.pattern.permute.xlu0 2
        %5889 = vperm.xlu0 %5888, %v2066
        %v5890 = vpop.permute.xlu0 %5889
        %5892 = vset.pattern.permute.xlu0 2
        %5893 = vperm.xlu0 %5892, %v2067
        %v5894 = vpop.permute.xlu0 %5893
        %5896 = vset.pattern.permute.xlu0 2
        %5897 = vperm.xlu0 %5896, %v2068
        %v5898 = vpop.permute.xlu0 %5897
        %5900 = vset.pattern.permute.xlu0 2
        %5901 = vperm.xlu0 %5900, %v2069
        %v5902 = vpop.permute.xlu0 %5901
        %5904 = vset.pattern.permute.xlu0 2
        %5905 = vperm.xlu0 %5904, %v2070
        %v5906 = vpop.permute.xlu0 %5905
        %5908 = vset.pattern.permute.xlu0 2
        %5909 = vperm.xlu0 %5908, %v2071
        %v5910 = vpop.permute.xlu0 %5909
        %5912 = vset.pattern.permute.xlu0 2
        %5913 = vperm.xlu0 %5912, %v2072
        %v5914 = vpop.permute.xlu0 %5913
        %5916 = vset.pattern.permute.xlu0 2
        %5917 = vperm.xlu0 %5916, %v2073
        %v5918 = vpop.permute.xlu0 %5917
        %5920 = vset.pattern.permute.xlu0 2
        %5921 = vperm.xlu0 %5920, %v2074
        %v5922 = vpop.permute.xlu0 %5921
        %5924 = vset.pattern.permute.xlu0 2
        %5925 = vperm.xlu0 %5924, %v2075
        %v5926 = vpop.permute.xlu0 %5925
        %5928 = vset.pattern.permute.xlu0 2
        %5929 = vperm.xlu0 %5928, %v2076
        %v5930 = vpop.permute.xlu0 %5929
        %5932 = vset.pattern.permute.xlu0 2
        %5933 = vperm.xlu0 %5932, %v2077
        %v5934 = vpop.permute.xlu0 %5933
        %5936 = vset.pattern.permute.xlu0 2
        %5937 = vperm.xlu0 %5936, %v2078
        %v5938 = vpop.permute.xlu0 %5937
        %5940 = vset.pattern.permute.xlu0 2
        %5941 = vperm.xlu0 %5940, %v2079
        %v5942 = vpop.permute.xlu0 %5941
        %5944 = vset.pattern.permute.xlu0 2
        %5945 = vperm.xlu0 %5944, %v2080
        %v5946 = vpop.permute.xlu0 %5945
        %5948 = vset.pattern.permute.xlu0 2
        %5949 = vperm.xlu0 %5948, %v2081
        %v5950 = vpop.permute.xlu0 %5949
        %5952 = vset.pattern.permute.xlu0 2
        %5953 = vperm.xlu0 %5952, %v2082
        %v5954 = vpop.permute.xlu0 %5953
        %5956 = vset.pattern.permute.xlu0 2
        %5957 = vperm.xlu0 %5956, %v2083
        %v5958 = vpop.permute.xlu0 %5957
        %5960 = vset.pattern.permute.xlu0 2
        %5961 = vperm.xlu0 %5960, %v2084
        %v5962 = vpop.permute.xlu0 %5961
        %5964 = vset.pattern.permute.xlu0 2
        %5965 = vperm.xlu0 %5964, %v2085
        %v5966 = vpop.permute.xlu0 %5965
        %5968 = vset.pattern.permute.xlu0 2
        %5969 = vperm.xlu0 %5968, %v2086
        %v5970 = vpop.permute.xlu0 %5969
        %5972 = vset.pattern.permute.xlu0 2
        %5973 = vperm.xlu0 %5972, %v2087
        %v5974 = vpop.permute.xlu0 %5973
        %5976 = vset.pattern.permute.xlu0 2
        %5977 = vperm.xlu0 %5976, %v2088
        %v5978 = vpop.permute.xlu0 %5977
        %5980 = vset.pattern.permute.xlu0 2
        %5981 = vperm.xlu0 %5980, %v2089
        %v5982 = vpop.permute.xlu0 %5981
        %5984 = vset.pattern.permute.xlu0 2
        %5985 = vperm.xlu0 %5984, %v2090
        %v5986 = vpop.permute.xlu0 %5985
        %5988 = vset.pattern.permute.xlu0 2
        %5989 = vperm.xlu0 %5988, %v2091
        %v5990 = vpop.permute.xlu0 %5989
        %5992 = vset.pattern.permute.xlu0 2
        %5993 = vperm.xlu0 %5992, %v2092
        %v5994 = vpop.permute.xlu0 %5993
        %5996 = vset.pattern.permute.xlu0 2
        %5997 = vperm.xlu0 %5996, %v2093
        %v5998 = vpop.permute.xlu0 %5997
        %6000 = vset.pattern.permute.xlu0 2
        %6001 = vperm.xlu0 %6000, %v2094
        %v6002 = vpop.permute.xlu0 %6001
        %6004 = vset.pattern.permute.xlu0 2
        %6005 = vperm.xlu0 %6004, %v2095
        %v6006 = vpop.permute.xlu0 %6005
        %6008 = vset.pattern.permute.xlu0 2
        %6009 = vperm.xlu0 %6008, %v2096
        %v6010 = vpop.permute.xlu0 %6009
        %6012 = vset.pattern.permute.xlu0 2
        %6013 = vperm.xlu0 %6012, %v2097
        %v6014 = vpop.permute.xlu0 %6013
        %6016 = vset.pattern.permute.xlu0 2
        %6017 = vperm.xlu0 %6016, %v2098
        %v6018 = vpop.permute.xlu0 %6017
        %6020 = vset.pattern.permute.xlu0 2
        %6021 = vperm.xlu0 %6020, %v2099
        %v6022 = vpop.permute.xlu0 %6021
        %6024 = vset.pattern.permute.xlu0 2
        %6025 = vperm.xlu0 %6024, %v2100
        %v6026 = vpop.permute.xlu0 %6025
        %6028 = vset.pattern.permute.xlu0 2
        %6029 = vperm.xlu0 %6028, %v2101
        %v6030 = vpop.permute.xlu0 %6029
        %6032 = vset.pattern.permute.xlu0 2
        %6033 = vperm.xlu0 %6032, %v2102
        %v6034 = vpop.permute.xlu0 %6033
        %6036 = vset.pattern.permute.xlu0 2
        %6037 = vperm.xlu0 %6036, %v2103
        %v6038 = vpop.permute.xlu0 %6037
        %6040 = vset.pattern.permute.xlu0 2
        %6041 = vperm.xlu0 %6040, %v2104
        %v6042 = vpop.permute.xlu0 %6041
        %6044 = vset.pattern.permute.xlu0 2
        %6045 = vperm.xlu0 %6044, %v2105
        %v6046 = vpop.permute.xlu0 %6045
        %6048 = vset.pattern.permute.xlu0 2
        %6049 = vperm.xlu0 %6048, %v2106
        %v6050 = vpop.permute.xlu0 %6049
        %6052 = vset.pattern.permute.xlu0 2
        %6053 = vperm.xlu0 %6052, %v2107
        %v6054 = vpop.permute.xlu0 %6053
        %6056 = vset.pattern.permute.xlu0 2
        %6057 = vperm.xlu0 %6056, %v2108
        %v6058 = vpop.permute.xlu0 %6057
        %6060 = vset.pattern.permute.xlu0 2
        %6061 = vperm.xlu0 %6060, %v2109
        %v6062 = vpop.permute.xlu0 %6061
        %6064 = vset.pattern.permute.xlu0 2
        %6065 = vperm.xlu0 %6064, %v2110
        %v6066 = vpop.permute.xlu0 %6065
        %6068 = vset.pattern.permute.xlu0 2
        %6069 = vperm.xlu0 %6068, %v2111
        %v6070 = vpop.permute.xlu0 %6069
        %6072 = vset.pattern.permute.xlu0 2
        %6073 = vperm.xlu0 %6072, %v2112
        %v6074 = vpop.permute.xlu0 %6073
        %6076 = vset.pattern.permute.xlu0 2
        %6077 = vperm.xlu0 %6076, %v2113
        %v6078 = vpop.permute.xlu0 %6077
        %6080 = vset.pattern.permute.xlu0 2
        %6081 = vperm.xlu0 %6080, %v2114
        %v6082 = vpop.permute.xlu0 %6081
        %6084 = vset.pattern.permute.xlu0 2
        %6085 = vperm.xlu0 %6084, %v2115
        %v6086 = vpop.permute.xlu0 %6085
        %6088 = vset.pattern.permute.xlu0 2
        %6089 = vperm.xlu0 %6088, %v2116
        %v6090 = vpop.permute.xlu0 %6089
        %6092 = vset.pattern.permute.xlu0 2
        %6093 = vperm.xlu0 %6092, %v2117
        %v6094 = vpop.permute.xlu0 %6093
        %6096 = vset.pattern.permute.xlu0 2
        %6097 = vperm.xlu0 %6096, %v2118
        %v6098 = vpop.permute.xlu0 %6097
        %6100 = vset.pattern.permute.xlu0 2
        %6101 = vperm.xlu0 %6100, %v2119
        %v6102 = vpop.permute.xlu0 %6101
        %6104 = vset.pattern.permute.xlu0 2
        %6105 = vperm.xlu0 %6104, %v2120
        %v6106 = vpop.permute.xlu0 %6105
        %6108 = vset.pattern.permute.xlu0 2
        %6109 = vperm.xlu0 %6108, %v2121
        %v6110 = vpop.permute.xlu0 %6109
        %6112 = vset.pattern.permute.xlu0 2
        %6113 = vperm.xlu0 %6112, %v2122
        %v6114 = vpop.permute.xlu0 %6113
        %6116 = vset.pattern.permute.xlu0 2
        %6117 = vperm.xlu0 %6116, %v2123
        %v6118 = vpop.permute.xlu0 %6117
        %6120 = vset.pattern.permute.xlu0 2
        %6121 = vperm.xlu0 %6120, %v2124
        %v6122 = vpop.permute.xlu0 %6121
        %6124 = vset.pattern.permute.xlu0 2
        %6125 = vperm.xlu0 %6124, %v2125
        %v6126 = vpop.permute.xlu0 %6125
        %6128 = vset.pattern.permute.xlu0 2
        %6129 = vperm.xlu0 %6128, %v2126
        %v6130 = vpop.permute.xlu0 %6129
        %6132 = vset.pattern.permute.xlu0 2
        %6133 = vperm.xlu0 %6132, %v2127
        %v6134 = vpop.permute.xlu0 %6133
        %6136 = vset.pattern.permute.xlu0 2
        %6137 = vperm.xlu0 %6136, %v2128
        %v6138 = vpop.permute.xlu0 %6137
        %6140 = vset.pattern.permute.xlu0 2
        %6141 = vperm.xlu0 %6140, %v2129
        %v6142 = vpop.permute.xlu0 %6141
        %6144 = vset.pattern.permute.xlu0 2
        %6145 = vperm.xlu0 %6144, %v2130
        %v6146 = vpop.permute.xlu0 %6145
        %6148 = vset.pattern.permute.xlu0 2
        %6149 = vperm.xlu0 %6148, %v2131
        %v6150 = vpop.permute.xlu0 %6149
        %6152 = vset.pattern.permute.xlu0 2
        %6153 = vperm.xlu0 %6152, %v2132
        %v6154 = vpop.permute.xlu0 %6153
        %6156 = vset.pattern.permute.xlu0 2
        %6157 = vperm.xlu0 %6156, %v2133
        %v6158 = vpop.permute.xlu0 %6157
        %v6160 = vperm.slane %v1971, 2
        %v6161 = vperm.slane %v1971, 6
        %v6162 = vperm.slane %v1972, 2
        %v6163 = vperm.slane %v1972, 6
        %v6168 = vperm.slane %v6160, 2
        %v6169 = vperm.slane %v6161, 2
        %v6170 = vperm.slane %v6162, 2
        %v6171 = vperm.slane %v6163, 2
        %v6172 = vmul.f32 %v5522, %v6168
        %v6173 = vmul.f32 %v5522, %v6169
        %v6174 = vmul.f32 %v5522, %v6170
        %v6175 = vmul.f32 %v5522, %v6171
        %v6176 = vmul.f32 %v5526, %v6168
        %v6177 = vmul.f32 %v5526, %v6169
        %v6178 = vmul.f32 %v5526, %v6170
        %v6179 = vmul.f32 %v5526, %v6171
        %v6180 = vmul.f32 %v5530, %v6168
        %v6181 = vmul.f32 %v5530, %v6169
        %v6182 = vmul.f32 %v5530, %v6170
        %v6183 = vmul.f32 %v5530, %v6171
        %v6184 = vmul.f32 %v5534, %v6168
        %v6185 = vmul.f32 %v5534, %v6169
        %v6186 = vmul.f32 %v5534, %v6170
        %v6187 = vmul.f32 %v5534, %v6171
        %v6188 = vmul.f32 %v5538, %v6168
        %v6189 = vmul.f32 %v5538, %v6169
        %v6190 = vmul.f32 %v5538, %v6170
        %v6191 = vmul.f32 %v5538, %v6171
        %v6192 = vmul.f32 %v5542, %v6168
        %v6193 = vmul.f32 %v5542, %v6169
        %v6194 = vmul.f32 %v5542, %v6170
        %v6195 = vmul.f32 %v5542, %v6171
        %v6196 = vmul.f32 %v5546, %v6168
        %v6197 = vmul.f32 %v5546, %v6169
        %v6198 = vmul.f32 %v5546, %v6170
        %v6199 = vmul.f32 %v5546, %v6171
        %v6200 = vmul.f32 %v5550, %v6168
        %v6201 = vmul.f32 %v5550, %v6169
        %v6202 = vmul.f32 %v5550, %v6170
        %v6203 = vmul.f32 %v5550, %v6171
        %v6204 = vmul.f32 %v5554, %v6168
        %v6205 = vmul.f32 %v5554, %v6169
        %v6206 = vmul.f32 %v5554, %v6170
        %v6207 = vmul.f32 %v5554, %v6171
        %v6208 = vmul.f32 %v5558, %v6168
        %v6209 = vmul.f32 %v5558, %v6169
        %v6210 = vmul.f32 %v5558, %v6170
        %v6211 = vmul.f32 %v5558, %v6171
        %v6212 = vmul.f32 %v5562, %v6168
        %v6213 = vmul.f32 %v5562, %v6169
        %v6214 = vmul.f32 %v5562, %v6170
        %v6215 = vmul.f32 %v5562, %v6171
        %v6216 = vmul.f32 %v5566, %v6168
        %v6217 = vmul.f32 %v5566, %v6169
        %v6218 = vmul.f32 %v5566, %v6170
        %v6219 = vmul.f32 %v5566, %v6171
        %v6220 = vmul.f32 %v5570, %v6168
        %v6221 = vmul.f32 %v5570, %v6169
        %v6222 = vmul.f32 %v5570, %v6170
        %v6223 = vmul.f32 %v5570, %v6171
        %v6224 = vmul.f32 %v5574, %v6168
        %v6225 = vmul.f32 %v5574, %v6169
        %v6226 = vmul.f32 %v5574, %v6170
        %v6227 = vmul.f32 %v5574, %v6171
        %v6228 = vmul.f32 %v5578, %v6168
        %v6229 = vmul.f32 %v5578, %v6169
        %v6230 = vmul.f32 %v5578, %v6170
        %v6231 = vmul.f32 %v5578, %v6171
        %v6232 = vmul.f32 %v5582, %v6168
        %v6233 = vmul.f32 %v5582, %v6169
        %v6234 = vmul.f32 %v5582, %v6170
        %v6235 = vmul.f32 %v5582, %v6171
        %v6236 = vmul.f32 %v5586, %v6168
        %v6237 = vmul.f32 %v5586, %v6169
        %v6238 = vmul.f32 %v5586, %v6170
        %v6239 = vmul.f32 %v5586, %v6171
        %v6240 = vmul.f32 %v5590, %v6168
        %v6241 = vmul.f32 %v5590, %v6169
        %v6242 = vmul.f32 %v5590, %v6170
        %v6243 = vmul.f32 %v5590, %v6171
        %v6244 = vmul.f32 %v5594, %v6168
        %v6245 = vmul.f32 %v5594, %v6169
        %v6246 = vmul.f32 %v5594, %v6170
        %v6247 = vmul.f32 %v5594, %v6171
        %v6248 = vmul.f32 %v5598, %v6168
        %v6249 = vmul.f32 %v5598, %v6169
        %v6250 = vmul.f32 %v5598, %v6170
        %v6251 = vmul.f32 %v5598, %v6171
        %v6252 = vmul.f32 %v5602, %v6168
        %v6253 = vmul.f32 %v5602, %v6169
        %v6254 = vmul.f32 %v5602, %v6170
        %v6255 = vmul.f32 %v5602, %v6171
        %v6256 = vmul.f32 %v5606, %v6168
        %v6257 = vmul.f32 %v5606, %v6169
        %v6258 = vmul.f32 %v5606, %v6170
        %v6259 = vmul.f32 %v5606, %v6171
        %v6260 = vmul.f32 %v5610, %v6168
        %v6261 = vmul.f32 %v5610, %v6169
        %v6262 = vmul.f32 %v5610, %v6170
        %v6263 = vmul.f32 %v5610, %v6171
        %v6264 = vmul.f32 %v5614, %v6168
        %v6265 = vmul.f32 %v5614, %v6169
        %v6266 = vmul.f32 %v5614, %v6170
        %v6267 = vmul.f32 %v5614, %v6171
        %v6268 = vmul.f32 %v5618, %v6168
        %v6269 = vmul.f32 %v5618, %v6169
        %v6270 = vmul.f32 %v5618, %v6170
        %v6271 = vmul.f32 %v5618, %v6171
        %v6272 = vmul.f32 %v5622, %v6168
        %v6273 = vmul.f32 %v5622, %v6169
        %v6274 = vmul.f32 %v5622, %v6170
        %v6275 = vmul.f32 %v5622, %v6171
        %v6276 = vmul.f32 %v5626, %v6168
        %v6277 = vmul.f32 %v5626, %v6169
        %v6278 = vmul.f32 %v5626, %v6170
        %v6279 = vmul.f32 %v5626, %v6171
        %v6280 = vmul.f32 %v5630, %v6168
        %v6281 = vmul.f32 %v5630, %v6169
        %v6282 = vmul.f32 %v5630, %v6170
        %v6283 = vmul.f32 %v5630, %v6171
        %v6284 = vmul.f32 %v5634, %v6168
        %v6285 = vmul.f32 %v5634, %v6169
        %v6286 = vmul.f32 %v5634, %v6170
        %v6287 = vmul.f32 %v5634, %v6171
        %v6288 = vmul.f32 %v5638, %v6168
        %v6289 = vmul.f32 %v5638, %v6169
        %v6290 = vmul.f32 %v5638, %v6170
        %v6291 = vmul.f32 %v5638, %v6171
        %v6292 = vmul.f32 %v5642, %v6168
        %v6293 = vmul.f32 %v5642, %v6169
        %v6294 = vmul.f32 %v5642, %v6170
        %v6295 = vmul.f32 %v5642, %v6171
        %v6296 = vmul.f32 %v5646, %v6168
        %v6297 = vmul.f32 %v5646, %v6169
        %v6298 = vmul.f32 %v5646, %v6170
        %v6299 = vmul.f32 %v5646, %v6171
        %v6300 = vmul.f32 %v5650, %v6168
        %v6301 = vmul.f32 %v5650, %v6169
        %v6302 = vmul.f32 %v5650, %v6170
        %v6303 = vmul.f32 %v5650, %v6171
        %v6304 = vmul.f32 %v5654, %v6168
        %v6305 = vmul.f32 %v5654, %v6169
        %v6306 = vmul.f32 %v5654, %v6170
        %v6307 = vmul.f32 %v5654, %v6171
        %v6308 = vmul.f32 %v5658, %v6168
        %v6309 = vmul.f32 %v5658, %v6169
        %v6310 = vmul.f32 %v5658, %v6170
        %v6311 = vmul.f32 %v5658, %v6171
        %v6312 = vmul.f32 %v5662, %v6168
        %v6313 = vmul.f32 %v5662, %v6169
        %v6314 = vmul.f32 %v5662, %v6170
        %v6315 = vmul.f32 %v5662, %v6171
        %v6316 = vmul.f32 %v5666, %v6168
        %v6317 = vmul.f32 %v5666, %v6169
        %v6318 = vmul.f32 %v5666, %v6170
        %v6319 = vmul.f32 %v5666, %v6171
        %v6320 = vmul.f32 %v5670, %v6168
        %v6321 = vmul.f32 %v5670, %v6169
        %v6322 = vmul.f32 %v5670, %v6170
        %v6323 = vmul.f32 %v5670, %v6171
        %v6324 = vmul.f32 %v5674, %v6168
        %v6325 = vmul.f32 %v5674, %v6169
        %v6326 = vmul.f32 %v5674, %v6170
        %v6327 = vmul.f32 %v5674, %v6171
        %v6328 = vmul.f32 %v5678, %v6168
        %v6329 = vmul.f32 %v5678, %v6169
        %v6330 = vmul.f32 %v5678, %v6170
        %v6331 = vmul.f32 %v5678, %v6171
        %v6332 = vmul.f32 %v5682, %v6168
        %v6333 = vmul.f32 %v5682, %v6169
        %v6334 = vmul.f32 %v5682, %v6170
        %v6335 = vmul.f32 %v5682, %v6171
        %v6336 = vmul.f32 %v5686, %v6168
        %v6337 = vmul.f32 %v5686, %v6169
        %v6338 = vmul.f32 %v5686, %v6170
        %v6339 = vmul.f32 %v5686, %v6171
        %v6340 = vmul.f32 %v5690, %v6168
        %v6341 = vmul.f32 %v5690, %v6169
        %v6342 = vmul.f32 %v5690, %v6170
        %v6343 = vmul.f32 %v5690, %v6171
        %v6344 = vmul.f32 %v5694, %v6168
        %v6345 = vmul.f32 %v5694, %v6169
        %v6346 = vmul.f32 %v5694, %v6170
        %v6347 = vmul.f32 %v5694, %v6171
        %v6348 = vmul.f32 %v5698, %v6168
        %v6349 = vmul.f32 %v5698, %v6169
        %v6350 = vmul.f32 %v5698, %v6170
        %v6351 = vmul.f32 %v5698, %v6171
        %v6352 = vmul.f32 %v5702, %v6168
        %v6353 = vmul.f32 %v5702, %v6169
        %v6354 = vmul.f32 %v5702, %v6170
        %v6355 = vmul.f32 %v5702, %v6171
        %v6356 = vmul.f32 %v5706, %v6168
        %v6357 = vmul.f32 %v5706, %v6169
        %v6358 = vmul.f32 %v5706, %v6170
        %v6359 = vmul.f32 %v5706, %v6171
        %v6360 = vmul.f32 %v5710, %v6168
        %v6361 = vmul.f32 %v5710, %v6169
        %v6362 = vmul.f32 %v5710, %v6170
        %v6363 = vmul.f32 %v5710, %v6171
        %v6364 = vmul.f32 %v5714, %v6168
        %v6365 = vmul.f32 %v5714, %v6169
        %v6366 = vmul.f32 %v5714, %v6170
        %v6367 = vmul.f32 %v5714, %v6171
        %v6368 = vmul.f32 %v5718, %v6168
        %v6369 = vmul.f32 %v5718, %v6169
        %v6370 = vmul.f32 %v5718, %v6170
        %v6371 = vmul.f32 %v5718, %v6171
        %v6372 = vmul.f32 %v5722, %v6168
        %v6373 = vmul.f32 %v5722, %v6169
        %v6374 = vmul.f32 %v5722, %v6170
        %v6375 = vmul.f32 %v5722, %v6171
        %v6376 = vmul.f32 %v5726, %v6168
        %v6377 = vmul.f32 %v5726, %v6169
        %v6378 = vmul.f32 %v5726, %v6170
        %v6379 = vmul.f32 %v5726, %v6171
        %v6380 = vmul.f32 %v5730, %v6168
        %v6381 = vmul.f32 %v5730, %v6169
        %v6382 = vmul.f32 %v5730, %v6170
        %v6383 = vmul.f32 %v5730, %v6171
        %v6384 = vmul.f32 %v5734, %v6168
        %v6385 = vmul.f32 %v5734, %v6169
        %v6386 = vmul.f32 %v5734, %v6170
        %v6387 = vmul.f32 %v5734, %v6171
        %v6388 = vmul.f32 %v5738, %v6168
        %v6389 = vmul.f32 %v5738, %v6169
        %v6390 = vmul.f32 %v5738, %v6170
        %v6391 = vmul.f32 %v5738, %v6171
        %v6392 = vmul.f32 %v5742, %v6168
        %v6393 = vmul.f32 %v5742, %v6169
        %v6394 = vmul.f32 %v5742, %v6170
        %v6395 = vmul.f32 %v5742, %v6171
        %v6396 = vmul.f32 %v5746, %v6168
        %v6397 = vmul.f32 %v5746, %v6169
        %v6398 = vmul.f32 %v5746, %v6170
        %v6399 = vmul.f32 %v5746, %v6171
        %v6400 = vmul.f32 %v5750, %v6168
        %v6401 = vmul.f32 %v5750, %v6169
        %v6402 = vmul.f32 %v5750, %v6170
        %v6403 = vmul.f32 %v5750, %v6171
        %v6404 = vmul.f32 %v5754, %v6168
        %v6405 = vmul.f32 %v5754, %v6169
        %v6406 = vmul.f32 %v5754, %v6170
        %v6407 = vmul.f32 %v5754, %v6171
        %v6408 = vmul.f32 %v5758, %v6168
        %v6409 = vmul.f32 %v5758, %v6169
        %v6410 = vmul.f32 %v5758, %v6170
        %v6411 = vmul.f32 %v5758, %v6171
        %v6412 = vmul.f32 %v5762, %v6168
        %v6413 = vmul.f32 %v5762, %v6169
        %v6414 = vmul.f32 %v5762, %v6170
        %v6415 = vmul.f32 %v5762, %v6171
        %v6416 = vmul.f32 %v5766, %v6168
        %v6417 = vmul.f32 %v5766, %v6169
        %v6418 = vmul.f32 %v5766, %v6170
        %v6419 = vmul.f32 %v5766, %v6171
        %v6420 = vmul.f32 %v5770, %v6168
        %v6421 = vmul.f32 %v5770, %v6169
        %v6422 = vmul.f32 %v5770, %v6170
        %v6423 = vmul.f32 %v5770, %v6171
        %v6424 = vmul.f32 %v5774, %v6168
        %v6425 = vmul.f32 %v5774, %v6169
        %v6426 = vmul.f32 %v5774, %v6170
        %v6427 = vmul.f32 %v5774, %v6171
        %v6428 = vmul.f32 %v5778, %v6168
        %v6429 = vmul.f32 %v5778, %v6169
        %v6430 = vmul.f32 %v5778, %v6170
        %v6431 = vmul.f32 %v5778, %v6171
        %v6432 = vmul.f32 %v5782, %v6168
        %v6433 = vmul.f32 %v5782, %v6169
        %v6434 = vmul.f32 %v5782, %v6170
        %v6435 = vmul.f32 %v5782, %v6171
        %v6436 = vmul.f32 %v5786, %v6168
        %v6437 = vmul.f32 %v5786, %v6169
        %v6438 = vmul.f32 %v5786, %v6170
        %v6439 = vmul.f32 %v5786, %v6171
        %v6440 = vmul.f32 %v5790, %v6168
        %v6441 = vmul.f32 %v5790, %v6169
        %v6442 = vmul.f32 %v5790, %v6170
        %v6443 = vmul.f32 %v5790, %v6171
        %v6444 = vmul.f32 %v5794, %v6168
        %v6445 = vmul.f32 %v5794, %v6169
        %v6446 = vmul.f32 %v5794, %v6170
        %v6447 = vmul.f32 %v5794, %v6171
        %v6448 = vmul.f32 %v5798, %v6168
        %v6449 = vmul.f32 %v5798, %v6169
        %v6450 = vmul.f32 %v5798, %v6170
        %v6451 = vmul.f32 %v5798, %v6171
        %v6452 = vmul.f32 %v5802, %v6168
        %v6453 = vmul.f32 %v5802, %v6169
        %v6454 = vmul.f32 %v5802, %v6170
        %v6455 = vmul.f32 %v5802, %v6171
        %v6456 = vmul.f32 %v5806, %v6168
        %v6457 = vmul.f32 %v5806, %v6169
        %v6458 = vmul.f32 %v5806, %v6170
        %v6459 = vmul.f32 %v5806, %v6171
        %v6460 = vmul.f32 %v5810, %v6168
        %v6461 = vmul.f32 %v5810, %v6169
        %v6462 = vmul.f32 %v5810, %v6170
        %v6463 = vmul.f32 %v5810, %v6171
        %v6464 = vmul.f32 %v5814, %v6168
        %v6465 = vmul.f32 %v5814, %v6169
        %v6466 = vmul.f32 %v5814, %v6170
        %v6467 = vmul.f32 %v5814, %v6171
        %v6468 = vmul.f32 %v5818, %v6168
        %v6469 = vmul.f32 %v5818, %v6169
        %v6470 = vmul.f32 %v5818, %v6170
        %v6471 = vmul.f32 %v5818, %v6171
        %v6472 = vmul.f32 %v5822, %v6168
        %v6473 = vmul.f32 %v5822, %v6169
        %v6474 = vmul.f32 %v5822, %v6170
        %v6475 = vmul.f32 %v5822, %v6171
        %v6476 = vmul.f32 %v5826, %v6168
        %v6477 = vmul.f32 %v5826, %v6169
        %v6478 = vmul.f32 %v5826, %v6170
        %v6479 = vmul.f32 %v5826, %v6171
        %v6480 = vmul.f32 %v5830, %v6168
        %v6481 = vmul.f32 %v5830, %v6169
        %v6482 = vmul.f32 %v5830, %v6170
        %v6483 = vmul.f32 %v5830, %v6171
        %v6484 = vmul.f32 %v5834, %v6168
        %v6485 = vmul.f32 %v5834, %v6169
        %v6486 = vmul.f32 %v5834, %v6170
        %v6487 = vmul.f32 %v5834, %v6171
        %v6488 = vmul.f32 %v5838, %v6168
        %v6489 = vmul.f32 %v5838, %v6169
        %v6490 = vmul.f32 %v5838, %v6170
        %v6491 = vmul.f32 %v5838, %v6171
        %v6492 = vmul.f32 %v5842, %v6168
        %v6493 = vmul.f32 %v5842, %v6169
        %v6494 = vmul.f32 %v5842, %v6170
        %v6495 = vmul.f32 %v5842, %v6171
        %v6496 = vmul.f32 %v5846, %v6168
        %v6497 = vmul.f32 %v5846, %v6169
        %v6498 = vmul.f32 %v5846, %v6170
        %v6499 = vmul.f32 %v5846, %v6171
        %v6500 = vmul.f32 %v5850, %v6168
        %v6501 = vmul.f32 %v5850, %v6169
        %v6502 = vmul.f32 %v5850, %v6170
        %v6503 = vmul.f32 %v5850, %v6171
        %v6504 = vmul.f32 %v5854, %v6168
        %v6505 = vmul.f32 %v5854, %v6169
        %v6506 = vmul.f32 %v5854, %v6170
        %v6507 = vmul.f32 %v5854, %v6171
        %v6508 = vmul.f32 %v5858, %v6168
        %v6509 = vmul.f32 %v5858, %v6169
        %v6510 = vmul.f32 %v5858, %v6170
        %v6511 = vmul.f32 %v5858, %v6171
        %v6512 = vmul.f32 %v5862, %v6168
        %v6513 = vmul.f32 %v5862, %v6169
        %v6514 = vmul.f32 %v5862, %v6170
        %v6515 = vmul.f32 %v5862, %v6171
        %v6516 = vmul.f32 %v5866, %v6168
        %v6517 = vmul.f32 %v5866, %v6169
        %v6518 = vmul.f32 %v5866, %v6170
        %v6519 = vmul.f32 %v5866, %v6171
        %v6520 = vmul.f32 %v5870, %v6168
        %v6521 = vmul.f32 %v5870, %v6169
        %v6522 = vmul.f32 %v5870, %v6170
        %v6523 = vmul.f32 %v5870, %v6171
        %v6524 = vmul.f32 %v5874, %v6168
        %v6525 = vmul.f32 %v5874, %v6169
        %v6526 = vmul.f32 %v5874, %v6170
        %v6527 = vmul.f32 %v5874, %v6171
        %v6528 = vmul.f32 %v5878, %v6168
        %v6529 = vmul.f32 %v5878, %v6169
        %v6530 = vmul.f32 %v5878, %v6170
        %v6531 = vmul.f32 %v5878, %v6171
        %v6532 = vmul.f32 %v5882, %v6168
        %v6533 = vmul.f32 %v5882, %v6169
        %v6534 = vmul.f32 %v5882, %v6170
        %v6535 = vmul.f32 %v5882, %v6171
        %v6536 = vmul.f32 %v5886, %v6168
        %v6537 = vmul.f32 %v5886, %v6169
        %v6538 = vmul.f32 %v5886, %v6170
        %v6539 = vmul.f32 %v5886, %v6171
        %v6540 = vmul.f32 %v5890, %v6168
        %v6541 = vmul.f32 %v5890, %v6169
        %v6542 = vmul.f32 %v5890, %v6170
        %v6543 = vmul.f32 %v5890, %v6171
        %v6544 = vmul.f32 %v5894, %v6168
        %v6545 = vmul.f32 %v5894, %v6169
        %v6546 = vmul.f32 %v5894, %v6170
        %v6547 = vmul.f32 %v5894, %v6171
        %v6548 = vmul.f32 %v5898, %v6168
        %v6549 = vmul.f32 %v5898, %v6169
        %v6550 = vmul.f32 %v5898, %v6170
        %v6551 = vmul.f32 %v5898, %v6171
        %v6552 = vmul.f32 %v5902, %v6168
        %v6553 = vmul.f32 %v5902, %v6169
        %v6554 = vmul.f32 %v5902, %v6170
        %v6555 = vmul.f32 %v5902, %v6171
        %v6556 = vmul.f32 %v5906, %v6168
        %v6557 = vmul.f32 %v5906, %v6169
        %v6558 = vmul.f32 %v5906, %v6170
        %v6559 = vmul.f32 %v5906, %v6171
        %v6560 = vmul.f32 %v5910, %v6168
        %v6561 = vmul.f32 %v5910, %v6169
        %v6562 = vmul.f32 %v5910, %v6170
        %v6563 = vmul.f32 %v5910, %v6171
        %v6564 = vmul.f32 %v5914, %v6168
        %v6565 = vmul.f32 %v5914, %v6169
        %v6566 = vmul.f32 %v5914, %v6170
        %v6567 = vmul.f32 %v5914, %v6171
        %v6568 = vmul.f32 %v5918, %v6168
        %v6569 = vmul.f32 %v5918, %v6169
        %v6570 = vmul.f32 %v5918, %v6170
        %v6571 = vmul.f32 %v5918, %v6171
        %v6572 = vmul.f32 %v5922, %v6168
        %v6573 = vmul.f32 %v5922, %v6169
        %v6574 = vmul.f32 %v5922, %v6170
        %v6575 = vmul.f32 %v5922, %v6171
        %v6576 = vmul.f32 %v5926, %v6168
        %v6577 = vmul.f32 %v5926, %v6169
        %v6578 = vmul.f32 %v5926, %v6170
        %v6579 = vmul.f32 %v5926, %v6171
        %v6580 = vmul.f32 %v5930, %v6168
        %v6581 = vmul.f32 %v5930, %v6169
        %v6582 = vmul.f32 %v5930, %v6170
        %v6583 = vmul.f32 %v5930, %v6171
        %v6584 = vmul.f32 %v5934, %v6168
        %v6585 = vmul.f32 %v5934, %v6169
        %v6586 = vmul.f32 %v5934, %v6170
        %v6587 = vmul.f32 %v5934, %v6171
        %v6588 = vmul.f32 %v5938, %v6168
        %v6589 = vmul.f32 %v5938, %v6169
        %v6590 = vmul.f32 %v5938, %v6170
        %v6591 = vmul.f32 %v5938, %v6171
        %v6592 = vmul.f32 %v5942, %v6168
        %v6593 = vmul.f32 %v5942, %v6169
        %v6594 = vmul.f32 %v5942, %v6170
        %v6595 = vmul.f32 %v5942, %v6171
        %v6596 = vmul.f32 %v5946, %v6168
        %v6597 = vmul.f32 %v5946, %v6169
        %v6598 = vmul.f32 %v5946, %v6170
        %v6599 = vmul.f32 %v5946, %v6171
        %v6600 = vmul.f32 %v5950, %v6168
        %v6601 = vmul.f32 %v5950, %v6169
        %v6602 = vmul.f32 %v5950, %v6170
        %v6603 = vmul.f32 %v5950, %v6171
        %v6604 = vmul.f32 %v5954, %v6168
        %v6605 = vmul.f32 %v5954, %v6169
        %v6606 = vmul.f32 %v5954, %v6170
        %v6607 = vmul.f32 %v5954, %v6171
        %v6608 = vmul.f32 %v5958, %v6168
        %v6609 = vmul.f32 %v5958, %v6169
        %v6610 = vmul.f32 %v5958, %v6170
        %v6611 = vmul.f32 %v5958, %v6171
        %v6612 = vmul.f32 %v5962, %v6168
        %v6613 = vmul.f32 %v5962, %v6169
        %v6614 = vmul.f32 %v5962, %v6170
        %v6615 = vmul.f32 %v5962, %v6171
        %v6616 = vmul.f32 %v5966, %v6168
        %v6617 = vmul.f32 %v5966, %v6169
        %v6618 = vmul.f32 %v5966, %v6170
        %v6619 = vmul.f32 %v5966, %v6171
        %v6620 = vmul.f32 %v5970, %v6168
        %v6621 = vmul.f32 %v5970, %v6169
        %v6622 = vmul.f32 %v5970, %v6170
        %v6623 = vmul.f32 %v5970, %v6171
        %v6624 = vmul.f32 %v5974, %v6168
        %v6625 = vmul.f32 %v5974, %v6169
        %v6626 = vmul.f32 %v5974, %v6170
        %v6627 = vmul.f32 %v5974, %v6171
        %v6628 = vmul.f32 %v5978, %v6168
        %v6629 = vmul.f32 %v5978, %v6169
        %v6630 = vmul.f32 %v5978, %v6170
        %v6631 = vmul.f32 %v5978, %v6171
        %v6632 = vmul.f32 %v5982, %v6168
        %v6633 = vmul.f32 %v5982, %v6169
        %v6634 = vmul.f32 %v5982, %v6170
        %v6635 = vmul.f32 %v5982, %v6171
        %v6636 = vmul.f32 %v5986, %v6168
        %v6637 = vmul.f32 %v5986, %v6169
        %v6638 = vmul.f32 %v5986, %v6170
        %v6639 = vmul.f32 %v5986, %v6171
        %v6640 = vmul.f32 %v5990, %v6168
        %v6641 = vmul.f32 %v5990, %v6169
        %v6642 = vmul.f32 %v5990, %v6170
        %v6643 = vmul.f32 %v5990, %v6171
        %v6644 = vmul.f32 %v5994, %v6168
        %v6645 = vmul.f32 %v5994, %v6169
        %v6646 = vmul.f32 %v5994, %v6170
        %v6647 = vmul.f32 %v5994, %v6171
        %v6648 = vmul.f32 %v5998, %v6168
        %v6649 = vmul.f32 %v5998, %v6169
        %v6650 = vmul.f32 %v5998, %v6170
        %v6651 = vmul.f32 %v5998, %v6171
        %v6652 = vmul.f32 %v6002, %v6168
        %v6653 = vmul.f32 %v6002, %v6169
        %v6654 = vmul.f32 %v6002, %v6170
        %v6655 = vmul.f32 %v6002, %v6171
        %v6656 = vmul.f32 %v6006, %v6168
        %v6657 = vmul.f32 %v6006, %v6169
        %v6658 = vmul.f32 %v6006, %v6170
        %v6659 = vmul.f32 %v6006, %v6171
        %v6660 = vmul.f32 %v6010, %v6168
        %v6661 = vmul.f32 %v6010, %v6169
        %v6662 = vmul.f32 %v6010, %v6170
        %v6663 = vmul.f32 %v6010, %v6171
        %v6664 = vmul.f32 %v6014, %v6168
        %v6665 = vmul.f32 %v6014, %v6169
        %v6666 = vmul.f32 %v6014, %v6170
        %v6667 = vmul.f32 %v6014, %v6171
        %v6668 = vmul.f32 %v6018, %v6168
        %v6669 = vmul.f32 %v6018, %v6169
        %v6670 = vmul.f32 %v6018, %v6170
        %v6671 = vmul.f32 %v6018, %v6171
        %v6672 = vmul.f32 %v6022, %v6168
        %v6673 = vmul.f32 %v6022, %v6169
        %v6674 = vmul.f32 %v6022, %v6170
        %v6675 = vmul.f32 %v6022, %v6171
        %v6676 = vmul.f32 %v6026, %v6168
        %v6677 = vmul.f32 %v6026, %v6169
        %v6678 = vmul.f32 %v6026, %v6170
        %v6679 = vmul.f32 %v6026, %v6171
        %v6680 = vmul.f32 %v6030, %v6168
        %v6681 = vmul.f32 %v6030, %v6169
        %v6682 = vmul.f32 %v6030, %v6170
        %v6683 = vmul.f32 %v6030, %v6171
        %v6684 = vmul.f32 %v6034, %v6168
        %v6685 = vmul.f32 %v6034, %v6169
        %v6686 = vmul.f32 %v6034, %v6170
        %v6687 = vmul.f32 %v6034, %v6171
        %v6688 = vmul.f32 %v6038, %v6168
        %v6689 = vmul.f32 %v6038, %v6169
        %v6690 = vmul.f32 %v6038, %v6170
        %v6691 = vmul.f32 %v6038, %v6171
        %v6692 = vmul.f32 %v6042, %v6168
        %v6693 = vmul.f32 %v6042, %v6169
        %v6694 = vmul.f32 %v6042, %v6170
        %v6695 = vmul.f32 %v6042, %v6171
        %v6696 = vmul.f32 %v6046, %v6168
        %v6697 = vmul.f32 %v6046, %v6169
        %v6698 = vmul.f32 %v6046, %v6170
        %v6699 = vmul.f32 %v6046, %v6171
        %v6700 = vmul.f32 %v6050, %v6168
        %v6701 = vmul.f32 %v6050, %v6169
        %v6702 = vmul.f32 %v6050, %v6170
        %v6703 = vmul.f32 %v6050, %v6171
        %v6704 = vmul.f32 %v6054, %v6168
        %v6705 = vmul.f32 %v6054, %v6169
        %v6706 = vmul.f32 %v6054, %v6170
        %v6707 = vmul.f32 %v6054, %v6171
        %v6708 = vmul.f32 %v6058, %v6168
        %v6709 = vmul.f32 %v6058, %v6169
        %v6710 = vmul.f32 %v6058, %v6170
        %v6711 = vmul.f32 %v6058, %v6171
        %v6712 = vmul.f32 %v6062, %v6168
        %v6713 = vmul.f32 %v6062, %v6169
        %v6714 = vmul.f32 %v6062, %v6170
        %v6715 = vmul.f32 %v6062, %v6171
        %v6716 = vmul.f32 %v6066, %v6168
        %v6717 = vmul.f32 %v6066, %v6169
        %v6718 = vmul.f32 %v6066, %v6170
        %v6719 = vmul.f32 %v6066, %v6171
        %v6720 = vmul.f32 %v6070, %v6168
        %v6721 = vmul.f32 %v6070, %v6169
        %v6722 = vmul.f32 %v6070, %v6170
        %v6723 = vmul.f32 %v6070, %v6171
        %v6724 = vmul.f32 %v6074, %v6168
        %v6725 = vmul.f32 %v6074, %v6169
        %v6726 = vmul.f32 %v6074, %v6170
        %v6727 = vmul.f32 %v6074, %v6171
        %v6728 = vmul.f32 %v6078, %v6168
        %v6729 = vmul.f32 %v6078, %v6169
        %v6730 = vmul.f32 %v6078, %v6170
        %v6731 = vmul.f32 %v6078, %v6171
        %v6732 = vmul.f32 %v6082, %v6168
        %v6733 = vmul.f32 %v6082, %v6169
        %v6734 = vmul.f32 %v6082, %v6170
        %v6735 = vmul.f32 %v6082, %v6171
        %v6736 = vmul.f32 %v6086, %v6168
        %v6737 = vmul.f32 %v6086, %v6169
        %v6738 = vmul.f32 %v6086, %v6170
        %v6739 = vmul.f32 %v6086, %v6171
        %v6740 = vmul.f32 %v6090, %v6168
        %v6741 = vmul.f32 %v6090, %v6169
        %v6742 = vmul.f32 %v6090, %v6170
        %v6743 = vmul.f32 %v6090, %v6171
        %v6744 = vmul.f32 %v6094, %v6168
        %v6745 = vmul.f32 %v6094, %v6169
        %v6746 = vmul.f32 %v6094, %v6170
        %v6747 = vmul.f32 %v6094, %v6171
        %v6748 = vmul.f32 %v6098, %v6168
        %v6749 = vmul.f32 %v6098, %v6169
        %v6750 = vmul.f32 %v6098, %v6170
        %v6751 = vmul.f32 %v6098, %v6171
        %v6752 = vmul.f32 %v6102, %v6168
        %v6753 = vmul.f32 %v6102, %v6169
        %v6754 = vmul.f32 %v6102, %v6170
        %v6755 = vmul.f32 %v6102, %v6171
        %v6756 = vmul.f32 %v6106, %v6168
        %v6757 = vmul.f32 %v6106, %v6169
        %v6758 = vmul.f32 %v6106, %v6170
        %v6759 = vmul.f32 %v6106, %v6171
        %v6760 = vmul.f32 %v6110, %v6168
        %v6761 = vmul.f32 %v6110, %v6169
        %v6762 = vmul.f32 %v6110, %v6170
        %v6763 = vmul.f32 %v6110, %v6171
        %v6764 = vmul.f32 %v6114, %v6168
        %v6765 = vmul.f32 %v6114, %v6169
        %v6766 = vmul.f32 %v6114, %v6170
        %v6767 = vmul.f32 %v6114, %v6171
        %v6768 = vmul.f32 %v6118, %v6168
        %v6769 = vmul.f32 %v6118, %v6169
        %v6770 = vmul.f32 %v6118, %v6170
        %v6771 = vmul.f32 %v6118, %v6171
        %v6772 = vmul.f32 %v6122, %v6168
        %v6773 = vmul.f32 %v6122, %v6169
        %v6774 = vmul.f32 %v6122, %v6170
        %v6775 = vmul.f32 %v6122, %v6171
        %v6776 = vmul.f32 %v6126, %v6168
        %v6777 = vmul.f32 %v6126, %v6169
        %v6778 = vmul.f32 %v6126, %v6170
        %v6779 = vmul.f32 %v6126, %v6171
        %v6780 = vmul.f32 %v6130, %v6168
        %v6781 = vmul.f32 %v6130, %v6169
        %v6782 = vmul.f32 %v6130, %v6170
        %v6783 = vmul.f32 %v6130, %v6171
        %v6784 = vmul.f32 %v6134, %v6168
        %v6785 = vmul.f32 %v6134, %v6169
        %v6786 = vmul.f32 %v6134, %v6170
        %v6787 = vmul.f32 %v6134, %v6171
        %v6788 = vmul.f32 %v6138, %v6168
        %v6789 = vmul.f32 %v6138, %v6169
        %v6790 = vmul.f32 %v6138, %v6170
        %v6791 = vmul.f32 %v6138, %v6171
        %v6792 = vmul.f32 %v6142, %v6168
        %v6793 = vmul.f32 %v6142, %v6169
        %v6794 = vmul.f32 %v6142, %v6170
        %v6795 = vmul.f32 %v6142, %v6171
        %v6796 = vmul.f32 %v6146, %v6168
        %v6797 = vmul.f32 %v6146, %v6169
        %v6798 = vmul.f32 %v6146, %v6170
        %v6799 = vmul.f32 %v6146, %v6171
        %v6800 = vmul.f32 %v6150, %v6168
        %v6801 = vmul.f32 %v6150, %v6169
        %v6802 = vmul.f32 %v6150, %v6170
        %v6803 = vmul.f32 %v6150, %v6171
        %v6804 = vmul.f32 %v6154, %v6168
        %v6805 = vmul.f32 %v6154, %v6169
        %v6806 = vmul.f32 %v6154, %v6170
        %v6807 = vmul.f32 %v6154, %v6171
        %v6808 = vmul.f32 %v6158, %v6168
        %v6809 = vmul.f32 %v6158, %v6169
        %v6810 = vmul.f32 %v6158, %v6170
        %v6811 = vmul.f32 %v6158, %v6171
        %v6812 = vadd.f32 %v4880, %v6172
        %v6813 = vadd.f32 %v4881, %v6173
        %v6814 = vadd.f32 %v4882, %v6174
        %v6815 = vadd.f32 %v4883, %v6175
        %v6816 = vadd.f32 %v4884, %v6176
        %v6817 = vadd.f32 %v4885, %v6177
        %v6818 = vadd.f32 %v4886, %v6178
        %v6819 = vadd.f32 %v4887, %v6179
        %v6820 = vadd.f32 %v4888, %v6180
        %v6821 = vadd.f32 %v4889, %v6181
        %v6822 = vadd.f32 %v4890, %v6182
        %v6823 = vadd.f32 %v4891, %v6183
        %v6824 = vadd.f32 %v4892, %v6184
        %v6825 = vadd.f32 %v4893, %v6185
        %v6826 = vadd.f32 %v4894, %v6186
        %v6827 = vadd.f32 %v4895, %v6187
        %v6828 = vadd.f32 %v4896, %v6188
        %v6829 = vadd.f32 %v4897, %v6189
        %v6830 = vadd.f32 %v4898, %v6190
        %v6831 = vadd.f32 %v4899, %v6191
        %v6832 = vadd.f32 %v4900, %v6192
        %v6833 = vadd.f32 %v4901, %v6193
        %v6834 = vadd.f32 %v4902, %v6194
        %v6835 = vadd.f32 %v4903, %v6195
        %v6836 = vadd.f32 %v4904, %v6196
        %v6837 = vadd.f32 %v4905, %v6197
        %v6838 = vadd.f32 %v4906, %v6198
        %v6839 = vadd.f32 %v4907, %v6199
        %v6840 = vadd.f32 %v4908, %v6200
        %v6841 = vadd.f32 %v4909, %v6201
        %v6842 = vadd.f32 %v4910, %v6202
        %v6843 = vadd.f32 %v4911, %v6203
        %v6844 = vadd.f32 %v4912, %v6204
        %v6845 = vadd.f32 %v4913, %v6205
        %v6846 = vadd.f32 %v4914, %v6206
        %v6847 = vadd.f32 %v4915, %v6207
        %v6848 = vadd.f32 %v4916, %v6208
        %v6849 = vadd.f32 %v4917, %v6209
        %v6850 = vadd.f32 %v4918, %v6210
        %v6851 = vadd.f32 %v4919, %v6211
        %v6852 = vadd.f32 %v4920, %v6212
        %v6853 = vadd.f32 %v4921, %v6213
        %v6854 = vadd.f32 %v4922, %v6214
        %v6855 = vadd.f32 %v4923, %v6215
        %v6856 = vadd.f32 %v4924, %v6216
        %v6857 = vadd.f32 %v4925, %v6217
        %v6858 = vadd.f32 %v4926, %v6218
        %v6859 = vadd.f32 %v4927, %v6219
        %v6860 = vadd.f32 %v4928, %v6220
        %v6861 = vadd.f32 %v4929, %v6221
        %v6862 = vadd.f32 %v4930, %v6222
        %v6863 = vadd.f32 %v4931, %v6223
        %v6864 = vadd.f32 %v4932, %v6224
        %v6865 = vadd.f32 %v4933, %v6225
        %v6866 = vadd.f32 %v4934, %v6226
        %v6867 = vadd.f32 %v4935, %v6227
        %v6868 = vadd.f32 %v4936, %v6228
        %v6869 = vadd.f32 %v4937, %v6229
        %v6870 = vadd.f32 %v4938, %v6230
        %v6871 = vadd.f32 %v4939, %v6231
        %v6872 = vadd.f32 %v4940, %v6232
        %v6873 = vadd.f32 %v4941, %v6233
        %v6874 = vadd.f32 %v4942, %v6234
        %v6875 = vadd.f32 %v4943, %v6235
        %v6876 = vadd.f32 %v4944, %v6236
        %v6877 = vadd.f32 %v4945, %v6237
        %v6878 = vadd.f32 %v4946, %v6238
        %v6879 = vadd.f32 %v4947, %v6239
        %v6880 = vadd.f32 %v4948, %v6240
        %v6881 = vadd.f32 %v4949, %v6241
        %v6882 = vadd.f32 %v4950, %v6242
        %v6883 = vadd.f32 %v4951, %v6243
        %v6884 = vadd.f32 %v4952, %v6244
        %v6885 = vadd.f32 %v4953, %v6245
        %v6886 = vadd.f32 %v4954, %v6246
        %v6887 = vadd.f32 %v4955, %v6247
        %v6888 = vadd.f32 %v4956, %v6248
        %v6889 = vadd.f32 %v4957, %v6249
        %v6890 = vadd.f32 %v4958, %v6250
        %v6891 = vadd.f32 %v4959, %v6251
        %v6892 = vadd.f32 %v4960, %v6252
        %v6893 = vadd.f32 %v4961, %v6253
        %v6894 = vadd.f32 %v4962, %v6254
        %v6895 = vadd.f32 %v4963, %v6255
        %v6896 = vadd.f32 %v4964, %v6256
        %v6897 = vadd.f32 %v4965, %v6257
        %v6898 = vadd.f32 %v4966, %v6258
        %v6899 = vadd.f32 %v4967, %v6259
        %v6900 = vadd.f32 %v4968, %v6260
        %v6901 = vadd.f32 %v4969, %v6261
        %v6902 = vadd.f32 %v4970, %v6262
        %v6903 = vadd.f32 %v4971, %v6263
        %v6904 = vadd.f32 %v4972, %v6264
        %v6905 = vadd.f32 %v4973, %v6265
        %v6906 = vadd.f32 %v4974, %v6266
        %v6907 = vadd.f32 %v4975, %v6267
        %v6908 = vadd.f32 %v4976, %v6268
        %v6909 = vadd.f32 %v4977, %v6269
        %v6910 = vadd.f32 %v4978, %v6270
        %v6911 = vadd.f32 %v4979, %v6271
        %v6912 = vadd.f32 %v4980, %v6272
        %v6913 = vadd.f32 %v4981, %v6273
        %v6914 = vadd.f32 %v4982, %v6274
        %v6915 = vadd.f32 %v4983, %v6275
        %v6916 = vadd.f32 %v4984, %v6276
        %v6917 = vadd.f32 %v4985, %v6277
        %v6918 = vadd.f32 %v4986, %v6278
        %v6919 = vadd.f32 %v4987, %v6279
        %v6920 = vadd.f32 %v4988, %v6280
        %v6921 = vadd.f32 %v4989, %v6281
        %v6922 = vadd.f32 %v4990, %v6282
        %v6923 = vadd.f32 %v4991, %v6283
        %v6924 = vadd.f32 %v4992, %v6284
        %v6925 = vadd.f32 %v4993, %v6285
        %v6926 = vadd.f32 %v4994, %v6286
        %v6927 = vadd.f32 %v4995, %v6287
        %v6928 = vadd.f32 %v4996, %v6288
        %v6929 = vadd.f32 %v4997, %v6289
        %v6930 = vadd.f32 %v4998, %v6290
        %v6931 = vadd.f32 %v4999, %v6291
        %v6932 = vadd.f32 %v5000, %v6292
        %v6933 = vadd.f32 %v5001, %v6293
        %v6934 = vadd.f32 %v5002, %v6294
        %v6935 = vadd.f32 %v5003, %v6295
        %v6936 = vadd.f32 %v5004, %v6296
        %v6937 = vadd.f32 %v5005, %v6297
        %v6938 = vadd.f32 %v5006, %v6298
        %v6939 = vadd.f32 %v5007, %v6299
        %v6940 = vadd.f32 %v5008, %v6300
        %v6941 = vadd.f32 %v5009, %v6301
        %v6942 = vadd.f32 %v5010, %v6302
        %v6943 = vadd.f32 %v5011, %v6303
        %v6944 = vadd.f32 %v5012, %v6304
        %v6945 = vadd.f32 %v5013, %v6305
        %v6946 = vadd.f32 %v5014, %v6306
        %v6947 = vadd.f32 %v5015, %v6307
        %v6948 = vadd.f32 %v5016, %v6308
        %v6949 = vadd.f32 %v5017, %v6309
        %v6950 = vadd.f32 %v5018, %v6310
        %v6951 = vadd.f32 %v5019, %v6311
        %v6952 = vadd.f32 %v5020, %v6312
        %v6953 = vadd.f32 %v5021, %v6313
        %v6954 = vadd.f32 %v5022, %v6314
        %v6955 = vadd.f32 %v5023, %v6315
        %v6956 = vadd.f32 %v5024, %v6316
        %v6957 = vadd.f32 %v5025, %v6317
        %v6958 = vadd.f32 %v5026, %v6318
        %v6959 = vadd.f32 %v5027, %v6319
        %v6960 = vadd.f32 %v5028, %v6320
        %v6961 = vadd.f32 %v5029, %v6321
        %v6962 = vadd.f32 %v5030, %v6322
        %v6963 = vadd.f32 %v5031, %v6323
        %v6964 = vadd.f32 %v5032, %v6324
        %v6965 = vadd.f32 %v5033, %v6325
        %v6966 = vadd.f32 %v5034, %v6326
        %v6967 = vadd.f32 %v5035, %v6327
        %v6968 = vadd.f32 %v5036, %v6328
        %v6969 = vadd.f32 %v5037, %v6329
        %v6970 = vadd.f32 %v5038, %v6330
        %v6971 = vadd.f32 %v5039, %v6331
        %v6972 = vadd.f32 %v5040, %v6332
        %v6973 = vadd.f32 %v5041, %v6333
        %v6974 = vadd.f32 %v5042, %v6334
        %v6975 = vadd.f32 %v5043, %v6335
        %v6976 = vadd.f32 %v5044, %v6336
        %v6977 = vadd.f32 %v5045, %v6337
        %v6978 = vadd.f32 %v5046, %v6338
        %v6979 = vadd.f32 %v5047, %v6339
        %v6980 = vadd.f32 %v5048, %v6340
        %v6981 = vadd.f32 %v5049, %v6341
        %v6982 = vadd.f32 %v5050, %v6342
        %v6983 = vadd.f32 %v5051, %v6343
        %v6984 = vadd.f32 %v5052, %v6344
        %v6985 = vadd.f32 %v5053, %v6345
        %v6986 = vadd.f32 %v5054, %v6346
        %v6987 = vadd.f32 %v5055, %v6347
        %v6988 = vadd.f32 %v5056, %v6348
        %v6989 = vadd.f32 %v5057, %v6349
        %v6990 = vadd.f32 %v5058, %v6350
        %v6991 = vadd.f32 %v5059, %v6351
        %v6992 = vadd.f32 %v5060, %v6352
        %v6993 = vadd.f32 %v5061, %v6353
        %v6994 = vadd.f32 %v5062, %v6354
        %v6995 = vadd.f32 %v5063, %v6355
        %v6996 = vadd.f32 %v5064, %v6356
        %v6997 = vadd.f32 %v5065, %v6357
        %v6998 = vadd.f32 %v5066, %v6358
        %v6999 = vadd.f32 %v5067, %v6359
        %v7000 = vadd.f32 %v5068, %v6360
        %v7001 = vadd.f32 %v5069, %v6361
        %v7002 = vadd.f32 %v5070, %v6362
        %v7003 = vadd.f32 %v5071, %v6363
        %v7004 = vadd.f32 %v5072, %v6364
        %v7005 = vadd.f32 %v5073, %v6365
        %v7006 = vadd.f32 %v5074, %v6366
        %v7007 = vadd.f32 %v5075, %v6367
        %v7008 = vadd.f32 %v5076, %v6368
        %v7009 = vadd.f32 %v5077, %v6369
        %v7010 = vadd.f32 %v5078, %v6370
        %v7011 = vadd.f32 %v5079, %v6371
        %v7012 = vadd.f32 %v5080, %v6372
        %v7013 = vadd.f32 %v5081, %v6373
        %v7014 = vadd.f32 %v5082, %v6374
        %v7015 = vadd.f32 %v5083, %v6375
        %v7016 = vadd.f32 %v5084, %v6376
        %v7017 = vadd.f32 %v5085, %v6377
        %v7018 = vadd.f32 %v5086, %v6378
        %v7019 = vadd.f32 %v5087, %v6379
        %v7020 = vadd.f32 %v5088, %v6380
        %v7021 = vadd.f32 %v5089, %v6381
        %v7022 = vadd.f32 %v5090, %v6382
        %v7023 = vadd.f32 %v5091, %v6383
        %v7024 = vadd.f32 %v5092, %v6384
        %v7025 = vadd.f32 %v5093, %v6385
        %v7026 = vadd.f32 %v5094, %v6386
        %v7027 = vadd.f32 %v5095, %v6387
        %v7028 = vadd.f32 %v5096, %v6388
        %v7029 = vadd.f32 %v5097, %v6389
        %v7030 = vadd.f32 %v5098, %v6390
        %v7031 = vadd.f32 %v5099, %v6391
        %v7032 = vadd.f32 %v5100, %v6392
        %v7033 = vadd.f32 %v5101, %v6393
        %v7034 = vadd.f32 %v5102, %v6394
        %v7035 = vadd.f32 %v5103, %v6395
        %v7036 = vadd.f32 %v5104, %v6396
        %v7037 = vadd.f32 %v5105, %v6397
        %v7038 = vadd.f32 %v5106, %v6398
        %v7039 = vadd.f32 %v5107, %v6399
        %v7040 = vadd.f32 %v5108, %v6400
        %v7041 = vadd.f32 %v5109, %v6401
        %v7042 = vadd.f32 %v5110, %v6402
        %v7043 = vadd.f32 %v5111, %v6403
        %v7044 = vadd.f32 %v5112, %v6404
        %v7045 = vadd.f32 %v5113, %v6405
        %v7046 = vadd.f32 %v5114, %v6406
        %v7047 = vadd.f32 %v5115, %v6407
        %v7048 = vadd.f32 %v5116, %v6408
        %v7049 = vadd.f32 %v5117, %v6409
        %v7050 = vadd.f32 %v5118, %v6410
        %v7051 = vadd.f32 %v5119, %v6411
        %v7052 = vadd.f32 %v5120, %v6412
        %v7053 = vadd.f32 %v5121, %v6413
        %v7054 = vadd.f32 %v5122, %v6414
        %v7055 = vadd.f32 %v5123, %v6415
        %v7056 = vadd.f32 %v5124, %v6416
        %v7057 = vadd.f32 %v5125, %v6417
        %v7058 = vadd.f32 %v5126, %v6418
        %v7059 = vadd.f32 %v5127, %v6419
        %v7060 = vadd.f32 %v5128, %v6420
        %v7061 = vadd.f32 %v5129, %v6421
        %v7062 = vadd.f32 %v5130, %v6422
        %v7063 = vadd.f32 %v5131, %v6423
        %v7064 = vadd.f32 %v5132, %v6424
        %v7065 = vadd.f32 %v5133, %v6425
        %v7066 = vadd.f32 %v5134, %v6426
        %v7067 = vadd.f32 %v5135, %v6427
        %v7068 = vadd.f32 %v5136, %v6428
        %v7069 = vadd.f32 %v5137, %v6429
        %v7070 = vadd.f32 %v5138, %v6430
        %v7071 = vadd.f32 %v5139, %v6431
        %v7072 = vadd.f32 %v5140, %v6432
        %v7073 = vadd.f32 %v5141, %v6433
        %v7074 = vadd.f32 %v5142, %v6434
        %v7075 = vadd.f32 %v5143, %v6435
        %v7076 = vadd.f32 %v5144, %v6436
        %v7077 = vadd.f32 %v5145, %v6437
        %v7078 = vadd.f32 %v5146, %v6438
        %v7079 = vadd.f32 %v5147, %v6439
        %v7080 = vadd.f32 %v5148, %v6440
        %v7081 = vadd.f32 %v5149, %v6441
        %v7082 = vadd.f32 %v5150, %v6442
        %v7083 = vadd.f32 %v5151, %v6443
        %v7084 = vadd.f32 %v5152, %v6444
        %v7085 = vadd.f32 %v5153, %v6445
        %v7086 = vadd.f32 %v5154, %v6446
        %v7087 = vadd.f32 %v5155, %v6447
        %v7088 = vadd.f32 %v5156, %v6448
        %v7089 = vadd.f32 %v5157, %v6449
        %v7090 = vadd.f32 %v5158, %v6450
        %v7091 = vadd.f32 %v5159, %v6451
        %v7092 = vadd.f32 %v5160, %v6452
        %v7093 = vadd.f32 %v5161, %v6453
        %v7094 = vadd.f32 %v5162, %v6454
        %v7095 = vadd.f32 %v5163, %v6455
        %v7096 = vadd.f32 %v5164, %v6456
        %v7097 = vadd.f32 %v5165, %v6457
        %v7098 = vadd.f32 %v5166, %v6458
        %v7099 = vadd.f32 %v5167, %v6459
        %v7100 = vadd.f32 %v5168, %v6460
        %v7101 = vadd.f32 %v5169, %v6461
        %v7102 = vadd.f32 %v5170, %v6462
        %v7103 = vadd.f32 %v5171, %v6463
        %v7104 = vadd.f32 %v5172, %v6464
        %v7105 = vadd.f32 %v5173, %v6465
        %v7106 = vadd.f32 %v5174, %v6466
        %v7107 = vadd.f32 %v5175, %v6467
        %v7108 = vadd.f32 %v5176, %v6468
        %v7109 = vadd.f32 %v5177, %v6469
        %v7110 = vadd.f32 %v5178, %v6470
        %v7111 = vadd.f32 %v5179, %v6471
        %v7112 = vadd.f32 %v5180, %v6472
        %v7113 = vadd.f32 %v5181, %v6473
        %v7114 = vadd.f32 %v5182, %v6474
        %v7115 = vadd.f32 %v5183, %v6475
        %v7116 = vadd.f32 %v5184, %v6476
        %v7117 = vadd.f32 %v5185, %v6477
        %v7118 = vadd.f32 %v5186, %v6478
        %v7119 = vadd.f32 %v5187, %v6479
        %v7120 = vadd.f32 %v5188, %v6480
        %v7121 = vadd.f32 %v5189, %v6481
        %v7122 = vadd.f32 %v5190, %v6482
        %v7123 = vadd.f32 %v5191, %v6483
        %v7124 = vadd.f32 %v5192, %v6484
        %v7125 = vadd.f32 %v5193, %v6485
        %v7126 = vadd.f32 %v5194, %v6486
        %v7127 = vadd.f32 %v5195, %v6487
        %v7128 = vadd.f32 %v5196, %v6488
        %v7129 = vadd.f32 %v5197, %v6489
        %v7130 = vadd.f32 %v5198, %v6490
        %v7131 = vadd.f32 %v5199, %v6491
        %v7132 = vadd.f32 %v5200, %v6492
        %v7133 = vadd.f32 %v5201, %v6493
        %v7134 = vadd.f32 %v5202, %v6494
        %v7135 = vadd.f32 %v5203, %v6495
        %v7136 = vadd.f32 %v5204, %v6496
        %v7137 = vadd.f32 %v5205, %v6497
        %v7138 = vadd.f32 %v5206, %v6498
        %v7139 = vadd.f32 %v5207, %v6499
        %v7140 = vadd.f32 %v5208, %v6500
        %v7141 = vadd.f32 %v5209, %v6501
        %v7142 = vadd.f32 %v5210, %v6502
        %v7143 = vadd.f32 %v5211, %v6503
        %v7144 = vadd.f32 %v5212, %v6504
        %v7145 = vadd.f32 %v5213, %v6505
        %v7146 = vadd.f32 %v5214, %v6506
        %v7147 = vadd.f32 %v5215, %v6507
        %v7148 = vadd.f32 %v5216, %v6508
        %v7149 = vadd.f32 %v5217, %v6509
        %v7150 = vadd.f32 %v5218, %v6510
        %v7151 = vadd.f32 %v5219, %v6511
        %v7152 = vadd.f32 %v5220, %v6512
        %v7153 = vadd.f32 %v5221, %v6513
        %v7154 = vadd.f32 %v5222, %v6514
        %v7155 = vadd.f32 %v5223, %v6515
        %v7156 = vadd.f32 %v5224, %v6516
        %v7157 = vadd.f32 %v5225, %v6517
        %v7158 = vadd.f32 %v5226, %v6518
        %v7159 = vadd.f32 %v5227, %v6519
        %v7160 = vadd.f32 %v5228, %v6520
        %v7161 = vadd.f32 %v5229, %v6521
        %v7162 = vadd.f32 %v5230, %v6522
        %v7163 = vadd.f32 %v5231, %v6523
        %v7164 = vadd.f32 %v5232, %v6524
        %v7165 = vadd.f32 %v5233, %v6525
        %v7166 = vadd.f32 %v5234, %v6526
        %v7167 = vadd.f32 %v5235, %v6527
        %v7168 = vadd.f32 %v5236, %v6528
        %v7169 = vadd.f32 %v5237, %v6529
        %v7170 = vadd.f32 %v5238, %v6530
        %v7171 = vadd.f32 %v5239, %v6531
        %v7172 = vadd.f32 %v5240, %v6532
        %v7173 = vadd.f32 %v5241, %v6533
        %v7174 = vadd.f32 %v5242, %v6534
        %v7175 = vadd.f32 %v5243, %v6535
        %v7176 = vadd.f32 %v5244, %v6536
        %v7177 = vadd.f32 %v5245, %v6537
        %v7178 = vadd.f32 %v5246, %v6538
        %v7179 = vadd.f32 %v5247, %v6539
        %v7180 = vadd.f32 %v5248, %v6540
        %v7181 = vadd.f32 %v5249, %v6541
        %v7182 = vadd.f32 %v5250, %v6542
        %v7183 = vadd.f32 %v5251, %v6543
        %v7184 = vadd.f32 %v5252, %v6544
        %v7185 = vadd.f32 %v5253, %v6545
        %v7186 = vadd.f32 %v5254, %v6546
        %v7187 = vadd.f32 %v5255, %v6547
        %v7188 = vadd.f32 %v5256, %v6548
        %v7189 = vadd.f32 %v5257, %v6549
        %v7190 = vadd.f32 %v5258, %v6550
        %v7191 = vadd.f32 %v5259, %v6551
        %v7192 = vadd.f32 %v5260, %v6552
        %v7193 = vadd.f32 %v5261, %v6553
        %v7194 = vadd.f32 %v5262, %v6554
        %v7195 = vadd.f32 %v5263, %v6555
        %v7196 = vadd.f32 %v5264, %v6556
        %v7197 = vadd.f32 %v5265, %v6557
        %v7198 = vadd.f32 %v5266, %v6558
        %v7199 = vadd.f32 %v5267, %v6559
        %v7200 = vadd.f32 %v5268, %v6560
        %v7201 = vadd.f32 %v5269, %v6561
        %v7202 = vadd.f32 %v5270, %v6562
        %v7203 = vadd.f32 %v5271, %v6563
        %v7204 = vadd.f32 %v5272, %v6564
        %v7205 = vadd.f32 %v5273, %v6565
        %v7206 = vadd.f32 %v5274, %v6566
        %v7207 = vadd.f32 %v5275, %v6567
        %v7208 = vadd.f32 %v5276, %v6568
        %v7209 = vadd.f32 %v5277, %v6569
        %v7210 = vadd.f32 %v5278, %v6570
        %v7211 = vadd.f32 %v5279, %v6571
        %v7212 = vadd.f32 %v5280, %v6572
        %v7213 = vadd.f32 %v5281, %v6573
        %v7214 = vadd.f32 %v5282, %v6574
        %v7215 = vadd.f32 %v5283, %v6575
        %v7216 = vadd.f32 %v5284, %v6576
        %v7217 = vadd.f32 %v5285, %v6577
        %v7218 = vadd.f32 %v5286, %v6578
        %v7219 = vadd.f32 %v5287, %v6579
        %v7220 = vadd.f32 %v5288, %v6580
        %v7221 = vadd.f32 %v5289, %v6581
        %v7222 = vadd.f32 %v5290, %v6582
        %v7223 = vadd.f32 %v5291, %v6583
        %v7224 = vadd.f32 %v5292, %v6584
        %v7225 = vadd.f32 %v5293, %v6585
        %v7226 = vadd.f32 %v5294, %v6586
        %v7227 = vadd.f32 %v5295, %v6587
        %v7228 = vadd.f32 %v5296, %v6588
        %v7229 = vadd.f32 %v5297, %v6589
        %v7230 = vadd.f32 %v5298, %v6590
        %v7231 = vadd.f32 %v5299, %v6591
        %v7232 = vadd.f32 %v5300, %v6592
        %v7233 = vadd.f32 %v5301, %v6593
        %v7234 = vadd.f32 %v5302, %v6594
        %v7235 = vadd.f32 %v5303, %v6595
        %v7236 = vadd.f32 %v5304, %v6596
        %v7237 = vadd.f32 %v5305, %v6597
        %v7238 = vadd.f32 %v5306, %v6598
        %v7239 = vadd.f32 %v5307, %v6599
        %v7240 = vadd.f32 %v5308, %v6600
        %v7241 = vadd.f32 %v5309, %v6601
        %v7242 = vadd.f32 %v5310, %v6602
        %v7243 = vadd.f32 %v5311, %v6603
        %v7244 = vadd.f32 %v5312, %v6604
        %v7245 = vadd.f32 %v5313, %v6605
        %v7246 = vadd.f32 %v5314, %v6606
        %v7247 = vadd.f32 %v5315, %v6607
        %v7248 = vadd.f32 %v5316, %v6608
        %v7249 = vadd.f32 %v5317, %v6609
        %v7250 = vadd.f32 %v5318, %v6610
        %v7251 = vadd.f32 %v5319, %v6611
        %v7252 = vadd.f32 %v5320, %v6612
        %v7253 = vadd.f32 %v5321, %v6613
        %v7254 = vadd.f32 %v5322, %v6614
        %v7255 = vadd.f32 %v5323, %v6615
        %v7256 = vadd.f32 %v5324, %v6616
        %v7257 = vadd.f32 %v5325, %v6617
        %v7258 = vadd.f32 %v5326, %v6618
        %v7259 = vadd.f32 %v5327, %v6619
        %v7260 = vadd.f32 %v5328, %v6620
        %v7261 = vadd.f32 %v5329, %v6621
        %v7262 = vadd.f32 %v5330, %v6622
        %v7263 = vadd.f32 %v5331, %v6623
        %v7264 = vadd.f32 %v5332, %v6624
        %v7265 = vadd.f32 %v5333, %v6625
        %v7266 = vadd.f32 %v5334, %v6626
        %v7267 = vadd.f32 %v5335, %v6627
        %v7268 = vadd.f32 %v5336, %v6628
        %v7269 = vadd.f32 %v5337, %v6629
        %v7270 = vadd.f32 %v5338, %v6630
        %v7271 = vadd.f32 %v5339, %v6631
        %v7272 = vadd.f32 %v5340, %v6632
        %v7273 = vadd.f32 %v5341, %v6633
        %v7274 = vadd.f32 %v5342, %v6634
        %v7275 = vadd.f32 %v5343, %v6635
        %v7276 = vadd.f32 %v5344, %v6636
        %v7277 = vadd.f32 %v5345, %v6637
        %v7278 = vadd.f32 %v5346, %v6638
        %v7279 = vadd.f32 %v5347, %v6639
        %v7280 = vadd.f32 %v5348, %v6640
        %v7281 = vadd.f32 %v5349, %v6641
        %v7282 = vadd.f32 %v5350, %v6642
        %v7283 = vadd.f32 %v5351, %v6643
        %v7284 = vadd.f32 %v5352, %v6644
        %v7285 = vadd.f32 %v5353, %v6645
        %v7286 = vadd.f32 %v5354, %v6646
        %v7287 = vadd.f32 %v5355, %v6647
        %v7288 = vadd.f32 %v5356, %v6648
        %v7289 = vadd.f32 %v5357, %v6649
        %v7290 = vadd.f32 %v5358, %v6650
        %v7291 = vadd.f32 %v5359, %v6651
        %v7292 = vadd.f32 %v5360, %v6652
        %v7293 = vadd.f32 %v5361, %v6653
        %v7294 = vadd.f32 %v5362, %v6654
        %v7295 = vadd.f32 %v5363, %v6655
        %v7296 = vadd.f32 %v5364, %v6656
        %v7297 = vadd.f32 %v5365, %v6657
        %v7298 = vadd.f32 %v5366, %v6658
        %v7299 = vadd.f32 %v5367, %v6659
        %v7300 = vadd.f32 %v5368, %v6660
        %v7301 = vadd.f32 %v5369, %v6661
        %v7302 = vadd.f32 %v5370, %v6662
        %v7303 = vadd.f32 %v5371, %v6663
        %v7304 = vadd.f32 %v5372, %v6664
        %v7305 = vadd.f32 %v5373, %v6665
        %v7306 = vadd.f32 %v5374, %v6666
        %v7307 = vadd.f32 %v5375, %v6667
        %v7308 = vadd.f32 %v5376, %v6668
        %v7309 = vadd.f32 %v5377, %v6669
        %v7310 = vadd.f32 %v5378, %v6670
        %v7311 = vadd.f32 %v5379, %v6671
        %v7312 = vadd.f32 %v5380, %v6672
        %v7313 = vadd.f32 %v5381, %v6673
        %v7314 = vadd.f32 %v5382, %v6674
        %v7315 = vadd.f32 %v5383, %v6675
        %v7316 = vadd.f32 %v5384, %v6676
        %v7317 = vadd.f32 %v5385, %v6677
        %v7318 = vadd.f32 %v5386, %v6678
        %v7319 = vadd.f32 %v5387, %v6679
        %v7320 = vadd.f32 %v5388, %v6680
        %v7321 = vadd.f32 %v5389, %v6681
        %v7322 = vadd.f32 %v5390, %v6682
        %v7323 = vadd.f32 %v5391, %v6683
        %v7324 = vadd.f32 %v5392, %v6684
        %v7325 = vadd.f32 %v5393, %v6685
        %v7326 = vadd.f32 %v5394, %v6686
        %v7327 = vadd.f32 %v5395, %v6687
        %v7328 = vadd.f32 %v5396, %v6688
        %v7329 = vadd.f32 %v5397, %v6689
        %v7330 = vadd.f32 %v5398, %v6690
        %v7331 = vadd.f32 %v5399, %v6691
        %v7332 = vadd.f32 %v5400, %v6692
        %v7333 = vadd.f32 %v5401, %v6693
        %v7334 = vadd.f32 %v5402, %v6694
        %v7335 = vadd.f32 %v5403, %v6695
        %v7336 = vadd.f32 %v5404, %v6696
        %v7337 = vadd.f32 %v5405, %v6697
        %v7338 = vadd.f32 %v5406, %v6698
        %v7339 = vadd.f32 %v5407, %v6699
        %v7340 = vadd.f32 %v5408, %v6700
        %v7341 = vadd.f32 %v5409, %v6701
        %v7342 = vadd.f32 %v5410, %v6702
        %v7343 = vadd.f32 %v5411, %v6703
        %v7344 = vadd.f32 %v5412, %v6704
        %v7345 = vadd.f32 %v5413, %v6705
        %v7346 = vadd.f32 %v5414, %v6706
        %v7347 = vadd.f32 %v5415, %v6707
        %v7348 = vadd.f32 %v5416, %v6708
        %v7349 = vadd.f32 %v5417, %v6709
        %v7350 = vadd.f32 %v5418, %v6710
        %v7351 = vadd.f32 %v5419, %v6711
        %v7352 = vadd.f32 %v5420, %v6712
        %v7353 = vadd.f32 %v5421, %v6713
        %v7354 = vadd.f32 %v5422, %v6714
        %v7355 = vadd.f32 %v5423, %v6715
        %v7356 = vadd.f32 %v5424, %v6716
        %v7357 = vadd.f32 %v5425, %v6717
        %v7358 = vadd.f32 %v5426, %v6718
        %v7359 = vadd.f32 %v5427, %v6719
        %v7360 = vadd.f32 %v5428, %v6720
        %v7361 = vadd.f32 %v5429, %v6721
        %v7362 = vadd.f32 %v5430, %v6722
        %v7363 = vadd.f32 %v5431, %v6723
        %v7364 = vadd.f32 %v5432, %v6724
        %v7365 = vadd.f32 %v5433, %v6725
        %v7366 = vadd.f32 %v5434, %v6726
        %v7367 = vadd.f32 %v5435, %v6727
        %v7368 = vadd.f32 %v5436, %v6728
        %v7369 = vadd.f32 %v5437, %v6729
        %v7370 = vadd.f32 %v5438, %v6730
        %v7371 = vadd.f32 %v5439, %v6731
        %v7372 = vadd.f32 %v5440, %v6732
        %v7373 = vadd.f32 %v5441, %v6733
        %v7374 = vadd.f32 %v5442, %v6734
        %v7375 = vadd.f32 %v5443, %v6735
        %v7376 = vadd.f32 %v5444, %v6736
        %v7377 = vadd.f32 %v5445, %v6737
        %v7378 = vadd.f32 %v5446, %v6738
        %v7379 = vadd.f32 %v5447, %v6739
        %v7380 = vadd.f32 %v5448, %v6740
        %v7381 = vadd.f32 %v5449, %v6741
        %v7382 = vadd.f32 %v5450, %v6742
        %v7383 = vadd.f32 %v5451, %v6743
        %v7384 = vadd.f32 %v5452, %v6744
        %v7385 = vadd.f32 %v5453, %v6745
        %v7386 = vadd.f32 %v5454, %v6746
        %v7387 = vadd.f32 %v5455, %v6747
        %v7388 = vadd.f32 %v5456, %v6748
        %v7389 = vadd.f32 %v5457, %v6749
        %v7390 = vadd.f32 %v5458, %v6750
        %v7391 = vadd.f32 %v5459, %v6751
        %v7392 = vadd.f32 %v5460, %v6752
        %v7393 = vadd.f32 %v5461, %v6753
        %v7394 = vadd.f32 %v5462, %v6754
        %v7395 = vadd.f32 %v5463, %v6755
        %v7396 = vadd.f32 %v5464, %v6756
        %v7397 = vadd.f32 %v5465, %v6757
        %v7398 = vadd.f32 %v5466, %v6758
        %v7399 = vadd.f32 %v5467, %v6759
        %v7400 = vadd.f32 %v5468, %v6760
        %v7401 = vadd.f32 %v5469, %v6761
        %v7402 = vadd.f32 %v5470, %v6762
        %v7403 = vadd.f32 %v5471, %v6763
        %v7404 = vadd.f32 %v5472, %v6764
        %v7405 = vadd.f32 %v5473, %v6765
        %v7406 = vadd.f32 %v5474, %v6766
        %v7407 = vadd.f32 %v5475, %v6767
        %v7408 = vadd.f32 %v5476, %v6768
        %v7409 = vadd.f32 %v5477, %v6769
        %v7410 = vadd.f32 %v5478, %v6770
        %v7411 = vadd.f32 %v5479, %v6771
        %v7412 = vadd.f32 %v5480, %v6772
        %v7413 = vadd.f32 %v5481, %v6773
        %v7414 = vadd.f32 %v5482, %v6774
        %v7415 = vadd.f32 %v5483, %v6775
        %v7416 = vadd.f32 %v5484, %v6776
        %v7417 = vadd.f32 %v5485, %v6777
        %v7418 = vadd.f32 %v5486, %v6778
        %v7419 = vadd.f32 %v5487, %v6779
        %v7420 = vadd.f32 %v5488, %v6780
        %v7421 = vadd.f32 %v5489, %v6781
        %v7422 = vadd.f32 %v5490, %v6782
        %v7423 = vadd.f32 %v5491, %v6783
        %v7424 = vadd.f32 %v5492, %v6784
        %v7425 = vadd.f32 %v5493, %v6785
        %v7426 = vadd.f32 %v5494, %v6786
        %v7427 = vadd.f32 %v5495, %v6787
        %v7428 = vadd.f32 %v5496, %v6788
        %v7429 = vadd.f32 %v5497, %v6789
        %v7430 = vadd.f32 %v5498, %v6790
        %v7431 = vadd.f32 %v5499, %v6791
        %v7432 = vadd.f32 %v5500, %v6792
        %v7433 = vadd.f32 %v5501, %v6793
        %v7434 = vadd.f32 %v5502, %v6794
        %v7435 = vadd.f32 %v5503, %v6795
        %v7436 = vadd.f32 %v5504, %v6796
        %v7437 = vadd.f32 %v5505, %v6797
        %v7438 = vadd.f32 %v5506, %v6798
        %v7439 = vadd.f32 %v5507, %v6799
        %v7440 = vadd.f32 %v5508, %v6800
        %v7441 = vadd.f32 %v5509, %v6801
        %v7442 = vadd.f32 %v5510, %v6802
        %v7443 = vadd.f32 %v5511, %v6803
        %v7444 = vadd.f32 %v5512, %v6804
        %v7445 = vadd.f32 %v5513, %v6805
        %v7446 = vadd.f32 %v5514, %v6806
        %v7447 = vadd.f32 %v5515, %v6807
        %v7448 = vadd.f32 %v5516, %v6808
        %v7449 = vadd.f32 %v5517, %v6809
        %v7450 = vadd.f32 %v5518, %v6810
        %v7451 = vadd.f32 %v5519, %v6811
        %v7453 = vperm.slane %v1973, 0
        %v7454 = vperm.slane %v1973, 1
        %v7455 = vperm.slane %v1973, 2
        %v7456 = vperm.slane %v1973, 3
        %v7461 = vadd.f32 %v6812, %v7453
        %v7462 = vadd.f32 %v6813, %v7454
        %v7463 = vadd.f32 %v6814, %v7455
        %v7464 = vadd.f32 %v6815, %v7456
        %v7465 = vadd.f32 %v6816, %v7453
        %v7466 = vadd.f32 %v6817, %v7454
        %v7467 = vadd.f32 %v6818, %v7455
        %v7468 = vadd.f32 %v6819, %v7456
        %v7469 = vadd.f32 %v6820, %v7453
        %v7470 = vadd.f32 %v6821, %v7454
        %v7471 = vadd.f32 %v6822, %v7455
        %v7472 = vadd.f32 %v6823, %v7456
        %v7473 = vadd.f32 %v6824, %v7453
        %v7474 = vadd.f32 %v6825, %v7454
        %v7475 = vadd.f32 %v6826, %v7455
        %v7476 = vadd.f32 %v6827, %v7456
        %v7477 = vadd.f32 %v6828, %v7453
        %v7478 = vadd.f32 %v6829, %v7454
        %v7479 = vadd.f32 %v6830, %v7455
        %v7480 = vadd.f32 %v6831, %v7456
        %v7481 = vadd.f32 %v6832, %v7453
        %v7482 = vadd.f32 %v6833, %v7454
        %v7483 = vadd.f32 %v6834, %v7455
        %v7484 = vadd.f32 %v6835, %v7456
        %v7485 = vadd.f32 %v6836, %v7453
        %v7486 = vadd.f32 %v6837, %v7454
        %v7487 = vadd.f32 %v6838, %v7455
        %v7488 = vadd.f32 %v6839, %v7456
        %v7489 = vadd.f32 %v6840, %v7453
        %v7490 = vadd.f32 %v6841, %v7454
        %v7491 = vadd.f32 %v6842, %v7455
        %v7492 = vadd.f32 %v6843, %v7456
        %v7493 = vadd.f32 %v6844, %v7453
        %v7494 = vadd.f32 %v6845, %v7454
        %v7495 = vadd.f32 %v6846, %v7455
        %v7496 = vadd.f32 %v6847, %v7456
        %v7497 = vadd.f32 %v6848, %v7453
        %v7498 = vadd.f32 %v6849, %v7454
        %v7499 = vadd.f32 %v6850, %v7455
        %v7500 = vadd.f32 %v6851, %v7456
        %v7501 = vadd.f32 %v6852, %v7453
        %v7502 = vadd.f32 %v6853, %v7454
        %v7503 = vadd.f32 %v6854, %v7455
        %v7504 = vadd.f32 %v6855, %v7456
        %v7505 = vadd.f32 %v6856, %v7453
        %v7506 = vadd.f32 %v6857, %v7454
        %v7507 = vadd.f32 %v6858, %v7455
        %v7508 = vadd.f32 %v6859, %v7456
        %v7509 = vadd.f32 %v6860, %v7453
        %v7510 = vadd.f32 %v6861, %v7454
        %v7511 = vadd.f32 %v6862, %v7455
        %v7512 = vadd.f32 %v6863, %v7456
        %v7513 = vadd.f32 %v6864, %v7453
        %v7514 = vadd.f32 %v6865, %v7454
        %v7515 = vadd.f32 %v6866, %v7455
        %v7516 = vadd.f32 %v6867, %v7456
        %v7517 = vadd.f32 %v6868, %v7453
        %v7518 = vadd.f32 %v6869, %v7454
        %v7519 = vadd.f32 %v6870, %v7455
        %v7520 = vadd.f32 %v6871, %v7456
        %v7521 = vadd.f32 %v6872, %v7453
        %v7522 = vadd.f32 %v6873, %v7454
        %v7523 = vadd.f32 %v6874, %v7455
        %v7524 = vadd.f32 %v6875, %v7456
        %v7525 = vadd.f32 %v6876, %v7453
        %v7526 = vadd.f32 %v6877, %v7454
        %v7527 = vadd.f32 %v6878, %v7455
        %v7528 = vadd.f32 %v6879, %v7456
        %v7529 = vadd.f32 %v6880, %v7453
        %v7530 = vadd.f32 %v6881, %v7454
        %v7531 = vadd.f32 %v6882, %v7455
        %v7532 = vadd.f32 %v6883, %v7456
        %v7533 = vadd.f32 %v6884, %v7453
        %v7534 = vadd.f32 %v6885, %v7454
        %v7535 = vadd.f32 %v6886, %v7455
        %v7536 = vadd.f32 %v6887, %v7456
        %v7537 = vadd.f32 %v6888, %v7453
        %v7538 = vadd.f32 %v6889, %v7454
        %v7539 = vadd.f32 %v6890, %v7455
        %v7540 = vadd.f32 %v6891, %v7456
        %v7541 = vadd.f32 %v6892, %v7453
        %v7542 = vadd.f32 %v6893, %v7454
        %v7543 = vadd.f32 %v6894, %v7455
        %v7544 = vadd.f32 %v6895, %v7456
        %v7545 = vadd.f32 %v6896, %v7453
        %v7546 = vadd.f32 %v6897, %v7454
        %v7547 = vadd.f32 %v6898, %v7455
        %v7548 = vadd.f32 %v6899, %v7456
        %v7549 = vadd.f32 %v6900, %v7453
        %v7550 = vadd.f32 %v6901, %v7454
        %v7551 = vadd.f32 %v6902, %v7455
        %v7552 = vadd.f32 %v6903, %v7456
        %v7553 = vadd.f32 %v6904, %v7453
        %v7554 = vadd.f32 %v6905, %v7454
        %v7555 = vadd.f32 %v6906, %v7455
        %v7556 = vadd.f32 %v6907, %v7456
        %v7557 = vadd.f32 %v6908, %v7453
        %v7558 = vadd.f32 %v6909, %v7454
        %v7559 = vadd.f32 %v6910, %v7455
        %v7560 = vadd.f32 %v6911, %v7456
        %v7561 = vadd.f32 %v6912, %v7453
        %v7562 = vadd.f32 %v6913, %v7454
        %v7563 = vadd.f32 %v6914, %v7455
        %v7564 = vadd.f32 %v6915, %v7456
        %v7565 = vadd.f32 %v6916, %v7453
        %v7566 = vadd.f32 %v6917, %v7454
        %v7567 = vadd.f32 %v6918, %v7455
        %v7568 = vadd.f32 %v6919, %v7456
        %v7569 = vadd.f32 %v6920, %v7453
        %v7570 = vadd.f32 %v6921, %v7454
        %v7571 = vadd.f32 %v6922, %v7455
        %v7572 = vadd.f32 %v6923, %v7456
        %v7573 = vadd.f32 %v6924, %v7453
        %v7574 = vadd.f32 %v6925, %v7454
        %v7575 = vadd.f32 %v6926, %v7455
        %v7576 = vadd.f32 %v6927, %v7456
        %v7577 = vadd.f32 %v6928, %v7453
        %v7578 = vadd.f32 %v6929, %v7454
        %v7579 = vadd.f32 %v6930, %v7455
        %v7580 = vadd.f32 %v6931, %v7456
        %v7581 = vadd.f32 %v6932, %v7453
        %v7582 = vadd.f32 %v6933, %v7454
        %v7583 = vadd.f32 %v6934, %v7455
        %v7584 = vadd.f32 %v6935, %v7456
        %v7585 = vadd.f32 %v6936, %v7453
        %v7586 = vadd.f32 %v6937, %v7454
        %v7587 = vadd.f32 %v6938, %v7455
        %v7588 = vadd.f32 %v6939, %v7456
        %v7589 = vadd.f32 %v6940, %v7453
        %v7590 = vadd.f32 %v6941, %v7454
        %v7591 = vadd.f32 %v6942, %v7455
        %v7592 = vadd.f32 %v6943, %v7456
        %v7593 = vadd.f32 %v6944, %v7453
        %v7594 = vadd.f32 %v6945, %v7454
        %v7595 = vadd.f32 %v6946, %v7455
        %v7596 = vadd.f32 %v6947, %v7456
        %v7597 = vadd.f32 %v6948, %v7453
        %v7598 = vadd.f32 %v6949, %v7454
        %v7599 = vadd.f32 %v6950, %v7455
        %v7600 = vadd.f32 %v6951, %v7456
        %v7601 = vadd.f32 %v6952, %v7453
        %v7602 = vadd.f32 %v6953, %v7454
        %v7603 = vadd.f32 %v6954, %v7455
        %v7604 = vadd.f32 %v6955, %v7456
        %v7605 = vadd.f32 %v6956, %v7453
        %v7606 = vadd.f32 %v6957, %v7454
        %v7607 = vadd.f32 %v6958, %v7455
        %v7608 = vadd.f32 %v6959, %v7456
        %v7609 = vadd.f32 %v6960, %v7453
        %v7610 = vadd.f32 %v6961, %v7454
        %v7611 = vadd.f32 %v6962, %v7455
        %v7612 = vadd.f32 %v6963, %v7456
        %v7613 = vadd.f32 %v6964, %v7453
        %v7614 = vadd.f32 %v6965, %v7454
        %v7615 = vadd.f32 %v6966, %v7455
        %v7616 = vadd.f32 %v6967, %v7456
        %v7617 = vadd.f32 %v6968, %v7453
        %v7618 = vadd.f32 %v6969, %v7454
        %v7619 = vadd.f32 %v6970, %v7455
        %v7620 = vadd.f32 %v6971, %v7456
        %v7621 = vadd.f32 %v6972, %v7453
        %v7622 = vadd.f32 %v6973, %v7454
        %v7623 = vadd.f32 %v6974, %v7455
        %v7624 = vadd.f32 %v6975, %v7456
        %v7625 = vadd.f32 %v6976, %v7453
        %v7626 = vadd.f32 %v6977, %v7454
        %v7627 = vadd.f32 %v6978, %v7455
        %v7628 = vadd.f32 %v6979, %v7456
        %v7629 = vadd.f32 %v6980, %v7453
        %v7630 = vadd.f32 %v6981, %v7454
        %v7631 = vadd.f32 %v6982, %v7455
        %v7632 = vadd.f32 %v6983, %v7456
        %v7633 = vadd.f32 %v6984, %v7453
        %v7634 = vadd.f32 %v6985, %v7454
        %v7635 = vadd.f32 %v6986, %v7455
        %v7636 = vadd.f32 %v6987, %v7456
        %v7637 = vadd.f32 %v6988, %v7453
        %v7638 = vadd.f32 %v6989, %v7454
        %v7639 = vadd.f32 %v6990, %v7455
        %v7640 = vadd.f32 %v6991, %v7456
        %v7641 = vadd.f32 %v6992, %v7453
        %v7642 = vadd.f32 %v6993, %v7454
        %v7643 = vadd.f32 %v6994, %v7455
        %v7644 = vadd.f32 %v6995, %v7456
        %v7645 = vadd.f32 %v6996, %v7453
        %v7646 = vadd.f32 %v6997, %v7454
        %v7647 = vadd.f32 %v6998, %v7455
        %v7648 = vadd.f32 %v6999, %v7456
        %v7649 = vadd.f32 %v7000, %v7453
        %v7650 = vadd.f32 %v7001, %v7454
        %v7651 = vadd.f32 %v7002, %v7455
        %v7652 = vadd.f32 %v7003, %v7456
        %v7653 = vadd.f32 %v7004, %v7453
        %v7654 = vadd.f32 %v7005, %v7454
        %v7655 = vadd.f32 %v7006, %v7455
        %v7656 = vadd.f32 %v7007, %v7456
        %v7657 = vadd.f32 %v7008, %v7453
        %v7658 = vadd.f32 %v7009, %v7454
        %v7659 = vadd.f32 %v7010, %v7455
        %v7660 = vadd.f32 %v7011, %v7456
        %v7661 = vadd.f32 %v7012, %v7453
        %v7662 = vadd.f32 %v7013, %v7454
        %v7663 = vadd.f32 %v7014, %v7455
        %v7664 = vadd.f32 %v7015, %v7456
        %v7665 = vadd.f32 %v7016, %v7453
        %v7666 = vadd.f32 %v7017, %v7454
        %v7667 = vadd.f32 %v7018, %v7455
        %v7668 = vadd.f32 %v7019, %v7456
        %v7669 = vadd.f32 %v7020, %v7453
        %v7670 = vadd.f32 %v7021, %v7454
        %v7671 = vadd.f32 %v7022, %v7455
        %v7672 = vadd.f32 %v7023, %v7456
        %v7673 = vadd.f32 %v7024, %v7453
        %v7674 = vadd.f32 %v7025, %v7454
        %v7675 = vadd.f32 %v7026, %v7455
        %v7676 = vadd.f32 %v7027, %v7456
        %v7677 = vadd.f32 %v7028, %v7453
        %v7678 = vadd.f32 %v7029, %v7454
        %v7679 = vadd.f32 %v7030, %v7455
        %v7680 = vadd.f32 %v7031, %v7456
        %v7681 = vadd.f32 %v7032, %v7453
        %v7682 = vadd.f32 %v7033, %v7454
        %v7683 = vadd.f32 %v7034, %v7455
        %v7684 = vadd.f32 %v7035, %v7456
        %v7685 = vadd.f32 %v7036, %v7453
        %v7686 = vadd.f32 %v7037, %v7454
        %v7687 = vadd.f32 %v7038, %v7455
        %v7688 = vadd.f32 %v7039, %v7456
        %v7689 = vadd.f32 %v7040, %v7453
        %v7690 = vadd.f32 %v7041, %v7454
        %v7691 = vadd.f32 %v7042, %v7455
        %v7692 = vadd.f32 %v7043, %v7456
        %v7693 = vadd.f32 %v7044, %v7453
        %v7694 = vadd.f32 %v7045, %v7454
        %v7695 = vadd.f32 %v7046, %v7455
        %v7696 = vadd.f32 %v7047, %v7456
        %v7697 = vadd.f32 %v7048, %v7453
        %v7698 = vadd.f32 %v7049, %v7454
        %v7699 = vadd.f32 %v7050, %v7455
        %v7700 = vadd.f32 %v7051, %v7456
        %v7701 = vadd.f32 %v7052, %v7453
        %v7702 = vadd.f32 %v7053, %v7454
        %v7703 = vadd.f32 %v7054, %v7455
        %v7704 = vadd.f32 %v7055, %v7456
        %v7705 = vadd.f32 %v7056, %v7453
        %v7706 = vadd.f32 %v7057, %v7454
        %v7707 = vadd.f32 %v7058, %v7455
        %v7708 = vadd.f32 %v7059, %v7456
        %v7709 = vadd.f32 %v7060, %v7453
        %v7710 = vadd.f32 %v7061, %v7454
        %v7711 = vadd.f32 %v7062, %v7455
        %v7712 = vadd.f32 %v7063, %v7456
        %v7713 = vadd.f32 %v7064, %v7453
        %v7714 = vadd.f32 %v7065, %v7454
        %v7715 = vadd.f32 %v7066, %v7455
        %v7716 = vadd.f32 %v7067, %v7456
        %v7717 = vadd.f32 %v7068, %v7453
        %v7718 = vadd.f32 %v7069, %v7454
        %v7719 = vadd.f32 %v7070, %v7455
        %v7720 = vadd.f32 %v7071, %v7456
        %v7721 = vadd.f32 %v7072, %v7453
        %v7722 = vadd.f32 %v7073, %v7454
        %v7723 = vadd.f32 %v7074, %v7455
        %v7724 = vadd.f32 %v7075, %v7456
        %v7725 = vadd.f32 %v7076, %v7453
        %v7726 = vadd.f32 %v7077, %v7454
        %v7727 = vadd.f32 %v7078, %v7455
        %v7728 = vadd.f32 %v7079, %v7456
        %v7729 = vadd.f32 %v7080, %v7453
        %v7730 = vadd.f32 %v7081, %v7454
        %v7731 = vadd.f32 %v7082, %v7455
        %v7732 = vadd.f32 %v7083, %v7456
        %v7733 = vadd.f32 %v7084, %v7453
        %v7734 = vadd.f32 %v7085, %v7454
        %v7735 = vadd.f32 %v7086, %v7455
        %v7736 = vadd.f32 %v7087, %v7456
        %v7737 = vadd.f32 %v7088, %v7453
        %v7738 = vadd.f32 %v7089, %v7454
        %v7739 = vadd.f32 %v7090, %v7455
        %v7740 = vadd.f32 %v7091, %v7456
        %v7741 = vadd.f32 %v7092, %v7453
        %v7742 = vadd.f32 %v7093, %v7454
        %v7743 = vadd.f32 %v7094, %v7455
        %v7744 = vadd.f32 %v7095, %v7456
        %v7745 = vadd.f32 %v7096, %v7453
        %v7746 = vadd.f32 %v7097, %v7454
        %v7747 = vadd.f32 %v7098, %v7455
        %v7748 = vadd.f32 %v7099, %v7456
        %v7749 = vadd.f32 %v7100, %v7453
        %v7750 = vadd.f32 %v7101, %v7454
        %v7751 = vadd.f32 %v7102, %v7455
        %v7752 = vadd.f32 %v7103, %v7456
        %v7753 = vadd.f32 %v7104, %v7453
        %v7754 = vadd.f32 %v7105, %v7454
        %v7755 = vadd.f32 %v7106, %v7455
        %v7756 = vadd.f32 %v7107, %v7456
        %v7757 = vadd.f32 %v7108, %v7453
        %v7758 = vadd.f32 %v7109, %v7454
        %v7759 = vadd.f32 %v7110, %v7455
        %v7760 = vadd.f32 %v7111, %v7456
        %v7761 = vadd.f32 %v7112, %v7453
        %v7762 = vadd.f32 %v7113, %v7454
        %v7763 = vadd.f32 %v7114, %v7455
        %v7764 = vadd.f32 %v7115, %v7456
        %v7765 = vadd.f32 %v7116, %v7453
        %v7766 = vadd.f32 %v7117, %v7454
        %v7767 = vadd.f32 %v7118, %v7455
        %v7768 = vadd.f32 %v7119, %v7456
        %v7769 = vadd.f32 %v7120, %v7453
        %v7770 = vadd.f32 %v7121, %v7454
        %v7771 = vadd.f32 %v7122, %v7455
        %v7772 = vadd.f32 %v7123, %v7456
        %v7773 = vadd.f32 %v7124, %v7453
        %v7774 = vadd.f32 %v7125, %v7454
        %v7775 = vadd.f32 %v7126, %v7455
        %v7776 = vadd.f32 %v7127, %v7456
        %v7777 = vadd.f32 %v7128, %v7453
        %v7778 = vadd.f32 %v7129, %v7454
        %v7779 = vadd.f32 %v7130, %v7455
        %v7780 = vadd.f32 %v7131, %v7456
        %v7781 = vadd.f32 %v7132, %v7453
        %v7782 = vadd.f32 %v7133, %v7454
        %v7783 = vadd.f32 %v7134, %v7455
        %v7784 = vadd.f32 %v7135, %v7456
        %v7785 = vadd.f32 %v7136, %v7453
        %v7786 = vadd.f32 %v7137, %v7454
        %v7787 = vadd.f32 %v7138, %v7455
        %v7788 = vadd.f32 %v7139, %v7456
        %v7789 = vadd.f32 %v7140, %v7453
        %v7790 = vadd.f32 %v7141, %v7454
        %v7791 = vadd.f32 %v7142, %v7455
        %v7792 = vadd.f32 %v7143, %v7456
        %v7793 = vadd.f32 %v7144, %v7453
        %v7794 = vadd.f32 %v7145, %v7454
        %v7795 = vadd.f32 %v7146, %v7455
        %v7796 = vadd.f32 %v7147, %v7456
        %v7797 = vadd.f32 %v7148, %v7453
        %v7798 = vadd.f32 %v7149, %v7454
        %v7799 = vadd.f32 %v7150, %v7455
        %v7800 = vadd.f32 %v7151, %v7456
        %v7801 = vadd.f32 %v7152, %v7453
        %v7802 = vadd.f32 %v7153, %v7454
        %v7803 = vadd.f32 %v7154, %v7455
        %v7804 = vadd.f32 %v7155, %v7456
        %v7805 = vadd.f32 %v7156, %v7453
        %v7806 = vadd.f32 %v7157, %v7454
        %v7807 = vadd.f32 %v7158, %v7455
        %v7808 = vadd.f32 %v7159, %v7456
        %v7809 = vadd.f32 %v7160, %v7453
        %v7810 = vadd.f32 %v7161, %v7454
        %v7811 = vadd.f32 %v7162, %v7455
        %v7812 = vadd.f32 %v7163, %v7456
        %v7813 = vadd.f32 %v7164, %v7453
        %v7814 = vadd.f32 %v7165, %v7454
        %v7815 = vadd.f32 %v7166, %v7455
        %v7816 = vadd.f32 %v7167, %v7456
        %v7817 = vadd.f32 %v7168, %v7453
        %v7818 = vadd.f32 %v7169, %v7454
        %v7819 = vadd.f32 %v7170, %v7455
        %v7820 = vadd.f32 %v7171, %v7456
        %v7821 = vadd.f32 %v7172, %v7453
        %v7822 = vadd.f32 %v7173, %v7454
        %v7823 = vadd.f32 %v7174, %v7455
        %v7824 = vadd.f32 %v7175, %v7456
        %v7825 = vadd.f32 %v7176, %v7453
        %v7826 = vadd.f32 %v7177, %v7454
        %v7827 = vadd.f32 %v7178, %v7455
        %v7828 = vadd.f32 %v7179, %v7456
        %v7829 = vadd.f32 %v7180, %v7453
        %v7830 = vadd.f32 %v7181, %v7454
        %v7831 = vadd.f32 %v7182, %v7455
        %v7832 = vadd.f32 %v7183, %v7456
        %v7833 = vadd.f32 %v7184, %v7453
        %v7834 = vadd.f32 %v7185, %v7454
        %v7835 = vadd.f32 %v7186, %v7455
        %v7836 = vadd.f32 %v7187, %v7456
        %v7837 = vadd.f32 %v7188, %v7453
        %v7838 = vadd.f32 %v7189, %v7454
        %v7839 = vadd.f32 %v7190, %v7455
        %v7840 = vadd.f32 %v7191, %v7456
        %v7841 = vadd.f32 %v7192, %v7453
        %v7842 = vadd.f32 %v7193, %v7454
        %v7843 = vadd.f32 %v7194, %v7455
        %v7844 = vadd.f32 %v7195, %v7456
        %v7845 = vadd.f32 %v7196, %v7453
        %v7846 = vadd.f32 %v7197, %v7454
        %v7847 = vadd.f32 %v7198, %v7455
        %v7848 = vadd.f32 %v7199, %v7456
        %v7849 = vadd.f32 %v7200, %v7453
        %v7850 = vadd.f32 %v7201, %v7454
        %v7851 = vadd.f32 %v7202, %v7455
        %v7852 = vadd.f32 %v7203, %v7456
        %v7853 = vadd.f32 %v7204, %v7453
        %v7854 = vadd.f32 %v7205, %v7454
        %v7855 = vadd.f32 %v7206, %v7455
        %v7856 = vadd.f32 %v7207, %v7456
        %v7857 = vadd.f32 %v7208, %v7453
        %v7858 = vadd.f32 %v7209, %v7454
        %v7859 = vadd.f32 %v7210, %v7455
        %v7860 = vadd.f32 %v7211, %v7456
        %v7861 = vadd.f32 %v7212, %v7453
        %v7862 = vadd.f32 %v7213, %v7454
        %v7863 = vadd.f32 %v7214, %v7455
        %v7864 = vadd.f32 %v7215, %v7456
        %v7865 = vadd.f32 %v7216, %v7453
        %v7866 = vadd.f32 %v7217, %v7454
        %v7867 = vadd.f32 %v7218, %v7455
        %v7868 = vadd.f32 %v7219, %v7456
        %v7869 = vadd.f32 %v7220, %v7453
        %v7870 = vadd.f32 %v7221, %v7454
        %v7871 = vadd.f32 %v7222, %v7455
        %v7872 = vadd.f32 %v7223, %v7456
        %v7873 = vadd.f32 %v7224, %v7453
        %v7874 = vadd.f32 %v7225, %v7454
        %v7875 = vadd.f32 %v7226, %v7455
        %v7876 = vadd.f32 %v7227, %v7456
        %v7877 = vadd.f32 %v7228, %v7453
        %v7878 = vadd.f32 %v7229, %v7454
        %v7879 = vadd.f32 %v7230, %v7455
        %v7880 = vadd.f32 %v7231, %v7456
        %v7881 = vadd.f32 %v7232, %v7453
        %v7882 = vadd.f32 %v7233, %v7454
        %v7883 = vadd.f32 %v7234, %v7455
        %v7884 = vadd.f32 %v7235, %v7456
        %v7885 = vadd.f32 %v7236, %v7453
        %v7886 = vadd.f32 %v7237, %v7454
        %v7887 = vadd.f32 %v7238, %v7455
        %v7888 = vadd.f32 %v7239, %v7456
        %v7889 = vadd.f32 %v7240, %v7453
        %v7890 = vadd.f32 %v7241, %v7454
        %v7891 = vadd.f32 %v7242, %v7455
        %v7892 = vadd.f32 %v7243, %v7456
        %v7893 = vadd.f32 %v7244, %v7453
        %v7894 = vadd.f32 %v7245, %v7454
        %v7895 = vadd.f32 %v7246, %v7455
        %v7896 = vadd.f32 %v7247, %v7456
        %v7897 = vadd.f32 %v7248, %v7453
        %v7898 = vadd.f32 %v7249, %v7454
        %v7899 = vadd.f32 %v7250, %v7455
        %v7900 = vadd.f32 %v7251, %v7456
        %v7901 = vadd.f32 %v7252, %v7453
        %v7902 = vadd.f32 %v7253, %v7454
        %v7903 = vadd.f32 %v7254, %v7455
        %v7904 = vadd.f32 %v7255, %v7456
        %v7905 = vadd.f32 %v7256, %v7453
        %v7906 = vadd.f32 %v7257, %v7454
        %v7907 = vadd.f32 %v7258, %v7455
        %v7908 = vadd.f32 %v7259, %v7456
        %v7909 = vadd.f32 %v7260, %v7453
        %v7910 = vadd.f32 %v7261, %v7454
        %v7911 = vadd.f32 %v7262, %v7455
        %v7912 = vadd.f32 %v7263, %v7456
        %v7913 = vadd.f32 %v7264, %v7453
        %v7914 = vadd.f32 %v7265, %v7454
        %v7915 = vadd.f32 %v7266, %v7455
        %v7916 = vadd.f32 %v7267, %v7456
        %v7917 = vadd.f32 %v7268, %v7453
        %v7918 = vadd.f32 %v7269, %v7454
        %v7919 = vadd.f32 %v7270, %v7455
        %v7920 = vadd.f32 %v7271, %v7456
        %v7921 = vadd.f32 %v7272, %v7453
        %v7922 = vadd.f32 %v7273, %v7454
        %v7923 = vadd.f32 %v7274, %v7455
        %v7924 = vadd.f32 %v7275, %v7456
        %v7925 = vadd.f32 %v7276, %v7453
        %v7926 = vadd.f32 %v7277, %v7454
        %v7927 = vadd.f32 %v7278, %v7455
        %v7928 = vadd.f32 %v7279, %v7456
        %v7929 = vadd.f32 %v7280, %v7453
        %v7930 = vadd.f32 %v7281, %v7454
        %v7931 = vadd.f32 %v7282, %v7455
        %v7932 = vadd.f32 %v7283, %v7456
        %v7933 = vadd.f32 %v7284, %v7453
        %v7934 = vadd.f32 %v7285, %v7454
        %v7935 = vadd.f32 %v7286, %v7455
        %v7936 = vadd.f32 %v7287, %v7456
        %v7937 = vadd.f32 %v7288, %v7453
        %v7938 = vadd.f32 %v7289, %v7454
        %v7939 = vadd.f32 %v7290, %v7455
        %v7940 = vadd.f32 %v7291, %v7456
        %v7941 = vadd.f32 %v7292, %v7453
        %v7942 = vadd.f32 %v7293, %v7454
        %v7943 = vadd.f32 %v7294, %v7455
        %v7944 = vadd.f32 %v7295, %v7456
        %v7945 = vadd.f32 %v7296, %v7453
        %v7946 = vadd.f32 %v7297, %v7454
        %v7947 = vadd.f32 %v7298, %v7455
        %v7948 = vadd.f32 %v7299, %v7456
        %v7949 = vadd.f32 %v7300, %v7453
        %v7950 = vadd.f32 %v7301, %v7454
        %v7951 = vadd.f32 %v7302, %v7455
        %v7952 = vadd.f32 %v7303, %v7456
        %v7953 = vadd.f32 %v7304, %v7453
        %v7954 = vadd.f32 %v7305, %v7454
        %v7955 = vadd.f32 %v7306, %v7455
        %v7956 = vadd.f32 %v7307, %v7456
        %v7957 = vadd.f32 %v7308, %v7453
        %v7958 = vadd.f32 %v7309, %v7454
        %v7959 = vadd.f32 %v7310, %v7455
        %v7960 = vadd.f32 %v7311, %v7456
        %v7961 = vadd.f32 %v7312, %v7453
        %v7962 = vadd.f32 %v7313, %v7454
        %v7963 = vadd.f32 %v7314, %v7455
        %v7964 = vadd.f32 %v7315, %v7456
        %v7965 = vadd.f32 %v7316, %v7453
        %v7966 = vadd.f32 %v7317, %v7454
        %v7967 = vadd.f32 %v7318, %v7455
        %v7968 = vadd.f32 %v7319, %v7456
        %v7969 = vadd.f32 %v7320, %v7453
        %v7970 = vadd.f32 %v7321, %v7454
        %v7971 = vadd.f32 %v7322, %v7455
        %v7972 = vadd.f32 %v7323, %v7456
        %v7973 = vadd.f32 %v7324, %v7453
        %v7974 = vadd.f32 %v7325, %v7454
        %v7975 = vadd.f32 %v7326, %v7455
        %v7976 = vadd.f32 %v7327, %v7456
        %v7977 = vadd.f32 %v7328, %v7453
        %v7978 = vadd.f32 %v7329, %v7454
        %v7979 = vadd.f32 %v7330, %v7455
        %v7980 = vadd.f32 %v7331, %v7456
        %v7981 = vadd.f32 %v7332, %v7453
        %v7982 = vadd.f32 %v7333, %v7454
        %v7983 = vadd.f32 %v7334, %v7455
        %v7984 = vadd.f32 %v7335, %v7456
        %v7985 = vadd.f32 %v7336, %v7453
        %v7986 = vadd.f32 %v7337, %v7454
        %v7987 = vadd.f32 %v7338, %v7455
        %v7988 = vadd.f32 %v7339, %v7456
        %v7989 = vadd.f32 %v7340, %v7453
        %v7990 = vadd.f32 %v7341, %v7454
        %v7991 = vadd.f32 %v7342, %v7455
        %v7992 = vadd.f32 %v7343, %v7456
        %v7993 = vadd.f32 %v7344, %v7453
        %v7994 = vadd.f32 %v7345, %v7454
        %v7995 = vadd.f32 %v7346, %v7455
        %v7996 = vadd.f32 %v7347, %v7456
        %v7997 = vadd.f32 %v7348, %v7453
        %v7998 = vadd.f32 %v7349, %v7454
        %v7999 = vadd.f32 %v7350, %v7455
        %v8000 = vadd.f32 %v7351, %v7456
        %v8001 = vadd.f32 %v7352, %v7453
        %v8002 = vadd.f32 %v7353, %v7454
        %v8003 = vadd.f32 %v7354, %v7455
        %v8004 = vadd.f32 %v7355, %v7456
        %v8005 = vadd.f32 %v7356, %v7453
        %v8006 = vadd.f32 %v7357, %v7454
        %v8007 = vadd.f32 %v7358, %v7455
        %v8008 = vadd.f32 %v7359, %v7456
        %v8009 = vadd.f32 %v7360, %v7453
        %v8010 = vadd.f32 %v7361, %v7454
        %v8011 = vadd.f32 %v7362, %v7455
        %v8012 = vadd.f32 %v7363, %v7456
        %v8013 = vadd.f32 %v7364, %v7453
        %v8014 = vadd.f32 %v7365, %v7454
        %v8015 = vadd.f32 %v7366, %v7455
        %v8016 = vadd.f32 %v7367, %v7456
        %v8017 = vadd.f32 %v7368, %v7453
        %v8018 = vadd.f32 %v7369, %v7454
        %v8019 = vadd.f32 %v7370, %v7455
        %v8020 = vadd.f32 %v7371, %v7456
        %v8021 = vadd.f32 %v7372, %v7453
        %v8022 = vadd.f32 %v7373, %v7454
        %v8023 = vadd.f32 %v7374, %v7455
        %v8024 = vadd.f32 %v7375, %v7456
        %v8025 = vadd.f32 %v7376, %v7453
        %v8026 = vadd.f32 %v7377, %v7454
        %v8027 = vadd.f32 %v7378, %v7455
        %v8028 = vadd.f32 %v7379, %v7456
        %v8029 = vadd.f32 %v7380, %v7453
        %v8030 = vadd.f32 %v7381, %v7454
        %v8031 = vadd.f32 %v7382, %v7455
        %v8032 = vadd.f32 %v7383, %v7456
        %v8033 = vadd.f32 %v7384, %v7453
        %v8034 = vadd.f32 %v7385, %v7454
        %v8035 = vadd.f32 %v7386, %v7455
        %v8036 = vadd.f32 %v7387, %v7456
        %v8037 = vadd.f32 %v7388, %v7453
        %v8038 = vadd.f32 %v7389, %v7454
        %v8039 = vadd.f32 %v7390, %v7455
        %v8040 = vadd.f32 %v7391, %v7456
        %v8041 = vadd.f32 %v7392, %v7453
        %v8042 = vadd.f32 %v7393, %v7454
        %v8043 = vadd.f32 %v7394, %v7455
        %v8044 = vadd.f32 %v7395, %v7456
        %v8045 = vadd.f32 %v7396, %v7453
        %v8046 = vadd.f32 %v7397, %v7454
        %v8047 = vadd.f32 %v7398, %v7455
        %v8048 = vadd.f32 %v7399, %v7456
        %v8049 = vadd.f32 %v7400, %v7453
        %v8050 = vadd.f32 %v7401, %v7454
        %v8051 = vadd.f32 %v7402, %v7455
        %v8052 = vadd.f32 %v7403, %v7456
        %v8053 = vadd.f32 %v7404, %v7453
        %v8054 = vadd.f32 %v7405, %v7454
        %v8055 = vadd.f32 %v7406, %v7455
        %v8056 = vadd.f32 %v7407, %v7456
        %v8057 = vadd.f32 %v7408, %v7453
        %v8058 = vadd.f32 %v7409, %v7454
        %v8059 = vadd.f32 %v7410, %v7455
        %v8060 = vadd.f32 %v7411, %v7456
        %v8061 = vadd.f32 %v7412, %v7453
        %v8062 = vadd.f32 %v7413, %v7454
        %v8063 = vadd.f32 %v7414, %v7455
        %v8064 = vadd.f32 %v7415, %v7456
        %v8065 = vadd.f32 %v7416, %v7453
        %v8066 = vadd.f32 %v7417, %v7454
        %v8067 = vadd.f32 %v7418, %v7455
        %v8068 = vadd.f32 %v7419, %v7456
        %v8069 = vadd.f32 %v7420, %v7453
        %v8070 = vadd.f32 %v7421, %v7454
        %v8071 = vadd.f32 %v7422, %v7455
        %v8072 = vadd.f32 %v7423, %v7456
        %v8073 = vadd.f32 %v7424, %v7453
        %v8074 = vadd.f32 %v7425, %v7454
        %v8075 = vadd.f32 %v7426, %v7455
        %v8076 = vadd.f32 %v7427, %v7456
        %v8077 = vadd.f32 %v7428, %v7453
        %v8078 = vadd.f32 %v7429, %v7454
        %v8079 = vadd.f32 %v7430, %v7455
        %v8080 = vadd.f32 %v7431, %v7456
        %v8081 = vadd.f32 %v7432, %v7453
        %v8082 = vadd.f32 %v7433, %v7454
        %v8083 = vadd.f32 %v7434, %v7455
        %v8084 = vadd.f32 %v7435, %v7456
        %v8085 = vadd.f32 %v7436, %v7453
        %v8086 = vadd.f32 %v7437, %v7454
        %v8087 = vadd.f32 %v7438, %v7455
        %v8088 = vadd.f32 %v7439, %v7456
        %v8089 = vadd.f32 %v7440, %v7453
        %v8090 = vadd.f32 %v7441, %v7454
        %v8091 = vadd.f32 %v7442, %v7455
        %v8092 = vadd.f32 %v7443, %v7456
        %v8093 = vadd.f32 %v7444, %v7453
        %v8094 = vadd.f32 %v7445, %v7454
        %v8095 = vadd.f32 %v7446, %v7455
        %v8096 = vadd.f32 %v7447, %v7456
        %v8097 = vadd.f32 %v7448, %v7453
        %v8098 = vadd.f32 %v7449, %v7454
        %v8099 = vadd.f32 %v7450, %v7455
        %v8100 = vadd.f32 %v7451, %v7456
        %v8101 = vmax.f32 %v7461, 0.0
        %v8102 = vmax.f32 %v7462, 0.0
        %v8103 = vmax.f32 %v7463, 0.0
        %v8104 = vmax.f32 %v7464, 0.0
        %v8105 = vmax.f32 %v7465, 0.0
        %v8106 = vmax.f32 %v7466, 0.0
        %v8107 = vmax.f32 %v7467, 0.0
        %v8108 = vmax.f32 %v7468, 0.0
        %v8109 = vmax.f32 %v7469, 0.0
        %v8110 = vmax.f32 %v7470, 0.0
        %v8111 = vmax.f32 %v7471, 0.0
        %v8112 = vmax.f32 %v7472, 0.0
        %v8113 = vmax.f32 %v7473, 0.0
        %v8114 = vmax.f32 %v7474, 0.0
        %v8115 = vmax.f32 %v7475, 0.0
        %v8116 = vmax.f32 %v7476, 0.0
        %v8117 = vmax.f32 %v7477, 0.0
        %v8118 = vmax.f32 %v7478, 0.0
        %v8119 = vmax.f32 %v7479, 0.0
        %v8120 = vmax.f32 %v7480, 0.0
        %v8121 = vmax.f32 %v7481, 0.0
        %v8122 = vmax.f32 %v7482, 0.0
        %v8123 = vmax.f32 %v7483, 0.0
        %v8124 = vmax.f32 %v7484, 0.0
        %v8125 = vmax.f32 %v7485, 0.0
        %v8126 = vmax.f32 %v7486, 0.0
        %v8127 = vmax.f32 %v7487, 0.0
        %v8128 = vmax.f32 %v7488, 0.0
        %v8129 = vmax.f32 %v7489, 0.0
        %v8130 = vmax.f32 %v7490, 0.0
        %v8131 = vmax.f32 %v7491, 0.0
        %v8132 = vmax.f32 %v7492, 0.0
        %v8133 = vmax.f32 %v7493, 0.0
        %v8134 = vmax.f32 %v7494, 0.0
        %v8135 = vmax.f32 %v7495, 0.0
        %v8136 = vmax.f32 %v7496, 0.0
        %v8137 = vmax.f32 %v7497, 0.0
        %v8138 = vmax.f32 %v7498, 0.0
        %v8139 = vmax.f32 %v7499, 0.0
        %v8140 = vmax.f32 %v7500, 0.0
        %v8141 = vmax.f32 %v7501, 0.0
        %v8142 = vmax.f32 %v7502, 0.0
        %v8143 = vmax.f32 %v7503, 0.0
        %v8144 = vmax.f32 %v7504, 0.0
        %v8145 = vmax.f32 %v7505, 0.0
        %v8146 = vmax.f32 %v7506, 0.0
        %v8147 = vmax.f32 %v7507, 0.0
        %v8148 = vmax.f32 %v7508, 0.0
        %v8149 = vmax.f32 %v7509, 0.0
        %v8150 = vmax.f32 %v7510, 0.0
        %v8151 = vmax.f32 %v7511, 0.0
        %v8152 = vmax.f32 %v7512, 0.0
        %v8153 = vmax.f32 %v7513, 0.0
        %v8154 = vmax.f32 %v7514, 0.0
        %v8155 = vmax.f32 %v7515, 0.0
        %v8156 = vmax.f32 %v7516, 0.0
        %v8157 = vmax.f32 %v7517, 0.0
        %v8158 = vmax.f32 %v7518, 0.0
        %v8159 = vmax.f32 %v7519, 0.0
        %v8160 = vmax.f32 %v7520, 0.0
        %v8161 = vmax.f32 %v7521, 0.0
        %v8162 = vmax.f32 %v7522, 0.0
        %v8163 = vmax.f32 %v7523, 0.0
        %v8164 = vmax.f32 %v7524, 0.0
        %v8165 = vmax.f32 %v7525, 0.0
        %v8166 = vmax.f32 %v7526, 0.0
        %v8167 = vmax.f32 %v7527, 0.0
        %v8168 = vmax.f32 %v7528, 0.0
        %v8169 = vmax.f32 %v7529, 0.0
        %v8170 = vmax.f32 %v7530, 0.0
        %v8171 = vmax.f32 %v7531, 0.0
        %v8172 = vmax.f32 %v7532, 0.0
        %v8173 = vmax.f32 %v7533, 0.0
        %v8174 = vmax.f32 %v7534, 0.0
        %v8175 = vmax.f32 %v7535, 0.0
        %v8176 = vmax.f32 %v7536, 0.0
        %v8177 = vmax.f32 %v7537, 0.0
        %v8178 = vmax.f32 %v7538, 0.0
        %v8179 = vmax.f32 %v7539, 0.0
        %v8180 = vmax.f32 %v7540, 0.0
        %v8181 = vmax.f32 %v7541, 0.0
        %v8182 = vmax.f32 %v7542, 0.0
        %v8183 = vmax.f32 %v7543, 0.0
        %v8184 = vmax.f32 %v7544, 0.0
        %v8185 = vmax.f32 %v7545, 0.0
        %v8186 = vmax.f32 %v7546, 0.0
        %v8187 = vmax.f32 %v7547, 0.0
        %v8188 = vmax.f32 %v7548, 0.0
        %v8189 = vmax.f32 %v7549, 0.0
        %v8190 = vmax.f32 %v7550, 0.0
        %v8191 = vmax.f32 %v7551, 0.0
        %v8192 = vmax.f32 %v7552, 0.0
        %v8193 = vmax.f32 %v7553, 0.0
        %v8194 = vmax.f32 %v7554, 0.0
        %v8195 = vmax.f32 %v7555, 0.0
        %v8196 = vmax.f32 %v7556, 0.0
        %v8197 = vmax.f32 %v7557, 0.0
        %v8198 = vmax.f32 %v7558, 0.0
        %v8199 = vmax.f32 %v7559, 0.0
        %v8200 = vmax.f32 %v7560, 0.0
        %v8201 = vmax.f32 %v7561, 0.0
        %v8202 = vmax.f32 %v7562, 0.0
        %v8203 = vmax.f32 %v7563, 0.0
        %v8204 = vmax.f32 %v7564, 0.0
        %v8205 = vmax.f32 %v7565, 0.0
        %v8206 = vmax.f32 %v7566, 0.0
        %v8207 = vmax.f32 %v7567, 0.0
        %v8208 = vmax.f32 %v7568, 0.0
        %v8209 = vmax.f32 %v7569, 0.0
        %v8210 = vmax.f32 %v7570, 0.0
        %v8211 = vmax.f32 %v7571, 0.0
        %v8212 = vmax.f32 %v7572, 0.0
        %v8213 = vmax.f32 %v7573, 0.0
        %v8214 = vmax.f32 %v7574, 0.0
        %v8215 = vmax.f32 %v7575, 0.0
        %v8216 = vmax.f32 %v7576, 0.0
        %v8217 = vmax.f32 %v7577, 0.0
        %v8218 = vmax.f32 %v7578, 0.0
        %v8219 = vmax.f32 %v7579, 0.0
        %v8220 = vmax.f32 %v7580, 0.0
        %v8221 = vmax.f32 %v7581, 0.0
        %v8222 = vmax.f32 %v7582, 0.0
        %v8223 = vmax.f32 %v7583, 0.0
        %v8224 = vmax.f32 %v7584, 0.0
        %v8225 = vmax.f32 %v7585, 0.0
        %v8226 = vmax.f32 %v7586, 0.0
        %v8227 = vmax.f32 %v7587, 0.0
        %v8228 = vmax.f32 %v7588, 0.0
        %v8229 = vmax.f32 %v7589, 0.0
        %v8230 = vmax.f32 %v7590, 0.0
        %v8231 = vmax.f32 %v7591, 0.0
        %v8232 = vmax.f32 %v7592, 0.0
        %v8233 = vmax.f32 %v7593, 0.0
        %v8234 = vmax.f32 %v7594, 0.0
        %v8235 = vmax.f32 %v7595, 0.0
        %v8236 = vmax.f32 %v7596, 0.0
        %v8237 = vmax.f32 %v7597, 0.0
        %v8238 = vmax.f32 %v7598, 0.0
        %v8239 = vmax.f32 %v7599, 0.0
        %v8240 = vmax.f32 %v7600, 0.0
        %v8241 = vmax.f32 %v7601, 0.0
        %v8242 = vmax.f32 %v7602, 0.0
        %v8243 = vmax.f32 %v7603, 0.0
        %v8244 = vmax.f32 %v7604, 0.0
        %v8245 = vmax.f32 %v7605, 0.0
        %v8246 = vmax.f32 %v7606, 0.0
        %v8247 = vmax.f32 %v7607, 0.0
        %v8248 = vmax.f32 %v7608, 0.0
        %v8249 = vmax.f32 %v7609, 0.0
        %v8250 = vmax.f32 %v7610, 0.0
        %v8251 = vmax.f32 %v7611, 0.0
        %v8252 = vmax.f32 %v7612, 0.0
        %v8253 = vmax.f32 %v7613, 0.0
        %v8254 = vmax.f32 %v7614, 0.0
        %v8255 = vmax.f32 %v7615, 0.0
        %v8256 = vmax.f32 %v7616, 0.0
        %v8257 = vmax.f32 %v7617, 0.0
        %v8258 = vmax.f32 %v7618, 0.0
        %v8259 = vmax.f32 %v7619, 0.0
        %v8260 = vmax.f32 %v7620, 0.0
        %v8261 = vmax.f32 %v7621, 0.0
        %v8262 = vmax.f32 %v7622, 0.0
        %v8263 = vmax.f32 %v7623, 0.0
        %v8264 = vmax.f32 %v7624, 0.0
        %v8265 = vmax.f32 %v7625, 0.0
        %v8266 = vmax.f32 %v7626, 0.0
        %v8267 = vmax.f32 %v7627, 0.0
        %v8268 = vmax.f32 %v7628, 0.0
        %v8269 = vmax.f32 %v7629, 0.0
        %v8270 = vmax.f32 %v7630, 0.0
        %v8271 = vmax.f32 %v7631, 0.0
        %v8272 = vmax.f32 %v7632, 0.0
        %v8273 = vmax.f32 %v7633, 0.0
        %v8274 = vmax.f32 %v7634, 0.0
        %v8275 = vmax.f32 %v7635, 0.0
        %v8276 = vmax.f32 %v7636, 0.0
        %v8277 = vmax.f32 %v7637, 0.0
        %v8278 = vmax.f32 %v7638, 0.0
        %v8279 = vmax.f32 %v7639, 0.0
        %v8280 = vmax.f32 %v7640, 0.0
        %v8281 = vmax.f32 %v7641, 0.0
        %v8282 = vmax.f32 %v7642, 0.0
        %v8283 = vmax.f32 %v7643, 0.0
        %v8284 = vmax.f32 %v7644, 0.0
        %v8285 = vmax.f32 %v7645, 0.0
        %v8286 = vmax.f32 %v7646, 0.0
        %v8287 = vmax.f32 %v7647, 0.0
        %v8288 = vmax.f32 %v7648, 0.0
        %v8289 = vmax.f32 %v7649, 0.0
        %v8290 = vmax.f32 %v7650, 0.0
        %v8291 = vmax.f32 %v7651, 0.0
        %v8292 = vmax.f32 %v7652, 0.0
        %v8293 = vmax.f32 %v7653, 0.0
        %v8294 = vmax.f32 %v7654, 0.0
        %v8295 = vmax.f32 %v7655, 0.0
        %v8296 = vmax.f32 %v7656, 0.0
        %v8297 = vmax.f32 %v7657, 0.0
        %v8298 = vmax.f32 %v7658, 0.0
        %v8299 = vmax.f32 %v7659, 0.0
        %v8300 = vmax.f32 %v7660, 0.0
        %v8301 = vmax.f32 %v7661, 0.0
        %v8302 = vmax.f32 %v7662, 0.0
        %v8303 = vmax.f32 %v7663, 0.0
        %v8304 = vmax.f32 %v7664, 0.0
        %v8305 = vmax.f32 %v7665, 0.0
        %v8306 = vmax.f32 %v7666, 0.0
        %v8307 = vmax.f32 %v7667, 0.0
        %v8308 = vmax.f32 %v7668, 0.0
        %v8309 = vmax.f32 %v7669, 0.0
        %v8310 = vmax.f32 %v7670, 0.0
        %v8311 = vmax.f32 %v7671, 0.0
        %v8312 = vmax.f32 %v7672, 0.0
        %v8313 = vmax.f32 %v7673, 0.0
        %v8314 = vmax.f32 %v7674, 0.0
        %v8315 = vmax.f32 %v7675, 0.0
        %v8316 = vmax.f32 %v7676, 0.0
        %v8317 = vmax.f32 %v7677, 0.0
        %v8318 = vmax.f32 %v7678, 0.0
        %v8319 = vmax.f32 %v7679, 0.0
        %v8320 = vmax.f32 %v7680, 0.0
        %v8321 = vmax.f32 %v7681, 0.0
        %v8322 = vmax.f32 %v7682, 0.0
        %v8323 = vmax.f32 %v7683, 0.0
        %v8324 = vmax.f32 %v7684, 0.0
        %v8325 = vmax.f32 %v7685, 0.0
        %v8326 = vmax.f32 %v7686, 0.0
        %v8327 = vmax.f32 %v7687, 0.0
        %v8328 = vmax.f32 %v7688, 0.0
        %v8329 = vmax.f32 %v7689, 0.0
        %v8330 = vmax.f32 %v7690, 0.0
        %v8331 = vmax.f32 %v7691, 0.0
        %v8332 = vmax.f32 %v7692, 0.0
        %v8333 = vmax.f32 %v7693, 0.0
        %v8334 = vmax.f32 %v7694, 0.0
        %v8335 = vmax.f32 %v7695, 0.0
        %v8336 = vmax.f32 %v7696, 0.0
        %v8337 = vmax.f32 %v7697, 0.0
        %v8338 = vmax.f32 %v7698, 0.0
        %v8339 = vmax.f32 %v7699, 0.0
        %v8340 = vmax.f32 %v7700, 0.0
        %v8341 = vmax.f32 %v7701, 0.0
        %v8342 = vmax.f32 %v7702, 0.0
        %v8343 = vmax.f32 %v7703, 0.0
        %v8344 = vmax.f32 %v7704, 0.0
        %v8345 = vmax.f32 %v7705, 0.0
        %v8346 = vmax.f32 %v7706, 0.0
        %v8347 = vmax.f32 %v7707, 0.0
        %v8348 = vmax.f32 %v7708, 0.0
        %v8349 = vmax.f32 %v7709, 0.0
        %v8350 = vmax.f32 %v7710, 0.0
        %v8351 = vmax.f32 %v7711, 0.0
        %v8352 = vmax.f32 %v7712, 0.0
        %v8353 = vmax.f32 %v7713, 0.0
        %v8354 = vmax.f32 %v7714, 0.0
        %v8355 = vmax.f32 %v7715, 0.0
        %v8356 = vmax.f32 %v7716, 0.0
        %v8357 = vmax.f32 %v7717, 0.0
        %v8358 = vmax.f32 %v7718, 0.0
        %v8359 = vmax.f32 %v7719, 0.0
        %v8360 = vmax.f32 %v7720, 0.0
        %v8361 = vmax.f32 %v7721, 0.0
        %v8362 = vmax.f32 %v7722, 0.0
        %v8363 = vmax.f32 %v7723, 0.0
        %v8364 = vmax.f32 %v7724, 0.0
        %v8365 = vmax.f32 %v7725, 0.0
        %v8366 = vmax.f32 %v7726, 0.0
        %v8367 = vmax.f32 %v7727, 0.0
        %v8368 = vmax.f32 %v7728, 0.0
        %v8369 = vmax.f32 %v7729, 0.0
        %v8370 = vmax.f32 %v7730, 0.0
        %v8371 = vmax.f32 %v7731, 0.0
        %v8372 = vmax.f32 %v7732, 0.0
        %v8373 = vmax.f32 %v7733, 0.0
        %v8374 = vmax.f32 %v7734, 0.0
        %v8375 = vmax.f32 %v7735, 0.0
        %v8376 = vmax.f32 %v7736, 0.0
        %v8377 = vmax.f32 %v7737, 0.0
        %v8378 = vmax.f32 %v7738, 0.0
        %v8379 = vmax.f32 %v7739, 0.0
        %v8380 = vmax.f32 %v7740, 0.0
        %v8381 = vmax.f32 %v7741, 0.0
        %v8382 = vmax.f32 %v7742, 0.0
        %v8383 = vmax.f32 %v7743, 0.0
        %v8384 = vmax.f32 %v7744, 0.0
        %v8385 = vmax.f32 %v7745, 0.0
        %v8386 = vmax.f32 %v7746, 0.0
        %v8387 = vmax.f32 %v7747, 0.0
        %v8388 = vmax.f32 %v7748, 0.0
        %v8389 = vmax.f32 %v7749, 0.0
        %v8390 = vmax.f32 %v7750, 0.0
        %v8391 = vmax.f32 %v7751, 0.0
        %v8392 = vmax.f32 %v7752, 0.0
        %v8393 = vmax.f32 %v7753, 0.0
        %v8394 = vmax.f32 %v7754, 0.0
        %v8395 = vmax.f32 %v7755, 0.0
        %v8396 = vmax.f32 %v7756, 0.0
        %v8397 = vmax.f32 %v7757, 0.0
        %v8398 = vmax.f32 %v7758, 0.0
        %v8399 = vmax.f32 %v7759, 0.0
        %v8400 = vmax.f32 %v7760, 0.0
        %v8401 = vmax.f32 %v7761, 0.0
        %v8402 = vmax.f32 %v7762, 0.0
        %v8403 = vmax.f32 %v7763, 0.0
        %v8404 = vmax.f32 %v7764, 0.0
        %v8405 = vmax.f32 %v7765, 0.0
        %v8406 = vmax.f32 %v7766, 0.0
        %v8407 = vmax.f32 %v7767, 0.0
        %v8408 = vmax.f32 %v7768, 0.0
        %v8409 = vmax.f32 %v7769, 0.0
        %v8410 = vmax.f32 %v7770, 0.0
        %v8411 = vmax.f32 %v7771, 0.0
        %v8412 = vmax.f32 %v7772, 0.0
        %v8413 = vmax.f32 %v7773, 0.0
        %v8414 = vmax.f32 %v7774, 0.0
        %v8415 = vmax.f32 %v7775, 0.0
        %v8416 = vmax.f32 %v7776, 0.0
        %v8417 = vmax.f32 %v7777, 0.0
        %v8418 = vmax.f32 %v7778, 0.0
        %v8419 = vmax.f32 %v7779, 0.0
        %v8420 = vmax.f32 %v7780, 0.0
        %v8421 = vmax.f32 %v7781, 0.0
        %v8422 = vmax.f32 %v7782, 0.0
        %v8423 = vmax.f32 %v7783, 0.0
        %v8424 = vmax.f32 %v7784, 0.0
        %v8425 = vmax.f32 %v7785, 0.0
        %v8426 = vmax.f32 %v7786, 0.0
        %v8427 = vmax.f32 %v7787, 0.0
        %v8428 = vmax.f32 %v7788, 0.0
        %v8429 = vmax.f32 %v7789, 0.0
        %v8430 = vmax.f32 %v7790, 0.0
        %v8431 = vmax.f32 %v7791, 0.0
        %v8432 = vmax.f32 %v7792, 0.0
        %v8433 = vmax.f32 %v7793, 0.0
        %v8434 = vmax.f32 %v7794, 0.0
        %v8435 = vmax.f32 %v7795, 0.0
        %v8436 = vmax.f32 %v7796, 0.0
        %v8437 = vmax.f32 %v7797, 0.0
        %v8438 = vmax.f32 %v7798, 0.0
        %v8439 = vmax.f32 %v7799, 0.0
        %v8440 = vmax.f32 %v7800, 0.0
        %v8441 = vmax.f32 %v7801, 0.0
        %v8442 = vmax.f32 %v7802, 0.0
        %v8443 = vmax.f32 %v7803, 0.0
        %v8444 = vmax.f32 %v7804, 0.0
        %v8445 = vmax.f32 %v7805, 0.0
        %v8446 = vmax.f32 %v7806, 0.0
        %v8447 = vmax.f32 %v7807, 0.0
        %v8448 = vmax.f32 %v7808, 0.0
        %v8449 = vmax.f32 %v7809, 0.0
        %v8450 = vmax.f32 %v7810, 0.0
        %v8451 = vmax.f32 %v7811, 0.0
        %v8452 = vmax.f32 %v7812, 0.0
        %v8453 = vmax.f32 %v7813, 0.0
        %v8454 = vmax.f32 %v7814, 0.0
        %v8455 = vmax.f32 %v7815, 0.0
        %v8456 = vmax.f32 %v7816, 0.0
        %v8457 = vmax.f32 %v7817, 0.0
        %v8458 = vmax.f32 %v7818, 0.0
        %v8459 = vmax.f32 %v7819, 0.0
        %v8460 = vmax.f32 %v7820, 0.0
        %v8461 = vmax.f32 %v7821, 0.0
        %v8462 = vmax.f32 %v7822, 0.0
        %v8463 = vmax.f32 %v7823, 0.0
        %v8464 = vmax.f32 %v7824, 0.0
        %v8465 = vmax.f32 %v7825, 0.0
        %v8466 = vmax.f32 %v7826, 0.0
        %v8467 = vmax.f32 %v7827, 0.0
        %v8468 = vmax.f32 %v7828, 0.0
        %v8469 = vmax.f32 %v7829, 0.0
        %v8470 = vmax.f32 %v7830, 0.0
        %v8471 = vmax.f32 %v7831, 0.0
        %v8472 = vmax.f32 %v7832, 0.0
        %v8473 = vmax.f32 %v7833, 0.0
        %v8474 = vmax.f32 %v7834, 0.0
        %v8475 = vmax.f32 %v7835, 0.0
        %v8476 = vmax.f32 %v7836, 0.0
        %v8477 = vmax.f32 %v7837, 0.0
        %v8478 = vmax.f32 %v7838, 0.0
        %v8479 = vmax.f32 %v7839, 0.0
        %v8480 = vmax.f32 %v7840, 0.0
        %v8481 = vmax.f32 %v7841, 0.0
        %v8482 = vmax.f32 %v7842, 0.0
        %v8483 = vmax.f32 %v7843, 0.0
        %v8484 = vmax.f32 %v7844, 0.0
        %v8485 = vmax.f32 %v7845, 0.0
        %v8486 = vmax.f32 %v7846, 0.0
        %v8487 = vmax.f32 %v7847, 0.0
        %v8488 = vmax.f32 %v7848, 0.0
        %v8489 = vmax.f32 %v7849, 0.0
        %v8490 = vmax.f32 %v7850, 0.0
        %v8491 = vmax.f32 %v7851, 0.0
        %v8492 = vmax.f32 %v7852, 0.0
        %v8493 = vmax.f32 %v7853, 0.0
        %v8494 = vmax.f32 %v7854, 0.0
        %v8495 = vmax.f32 %v7855, 0.0
        %v8496 = vmax.f32 %v7856, 0.0
        %v8497 = vmax.f32 %v7857, 0.0
        %v8498 = vmax.f32 %v7858, 0.0
        %v8499 = vmax.f32 %v7859, 0.0
        %v8500 = vmax.f32 %v7860, 0.0
        %v8501 = vmax.f32 %v7861, 0.0
        %v8502 = vmax.f32 %v7862, 0.0
        %v8503 = vmax.f32 %v7863, 0.0
        %v8504 = vmax.f32 %v7864, 0.0
        %v8505 = vmax.f32 %v7865, 0.0
        %v8506 = vmax.f32 %v7866, 0.0
        %v8507 = vmax.f32 %v7867, 0.0
        %v8508 = vmax.f32 %v7868, 0.0
        %v8509 = vmax.f32 %v7869, 0.0
        %v8510 = vmax.f32 %v7870, 0.0
        %v8511 = vmax.f32 %v7871, 0.0
        %v8512 = vmax.f32 %v7872, 0.0
        %v8513 = vmax.f32 %v7873, 0.0
        %v8514 = vmax.f32 %v7874, 0.0
        %v8515 = vmax.f32 %v7875, 0.0
        %v8516 = vmax.f32 %v7876, 0.0
        %v8517 = vmax.f32 %v7877, 0.0
        %v8518 = vmax.f32 %v7878, 0.0
        %v8519 = vmax.f32 %v7879, 0.0
        %v8520 = vmax.f32 %v7880, 0.0
        %v8521 = vmax.f32 %v7881, 0.0
        %v8522 = vmax.f32 %v7882, 0.0
        %v8523 = vmax.f32 %v7883, 0.0
        %v8524 = vmax.f32 %v7884, 0.0
        %v8525 = vmax.f32 %v7885, 0.0
        %v8526 = vmax.f32 %v7886, 0.0
        %v8527 = vmax.f32 %v7887, 0.0
        %v8528 = vmax.f32 %v7888, 0.0
        %v8529 = vmax.f32 %v7889, 0.0
        %v8530 = vmax.f32 %v7890, 0.0
        %v8531 = vmax.f32 %v7891, 0.0
        %v8532 = vmax.f32 %v7892, 0.0
        %v8533 = vmax.f32 %v7893, 0.0
        %v8534 = vmax.f32 %v7894, 0.0
        %v8535 = vmax.f32 %v7895, 0.0
        %v8536 = vmax.f32 %v7896, 0.0
        %v8537 = vmax.f32 %v7897, 0.0
        %v8538 = vmax.f32 %v7898, 0.0
        %v8539 = vmax.f32 %v7899, 0.0
        %v8540 = vmax.f32 %v7900, 0.0
        %v8541 = vmax.f32 %v7901, 0.0
        %v8542 = vmax.f32 %v7902, 0.0
        %v8543 = vmax.f32 %v7903, 0.0
        %v8544 = vmax.f32 %v7904, 0.0
        %v8545 = vmax.f32 %v7905, 0.0
        %v8546 = vmax.f32 %v7906, 0.0
        %v8547 = vmax.f32 %v7907, 0.0
        %v8548 = vmax.f32 %v7908, 0.0
        %v8549 = vmax.f32 %v7909, 0.0
        %v8550 = vmax.f32 %v7910, 0.0
        %v8551 = vmax.f32 %v7911, 0.0
        %v8552 = vmax.f32 %v7912, 0.0
        %v8553 = vmax.f32 %v7913, 0.0
        %v8554 = vmax.f32 %v7914, 0.0
        %v8555 = vmax.f32 %v7915, 0.0
        %v8556 = vmax.f32 %v7916, 0.0
        %v8557 = vmax.f32 %v7917, 0.0
        %v8558 = vmax.f32 %v7918, 0.0
        %v8559 = vmax.f32 %v7919, 0.0
        %v8560 = vmax.f32 %v7920, 0.0
        %v8561 = vmax.f32 %v7921, 0.0
        %v8562 = vmax.f32 %v7922, 0.0
        %v8563 = vmax.f32 %v7923, 0.0
        %v8564 = vmax.f32 %v7924, 0.0
        %v8565 = vmax.f32 %v7925, 0.0
        %v8566 = vmax.f32 %v7926, 0.0
        %v8567 = vmax.f32 %v7927, 0.0
        %v8568 = vmax.f32 %v7928, 0.0
        %v8569 = vmax.f32 %v7929, 0.0
        %v8570 = vmax.f32 %v7930, 0.0
        %v8571 = vmax.f32 %v7931, 0.0
        %v8572 = vmax.f32 %v7932, 0.0
        %v8573 = vmax.f32 %v7933, 0.0
        %v8574 = vmax.f32 %v7934, 0.0
        %v8575 = vmax.f32 %v7935, 0.0
        %v8576 = vmax.f32 %v7936, 0.0
        %v8577 = vmax.f32 %v7937, 0.0
        %v8578 = vmax.f32 %v7938, 0.0
        %v8579 = vmax.f32 %v7939, 0.0
        %v8580 = vmax.f32 %v7940, 0.0
        %v8581 = vmax.f32 %v7941, 0.0
        %v8582 = vmax.f32 %v7942, 0.0
        %v8583 = vmax.f32 %v7943, 0.0
        %v8584 = vmax.f32 %v7944, 0.0
        %v8585 = vmax.f32 %v7945, 0.0
        %v8586 = vmax.f32 %v7946, 0.0
        %v8587 = vmax.f32 %v7947, 0.0
        %v8588 = vmax.f32 %v7948, 0.0
        %v8589 = vmax.f32 %v7949, 0.0
        %v8590 = vmax.f32 %v7950, 0.0
        %v8591 = vmax.f32 %v7951, 0.0
        %v8592 = vmax.f32 %v7952, 0.0
        %v8593 = vmax.f32 %v7953, 0.0
        %v8594 = vmax.f32 %v7954, 0.0
        %v8595 = vmax.f32 %v7955, 0.0
        %v8596 = vmax.f32 %v7956, 0.0
        %v8597 = vmax.f32 %v7957, 0.0
        %v8598 = vmax.f32 %v7958, 0.0
        %v8599 = vmax.f32 %v7959, 0.0
        %v8600 = vmax.f32 %v7960, 0.0
        %v8601 = vmax.f32 %v7961, 0.0
        %v8602 = vmax.f32 %v7962, 0.0
        %v8603 = vmax.f32 %v7963, 0.0
        %v8604 = vmax.f32 %v7964, 0.0
        %v8605 = vmax.f32 %v7965, 0.0
        %v8606 = vmax.f32 %v7966, 0.0
        %v8607 = vmax.f32 %v7967, 0.0
        %v8608 = vmax.f32 %v7968, 0.0
        %v8609 = vmax.f32 %v7969, 0.0
        %v8610 = vmax.f32 %v7970, 0.0
        %v8611 = vmax.f32 %v7971, 0.0
        %v8612 = vmax.f32 %v7972, 0.0
        %v8613 = vmax.f32 %v7973, 0.0
        %v8614 = vmax.f32 %v7974, 0.0
        %v8615 = vmax.f32 %v7975, 0.0
        %v8616 = vmax.f32 %v7976, 0.0
        %v8617 = vmax.f32 %v7977, 0.0
        %v8618 = vmax.f32 %v7978, 0.0
        %v8619 = vmax.f32 %v7979, 0.0
        %v8620 = vmax.f32 %v7980, 0.0
        %v8621 = vmax.f32 %v7981, 0.0
        %v8622 = vmax.f32 %v7982, 0.0
        %v8623 = vmax.f32 %v7983, 0.0
        %v8624 = vmax.f32 %v7984, 0.0
        %v8625 = vmax.f32 %v7985, 0.0
        %v8626 = vmax.f32 %v7986, 0.0
        %v8627 = vmax.f32 %v7987, 0.0
        %v8628 = vmax.f32 %v7988, 0.0
        %v8629 = vmax.f32 %v7989, 0.0
        %v8630 = vmax.f32 %v7990, 0.0
        %v8631 = vmax.f32 %v7991, 0.0
        %v8632 = vmax.f32 %v7992, 0.0
        %v8633 = vmax.f32 %v7993, 0.0
        %v8634 = vmax.f32 %v7994, 0.0
        %v8635 = vmax.f32 %v7995, 0.0
        %v8636 = vmax.f32 %v7996, 0.0
        %v8637 = vmax.f32 %v7997, 0.0
        %v8638 = vmax.f32 %v7998, 0.0
        %v8639 = vmax.f32 %v7999, 0.0
        %v8640 = vmax.f32 %v8000, 0.0
        %v8641 = vmax.f32 %v8001, 0.0
        %v8642 = vmax.f32 %v8002, 0.0
        %v8643 = vmax.f32 %v8003, 0.0
        %v8644 = vmax.f32 %v8004, 0.0
        %v8645 = vmax.f32 %v8005, 0.0
        %v8646 = vmax.f32 %v8006, 0.0
        %v8647 = vmax.f32 %v8007, 0.0
        %v8648 = vmax.f32 %v8008, 0.0
        %v8649 = vmax.f32 %v8009, 0.0
        %v8650 = vmax.f32 %v8010, 0.0
        %v8651 = vmax.f32 %v8011, 0.0
        %v8652 = vmax.f32 %v8012, 0.0
        %v8653 = vmax.f32 %v8013, 0.0
        %v8654 = vmax.f32 %v8014, 0.0
        %v8655 = vmax.f32 %v8015, 0.0
        %v8656 = vmax.f32 %v8016, 0.0
        %v8657 = vmax.f32 %v8017, 0.0
        %v8658 = vmax.f32 %v8018, 0.0
        %v8659 = vmax.f32 %v8019, 0.0
        %v8660 = vmax.f32 %v8020, 0.0
        %v8661 = vmax.f32 %v8021, 0.0
        %v8662 = vmax.f32 %v8022, 0.0
        %v8663 = vmax.f32 %v8023, 0.0
        %v8664 = vmax.f32 %v8024, 0.0
        %v8665 = vmax.f32 %v8025, 0.0
        %v8666 = vmax.f32 %v8026, 0.0
        %v8667 = vmax.f32 %v8027, 0.0
        %v8668 = vmax.f32 %v8028, 0.0
        %v8669 = vmax.f32 %v8029, 0.0
        %v8670 = vmax.f32 %v8030, 0.0
        %v8671 = vmax.f32 %v8031, 0.0
        %v8672 = vmax.f32 %v8032, 0.0
        %v8673 = vmax.f32 %v8033, 0.0
        %v8674 = vmax.f32 %v8034, 0.0
        %v8675 = vmax.f32 %v8035, 0.0
        %v8676 = vmax.f32 %v8036, 0.0
        %v8677 = vmax.f32 %v8037, 0.0
        %v8678 = vmax.f32 %v8038, 0.0
        %v8679 = vmax.f32 %v8039, 0.0
        %v8680 = vmax.f32 %v8040, 0.0
        %v8681 = vmax.f32 %v8041, 0.0
        %v8682 = vmax.f32 %v8042, 0.0
        %v8683 = vmax.f32 %v8043, 0.0
        %v8684 = vmax.f32 %v8044, 0.0
        %v8685 = vmax.f32 %v8045, 0.0
        %v8686 = vmax.f32 %v8046, 0.0
        %v8687 = vmax.f32 %v8047, 0.0
        %v8688 = vmax.f32 %v8048, 0.0
        %v8689 = vmax.f32 %v8049, 0.0
        %v8690 = vmax.f32 %v8050, 0.0
        %v8691 = vmax.f32 %v8051, 0.0
        %v8692 = vmax.f32 %v8052, 0.0
        %v8693 = vmax.f32 %v8053, 0.0
        %v8694 = vmax.f32 %v8054, 0.0
        %v8695 = vmax.f32 %v8055, 0.0
        %v8696 = vmax.f32 %v8056, 0.0
        %v8697 = vmax.f32 %v8057, 0.0
        %v8698 = vmax.f32 %v8058, 0.0
        %v8699 = vmax.f32 %v8059, 0.0
        %v8700 = vmax.f32 %v8060, 0.0
        %v8701 = vmax.f32 %v8061, 0.0
        %v8702 = vmax.f32 %v8062, 0.0
        %v8703 = vmax.f32 %v8063, 0.0
        %v8704 = vmax.f32 %v8064, 0.0
        %v8705 = vmax.f32 %v8065, 0.0
        %v8706 = vmax.f32 %v8066, 0.0
        %v8707 = vmax.f32 %v8067, 0.0
        %v8708 = vmax.f32 %v8068, 0.0
        %v8709 = vmax.f32 %v8069, 0.0
        %v8710 = vmax.f32 %v8070, 0.0
        %v8711 = vmax.f32 %v8071, 0.0
        %v8712 = vmax.f32 %v8072, 0.0
        %v8713 = vmax.f32 %v8073, 0.0
        %v8714 = vmax.f32 %v8074, 0.0
        %v8715 = vmax.f32 %v8075, 0.0
        %v8716 = vmax.f32 %v8076, 0.0
        %v8717 = vmax.f32 %v8077, 0.0
        %v8718 = vmax.f32 %v8078, 0.0
        %v8719 = vmax.f32 %v8079, 0.0
        %v8720 = vmax.f32 %v8080, 0.0
        %v8721 = vmax.f32 %v8081, 0.0
        %v8722 = vmax.f32 %v8082, 0.0
        %v8723 = vmax.f32 %v8083, 0.0
        %v8724 = vmax.f32 %v8084, 0.0
        %v8725 = vmax.f32 %v8085, 0.0
        %v8726 = vmax.f32 %v8086, 0.0
        %v8727 = vmax.f32 %v8087, 0.0
        %v8728 = vmax.f32 %v8088, 0.0
        %v8729 = vmax.f32 %v8089, 0.0
        %v8730 = vmax.f32 %v8090, 0.0
        %v8731 = vmax.f32 %v8091, 0.0
        %v8732 = vmax.f32 %v8092, 0.0
        %v8733 = vmax.f32 %v8093, 0.0
        %v8734 = vmax.f32 %v8094, 0.0
        %v8735 = vmax.f32 %v8095, 0.0
        %v8736 = vmax.f32 %v8096, 0.0
        %v8737 = vmax.f32 %v8097, 0.0
        %v8738 = vmax.f32 %v8098, 0.0
        %v8739 = vmax.f32 %v8099, 0.0
        %v8740 = vmax.f32 %v8100, 0.0
        %v8741 = vadd.f32 %v8101, %v8105
        %v8742 = vadd.f32 %v8741, %v8109
        %v8743 = vadd.f32 %v8742, %v8113
        %v8744 = vadd.f32 %v8743, %v8117
        %v8745 = vadd.f32 %v8744, %v8121
        %v8746 = vadd.f32 %v8745, %v8125
        %v8747 = vadd.f32 %v8746, %v8129
        %v8748 = vadd.f32 %v8747, %v8133
        %v8749 = vadd.f32 %v8748, %v8137
        %v8750 = vadd.f32 %v8749, %v8141
        %v8751 = vadd.f32 %v8750, %v8145
        %v8752 = vadd.f32 %v8751, %v8149
        %v8753 = vadd.f32 %v8752, %v8153
        %v8754 = vadd.f32 %v8753, %v8157
        %v8755 = vadd.f32 %v8754, %v8161
        %v8756 = vadd.f32 %v8755, %v8165
        %v8757 = vadd.f32 %v8756, %v8169
        %v8758 = vadd.f32 %v8757, %v8173
        %v8759 = vadd.f32 %v8758, %v8177
        %v8760 = vadd.f32 %v8759, %v8181
        %v8761 = vadd.f32 %v8760, %v8185
        %v8762 = vadd.f32 %v8761, %v8189
        %v8763 = vadd.f32 %v8762, %v8193
        %v8764 = vadd.f32 %v8763, %v8197
        %v8765 = vadd.f32 %v8764, %v8201
        %v8766 = vadd.f32 %v8765, %v8205
        %v8767 = vadd.f32 %v8766, %v8209
        %v8768 = vadd.f32 %v8767, %v8213
        %v8769 = vadd.f32 %v8768, %v8217
        %v8770 = vadd.f32 %v8769, %v8221
        %v8771 = vadd.f32 %v8770, %v8225
        %v8772 = vadd.f32 %v8771, %v8229
        %v8773 = vadd.f32 %v8772, %v8233
        %v8774 = vadd.f32 %v8773, %v8237
        %v8775 = vadd.f32 %v8774, %v8241
        %v8776 = vadd.f32 %v8775, %v8245
        %v8777 = vadd.f32 %v8776, %v8249
        %v8778 = vadd.f32 %v8777, %v8253
        %v8779 = vadd.f32 %v8778, %v8257
        %v8780 = vadd.f32 %v8779, %v8261
        %v8781 = vadd.f32 %v8780, %v8265
        %v8782 = vadd.f32 %v8781, %v8269
        %v8783 = vadd.f32 %v8782, %v8273
        %v8784 = vadd.f32 %v8783, %v8277
        %v8785 = vadd.f32 %v8784, %v8281
        %v8786 = vadd.f32 %v8785, %v8285
        %v8787 = vadd.f32 %v8786, %v8289
        %v8788 = vadd.f32 %v8787, %v8293
        %v8789 = vadd.f32 %v8788, %v8297
        %v8790 = vadd.f32 %v8789, %v8301
        %v8791 = vadd.f32 %v8790, %v8305
        %v8792 = vadd.f32 %v8791, %v8309
        %v8793 = vadd.f32 %v8792, %v8313
        %v8794 = vadd.f32 %v8793, %v8317
        %v8795 = vadd.f32 %v8794, %v8321
        %v8796 = vadd.f32 %v8795, %v8325
        %v8797 = vadd.f32 %v8796, %v8329
        %v8798 = vadd.f32 %v8797, %v8333
        %v8799 = vadd.f32 %v8798, %v8337
        %v8800 = vadd.f32 %v8799, %v8341
        %v8801 = vadd.f32 %v8800, %v8345
        %v8802 = vadd.f32 %v8801, %v8349
        %v8803 = vadd.f32 %v8802, %v8353
        %v8804 = vadd.f32 %v8803, %v8357
        %v8805 = vadd.f32 %v8804, %v8361
        %v8806 = vadd.f32 %v8805, %v8365
        %v8807 = vadd.f32 %v8806, %v8369
        %v8808 = vadd.f32 %v8807, %v8373
        %v8809 = vadd.f32 %v8808, %v8377
        %v8810 = vadd.f32 %v8809, %v8381
        %v8811 = vadd.f32 %v8810, %v8385
        %v8812 = vadd.f32 %v8811, %v8389
        %v8813 = vadd.f32 %v8812, %v8393
        %v8814 = vadd.f32 %v8813, %v8397
        %v8815 = vadd.f32 %v8814, %v8401
        %v8816 = vadd.f32 %v8815, %v8405
        %v8817 = vadd.f32 %v8816, %v8409
        %v8818 = vadd.f32 %v8817, %v8413
        %v8819 = vadd.f32 %v8818, %v8417
        %v8820 = vadd.f32 %v8819, %v8421
        %v8821 = vadd.f32 %v8820, %v8425
        %v8822 = vadd.f32 %v8821, %v8429
        %v8823 = vadd.f32 %v8822, %v8433
        %v8824 = vadd.f32 %v8823, %v8437
        %v8825 = vadd.f32 %v8824, %v8441
        %v8826 = vadd.f32 %v8825, %v8445
        %v8827 = vadd.f32 %v8826, %v8449
        %v8828 = vadd.f32 %v8827, %v8453
        %v8829 = vadd.f32 %v8828, %v8457
        %v8830 = vadd.f32 %v8829, %v8461
        %v8831 = vadd.f32 %v8830, %v8465
        %v8832 = vadd.f32 %v8831, %v8469
        %v8833 = vadd.f32 %v8832, %v8473
        %v8834 = vadd.f32 %v8833, %v8477
        %v8835 = vadd.f32 %v8834, %v8481
        %v8836 = vadd.f32 %v8835, %v8485
        %v8837 = vadd.f32 %v8836, %v8489
        %v8838 = vadd.f32 %v8837, %v8493
        %v8839 = vadd.f32 %v8838, %v8497
        %v8840 = vadd.f32 %v8839, %v8501
        %v8841 = vadd.f32 %v8840, %v8505
        %v8842 = vadd.f32 %v8841, %v8509
        %v8843 = vadd.f32 %v8842, %v8513
        %v8844 = vadd.f32 %v8843, %v8517
        %v8845 = vadd.f32 %v8844, %v8521
        %v8846 = vadd.f32 %v8845, %v8525
        %v8847 = vadd.f32 %v8846, %v8529
        %v8848 = vadd.f32 %v8847, %v8533
        %v8849 = vadd.f32 %v8848, %v8537
        %v8850 = vadd.f32 %v8849, %v8541
        %v8851 = vadd.f32 %v8850, %v8545
        %v8852 = vadd.f32 %v8851, %v8549
        %v8853 = vadd.f32 %v8852, %v8553
        %v8854 = vadd.f32 %v8853, %v8557
        %v8855 = vadd.f32 %v8854, %v8561
        %v8856 = vadd.f32 %v8855, %v8565
        %v8857 = vadd.f32 %v8856, %v8569
        %v8858 = vadd.f32 %v8857, %v8573
        %v8859 = vadd.f32 %v8858, %v8577
        %v8860 = vadd.f32 %v8859, %v8581
        %v8861 = vadd.f32 %v8860, %v8585
        %v8862 = vadd.f32 %v8861, %v8589
        %v8863 = vadd.f32 %v8862, %v8593
        %v8864 = vadd.f32 %v8863, %v8597
        %v8865 = vadd.f32 %v8864, %v8601
        %v8866 = vadd.f32 %v8865, %v8605
        %v8867 = vadd.f32 %v8866, %v8609
        %v8868 = vadd.f32 %v8867, %v8613
        %v8869 = vadd.f32 %v8868, %v8617
        %v8870 = vadd.f32 %v8869, %v8621
        %v8871 = vadd.f32 %v8870, %v8625
        %v8872 = vadd.f32 %v8871, %v8629
        %v8873 = vadd.f32 %v8872, %v8633
        %v8874 = vadd.f32 %v8873, %v8637
        %v8875 = vadd.f32 %v8874, %v8641
        %v8876 = vadd.f32 %v8875, %v8645
        %v8877 = vadd.f32 %v8876, %v8649
        %v8878 = vadd.f32 %v8877, %v8653
        %v8879 = vadd.f32 %v8878, %v8657
        %v8880 = vadd.f32 %v8879, %v8661
        %v8881 = vadd.f32 %v8880, %v8665
        %v8882 = vadd.f32 %v8881, %v8669
        %v8883 = vadd.f32 %v8882, %v8673
        %v8884 = vadd.f32 %v8883, %v8677
        %v8885 = vadd.f32 %v8884, %v8681
        %v8886 = vadd.f32 %v8885, %v8685
        %v8887 = vadd.f32 %v8886, %v8689
        %v8888 = vadd.f32 %v8887, %v8693
        %v8889 = vadd.f32 %v8888, %v8697
        %v8890 = vadd.f32 %v8889, %v8701
        %v8891 = vadd.f32 %v8890, %v8705
        %v8892 = vadd.f32 %v8891, %v8709
        %v8893 = vadd.f32 %v8892, %v8713
        %v8894 = vadd.f32 %v8893, %v8717
        %v8895 = vadd.f32 %v8894, %v8721
        %v8896 = vadd.f32 %v8895, %v8725
        %v8897 = vadd.f32 %v8896, %v8729
        %v8898 = vadd.f32 %v8897, %v8733
        %v8899 = vadd.f32 %v8898, %v8737
        %v8900 = vrot.slane %v8899, 4
        %v8901 = vadd.f32 %v8899, %v8900
        %v8902 = vrot.slane %v8901, 2
        %v8903 = vadd.f32 %v8901, %v8902
        %v8904 = vrot.slane %v8903, 1
        %v8905 = vadd.f32 %v8903, %v8904
        %v8906 = vadd.f32 %v8102, %v8106
        %v8907 = vadd.f32 %v8906, %v8110
        %v8908 = vadd.f32 %v8907, %v8114
        %v8909 = vadd.f32 %v8908, %v8118
        %v8910 = vadd.f32 %v8909, %v8122
        %v8911 = vadd.f32 %v8910, %v8126
        %v8912 = vadd.f32 %v8911, %v8130
        %v8913 = vadd.f32 %v8912, %v8134
        %v8914 = vadd.f32 %v8913, %v8138
        %v8915 = vadd.f32 %v8914, %v8142
        %v8916 = vadd.f32 %v8915, %v8146
        %v8917 = vadd.f32 %v8916, %v8150
        %v8918 = vadd.f32 %v8917, %v8154
        %v8919 = vadd.f32 %v8918, %v8158
        %v8920 = vadd.f32 %v8919, %v8162
        %v8921 = vadd.f32 %v8920, %v8166
        %v8922 = vadd.f32 %v8921, %v8170
        %v8923 = vadd.f32 %v8922, %v8174
        %v8924 = vadd.f32 %v8923, %v8178
        %v8925 = vadd.f32 %v8924, %v8182
        %v8926 = vadd.f32 %v8925, %v8186
        %v8927 = vadd.f32 %v8926, %v8190
        %v8928 = vadd.f32 %v8927, %v8194
        %v8929 = vadd.f32 %v8928, %v8198
        %v8930 = vadd.f32 %v8929, %v8202
        %v8931 = vadd.f32 %v8930, %v8206
        %v8932 = vadd.f32 %v8931, %v8210
        %v8933 = vadd.f32 %v8932, %v8214
        %v8934 = vadd.f32 %v8933, %v8218
        %v8935 = vadd.f32 %v8934, %v8222
        %v8936 = vadd.f32 %v8935, %v8226
        %v8937 = vadd.f32 %v8936, %v8230
        %v8938 = vadd.f32 %v8937, %v8234
        %v8939 = vadd.f32 %v8938, %v8238
        %v8940 = vadd.f32 %v8939, %v8242
        %v8941 = vadd.f32 %v8940, %v8246
        %v8942 = vadd.f32 %v8941, %v8250
        %v8943 = vadd.f32 %v8942, %v8254
        %v8944 = vadd.f32 %v8943, %v8258
        %v8945 = vadd.f32 %v8944, %v8262
        %v8946 = vadd.f32 %v8945, %v8266
        %v8947 = vadd.f32 %v8946, %v8270
        %v8948 = vadd.f32 %v8947, %v8274
        %v8949 = vadd.f32 %v8948, %v8278
        %v8950 = vadd.f32 %v8949, %v8282
        %v8951 = vadd.f32 %v8950, %v8286
        %v8952 = vadd.f32 %v8951, %v8290
        %v8953 = vadd.f32 %v8952, %v8294
        %v8954 = vadd.f32 %v8953, %v8298
        %v8955 = vadd.f32 %v8954, %v8302
        %v8956 = vadd.f32 %v8955, %v8306
        %v8957 = vadd.f32 %v8956, %v8310
        %v8958 = vadd.f32 %v8957, %v8314
        %v8959 = vadd.f32 %v8958, %v8318
        %v8960 = vadd.f32 %v8959, %v8322
        %v8961 = vadd.f32 %v8960, %v8326
        %v8962 = vadd.f32 %v8961, %v8330
        %v8963 = vadd.f32 %v8962, %v8334
        %v8964 = vadd.f32 %v8963, %v8338
        %v8965 = vadd.f32 %v8964, %v8342
        %v8966 = vadd.f32 %v8965, %v8346
        %v8967 = vadd.f32 %v8966, %v8350
        %v8968 = vadd.f32 %v8967, %v8354
        %v8969 = vadd.f32 %v8968, %v8358
        %v8970 = vadd.f32 %v8969, %v8362
        %v8971 = vadd.f32 %v8970, %v8366
        %v8972 = vadd.f32 %v8971, %v8370
        %v8973 = vadd.f32 %v8972, %v8374
        %v8974 = vadd.f32 %v8973, %v8378
        %v8975 = vadd.f32 %v8974, %v8382
        %v8976 = vadd.f32 %v8975, %v8386
        %v8977 = vadd.f32 %v8976, %v8390
        %v8978 = vadd.f32 %v8977, %v8394
        %v8979 = vadd.f32 %v8978, %v8398
        %v8980 = vadd.f32 %v8979, %v8402
        %v8981 = vadd.f32 %v8980, %v8406
        %v8982 = vadd.f32 %v8981, %v8410
        %v8983 = vadd.f32 %v8982, %v8414
        %v8984 = vadd.f32 %v8983, %v8418
        %v8985 = vadd.f32 %v8984, %v8422
        %v8986 = vadd.f32 %v8985, %v8426
        %v8987 = vadd.f32 %v8986, %v8430
        %v8988 = vadd.f32 %v8987, %v8434
        %v8989 = vadd.f32 %v8988, %v8438
        %v8990 = vadd.f32 %v8989, %v8442
        %v8991 = vadd.f32 %v8990, %v8446
        %v8992 = vadd.f32 %v8991, %v8450
        %v8993 = vadd.f32 %v8992, %v8454
        %v8994 = vadd.f32 %v8993, %v8458
        %v8995 = vadd.f32 %v8994, %v8462
        %v8996 = vadd.f32 %v8995, %v8466
        %v8997 = vadd.f32 %v8996, %v8470
        %v8998 = vadd.f32 %v8997, %v8474
        %v8999 = vadd.f32 %v8998, %v8478
        %v9000 = vadd.f32 %v8999, %v8482
        %v9001 = vadd.f32 %v9000, %v8486
        %v9002 = vadd.f32 %v9001, %v8490
        %v9003 = vadd.f32 %v9002, %v8494
        %v9004 = vadd.f32 %v9003, %v8498
        %v9005 = vadd.f32 %v9004, %v8502
        %v9006 = vadd.f32 %v9005, %v8506
        %v9007 = vadd.f32 %v9006, %v8510
        %v9008 = vadd.f32 %v9007, %v8514
        %v9009 = vadd.f32 %v9008, %v8518
        %v9010 = vadd.f32 %v9009, %v8522
        %v9011 = vadd.f32 %v9010, %v8526
        %v9012 = vadd.f32 %v9011, %v8530
        %v9013 = vadd.f32 %v9012, %v8534
        %v9014 = vadd.f32 %v9013, %v8538
        %v9015 = vadd.f32 %v9014, %v8542
        %v9016 = vadd.f32 %v9015, %v8546
        %v9017 = vadd.f32 %v9016, %v8550
        %v9018 = vadd.f32 %v9017, %v8554
        %v9019 = vadd.f32 %v9018, %v8558
        %v9020 = vadd.f32 %v9019, %v8562
        %v9021 = vadd.f32 %v9020, %v8566
        %v9022 = vadd.f32 %v9021, %v8570
        %v9023 = vadd.f32 %v9022, %v8574
        %v9024 = vadd.f32 %v9023, %v8578
        %v9025 = vadd.f32 %v9024, %v8582
        %v9026 = vadd.f32 %v9025, %v8586
        %v9027 = vadd.f32 %v9026, %v8590
        %v9028 = vadd.f32 %v9027, %v8594
        %v9029 = vadd.f32 %v9028, %v8598
        %v9030 = vadd.f32 %v9029, %v8602
        %v9031 = vadd.f32 %v9030, %v8606
        %v9032 = vadd.f32 %v9031, %v8610
        %v9033 = vadd.f32 %v9032, %v8614
        %v9034 = vadd.f32 %v9033, %v8618
        %v9035 = vadd.f32 %v9034, %v8622
        %v9036 = vadd.f32 %v9035, %v8626
        %v9037 = vadd.f32 %v9036, %v8630
        %v9038 = vadd.f32 %v9037, %v8634
        %v9039 = vadd.f32 %v9038, %v8638
        %v9040 = vadd.f32 %v9039, %v8642
        %v9041 = vadd.f32 %v9040, %v8646
        %v9042 = vadd.f32 %v9041, %v8650
        %v9043 = vadd.f32 %v9042, %v8654
        %v9044 = vadd.f32 %v9043, %v8658
        %v9045 = vadd.f32 %v9044, %v8662
        %v9046 = vadd.f32 %v9045, %v8666
        %v9047 = vadd.f32 %v9046, %v8670
        %v9048 = vadd.f32 %v9047, %v8674
        %v9049 = vadd.f32 %v9048, %v8678
        %v9050 = vadd.f32 %v9049, %v8682
        %v9051 = vadd.f32 %v9050, %v8686
        %v9052 = vadd.f32 %v9051, %v8690
        %v9053 = vadd.f32 %v9052, %v8694
        %v9054 = vadd.f32 %v9053, %v8698
        %v9055 = vadd.f32 %v9054, %v8702
        %v9056 = vadd.f32 %v9055, %v8706
        %v9057 = vadd.f32 %v9056, %v8710
        %v9058 = vadd.f32 %v9057, %v8714
        %v9059 = vadd.f32 %v9058, %v8718
        %v9060 = vadd.f32 %v9059, %v8722
        %v9061 = vadd.f32 %v9060, %v8726
        %v9062 = vadd.f32 %v9061, %v8730
        %v9063 = vadd.f32 %v9062, %v8734
        %v9064 = vadd.f32 %v9063, %v8738
        %v9065 = vrot.slane %v9064, 4
        %v9066 = vadd.f32 %v9064, %v9065
        %v9067 = vrot.slane %v9066, 2
        %v9068 = vadd.f32 %v9066, %v9067
        %v9069 = vrot.slane %v9068, 1
        %v9070 = vadd.f32 %v9068, %v9069
        %v9071 = vadd.f32 %v8103, %v8107
        %v9072 = vadd.f32 %v9071, %v8111
        %v9073 = vadd.f32 %v9072, %v8115
        %v9074 = vadd.f32 %v9073, %v8119
        %v9075 = vadd.f32 %v9074, %v8123
        %v9076 = vadd.f32 %v9075, %v8127
        %v9077 = vadd.f32 %v9076, %v8131
        %v9078 = vadd.f32 %v9077, %v8135
        %v9079 = vadd.f32 %v9078, %v8139
        %v9080 = vadd.f32 %v9079, %v8143
        %v9081 = vadd.f32 %v9080, %v8147
        %v9082 = vadd.f32 %v9081, %v8151
        %v9083 = vadd.f32 %v9082, %v8155
        %v9084 = vadd.f32 %v9083, %v8159
        %v9085 = vadd.f32 %v9084, %v8163
        %v9086 = vadd.f32 %v9085, %v8167
        %v9087 = vadd.f32 %v9086, %v8171
        %v9088 = vadd.f32 %v9087, %v8175
        %v9089 = vadd.f32 %v9088, %v8179
        %v9090 = vadd.f32 %v9089, %v8183
        %v9091 = vadd.f32 %v9090, %v8187
        %v9092 = vadd.f32 %v9091, %v8191
        %v9093 = vadd.f32 %v9092, %v8195
        %v9094 = vadd.f32 %v9093, %v8199
        %v9095 = vadd.f32 %v9094, %v8203
        %v9096 = vadd.f32 %v9095, %v8207
        %v9097 = vadd.f32 %v9096, %v8211
        %v9098 = vadd.f32 %v9097, %v8215
        %v9099 = vadd.f32 %v9098, %v8219
        %v9100 = vadd.f32 %v9099, %v8223
        %v9101 = vadd.f32 %v9100, %v8227
        %v9102 = vadd.f32 %v9101, %v8231
        %v9103 = vadd.f32 %v9102, %v8235
        %v9104 = vadd.f32 %v9103, %v8239
        %v9105 = vadd.f32 %v9104, %v8243
        %v9106 = vadd.f32 %v9105, %v8247
        %v9107 = vadd.f32 %v9106, %v8251
        %v9108 = vadd.f32 %v9107, %v8255
        %v9109 = vadd.f32 %v9108, %v8259
        %v9110 = vadd.f32 %v9109, %v8263
        %v9111 = vadd.f32 %v9110, %v8267
        %v9112 = vadd.f32 %v9111, %v8271
        %v9113 = vadd.f32 %v9112, %v8275
        %v9114 = vadd.f32 %v9113, %v8279
        %v9115 = vadd.f32 %v9114, %v8283
        %v9116 = vadd.f32 %v9115, %v8287
        %v9117 = vadd.f32 %v9116, %v8291
        %v9118 = vadd.f32 %v9117, %v8295
        %v9119 = vadd.f32 %v9118, %v8299
        %v9120 = vadd.f32 %v9119, %v8303
        %v9121 = vadd.f32 %v9120, %v8307
        %v9122 = vadd.f32 %v9121, %v8311
        %v9123 = vadd.f32 %v9122, %v8315
        %v9124 = vadd.f32 %v9123, %v8319
        %v9125 = vadd.f32 %v9124, %v8323
        %v9126 = vadd.f32 %v9125, %v8327
        %v9127 = vadd.f32 %v9126, %v8331
        %v9128 = vadd.f32 %v9127, %v8335
        %v9129 = vadd.f32 %v9128, %v8339
        %v9130 = vadd.f32 %v9129, %v8343
        %v9131 = vadd.f32 %v9130, %v8347
        %v9132 = vadd.f32 %v9131, %v8351
        %v9133 = vadd.f32 %v9132, %v8355
        %v9134 = vadd.f32 %v9133, %v8359
        %v9135 = vadd.f32 %v9134, %v8363
        %v9136 = vadd.f32 %v9135, %v8367
        %v9137 = vadd.f32 %v9136, %v8371
        %v9138 = vadd.f32 %v9137, %v8375
        %v9139 = vadd.f32 %v9138, %v8379
        %v9140 = vadd.f32 %v9139, %v8383
        %v9141 = vadd.f32 %v9140, %v8387
        %v9142 = vadd.f32 %v9141, %v8391
        %v9143 = vadd.f32 %v9142, %v8395
        %v9144 = vadd.f32 %v9143, %v8399
        %v9145 = vadd.f32 %v9144, %v8403
        %v9146 = vadd.f32 %v9145, %v8407
        %v9147 = vadd.f32 %v9146, %v8411
        %v9148 = vadd.f32 %v9147, %v8415
        %v9149 = vadd.f32 %v9148, %v8419
        %v9150 = vadd.f32 %v9149, %v8423
        %v9151 = vadd.f32 %v9150, %v8427
        %v9152 = vadd.f32 %v9151, %v8431
        %v9153 = vadd.f32 %v9152, %v8435
        %v9154 = vadd.f32 %v9153, %v8439
        %v9155 = vadd.f32 %v9154, %v8443
        %v9156 = vadd.f32 %v9155, %v8447
        %v9157 = vadd.f32 %v9156, %v8451
        %v9158 = vadd.f32 %v9157, %v8455
        %v9159 = vadd.f32 %v9158, %v8459
        %v9160 = vadd.f32 %v9159, %v8463
        %v9161 = vadd.f32 %v9160, %v8467
        %v9162 = vadd.f32 %v9161, %v8471
        %v9163 = vadd.f32 %v9162, %v8475
        %v9164 = vadd.f32 %v9163, %v8479
        %v9165 = vadd.f32 %v9164, %v8483
        %v9166 = vadd.f32 %v9165, %v8487
        %v9167 = vadd.f32 %v9166, %v8491
        %v9168 = vadd.f32 %v9167, %v8495
        %v9169 = vadd.f32 %v9168, %v8499
        %v9170 = vadd.f32 %v9169, %v8503
        %v9171 = vadd.f32 %v9170, %v8507
        %v9172 = vadd.f32 %v9171, %v8511
        %v9173 = vadd.f32 %v9172, %v8515
        %v9174 = vadd.f32 %v9173, %v8519
        %v9175 = vadd.f32 %v9174, %v8523
        %v9176 = vadd.f32 %v9175, %v8527
        %v9177 = vadd.f32 %v9176, %v8531
        %v9178 = vadd.f32 %v9177, %v8535
        %v9179 = vadd.f32 %v9178, %v8539
        %v9180 = vadd.f32 %v9179, %v8543
        %v9181 = vadd.f32 %v9180, %v8547
        %v9182 = vadd.f32 %v9181, %v8551
        %v9183 = vadd.f32 %v9182, %v8555
        %v9184 = vadd.f32 %v9183, %v8559
        %v9185 = vadd.f32 %v9184, %v8563
        %v9186 = vadd.f32 %v9185, %v8567
        %v9187 = vadd.f32 %v9186, %v8571
        %v9188 = vadd.f32 %v9187, %v8575
        %v9189 = vadd.f32 %v9188, %v8579
        %v9190 = vadd.f32 %v9189, %v8583
        %v9191 = vadd.f32 %v9190, %v8587
        %v9192 = vadd.f32 %v9191, %v8591
        %v9193 = vadd.f32 %v9192, %v8595
        %v9194 = vadd.f32 %v9193, %v8599
        %v9195 = vadd.f32 %v9194, %v8603
        %v9196 = vadd.f32 %v9195, %v8607
        %v9197 = vadd.f32 %v9196, %v8611
        %v9198 = vadd.f32 %v9197, %v8615
        %v9199 = vadd.f32 %v9198, %v8619
        %v9200 = vadd.f32 %v9199, %v8623
        %v9201 = vadd.f32 %v9200, %v8627
        %v9202 = vadd.f32 %v9201, %v8631
        %v9203 = vadd.f32 %v9202, %v8635
        %v9204 = vadd.f32 %v9203, %v8639
        %v9205 = vadd.f32 %v9204, %v8643
        %v9206 = vadd.f32 %v9205, %v8647
        %v9207 = vadd.f32 %v9206, %v8651
        %v9208 = vadd.f32 %v9207, %v8655
        %v9209 = vadd.f32 %v9208, %v8659
        %v9210 = vadd.f32 %v9209, %v8663
        %v9211 = vadd.f32 %v9210, %v8667
        %v9212 = vadd.f32 %v9211, %v8671
        %v9213 = vadd.f32 %v9212, %v8675
        %v9214 = vadd.f32 %v9213, %v8679
        %v9215 = vadd.f32 %v9214, %v8683
        %v9216 = vadd.f32 %v9215, %v8687
        %v9217 = vadd.f32 %v9216, %v8691
        %v9218 = vadd.f32 %v9217, %v8695
        %v9219 = vadd.f32 %v9218, %v8699
        %v9220 = vadd.f32 %v9219, %v8703
        %v9221 = vadd.f32 %v9220, %v8707
        %v9222 = vadd.f32 %v9221, %v8711
        %v9223 = vadd.f32 %v9222, %v8715
        %v9224 = vadd.f32 %v9223, %v8719
        %v9225 = vadd.f32 %v9224, %v8723
        %v9226 = vadd.f32 %v9225, %v8727
        %v9227 = vadd.f32 %v9226, %v8731
        %v9228 = vadd.f32 %v9227, %v8735
        %v9229 = vadd.f32 %v9228, %v8739
        %v9230 = vrot.slane %v9229, 4
        %v9231 = vadd.f32 %v9229, %v9230
        %v9232 = vrot.slane %v9231, 2
        %v9233 = vadd.f32 %v9231, %v9232
        %v9234 = vrot.slane %v9233, 1
        %v9235 = vadd.f32 %v9233, %v9234
        %v9236 = vadd.f32 %v8104, %v8108
        %v9237 = vadd.f32 %v9236, %v8112
        %v9238 = vadd.f32 %v9237, %v8116
        %v9239 = vadd.f32 %v9238, %v8120
        %v9240 = vadd.f32 %v9239, %v8124
        %v9241 = vadd.f32 %v9240, %v8128
        %v9242 = vadd.f32 %v9241, %v8132
        %v9243 = vadd.f32 %v9242, %v8136
        %v9244 = vadd.f32 %v9243, %v8140
        %v9245 = vadd.f32 %v9244, %v8144
        %v9246 = vadd.f32 %v9245, %v8148
        %v9247 = vadd.f32 %v9246, %v8152
        %v9248 = vadd.f32 %v9247, %v8156
        %v9249 = vadd.f32 %v9248, %v8160
        %v9250 = vadd.f32 %v9249, %v8164
        %v9251 = vadd.f32 %v9250, %v8168
        %v9252 = vadd.f32 %v9251, %v8172
        %v9253 = vadd.f32 %v9252, %v8176
        %v9254 = vadd.f32 %v9253, %v8180
        %v9255 = vadd.f32 %v9254, %v8184
        %v9256 = vadd.f32 %v9255, %v8188
        %v9257 = vadd.f32 %v9256, %v8192
        %v9258 = vadd.f32 %v9257, %v8196
        %v9259 = vadd.f32 %v9258, %v8200
        %v9260 = vadd.f32 %v9259, %v8204
        %v9261 = vadd.f32 %v9260, %v8208
        %v9262 = vadd.f32 %v9261, %v8212
        %v9263 = vadd.f32 %v9262, %v8216
        %v9264 = vadd.f32 %v9263, %v8220
        %v9265 = vadd.f32 %v9264, %v8224
        %v9266 = vadd.f32 %v9265, %v8228
        %v9267 = vadd.f32 %v9266, %v8232
        %v9268 = vadd.f32 %v9267, %v8236
        %v9269 = vadd.f32 %v9268, %v8240
        %v9270 = vadd.f32 %v9269, %v8244
        %v9271 = vadd.f32 %v9270, %v8248
        %v9272 = vadd.f32 %v9271, %v8252
        %v9273 = vadd.f32 %v9272, %v8256
        %v9274 = vadd.f32 %v9273, %v8260
        %v9275 = vadd.f32 %v9274, %v8264
        %v9276 = vadd.f32 %v9275, %v8268
        %v9277 = vadd.f32 %v9276, %v8272
        %v9278 = vadd.f32 %v9277, %v8276
        %v9279 = vadd.f32 %v9278, %v8280
        %v9280 = vadd.f32 %v9279, %v8284
        %v9281 = vadd.f32 %v9280, %v8288
        %v9282 = vadd.f32 %v9281, %v8292
        %v9283 = vadd.f32 %v9282, %v8296
        %v9284 = vadd.f32 %v9283, %v8300
        %v9285 = vadd.f32 %v9284, %v8304
        %v9286 = vadd.f32 %v9285, %v8308
        %v9287 = vadd.f32 %v9286, %v8312
        %v9288 = vadd.f32 %v9287, %v8316
        %v9289 = vadd.f32 %v9288, %v8320
        %v9290 = vadd.f32 %v9289, %v8324
        %v9291 = vadd.f32 %v9290, %v8328
        %v9292 = vadd.f32 %v9291, %v8332
        %v9293 = vadd.f32 %v9292, %v8336
        %v9294 = vadd.f32 %v9293, %v8340
        %v9295 = vadd.f32 %v9294, %v8344
        %v9296 = vadd.f32 %v9295, %v8348
        %v9297 = vadd.f32 %v9296, %v8352
        %v9298 = vadd.f32 %v9297, %v8356
        %v9299 = vadd.f32 %v9298, %v8360
        %v9300 = vadd.f32 %v9299, %v8364
        %v9301 = vadd.f32 %v9300, %v8368
        %v9302 = vadd.f32 %v9301, %v8372
        %v9303 = vadd.f32 %v9302, %v8376
        %v9304 = vadd.f32 %v9303, %v8380
        %v9305 = vadd.f32 %v9304, %v8384
        %v9306 = vadd.f32 %v9305, %v8388
        %v9307 = vadd.f32 %v9306, %v8392
        %v9308 = vadd.f32 %v9307, %v8396
        %v9309 = vadd.f32 %v9308, %v8400
        %v9310 = vadd.f32 %v9309, %v8404
        %v9311 = vadd.f32 %v9310, %v8408
        %v9312 = vadd.f32 %v9311, %v8412
        %v9313 = vadd.f32 %v9312, %v8416
        %v9314 = vadd.f32 %v9313, %v8420
        %v9315 = vadd.f32 %v9314, %v8424
        %v9316 = vadd.f32 %v9315, %v8428
        %v9317 = vadd.f32 %v9316, %v8432
        %v9318 = vadd.f32 %v9317, %v8436
        %v9319 = vadd.f32 %v9318, %v8440
        %v9320 = vadd.f32 %v9319, %v8444
        %v9321 = vadd.f32 %v9320, %v8448
        %v9322 = vadd.f32 %v9321, %v8452
        %v9323 = vadd.f32 %v9322, %v8456
        %v9324 = vadd.f32 %v9323, %v8460
        %v9325 = vadd.f32 %v9324, %v8464
        %v9326 = vadd.f32 %v9325, %v8468
        %v9327 = vadd.f32 %v9326, %v8472
        %v9328 = vadd.f32 %v9327, %v8476
        %v9329 = vadd.f32 %v9328, %v8480
        %v9330 = vadd.f32 %v9329, %v8484
        %v9331 = vadd.f32 %v9330, %v8488
        %v9332 = vadd.f32 %v9331, %v8492
        %v9333 = vadd.f32 %v9332, %v8496
        %v9334 = vadd.f32 %v9333, %v8500
        %v9335 = vadd.f32 %v9334, %v8504
        %v9336 = vadd.f32 %v9335, %v8508
        %v9337 = vadd.f32 %v9336, %v8512
        %v9338 = vadd.f32 %v9337, %v8516
        %v9339 = vadd.f32 %v9338, %v8520
        %v9340 = vadd.f32 %v9339, %v8524
        %v9341 = vadd.f32 %v9340, %v8528
        %v9342 = vadd.f32 %v9341, %v8532
        %v9343 = vadd.f32 %v9342, %v8536
        %v9344 = vadd.f32 %v9343, %v8540
        %v9345 = vadd.f32 %v9344, %v8544
        %v9346 = vadd.f32 %v9345, %v8548
        %v9347 = vadd.f32 %v9346, %v8552
        %v9348 = vadd.f32 %v9347, %v8556
        %v9349 = vadd.f32 %v9348, %v8560
        %v9350 = vadd.f32 %v9349, %v8564
        %v9351 = vadd.f32 %v9350, %v8568
        %v9352 = vadd.f32 %v9351, %v8572
        %v9353 = vadd.f32 %v9352, %v8576
        %v9354 = vadd.f32 %v9353, %v8580
        %v9355 = vadd.f32 %v9354, %v8584
        %v9356 = vadd.f32 %v9355, %v8588
        %v9357 = vadd.f32 %v9356, %v8592
        %v9358 = vadd.f32 %v9357, %v8596
        %v9359 = vadd.f32 %v9358, %v8600
        %v9360 = vadd.f32 %v9359, %v8604
        %v9361 = vadd.f32 %v9360, %v8608
        %v9362 = vadd.f32 %v9361, %v8612
        %v9363 = vadd.f32 %v9362, %v8616
        %v9364 = vadd.f32 %v9363, %v8620
        %v9365 = vadd.f32 %v9364, %v8624
        %v9366 = vadd.f32 %v9365, %v8628
        %v9367 = vadd.f32 %v9366, %v8632
        %v9368 = vadd.f32 %v9367, %v8636
        %v9369 = vadd.f32 %v9368, %v8640
        %v9370 = vadd.f32 %v9369, %v8644
        %v9371 = vadd.f32 %v9370, %v8648
        %v9372 = vadd.f32 %v9371, %v8652
        %v9373 = vadd.f32 %v9372, %v8656
        %v9374 = vadd.f32 %v9373, %v8660
        %v9375 = vadd.f32 %v9374, %v8664
        %v9376 = vadd.f32 %v9375, %v8668
        %v9377 = vadd.f32 %v9376, %v8672
        %v9378 = vadd.f32 %v9377, %v8676
        %v9379 = vadd.f32 %v9378, %v8680
        %v9380 = vadd.f32 %v9379, %v8684
        %v9381 = vadd.f32 %v9380, %v8688
        %v9382 = vadd.f32 %v9381, %v8692
        %v9383 = vadd.f32 %v9382, %v8696
        %v9384 = vadd.f32 %v9383, %v8700
        %v9385 = vadd.f32 %v9384, %v8704
        %v9386 = vadd.f32 %v9385, %v8708
        %v9387 = vadd.f32 %v9386, %v8712
        %v9388 = vadd.f32 %v9387, %v8716
        %v9389 = vadd.f32 %v9388, %v8720
        %v9390 = vadd.f32 %v9389, %v8724
        %v9391 = vadd.f32 %v9390, %v8728
        %v9392 = vadd.f32 %v9391, %v8732
        %v9393 = vadd.f32 %v9392, %v8736
        %v9394 = vadd.f32 %v9393, %v8740
        %v9395 = vrot.slane %v9394, 4
        %v9396 = vadd.f32 %v9394, %v9395
        %v9397 = vrot.slane %v9396, 2
        %v9398 = vadd.f32 %v9396, %v9397
        %v9399 = vrot.slane %v9398, 1
        %v9400 = vadd.f32 %v9398, %v9399
        %v9401 = vmax.f32 %v1973, 0.0
        %v9402 = vmul.f32 %v9401, 80.0
        %v9404 = vperm.slane %v9402, 0
        %v9405 = vperm.slane %v9402, 1
        %v9406 = vperm.slane %v9402, 2
        %v9407 = vperm.slane %v9402, 3
        %v9412 = vsub.f32 %v8905, %v9404
        %v9413 = vsub.f32 %v9070, %v9405
        %v9414 = vsub.f32 %v9235, %v9406
        %v9415 = vsub.f32 %v9400, %v9407
        %v9416 = vmul.f32 %v9412, 0.00083333335
        %v9417 = vmul.f32 %v9413, 0.00083333335
        %v9418 = vmul.f32 %v9414, 0.00083333335
        %v9419 = vmul.f32 %v9415, 0.00083333335
        %v9420 = vld [vmem:[%s495] sm:$0x1]
        %9422 = vset.pattern.permute.xlu0 0
        %9423 = vperm.xlu0 %9422, %v9420
        %v9424 = vpop.permute.xlu0 %9423
        %v9426 = vperm.slane %v9424, 0
        %v9427 = vmul.f32 %v1967, %v9426
        %v9428 = vmul.f32 %v1968, %v9426
        %v9429 = vmul.f32 %v1969, %v9426
        %v9430 = vmul.f32 %v1970, %v9426
        %v9431 = vld [vmem:[%s503] sm:$0x1]
        %9433 = vset.pattern.permute.xlu0 0
        %9434 = vperm.xlu0 %9433, %v9431
        %v9435 = vpop.permute.xlu0 %9434
        %v9437 = vperm.slane %v9435, 0
        %v9438 = vmul.f32 %v9416, %v9437
        %v9439 = vmul.f32 %v9417, %v9437
        %v9440 = vmul.f32 %v9418, %v9437
        %v9441 = vmul.f32 %v9419, %v9437
        %v9446 = vrot.slane %v9428, 7
        %v9447 = vrot.slane %v9429, 6
        %v9448 = vrot.slane %v9430, 5
        %vm9449 = vcmask 1040384
        %v9450 = vsel %vm9449, %v9427, %v9446
        %vm9451 = vcmask 1042434
        %v9452 = vsel %vm9451, %v9447, %v9448
        %vm9453 = vcmask 1041408
        %v9454 = vsel %vm9453, %v9450, %v9452
        %v9456 = vlaneseq
        %vm9457 = vcmp.ge.s32.totalorder %v9456, 0
        %vm9458 = vcmp.lt.s32.totalorder %v9456, 512
        %vm9459 = vmand %vm9457, %vm9458
        %9460 = vst.msk [vmem:[%s474] sm:$0xf] %vm9459, %v9454
        %v9465 = vrot.slane %v9439, 7
        %v9466 = vrot.slane %v9440, 6
        %v9467 = vrot.slane %v9441, 5
        %v9468 = vsel %vm9449, %v9438, %v9465
        %v9469 = vsel %vm9451, %v9466, %v9467
        %v9470 = vsel %vm9453, %v9468, %v9469
        %9472 = vst.msk [vmem:[%s481] sm:$0xf] %vm9459, %v9470
        %v9473 = vld [vmem:[%s8] sm:$0xff]
        %v9474 = vld [vmem:[%s8 + $0x8] sm:$0xff]
        %v9475 = vld [vmem:[%s8 + $0x10] sm:$0xff]
        %v9476 = vld [vmem:[%s8 + $0x18] sm:$0xff]
        %v9477 = vld [vmem:[%s8 + $0x20] sm:$0xff]
        %v9478 = vld [vmem:[%s8 + $0x28] sm:$0xff]
        %v9479 = vld [vmem:[%s8 + $0x30] sm:$0xff]
        %v9480 = vld [vmem:[%s8 + $0x38] sm:$0xff]
        %v9481 = vld [vmem:[%s8 + $0x40] sm:$0xff]
        %v9482 = vld [vmem:[%s8 + $0x48] sm:$0xff]
        %v9483 = vld [vmem:[%s8 + $0x50] sm:$0xff]
        %v9484 = vld [vmem:[%s8 + $0x58] sm:$0xff]
        %v9485 = vld [vmem:[%s8 + $0x60] sm:$0xff]
        %v9486 = vld [vmem:[%s8 + $0x68] sm:$0xff]
        %v9487 = vld [vmem:[%s8 + $0x70] sm:$0xff]
        %v9488 = vld [vmem:[%s8 + $0x78] sm:$0xff]
        %v9489 = vld [vmem:[%s8 + $0x80] sm:$0xff]
        %v9490 = vld [vmem:[%s8 + $0x88] sm:$0xff]
        %v9491 = vld [vmem:[%s8 + $0x90] sm:$0xff]
        %v9492 = vld [vmem:[%s8 + $0x98] sm:$0xff]
        %v9493 = vld [vmem:[%s8 + $0xa0] sm:$0xff]
        %v9494 = vld [vmem:[%s8 + $0xa8] sm:$0xff]
        %v9495 = vld [vmem:[%s8 + $0xb0] sm:$0xff]
        %v9496 = vld [vmem:[%s8 + $0xb8] sm:$0xff]
        %v9497 = vld [vmem:[%s8 + $0xc0] sm:$0xff]
        %v9498 = vld [vmem:[%s8 + $0xc8] sm:$0xff]
        %v9499 = vld [vmem:[%s8 + $0xd0] sm:$0xff]
        %v9500 = vld [vmem:[%s8 + $0xd8] sm:$0xff]
        %v9501 = vld [vmem:[%s8 + $0xe0] sm:$0xff]
        %v9502 = vld [vmem:[%s8 + $0xe8] sm:$0xff]
        %v9503 = vld [vmem:[%s8 + $0xf0] sm:$0xff]
        %v9504 = vld [vmem:[%s8 + $0xf8] sm:$0xff]
        %v9505 = vld [vmem:[%s8 + $0x100] sm:$0xff]
        %v9506 = vld [vmem:[%s8 + $0x108] sm:$0xff]
        %v9507 = vld [vmem:[%s8 + $0x110] sm:$0xff]
        %v9508 = vld [vmem:[%s8 + $0x118] sm:$0xff]
        %v9509 = vld [vmem:[%s8 + $0x120] sm:$0xff]
        %v9510 = vld [vmem:[%s8 + $0x128] sm:$0xff]
        %v9511 = vld [vmem:[%s8 + $0x130] sm:$0xff]
        %v9512 = vld [vmem:[%s8 + $0x138] sm:$0xff]
        %v9513 = vld [vmem:[%s8 + $0x140] sm:$0xff]
        %v9514 = vld [vmem:[%s8 + $0x148] sm:$0xff]
        %v9515 = vld [vmem:[%s8 + $0x150] sm:$0xff]
        %v9516 = vld [vmem:[%s8 + $0x158] sm:$0xff]
        %v9517 = vld [vmem:[%s8 + $0x160] sm:$0xff]
        %v9518 = vld [vmem:[%s8 + $0x168] sm:$0xff]
        %v9519 = vld [vmem:[%s8 + $0x170] sm:$0xff]
        %v9520 = vld [vmem:[%s8 + $0x178] sm:$0xff]
        %v9521 = vld [vmem:[%s8 + $0x180] sm:$0xff]
        %v9522 = vld [vmem:[%s8 + $0x188] sm:$0xff]
        %v9523 = vld [vmem:[%s8 + $0x190] sm:$0xff]
        %v9524 = vld [vmem:[%s8 + $0x198] sm:$0xff]
        %v9525 = vld [vmem:[%s8 + $0x1a0] sm:$0xff]
        %v9526 = vld [vmem:[%s8 + $0x1a8] sm:$0xff]
        %v9527 = vld [vmem:[%s8 + $0x1b0] sm:$0xff]
        %v9528 = vld [vmem:[%s8 + $0x1b8] sm:$0xff]
        %v9529 = vld [vmem:[%s8 + $0x1c0] sm:$0xff]
        %v9530 = vld [vmem:[%s8 + $0x1c8] sm:$0xff]
        %v9531 = vld [vmem:[%s8 + $0x1d0] sm:$0xff]
        %v9532 = vld [vmem:[%s8 + $0x1d8] sm:$0xff]
        %v9533 = vld [vmem:[%s8 + $0x1e0] sm:$0xff]
        %v9534 = vld [vmem:[%s8 + $0x1e8] sm:$0xff]
        %v9535 = vld [vmem:[%s8 + $0x1f0] sm:$0xff]
        %v9536 = vld [vmem:[%s8 + $0x1f8] sm:$0xff]
        %v9537 = vld [vmem:[%s9] sm:$0xff]
        %v9538 = vld [vmem:[%s9 + $0x8] sm:$0xff]
        %v9539 = vld [vmem:[%s9 + $0x10] sm:$0xff]
        %v9540 = vld [vmem:[%s9 + $0x18] sm:$0xff]
        %v9541 = vld [vmem:[%s9 + $0x20] sm:$0xff]
        %v9542 = vld [vmem:[%s9 + $0x28] sm:$0xff]
        %v9543 = vld [vmem:[%s9 + $0x30] sm:$0xff]
        %v9544 = vld [vmem:[%s9 + $0x38] sm:$0xff]
        %v9545 = vld [vmem:[%s9 + $0x40] sm:$0xff]
        %v9546 = vld [vmem:[%s9 + $0x48] sm:$0xff]
        %v9547 = vld [vmem:[%s9 + $0x50] sm:$0xff]
        %v9548 = vld [vmem:[%s9 + $0x58] sm:$0xff]
        %v9549 = vld [vmem:[%s9 + $0x60] sm:$0xff]
        %v9550 = vld [vmem:[%s9 + $0x68] sm:$0xff]
        %v9551 = vld [vmem:[%s9 + $0x70] sm:$0xff]
        %v9552 = vld [vmem:[%s9 + $0x78] sm:$0xff]
        %v9553 = vld [vmem:[%s9 + $0x80] sm:$0xff]
        %v9554 = vld [vmem:[%s9 + $0x88] sm:$0xff]
        %v9555 = vld [vmem:[%s9 + $0x90] sm:$0xff]
        %v9556 = vld [vmem:[%s9 + $0x98] sm:$0xff]
        %v9557 = vld [vmem:[%s9 + $0xa0] sm:$0xff]
        %v9558 = vld [vmem:[%s9 + $0xa8] sm:$0xff]
        %v9559 = vld [vmem:[%s9 + $0xb0] sm:$0xff]
        %v9560 = vld [vmem:[%s9 + $0xb8] sm:$0xff]
        %v9561 = vld [vmem:[%s9 + $0xc0] sm:$0xff]
        %v9562 = vld [vmem:[%s9 + $0xc8] sm:$0xff]
        %v9563 = vld [vmem:[%s9 + $0xd0] sm:$0xff]
        %v9564 = vld [vmem:[%s9 + $0xd8] sm:$0xff]
        %v9565 = vld [vmem:[%s9 + $0xe0] sm:$0xff]
        %v9566 = vld [vmem:[%s9 + $0xe8] sm:$0xff]
        %v9567 = vld [vmem:[%s9 + $0xf0] sm:$0xff]
        %v9568 = vld [vmem:[%s9 + $0xf8] sm:$0xff]
        %v9569 = vld [vmem:[%s9 + $0x100] sm:$0xff]
        %v9570 = vld [vmem:[%s9 + $0x108] sm:$0xff]
        %v9571 = vld [vmem:[%s9 + $0x110] sm:$0xff]
        %v9572 = vld [vmem:[%s9 + $0x118] sm:$0xff]
        %v9573 = vld [vmem:[%s9 + $0x120] sm:$0xff]
        %v9574 = vld [vmem:[%s9 + $0x128] sm:$0xff]
        %v9575 = vld [vmem:[%s9 + $0x130] sm:$0xff]
        %v9576 = vld [vmem:[%s9 + $0x138] sm:$0xff]
        %v9577 = vld [vmem:[%s9 + $0x140] sm:$0xff]
        %v9578 = vld [vmem:[%s9 + $0x148] sm:$0xff]
        %v9579 = vld [vmem:[%s9 + $0x150] sm:$0xff]
        %v9580 = vld [vmem:[%s9 + $0x158] sm:$0xff]
        %v9581 = vld [vmem:[%s9 + $0x160] sm:$0xff]
        %v9582 = vld [vmem:[%s9 + $0x168] sm:$0xff]
        %v9583 = vld [vmem:[%s9 + $0x170] sm:$0xff]
        %v9584 = vld [vmem:[%s9 + $0x178] sm:$0xff]
        %v9585 = vld [vmem:[%s9 + $0x180] sm:$0xff]
        %v9586 = vld [vmem:[%s9 + $0x188] sm:$0xff]
        %v9587 = vld [vmem:[%s9 + $0x190] sm:$0xff]
        %v9588 = vld [vmem:[%s9 + $0x198] sm:$0xff]
        %v9589 = vld [vmem:[%s9 + $0x1a0] sm:$0xff]
        %v9590 = vld [vmem:[%s9 + $0x1a8] sm:$0xff]
        %v9591 = vld [vmem:[%s9 + $0x1b0] sm:$0xff]
        %v9592 = vld [vmem:[%s9 + $0x1b8] sm:$0xff]
        %v9593 = vld [vmem:[%s9 + $0x1c0] sm:$0xff]
        %v9594 = vld [vmem:[%s9 + $0x1c8] sm:$0xff]
        %v9595 = vld [vmem:[%s9 + $0x1d0] sm:$0xff]
        %v9596 = vld [vmem:[%s9 + $0x1d8] sm:$0xff]
        %v9597 = vld [vmem:[%s9 + $0x1e0] sm:$0xff]
        %v9598 = vld [vmem:[%s9 + $0x1e8] sm:$0xff]
        %v9599 = vld [vmem:[%s9 + $0x1f0] sm:$0xff]
        %v9600 = vld [vmem:[%s9 + $0x1f8] sm:$0xff]
        %9601 = vmatpush.msra.mxu0 %v9552
        %9602 = vmatpush.msra.mxu0 %v9551
        %9603 = vmatpush.msra.mxu0 %v9550
        %9604 = vmatpush.msra.mxu0 %v9549
        %9605 = vmatpush.msra.mxu0 %v9548
        %9606 = vmatpush.msra.mxu0 %v9547
        %9607 = vmatpush.msra.mxu0 %v9546
        %9608 = vmatpush.msra.mxu0 %v9545
        %9609 = vmatpush.msra.mxu0 %v9544
        %9610 = vmatpush.msra.mxu0 %v9543
        %9611 = vmatpush.msra.mxu0 %v9542
        %9612 = vmatpush.msra.mxu0 %v9541
        %9613 = vmatpush.msra.mxu0 %v9540
        %9614 = vmatpush.msra.mxu0 %v9539
        %9615 = vmatpush.msra.mxu0 %v9538
        %9616 = vmatpush.msra.mxu0 %v9537
        %9617 = vmatmul.f32.gmra.mxu0 %v9438
        %v9618 = vpop.f32.mrf.mxu0
        %v9619 = vadd.f32 0.0, %v9618
        %9620 = vdwg.mxu0
        %9621 = vmatpush.msra.mxu0 %v9568
        %9622 = vmatpush.msra.mxu0 %v9567
        %9623 = vmatpush.msra.mxu0 %v9566
        %9624 = vmatpush.msra.mxu0 %v9565
        %9625 = vmatpush.msra.mxu0 %v9564
        %9626 = vmatpush.msra.mxu0 %v9563
        %9627 = vmatpush.msra.mxu0 %v9562
        %9628 = vmatpush.msra.mxu0 %v9561
        %9629 = vmatpush.msra.mxu0 %v9560
        %9630 = vmatpush.msra.mxu0 %v9559
        %9631 = vmatpush.msra.mxu0 %v9558
        %9632 = vmatpush.msra.mxu0 %v9557
        %9633 = vmatpush.msra.mxu0 %v9556
        %9634 = vmatpush.msra.mxu0 %v9555
        %9635 = vmatpush.msra.mxu0 %v9554
        %9636 = vmatpush.msra.mxu0 %v9553
        %9637 = vmatmul.f32.gmra.mxu0 %v9439
        %v9638 = vpop.f32.mrf.mxu0
        %v9639 = vadd.f32 %v9619, %v9638
        %9640 = vdwg.mxu0
        %9641 = vmatpush.msra.mxu0 %v9584
        %9642 = vmatpush.msra.mxu0 %v9583
        %9643 = vmatpush.msra.mxu0 %v9582
        %9644 = vmatpush.msra.mxu0 %v9581
        %9645 = vmatpush.msra.mxu0 %v9580
        %9646 = vmatpush.msra.mxu0 %v9579
        %9647 = vmatpush.msra.mxu0 %v9578
        %9648 = vmatpush.msra.mxu0 %v9577
        %9649 = vmatpush.msra.mxu0 %v9576
        %9650 = vmatpush.msra.mxu0 %v9575
        %9651 = vmatpush.msra.mxu0 %v9574
        %9652 = vmatpush.msra.mxu0 %v9573
        %9653 = vmatpush.msra.mxu0 %v9572
        %9654 = vmatpush.msra.mxu0 %v9571
        %9655 = vmatpush.msra.mxu0 %v9570
        %9656 = vmatpush.msra.mxu0 %v9569
        %9657 = vmatmul.f32.gmra.mxu0 %v9440
        %v9658 = vpop.f32.mrf.mxu0
        %v9659 = vadd.f32 %v9639, %v9658
        %9660 = vdwg.mxu0
        %9661 = vmatpush.msra.mxu0 %v9600
        %9662 = vmatpush.msra.mxu0 %v9599
        %9663 = vmatpush.msra.mxu0 %v9598
        %9664 = vmatpush.msra.mxu0 %v9597
        %9665 = vmatpush.msra.mxu0 %v9596
        %9666 = vmatpush.msra.mxu0 %v9595
        %9667 = vmatpush.msra.mxu0 %v9594
        %9668 = vmatpush.msra.mxu0 %v9593
        %9669 = vmatpush.msra.mxu0 %v9592
        %9670 = vmatpush.msra.mxu0 %v9591
        %9671 = vmatpush.msra.mxu0 %v9590
        %9672 = vmatpush.msra.mxu0 %v9589
        %9673 = vmatpush.msra.mxu0 %v9588
        %9674 = vmatpush.msra.mxu0 %v9587
        %9675 = vmatpush.msra.mxu0 %v9586
        %9676 = vmatpush.msra.mxu0 %v9585
        %9677 = vmatmul.f32.gmra.mxu0 %v9441
        %v9678 = vpop.f32.mrf.mxu0
        %v9679 = vadd.f32 %v9659, %v9678
        %9680 = vdwg.mxu0
        %9681 = vmatpush.msra.mxu0 %v9488
        %9682 = vmatpush.msra.mxu0 %v9487
        %9683 = vmatpush.msra.mxu0 %v9486
        %9684 = vmatpush.msra.mxu0 %v9485
        %9685 = vmatpush.msra.mxu0 %v9484
        %9686 = vmatpush.msra.mxu0 %v9483
        %9687 = vmatpush.msra.mxu0 %v9482
        %9688 = vmatpush.msra.mxu0 %v9481
        %9689 = vmatpush.msra.mxu0 %v9480
        %9690 = vmatpush.msra.mxu0 %v9479
        %9691 = vmatpush.msra.mxu0 %v9478
        %9692 = vmatpush.msra.mxu0 %v9477
        %9693 = vmatpush.msra.mxu0 %v9476
        %9694 = vmatpush.msra.mxu0 %v9475
        %9695 = vmatpush.msra.mxu0 %v9474
        %9696 = vmatpush.msra.mxu0 %v9473
        %9697 = vmatmul.f32.gmra.mxu0 %v9427
        %v9698 = vpop.f32.mrf.mxu0
        %v9699 = vadd.f32 %v9679, %v9698
        %9700 = vdwg.mxu0
        %9701 = vmatpush.msra.mxu0 %v9504
        %9702 = vmatpush.msra.mxu0 %v9503
        %9703 = vmatpush.msra.mxu0 %v9502
        %9704 = vmatpush.msra.mxu0 %v9501
        %9705 = vmatpush.msra.mxu0 %v9500
        %9706 = vmatpush.msra.mxu0 %v9499
        %9707 = vmatpush.msra.mxu0 %v9498
        %9708 = vmatpush.msra.mxu0 %v9497
        %9709 = vmatpush.msra.mxu0 %v9496
        %9710 = vmatpush.msra.mxu0 %v9495
        %9711 = vmatpush.msra.mxu0 %v9494
        %9712 = vmatpush.msra.mxu0 %v9493
        %9713 = vmatpush.msra.mxu0 %v9492
        %9714 = vmatpush.msra.mxu0 %v9491
        %9715 = vmatpush.msra.mxu0 %v9490
        %9716 = vmatpush.msra.mxu0 %v9489
        %9717 = vmatmul.f32.gmra.mxu0 %v9428
        %v9718 = vpop.f32.mrf.mxu0
        %v9719 = vadd.f32 %v9699, %v9718
        %9720 = vdwg.mxu0
        %9721 = vmatpush.msra.mxu0 %v9520
        %9722 = vmatpush.msra.mxu0 %v9519
        %9723 = vmatpush.msra.mxu0 %v9518
        %9724 = vmatpush.msra.mxu0 %v9517
        %9725 = vmatpush.msra.mxu0 %v9516
        %9726 = vmatpush.msra.mxu0 %v9515
        %9727 = vmatpush.msra.mxu0 %v9514
        %9728 = vmatpush.msra.mxu0 %v9513
        %9729 = vmatpush.msra.mxu0 %v9512
        %9730 = vmatpush.msra.mxu0 %v9511
        %9731 = vmatpush.msra.mxu0 %v9510
        %9732 = vmatpush.msra.mxu0 %v9509
        %9733 = vmatpush.msra.mxu0 %v9508
        %9734 = vmatpush.msra.mxu0 %v9507
        %9735 = vmatpush.msra.mxu0 %v9506
        %9736 = vmatpush.msra.mxu0 %v9505
        %9737 = vmatmul.f32.gmra.mxu0 %v9429
        %v9738 = vpop.f32.mrf.mxu0
        %v9739 = vadd.f32 %v9719, %v9738
        %9740 = vdwg.mxu0
        %9741 = vmatpush.msra.mxu0 %v9536
        %9742 = vmatpush.msra.mxu0 %v9535
        %9743 = vmatpush.msra.mxu0 %v9534
        %9744 = vmatpush.msra.mxu0 %v9533
        %9745 = vmatpush.msra.mxu0 %v9532
        %9746 = vmatpush.msra.mxu0 %v9531
        %9747 = vmatpush.msra.mxu0 %v9530
        %9748 = vmatpush.msra.mxu0 %v9529
        %9749 = vmatpush.msra.mxu0 %v9528
        %9750 = vmatpush.msra.mxu0 %v9527
        %9751 = vmatpush.msra.mxu0 %v9526
        %9752 = vmatpush.msra.mxu0 %v9525
        %9753 = vmatpush.msra.mxu0 %v9524
        %9754 = vmatpush.msra.mxu0 %v9523
        %9755 = vmatpush.msra.mxu0 %v9522
        %9756 = vmatpush.msra.mxu0 %v9521
        %9757 = vmatmul.f32.gmra.mxu0 %v9430
        %v9758 = vpop.f32.mrf.mxu0
        %v9759 = vadd.f32 %v9739, %v9758
        %9760 = vdwg.mxu0
        %v9761 = vld [vmem:[%s10] sm:$0x1]
        %v9762 = vadd.f32 %v9759, %v9761
        %9763 = vst [vmem:[%s487] sm:$0x1] %v9762
        %s9764 = sand.u32 %s290, 1
        %s9765 = scalar_lea.sflag [#allocation3], %s9764
        %s9766 = sand.u32 %s290, 1
        %s9767 = smul.addr %s9766, 4
        %s9768 = scalar_lea.vmem [#allocation2], %s9767
        %s9769 = sand.u32 %s31, 1
        %s9770 = scalar_lea.sflag [#allocation5], %s9769
        %s9771 = sand.u32 %s316, 1
        %s9772 = smul.addr %s9771, 4
        %s9773 = scalar_lea.vmem [#allocation4], %s9772
        %s9774 = sand.u32 %s31, 1
        %s9775 = scalar_lea.sflag [#allocation5], %s9774
        %s9776 = sand.u32 %s342, 1
        %s9777 = scalar_lea.vmem [#allocation6], %s9776
        // Predicated region
        $region65: #{tpu_custom_call.1} parent=63 // pred_check
          %p9778 = pneg %p300
        $region66: #{tpu_custom_call.1} parent=63 // pred_check_branch
          %9780 = sbr.rel (%p9778) target = $region68
        $region67: #{tpu_custom_call.1} parent=63 // pred_region
          %9782 = vsyncadd %s9765, 0
          %s9783 = smul.addr %s31, 4
          %s9784 = scalar_lea.hbm %s11, %s9783
          %s9786 = sshll.u32 %s9768, 4
          %s9787 = int_to_ptr.vmem [resolvable:$true] %s9786
          %s9788 = sshll.u32 %s9784, 4
          %s9789 = int_to_ptr.hbm [resolvable:$true] %s9788
          %9791 = dma.vmem_to_hbm [thread:$0]  %s9787, 64, %s9789, %s9765
        $region68: #{tpu_custom_call.1} parent=63 // pred_fallthru
          _
        // Predicated region
        $region69: #{tpu_custom_call.1} parent=63 // pred_check
          %p9792 = pneg %p326
        $region70: #{tpu_custom_call.1} parent=63 // pred_check_branch
          %9794 = sbr.rel (%p9792) target = $region72
        $region71: #{tpu_custom_call.1} parent=63 // pred_region
          %9796 = vsyncadd %s9770, 0
          %s9797 = smul.addr %s31, 4
          %s9798 = scalar_lea.hbm %s12, %s9797
          %s9800 = sshll.u32 %s9773, 4
          %s9801 = int_to_ptr.vmem [resolvable:$true] %s9800
          %s9802 = sshll.u32 %s9798, 4
          %s9803 = int_to_ptr.hbm [resolvable:$true] %s9802
          %9805 = dma.vmem_to_hbm [thread:$0]  %s9801, 64, %s9803, %s9770
        $region72: #{tpu_custom_call.1} parent=63 // pred_fallthru
          _
        // Predicated region
        $region73: #{tpu_custom_call.1} parent=63 // pred_check
          %p9806 = pneg %p352
        $region74: #{tpu_custom_call.1} parent=63 // pred_check_branch
          %9808 = sbr.rel (%p9806) target = $region76
        $region75: #{tpu_custom_call.1} parent=63 // pred_region
          %9810 = vsyncadd %s9775, 0
          %s9811 = scalar_lea.hbm %s13, %s31
          %s9813 = sshll.u32 %s9777, 4
          %s9814 = int_to_ptr.vmem [resolvable:$true] %s9813
          %s9815 = sshll.u32 %s9811, 4
          %s9816 = int_to_ptr.hbm [resolvable:$true] %s9815
          %9818 = dma.vmem_to_hbm [thread:$0]  %s9814, 16, %s9816, %s9775
        $region76: #{tpu_custom_call.1} parent=63 // pred_fallthru
          _
      $region64: #{tpu_custom_call.1} parent=5 // pred_fallthru
        _
      %p9819 = scmp.le.s32.totalorder 2, %s26
      // Predicated region
      $region77: #{tpu_custom_call.1} parent=5 // pred_check
        %p9820 = pneg %p9819
      $region78: #{tpu_custom_call.1} parent=5 // pred_check_branch
        %9822 = sbr.rel (%p9820) target = $region80
      $region79: #{tpu_custom_call.1} parent=5 // pred_region
        %s9823 = ssub.s32 %s26, 2
        // Predicated region
        $region81: #{tpu_custom_call.1} parent=79 // pred_check
          %p9824 = pneg %p306
        $region82: #{tpu_custom_call.1} parent=79 // pred_check_branch
          %9826 = sbr.rel (%p9824) target = $region84
        $region83: #{tpu_custom_call.1} parent=79 // pred_region
          %s9827 = sand.u32 %s291, 1
          %s9828 = scalar_lea.sflag [#allocation3], %s9827
          %s9829 = sand.u32 %s291, 1
          %s9830 = smul.addr %s9829, 4
          %s9831 = scalar_lea.vmem [#allocation2], %s9830
          %9833 = dma.done %s9828, 64
        $region84: #{tpu_custom_call.1} parent=79 // pred_fallthru
          _
        // Predicated region
        $region85: #{tpu_custom_call.1} parent=79 // pred_check
          %p9834 = pneg %p332
        $region86: #{tpu_custom_call.1} parent=79 // pred_check_branch
          %9836 = sbr.rel (%p9834) target = $region88
        $region87: #{tpu_custom_call.1} parent=79 // pred_region
          %s9837 = sand.u32 %s32, 1
          %s9838 = scalar_lea.sflag [#allocation5], %s9837
          %s9839 = sand.u32 %s317, 1
          %s9840 = smul.addr %s9839, 4
          %s9841 = scalar_lea.vmem [#allocation4], %s9840
          %9843 = dma.done %s9838, 64
        $region88: #{tpu_custom_call.1} parent=79 // pred_fallthru
          _
        // Predicated region
        $region89: #{tpu_custom_call.1} parent=79 // pred_check
          %p9844 = pneg %p358
        $region90: #{tpu_custom_call.1} parent=79 // pred_check_branch
          %9846 = sbr.rel (%p9844) target = $region92
        $region91: #{tpu_custom_call.1} parent=79 // pred_region
          %s9847 = sand.u32 %s32, 1
          %s9848 = scalar_lea.sflag [#allocation5], %s9847
          %s9849 = sand.u32 %s343, 1
          %s9850 = scalar_lea.vmem [#allocation6], %s9849
          %9852 = dma.done %s9848, 16
        $region92: #{tpu_custom_call.1} parent=79 // pred_fallthru
          _
      $region80: #{tpu_custom_call.1} parent=5 // pred_fallthru
        _
    $region6: #{tpu_custom_call.1} parent=1 // loop_footer
      %s30 = sadd.s32 1, %s26
    $region7: #{tpu_custom_call.1} parent=1 // loop_footer_branch
      %25 = sbr.rel target = $region3
    $region8: #{tpu_custom_call.1} parent=1 // loop_exit
      _
    %9853 = vsyncpa [#allocation3], 1
    %s9854 = scalar_lea.sflag [#allocation3], 1
    %9855 = vsyncpa %s9854, 1
    %9856 = vsyncpa [#allocation5], 1
    %s9857 = scalar_lea.sflag [#allocation5], 1
    %9858 = vsyncpa %s9857, 1

</llo_original>
